<compile_context>
chip_gen: v7x
topology: tpu7x:2x2x1
jax: 0.10.0
libtpu: 0.0.40
codegen_flags: <defaults>
</compile_context>

<pallas_src>
import functools

import jax
import jax.numpy as jnp
from jax.experimental import pallas as pl
from jax.experimental.pallas import tpu as pltpu

LEAKY_SLOPE = 0.1   # nn.LeakyReLU(negative_slope=0.1) used by this WideResNet
BN_EPS = 1e-5       # PyTorch BatchNorm2d default eps


# ------------------------------ small helpers --------------------------------

def _leaky(y):
    return jnp.where(y >= 0, y, LEAKY_SLOPE * y)


def _sp(start, size, stride):
    # (strided) spatial slice; plain slice when stride == 1
    return pl.ds(start, size, stride) if stride > 1 else pl.ds(start, size)


def _zero_border(ref):
    """Zero ONLY the 1-pixel spatial border of a padded (N,Hp,Wp,C) scratch.

    Interior rows are fully rewritten before every conv, so zeroing the four
    edge strips once at kernel entry replaces the old per-conv full-tensor
    memset (cuts redundant passes on the vector-store slot)."""
    n, hp, wp, c = ref.shape
    ref[:, pl.ds(0, 1), :, :] = jnp.zeros((n, 1, wp, c), ref.dtype)
    ref[:, pl.ds(hp - 1, 1), :, :] = jnp.zeros((n, 1, wp, c), ref.dtype)
    ref[:, :, pl.ds(0, 1), :] = jnp.zeros((n, hp, 1, c), ref.dtype)
    ref[:, :, pl.ds(wp - 1, 1), :] = jnp.zeros((n, hp, 1, c), ref.dtype)


def _conv3x3_taps(pad_ref, inp4d, w3x3, stride):
    """3x3 / pad=1 conv as 9 accumulating MXU matmuls over shifted, strided
    views of the zero-bordered scratch (no im2col buffer, no tap scatter).

    Returns (acc (P,Cout) f32, center_lhs (P,Cin) bf16). `center_lhs` is
    exactly the strided sub-sample a 1x1/stride shortcut conv consumes, so the
    caller can reuse it for the residual matmul with zero extra loads."""
    n, hi, wi, ci = inp4d.shape
    ho = (hi - 1) // stride + 1
    wo = (wi - 1) // stride + 1
    p = n * ho * wo
    # Stage the interior (border already zero and never rewritten).
    # TODO(synk): at real WRN widths make this staging bf16 to halve VMEM /
    # store traffic (kept f32 here for robust strided-load lowering).
    pad_ref[:, pl.ds(1, hi), pl.ds(1, wi), :] = inp4d
    acc = None
    center = None
    for ky in range(3):
        for kx in range(3):
            lhs = pad_ref[:, _sp(ky, ho, stride), _sp(kx, wo, stride), :]
            lhs = lhs.reshape(p, ci).astype(jnp.bfloat16)
            if ky == 1 and kx == 1:
                center = lhs
            d = jnp.dot(lhs, w3x3[ky, kx], preferred_element_type=jnp.float32)
            acc = d if acc is None else acc + d
    return acc, center


# --------------------------- fused NetworkBlock kernel -----------------------

def _make_network_block_kernel(N, H, W, layer_specs, activate_before_residual):
    st0 = layer_specs[0]["stride"]
    Ho = (H - 1) // st0 + 1
    Wo = (W - 1) // st0 + 1

    def kernel(*refs):
        x_ref = refs[0]
        idx = 1
        per_layer = []
        for spec in layer_specs:
            n_args = 5 if spec["equal"] else 6
            per_layer.append(refs[idx:idx + n_args])
            idx += n_args
        o_ref = refs[idx]
        padA_ref, padB_ref = refs[idx + 1], refs[idx + 2]

        # Zero only the borders, once, for both padded scratches.
        _zero_border(padA_ref)
        _zero_border(padB_ref)

        cur = x_ref[...]                                  # (N, Hi, Wi, Ci) f32
        for li, (spec, lr) in enumerate(zip(layer_specs, per_layer)):
            cin, cout, st, equal = (spec["cin"], spec["cout"],
                                    spec["stride"], spec["equal"])
            if equal:
                s1_ref, b1_ref, w1_ref, b2_ref, w2_ref = lr
                ws_ref = None
            else:
                s1_ref, b1_ref, w1_ref, b2_ref, w2_ref, ws_ref = lr

            n_, hi, wi, _ = cur.shape
            ho = (hi - 1) // st + 1
            wo = (wi - 1) // st + 1
            p = n_ * ho * wo
            pad1_ref = padA_ref if li == 0 else padB_ref

            # ---- BN1 + LeakyReLU (static branch structure) ----
            if equal or activate_before_residual:
                a1 = _leaky(cur * s1_ref[...] + b1_ref[...])
            else:
                # MixMatch-WRN: relu1(bn1(x)) is dead here (conv1 & shortcut
                # both consume raw x), so it is skipped.
                a1 = cur

            # ---- conv1: 3x3/stride/pad=1; BN2 scale pre-folded into w1 ----
            h1, center = _conv3x3_taps(pad1_ref, a1, w1_ref[...], st)

            # ---- BN2 (shift only) + LeakyReLU ----
            a2 = _leaky(h1 + b2_ref[...])                       # (P, Cout) f32
            # TODO(synk): F.dropout omitted -- drop_rate=0.0 / eval => identity.

            # ---- conv2: 3x3/stride=1/pad=1 ----
            h2, _ = _conv3x3_taps(padB_ref, a2.reshape(n_, ho, wo, cout),
                                  w2_ref[...], 1)

            # ---- residual ----
            if equal:
                res = cur.reshape(p, cout)                  # raw x (stride 1)
            else:
                # 1x1/stride shortcut rides on conv1's center-tap operand.
                res = jnp.dot(center, ws_ref[...],
                              preferred_element_type=jnp.float32)

            cur = (h2 + res).reshape(n_, ho, wo, cout)

        o_ref[...] = cur.astype(o_ref.dtype)

    return kernel, Ho, Wo


# ------------------------------ model wrappers --------------------------------

def _bn_fold(bn):
    scale = bn["gamma"] / jnp.sqrt(bn["var"] + BN_EPS)
    shift = bn["beta"] - bn["mean"] * scale
    return scale, shift


def prepare_params(params, stride):
    """Fold eval-mode BN, fold BN2's scale into conv1's output columns, and
    cast conv weights to bf16 (MXU operand dtype). Shared with the reference."""
    prepared = []
    for i, p in enumerate(params):
        st = stride if i == 0 else 1
        cin, cout = p["conv1_w"].shape[2], p["conv1_w"].shape[3]
        equal = (cin == cout)
        s1, b1 = _bn_fold(p["bn1"])
        s2, b2 = _bn_fold(p["bn2"])
        q = {
            "s1": s1.reshape(1, 1, 1, cin).astype(jnp.float32),
            "b1": b1.reshape(1, 1, 1, cin).astype(jnp.float32),
            # BN2 scale folded into conv1's output channels (HWIO last axis).
            "w1": (p["conv1_w"] * s2.reshape(1, 1, 1, cout)).astype(jnp.bfloat16),
            "b2": b2.reshape(1, cout).astype(jnp.float32),
            "w2": p["conv2_w"].astype(jnp.bfloat16),
        }
        if not equal:
            q["ws"] = p["short_w"].astype(jnp.bfloat16)          # (1,1,cin,cout)
        prepared.append(({"cin": cin, "cout": cout, "stride": st,
                          "equal": equal}, q))
    return prepared


def network_block_forward(x, params, stride, activate_before_residual):
    """x: (N,H,W,Cin) f32 NHWC. ONE fused pallas_call for the whole NetworkBlock."""
    N, H, W, Cin0 = x.shape
    prepared = prepare_params(params, stride)
    layer_specs = [spec for spec, _ in prepared]

    assert layer_specs[0]["cin"] == Cin0
    assert (not layer_specs[0]["equal"]) or layer_specs[0]["stride"] == 1, \
        "identity residual needs stride 1"
    for spec in layer_specs[1:]:
        assert spec["stride"] == 1 and spec["equal"], \
            "NetworkBlock layers >= 1 are stride-1, equal-in-out"

    kernel, Ho, Wo = _make_network_block_kernel(
        N, H, W, layer_specs, activate_before_residual)
    Cout = layer_specs[-1]["cout"]

    args = [x.astype(jnp.float32)]
    for spec, q in prepared:
        args += [q["s1"], q["b1"], q["w1"], q["b2"], q["w2"]]
        if not spec["equal"]:
            args.append(q["ws"].reshape(spec["cin"], spec["cout"]))

    scratch = [
        # zero-bordered padded input for layer-0 conv1
        pltpu.VMEM((N, H + 2, W + 2, Cin0), jnp.float32),
        # shared zero-bordered padded map for every other 3x3 conv in the block
        pltpu.VMEM((N, Ho + 2, Wo + 2, Cout), jnp.float32),
    ]
    vmem = pl.BlockSpec(memory_space=pltpu.MemorySpace.VMEM)
    # No grid: the whole (tiny) problem is one invocation; all intermediates and
    # weights live in VMEM and layers never round-trip HBM. Scaling note: at
    # real WRN widths, add a grid over P = N*Ho*Wo tiles, mark it
    # dimension_semantics=("parallel",) (2 TCs on v7x) and set
    # pltpu.CompilerParams(vmem_limit_bytes=...) against 64 MiB (v7x) /
    # 128 MiB (v6e) / 16 MiB-default-scoped (v5e) VMEM budgets.
    return pl.pallas_call(
        kernel,
        out_shape=jax.ShapeDtypeStruct((N, Ho, Wo, Cout), jnp.float32),
        in_specs=[vmem] * len(args),
        out_specs=vmem,
        scratch_shapes=scratch,
    )(*args)


# ------------------------- pure-JAX reference check ---------------------------

def _ref_conv(x, w_bf16, stride, padding):
    # bf16 operands + f32 accumulation, mirroring the kernel's MXU path.
    return jax.lax.conv_general_dilated(
        x.astype(jnp.bfloat16), w_bf16,
        window_strides=(stride, stride),
        padding=[(padding, padding), (padding, padding)],
        dimension_numbers=("NHWC", "HWIO", "NHWC"),
        preferred_element_type=jnp.float32)


def ref_network_block(x, params, stride, activate_before_residual):
    """Reference of the same forward graph using lax convs, consuming the same
    prepared (BN-folded, bf16) weights the kernel uses."""
    for spec, q in prepare_params(params, stride):
        st, equal = spec["stride"], spec["equal"]
        if equal or activate_before_residual:
            a1 = _leaky(x * q["s1"] + q["b1"])
        else:
            a1 = x                                   # BN1 output is dead here
        h = _ref_conv(a1, q["w1"], st, 1)            # BN2 scale already in w1
        h = _leaky(h + q["b2"].reshape(1, 1, 1, -1))
        h = _ref_conv(h, q["w2"], 1, 1)
        res = x if equal else _ref_conv(a1, q["ws"], st, 0)
        x = res + h
    return x


# ------------------------------- initialization --------------------------------

def _init_bn(key, c):
    k1, k2, k3, k4 = jax.random.split(key, 4)
    return {
        "gamma": 1.0 + 0.1 * jax.random.normal(k1, (c,), jnp.float32),
        "beta": 0.1 * jax.random.normal(k2, (c,), jnp.float32),
        "mean": 0.1 * jax.random.normal(k3, (c,), jnp.float32),
        "var": jax.random.uniform(k4, (c,), jnp.float32, minval=0.5, maxval=1.5),
    }


def init_network_block_params(key, nb_layers, in_planes, out_planes):
    params = []
    for i in range(nb_layers):
        ip = in_planes if i == 0 else out_planes
        key, kb1, kc1, kb2, kc2, ks = jax.random.split(key, 6)
        p = {
            "bn1": _init_bn(kb1, ip),
            "conv1_w": jax.random.normal(kc1, (3, 3, ip, out_planes), jnp.float32)
                       * (2.0 / (9 * ip)) ** 0.5,
            "bn2": _init_bn(kb2, out_planes),
            "conv2_w": jax.random.normal(kc2, (3, 3, out_planes, out_planes),
                                         jnp.float32) * (2.0 / (9 * out_planes)) ** 0.5,
        }
        if ip != out_planes:
            p["short_w"] = jax.random.normal(ks, (1, 1, ip, out_planes),
                                             jnp.float32) * (2.0 / ip) ** 0.5
        params.append(p)
    return params


# ------------------------------------ main -------------------------------------

if __name__ == "__main__":
    key = jax.random.PRNGKey(0)
    k_x, k_p = jax.random.split(key)

    # NetworkBlock(nb_layers=2, in_planes=4, out_planes=8, block=BasicBlock,
    #              stride=2, drop_rate=0.0, activate_before_residual=True)
    N, C, H, W = 2, 4, 16, 16
    nb_layers, in_planes, out_planes, stride = 2, 4, 8, 2
    activate_before_residual = True

    x_nchw = jax.random.normal(k_x, (N, C, H, W), jnp.float32)   # PyTorch layout
    params = init_network_block_params(k_p, nb_layers, in_planes, out_planes)

    x_nhwc = jnp.transpose(x_nchw, (0, 2, 3, 1))                 # NCHW -> NHWC

    fwd = jax.jit(functools.partial(
        network_block_forward, stride=stride,
        activate_before_residual=activate_before_residual))
    y_nhwc = fwd(x_nhwc, params)
    y_nchw = jnp.transpose(y_nhwc, (0, 3, 1, 2))                 # back to NCHW
    jax.block_until_ready(y_nchw)

    # Sanity-check against a pure-JAX reference of the same forward pass
    # (same BN-folded bf16 weights, f32 accumulation).
    y_ref = ref_network_block(x_nhwc, params, stride, activate_before_residual)
    assert y_nhwc.shape == (N, H // stride, W // stride, out_planes)
    max_err = float(jnp.max(jnp.abs(y_nhwc - y_ref)))
    assert jnp.allclose(y_nhwc, y_ref, rtol=1e-2, atol=1e-2), \
        f"mismatch vs reference (max abs err = {max_err})"

    print("KERNEL_OK")
</pallas_src>

<mosaic_0001>
module attributes {stable_mosaic.version = 11 : i64} {
  func.func @kernel(%arg0: memref<2x16x16x4xf32, #tpu.memory_space<vmem>>, %arg1: memref<1x1x1x4xf32, #tpu.memory_space<vmem>>, %arg2: memref<1x1x1x4xf32, #tpu.memory_space<vmem>>, %arg3: memref<3x3x4x8xbf16, #tpu.memory_space<vmem>>, %arg4: memref<1x8xf32, #tpu.memory_space<vmem>>, %arg5: memref<3x3x8x8xbf16, #tpu.memory_space<vmem>>, %arg6: memref<4x8xbf16, #tpu.memory_space<vmem>>, %arg7: memref<1x1x1x8xf32, #tpu.memory_space<vmem>>, %arg8: memref<1x1x1x8xf32, #tpu.memory_space<vmem>>, %arg9: memref<3x3x8x8xbf16, #tpu.memory_space<vmem>>, %arg10: memref<1x8xf32, #tpu.memory_space<vmem>>, %arg11: memref<3x3x8x8xbf16, #tpu.memory_space<vmem>>, %arg12: memref<2x8x8x8xf32, #tpu.memory_space<vmem>>, %arg13: memref<2x18x18x4xf32, #tpu.memory_space<vmem>>, %arg14: memref<2x10x10x8xf32, #tpu.memory_space<vmem>>) attributes {dimension_semantics = [], scalar_prefetch = 0 : i64, scratch_operands = 2 : i64, tpu.core_type = #tpu.core_type<tc>} {
    %cst = arith.constant 0.000000e+00 : f32
    %0 = vector.broadcast %cst : f32 to vector<2x1x18x4xf32>
    %c0 = arith.constant 0 : index
    %c0_0 = arith.constant 0 : index
    %c0_1 = arith.constant 0 : index
    %c0_2 = arith.constant 0 : index
    %1 = vector.load %arg13[%c0, %c0_0, %c0_1, %c0_2] : memref<2x18x18x4xf32, #tpu.memory_space<vmem>>, vector<2x1x18x4xf32>
    tpu.vector_store %arg13[%c0, %c0_0, %c0_1, %c0_2], %0 {strides = array<i32>} : memref<2x18x18x4xf32, #tpu.memory_space<vmem>>, vector<2x1x18x4xf32>,
    %cst_3 = arith.constant 0.000000e+00 : f32
    %2 = vector.broadcast %cst_3 : f32 to vector<2x1x18x4xf32>
    %c0_4 = arith.constant 0 : index
    %c17 = arith.constant 17 : index
    %c0_5 = arith.constant 0 : index
    %c0_6 = arith.constant 0 : index
    %3 = vector.load %arg13[%c0_4, %c17, %c0_5, %c0_6] : memref<2x18x18x4xf32, #tpu.memory_space<vmem>>, vector<2x1x18x4xf32>
    tpu.vector_store %arg13[%c0_4, %c17, %c0_5, %c0_6], %2 {strides = array<i32>} : memref<2x18x18x4xf32, #tpu.memory_space<vmem>>, vector<2x1x18x4xf32>,
    %cst_7 = arith.constant 0.000000e+00 : f32
    %4 = vector.broadcast %cst_7 : f32 to vector<2x18x1x4xf32>
    %c0_8 = arith.constant 0 : index
    %c0_9 = arith.constant 0 : index
    %c0_10 = arith.constant 0 : index
    %c0_11 = arith.constant 0 : index
    %5 = vector.load %arg13[%c0_8, %c0_9, %c0_10, %c0_11] : memref<2x18x18x4xf32, #tpu.memory_space<vmem>>, vector<2x18x1x4xf32>
    tpu.vector_store %arg13[%c0_8, %c0_9, %c0_10, %c0_11], %4 {strides = array<i32>} : memref<2x18x18x4xf32, #tpu.memory_space<vmem>>, vector<2x18x1x4xf32>,
    %cst_12 = arith.constant 0.000000e+00 : f32
    %6 = vector.broadcast %cst_12 : f32 to vector<2x18x1x4xf32>
    %c0_13 = arith.constant 0 : index
    %c0_14 = arith.constant 0 : index
    %c17_15 = arith.constant 17 : index
    %c0_16 = arith.constant 0 : index
    %7 = vector.load %arg13[%c0_13, %c0_14, %c17_15, %c0_16] : memref<2x18x18x4xf32, #tpu.memory_space<vmem>>, vector<2x18x1x4xf32>
    tpu.vector_store %arg13[%c0_13, %c0_14, %c17_15, %c0_16], %6 {strides = array<i32>} : memref<2x18x18x4xf32, #tpu.memory_space<vmem>>, vector<2x18x1x4xf32>,
    %cst_17 = arith.constant 0.000000e+00 : f32
    %8 = vector.broadcast %cst_17 : f32 to vector<2x1x10x8xf32>
    %c0_18 = arith.constant 0 : index
    %c0_19 = arith.constant 0 : index
    %c0_20 = arith.constant 0 : index
    %c0_21 = arith.constant 0 : index
    %9 = vector.load %arg14[%c0_18, %c0_19, %c0_20, %c0_21] : memref<2x10x10x8xf32, #tpu.memory_space<vmem>>, vector<2x1x10x8xf32>
    tpu.vector_store %arg14[%c0_18, %c0_19, %c0_20, %c0_21], %8 {strides = array<i32>} : memref<2x10x10x8xf32, #tpu.memory_space<vmem>>, vector<2x1x10x8xf32>,
    %cst_22 = arith.constant 0.000000e+00 : f32
    %10 = vector.broadcast %cst_22 : f32 to vector<2x1x10x8xf32>
    %c0_23 = arith.constant 0 : index
    %c9 = arith.constant 9 : index
    %c0_24 = arith.constant 0 : index
    %c0_25 = arith.constant 0 : index
    %11 = vector.load %arg14[%c0_23, %c9, %c0_24, %c0_25] : memref<2x10x10x8xf32, #tpu.memory_space<vmem>>, vector<2x1x10x8xf32>
    tpu.vector_store %arg14[%c0_23, %c9, %c0_24, %c0_25], %10 {strides = array<i32>} : memref<2x10x10x8xf32, #tpu.memory_space<vmem>>, vector<2x1x10x8xf32>,
    %cst_26 = arith.constant 0.000000e+00 : f32
    %12 = vector.broadcast %cst_26 : f32 to vector<2x10x1x8xf32>
    %c0_27 = arith.constant 0 : index
    %c0_28 = arith.constant 0 : index
    %c0_29 = arith.constant 0 : index
    %c0_30 = arith.constant 0 : index
    %13 = vector.load %arg14[%c0_27, %c0_28, %c0_29, %c0_30] : memref<2x10x10x8xf32, #tpu.memory_space<vmem>>, vector<2x10x1x8xf32>
    tpu.vector_store %arg14[%c0_27, %c0_28, %c0_29, %c0_30], %12 {strides = array<i32>} : memref<2x10x10x8xf32, #tpu.memory_space<vmem>>, vector<2x10x1x8xf32>,
    %cst_31 = arith.constant 0.000000e+00 : f32
    %14 = vector.broadcast %cst_31 : f32 to vector<2x10x1x8xf32>
    %c0_32 = arith.constant 0 : index
    %c0_33 = arith.constant 0 : index
    %c9_34 = arith.constant 9 : index
    %c0_35 = arith.constant 0 : index
    %15 = vector.load %arg14[%c0_32, %c0_33, %c9_34, %c0_35] : memref<2x10x10x8xf32, #tpu.memory_space<vmem>>, vector<2x10x1x8xf32>
    tpu.vector_store %arg14[%c0_32, %c0_33, %c9_34, %c0_35], %14 {strides = array<i32>} : memref<2x10x10x8xf32, #tpu.memory_space<vmem>>, vector<2x10x1x8xf32>,
    %c0_36 = arith.constant 0 : index
    %c0_37 = arith.constant 0 : index
    %c0_38 = arith.constant 0 : index
    %c0_39 = arith.constant 0 : index
    %16 = vector.load %arg0[%c0_36, %c0_37, %c0_38, %c0_39] : memref<2x16x16x4xf32, #tpu.memory_space<vmem>>, vector<2x16x16x4xf32>
    %c0_40 = arith.constant 0 : index
    %c0_41 = arith.constant 0 : index
    %c0_42 = arith.constant 0 : index
    %c0_43 = arith.constant 0 : index
    %17 = vector.load %arg1[%c0_40, %c0_41, %c0_42, %c0_43] : memref<1x1x1x4xf32, #tpu.memory_space<vmem>>, vector<1x1x1x4xf32>
    %18 = vector.broadcast %17 : vector<1x1x1x4xf32> to vector<2x16x16x4xf32>
    %19 = arith.mulf %16, %18 : vector<2x16x16x4xf32>
    %c0_44 = arith.constant 0 : index
    %c0_45 = arith.constant 0 : index
    %c0_46 = arith.constant 0 : index
    %c0_47 = arith.constant 0 : index
    %20 = vector.load %arg2[%c0_44, %c0_45, %c0_46, %c0_47] : memref<1x1x1x4xf32, #tpu.memory_space<vmem>>, vector<1x1x1x4xf32>
    %21 = vector.broadcast %20 : vector<1x1x1x4xf32> to vector<2x16x16x4xf32>
    %22 = arith.addf %19, %21 : vector<2x16x16x4xf32>
    %cst_48 = arith.constant 0.000000e+00 : f32
    %23 = vector.broadcast %cst_48 : f32 to vector<2x16x16x4xf32>
    %24 = arith.cmpf oge, %22, %23 : vector<2x16x16x4xf32>
    %cst_49 = arith.constant 1.000000e-01 : f32
    %25 = vector.broadcast %cst_49 : f32 to vector<2x16x16x4xf32>
    %26 = arith.mulf %25, %22 : vector<2x16x16x4xf32>
    %27 = arith.select %24, %22, %26 : vector<2x16x16x4xi1>, vector<2x16x16x4xf32>
    %c0_50 = arith.constant 0 : index
    %c0_51 = arith.constant 0 : index
    %c0_52 = arith.constant 0 : index
    %c0_53 = arith.constant 0 : index
    %28 = vector.load %arg3[%c0_50, %c0_51, %c0_52, %c0_53] : memref<3x3x4x8xbf16, #tpu.memory_space<vmem>>, vector<3x3x4x8xbf16>
    %c0_54 = arith.constant 0 : index
    %c1 = arith.constant 1 : index
    %c1_55 = arith.constant 1 : index
    %c0_56 = arith.constant 0 : index
    %29 = vector.load %arg13[%c0_54, %c1, %c1_55, %c0_56] : memref<2x18x18x4xf32, #tpu.memory_space<vmem>>, vector<2x16x16x4xf32>
    tpu.vector_store %arg13[%c0_54, %c1, %c1_55, %c0_56], %27 {strides = array<i32>} : memref<2x18x18x4xf32, #tpu.memory_space<vmem>>, vector<2x16x16x4xf32>,
    %c0_57 = arith.constant 0 : index
    %c0_58 = arith.constant 0 : index
    %c0_59 = arith.constant 0 : index
    %c0_60 = arith.constant 0 : index
    %30 = tpu.strided_load %arg13[%c0_57, %c0_58, %c0_59, %c0_60] {strides = array<i32: 1, 2, 2, 1>} : memref<2x18x18x4xf32, #tpu.memory_space<vmem>>, vector<2x8x8x4xf32>
    %31 = vector.shape_cast %30 : vector<2x8x8x4xf32> to vector<128x4xf32>
    %32 = arith.truncf %31 : vector<128x4xf32> to vector<128x4xbf16>
    %33 = vector.extract_strided_slice %28 {offsets = [0, 0, 0, 0], sizes = [1, 1, 4, 8], strides = [1, 1, 1, 1]} : vector<3x3x4x8xbf16> to vector<1x1x4x8xbf16>
    %34 = vector.shape_cast %33 : vector<1x1x4x8xbf16> to vector<4x8xbf16>
    %cst_61 = arith.constant dense<0.000000e+00> : vector<128x8xf32>
    %35 = tpu.matmul %32, %34, %cst_61 {dimension_numbers = #tpu.dot_dimension_numbers<[1], [0], [0], [1], [0, 0, 1, 1], [], []>} : vector<128x4xbf16>, vector<4x8xbf16>, vector<128x8xf32> -> vector<128x8xf32>
    %c0_62 = arith.constant 0 : index
    %c0_63 = arith.constant 0 : index
    %c1_64 = arith.constant 1 : index
    %c0_65 = arith.constant 0 : index
    %36 = tpu.strided_load %arg13[%c0_62, %c0_63, %c1_64, %c0_65] {strides = array<i32: 1, 2, 2, 1>} : memref<2x18x18x4xf32, #tpu.memory_space<vmem>>, vector<2x8x8x4xf32>
    %37 = vector.shape_cast %36 : vector<2x8x8x4xf32> to vector<128x4xf32>
    %38 = arith.truncf %37 : vector<128x4xf32> to vector<128x4xbf16>
    %39 = vector.extract_strided_slice %28 {offsets = [0, 1, 0, 0], sizes = [1, 1, 4, 8], strides = [1, 1, 1, 1]} : vector<3x3x4x8xbf16> to vector<1x1x4x8xbf16>
    %40 = vector.shape_cast %39 : vector<1x1x4x8xbf16> to vector<4x8xbf16>
    %cst_66 = arith.constant dense<0.000000e+00> : vector<128x8xf32>
    %41 = tpu.matmul %38, %40, %cst_66 {dimension_numbers = #tpu.dot_dimension_numbers<[1], [0], [0], [1], [0, 0, 1, 1], [], []>} : vector<128x4xbf16>, vector<4x8xbf16>, vector<128x8xf32> -> vector<128x8xf32>
    %42 = arith.addf %35, %41 : vector<128x8xf32>
    %c0_67 = arith.constant 0 : index
    %c0_68 = arith.constant 0 : index
    %c2 = arith.constant 2 : index
    %c0_69 = arith.constant 0 : index
    %43 = tpu.strided_load %arg13[%c0_67, %c0_68, %c2, %c0_69] {strides = array<i32: 1, 2, 2, 1>} : memref<2x18x18x4xf32, #tpu.memory_space<vmem>>, vector<2x8x8x4xf32>
    %44 = vector.shape_cast %43 : vector<2x8x8x4xf32> to vector<128x4xf32>
    %45 = arith.truncf %44 : vector<128x4xf32> to vector<128x4xbf16>
    %46 = vector.extract_strided_slice %28 {offsets = [0, 2, 0, 0], sizes = [1, 1, 4, 8], strides = [1, 1, 1, 1]} : vector<3x3x4x8xbf16> to vector<1x1x4x8xbf16>
    %47 = vector.shape_cast %46 : vector<1x1x4x8xbf16> to vector<4x8xbf16>
    %cst_70 = arith.constant dense<0.000000e+00> : vector<128x8xf32>
    %48 = tpu.matmul %45, %47, %cst_70 {dimension_numbers = #tpu.dot_dimension_numbers<[1], [0], [0], [1], [0, 0, 1, 1], [], []>} : vector<128x4xbf16>, vector<4x8xbf16>, vector<128x8xf32> -> vector<128x8xf32>
    %49 = arith.addf %42, %48 : vector<128x8xf32>
    %c0_71 = arith.constant 0 : index
    %c1_72 = arith.constant 1 : index
    %c0_73 = arith.constant 0 : index
    %c0_74 = arith.constant 0 : index
    %50 = tpu.strided_load %arg13[%c0_71, %c1_72, %c0_73, %c0_74] {strides = array<i32: 1, 2, 2, 1>} : memref<2x18x18x4xf32, #tpu.memory_space<vmem>>, vector<2x8x8x4xf32>
    %51 = vector.shape_cast %50 : vector<2x8x8x4xf32> to vector<128x4xf32>
    %52 = arith.truncf %51 : vector<128x4xf32> to vector<128x4xbf16>
    %53 = vector.extract_strided_slice %28 {offsets = [1, 0, 0, 0], sizes = [1, 1, 4, 8], strides = [1, 1, 1, 1]} : vector<3x3x4x8xbf16> to vector<1x1x4x8xbf16>
    %54 = vector.shape_cast %53 : vector<1x1x4x8xbf16> to vector<4x8xbf16>
    %cst_75 = arith.constant dense<0.000000e+00> : vector<128x8xf32>
    %55 = tpu.matmul %52, %54, %cst_75 {dimension_numbers = #tpu.dot_dimension_numbers<[1], [0], [0], [1], [0, 0, 1, 1], [], []>} : vector<128x4xbf16>, vector<4x8xbf16>, vector<128x8xf32> -> vector<128x8xf32>
    %56 = arith.addf %49, %55 : vector<128x8xf32>
    %c0_76 = arith.constant 0 : index
    %c1_77 = arith.constant 1 : index
    %c1_78 = arith.constant 1 : index
    %c0_79 = arith.constant 0 : index
    %57 = tpu.strided_load %arg13[%c0_76, %c1_77, %c1_78, %c0_79] {strides = array<i32: 1, 2, 2, 1>} : memref<2x18x18x4xf32, #tpu.memory_space<vmem>>, vector<2x8x8x4xf32>
    %58 = vector.shape_cast %57 : vector<2x8x8x4xf32> to vector<128x4xf32>
    %59 = arith.truncf %58 : vector<128x4xf32> to vector<128x4xbf16>
    %60 = vector.extract_strided_slice %28 {offsets = [1, 1, 0, 0], sizes = [1, 1, 4, 8], strides = [1, 1, 1, 1]} : vector<3x3x4x8xbf16> to vector<1x1x4x8xbf16>
    %61 = vector.shape_cast %60 : vector<1x1x4x8xbf16> to vector<4x8xbf16>
    %cst_80 = arith.constant dense<0.000000e+00> : vector<128x8xf32>
    %62 = tpu.matmul %59, %61, %cst_80 {dimension_numbers = #tpu.dot_dimension_numbers<[1], [0], [0], [1], [0, 0, 1, 1], [], []>} : vector<128x4xbf16>, vector<4x8xbf16>, vector<128x8xf32> -> vector<128x8xf32>
    %63 = arith.addf %56, %62 : vector<128x8xf32>
    %c0_81 = arith.constant 0 : index
    %c1_82 = arith.constant 1 : index
    %c2_83 = arith.constant 2 : index
    %c0_84 = arith.constant 0 : index
    %64 = tpu.strided_load %arg13[%c0_81, %c1_82, %c2_83, %c0_84] {strides = array<i32: 1, 2, 2, 1>} : memref<2x18x18x4xf32, #tpu.memory_space<vmem>>, vector<2x8x8x4xf32>
    %65 = vector.shape_cast %64 : vector<2x8x8x4xf32> to vector<128x4xf32>
    %66 = arith.truncf %65 : vector<128x4xf32> to vector<128x4xbf16>
    %67 = vector.extract_strided_slice %28 {offsets = [1, 2, 0, 0], sizes = [1, 1, 4, 8], strides = [1, 1, 1, 1]} : vector<3x3x4x8xbf16> to vector<1x1x4x8xbf16>
    %68 = vector.shape_cast %67 : vector<1x1x4x8xbf16> to vector<4x8xbf16>
    %cst_85 = arith.constant dense<0.000000e+00> : vector<128x8xf32>
    %69 = tpu.matmul %66, %68, %cst_85 {dimension_numbers = #tpu.dot_dimension_numbers<[1], [0], [0], [1], [0, 0, 1, 1], [], []>} : vector<128x4xbf16>, vector<4x8xbf16>, vector<128x8xf32> -> vector<128x8xf32>
    %70 = arith.addf %63, %69 : vector<128x8xf32>
    %c0_86 = arith.constant 0 : index
    %c2_87 = arith.constant 2 : index
    %c0_88 = arith.constant 0 : index
    %c0_89 = arith.constant 0 : index
    %71 = tpu.strided_load %arg13[%c0_86, %c2_87, %c0_88, %c0_89] {strides = array<i32: 1, 2, 2, 1>} : memref<2x18x18x4xf32, #tpu.memory_space<vmem>>, vector<2x8x8x4xf32>
    %72 = vector.shape_cast %71 : vector<2x8x8x4xf32> to vector<128x4xf32>
    %73 = arith.truncf %72 : vector<128x4xf32> to vector<128x4xbf16>
    %74 = vector.extract_strided_slice %28 {offsets = [2, 0, 0, 0], sizes = [1, 1, 4, 8], strides = [1, 1, 1, 1]} : vector<3x3x4x8xbf16> to vector<1x1x4x8xbf16>
    %75 = vector.shape_cast %74 : vector<1x1x4x8xbf16> to vector<4x8xbf16>
    %cst_90 = arith.constant dense<0.000000e+00> : vector<128x8xf32>
    %76 = tpu.matmul %73, %75, %cst_90 {dimension_numbers = #tpu.dot_dimension_numbers<[1], [0], [0], [1], [0, 0, 1, 1], [], []>} : vector<128x4xbf16>, vector<4x8xbf16>, vector<128x8xf32> -> vector<128x8xf32>
    %77 = arith.addf %70, %76 : vector<128x8xf32>
    %c0_91 = arith.constant 0 : index
    %c2_92 = arith.constant 2 : index
    %c1_93 = arith.constant 1 : index
    %c0_94 = arith.constant 0 : index
    %78 = tpu.strided_load %arg13[%c0_91, %c2_92, %c1_93, %c0_94] {strides = array<i32: 1, 2, 2, 1>} : memref<2x18x18x4xf32, #tpu.memory_space<vmem>>, vector<2x8x8x4xf32>
    %79 = vector.shape_cast %78 : vector<2x8x8x4xf32> to vector<128x4xf32>
    %80 = arith.truncf %79 : vector<128x4xf32> to vector<128x4xbf16>
    %81 = vector.extract_strided_slice %28 {offsets = [2, 1, 0, 0], sizes = [1, 1, 4, 8], strides = [1, 1, 1, 1]} : vector<3x3x4x8xbf16> to vector<1x1x4x8xbf16>
    %82 = vector.shape_cast %81 : vector<1x1x4x8xbf16> to vector<4x8xbf16>
    %cst_95 = arith.constant dense<0.000000e+00> : vector<128x8xf32>
    %83 = tpu.matmul %80, %82, %cst_95 {dimension_numbers = #tpu.dot_dimension_numbers<[1], [0], [0], [1], [0, 0, 1, 1], [], []>} : vector<128x4xbf16>, vector<4x8xbf16>, vector<128x8xf32> -> vector<128x8xf32>
    %84 = arith.addf %77, %83 : vector<128x8xf32>
    %c0_96 = arith.constant 0 : index
    %c2_97 = arith.constant 2 : index
    %c2_98 = arith.constant 2 : index
    %c0_99 = arith.constant 0 : index
    %85 = tpu.strided_load %arg13[%c0_96, %c2_97, %c2_98, %c0_99] {strides = array<i32: 1, 2, 2, 1>} : memref<2x18x18x4xf32, #tpu.memory_space<vmem>>, vector<2x8x8x4xf32>
    %86 = vector.shape_cast %85 : vector<2x8x8x4xf32> to vector<128x4xf32>
    %87 = arith.truncf %86 : vector<128x4xf32> to vector<128x4xbf16>
    %88 = vector.extract_strided_slice %28 {offsets = [2, 2, 0, 0], sizes = [1, 1, 4, 8], strides = [1, 1, 1, 1]} : vector<3x3x4x8xbf16> to vector<1x1x4x8xbf16>
    %89 = vector.shape_cast %88 : vector<1x1x4x8xbf16> to vector<4x8xbf16>
    %cst_100 = arith.constant dense<0.000000e+00> : vector<128x8xf32>
    %90 = tpu.matmul %87, %89, %cst_100 {dimension_numbers = #tpu.dot_dimension_numbers<[1], [0], [0], [1], [0, 0, 1, 1], [], []>} : vector<128x4xbf16>, vector<4x8xbf16>, vector<128x8xf32> -> vector<128x8xf32>
    %91 = arith.addf %84, %90 : vector<128x8xf32>
    %c0_101 = arith.constant 0 : index
    %c0_102 = arith.constant 0 : index
    %92 = vector.load %arg4[%c0_101, %c0_102] : memref<1x8xf32, #tpu.memory_space<vmem>>, vector<1x8xf32>
    %93 = vector.broadcast %92 : vector<1x8xf32> to vector<128x8xf32>
    %94 = arith.addf %91, %93 : vector<128x8xf32>
    %cst_103 = arith.constant 0.000000e+00 : f32
    %95 = vector.broadcast %cst_103 : f32 to vector<128x8xf32>
    %96 = arith.cmpf oge, %94, %95 : vector<128x8xf32>
    %cst_104 = arith.constant 1.000000e-01 : f32
    %97 = vector.broadcast %cst_104 : f32 to vector<128x8xf32>
    %98 = arith.mulf %97, %94 : vector<128x8xf32>
    %99 = arith.select %96, %94, %98 : vector<128x8xi1>, vector<128x8xf32>
    %100 = vector.shape_cast %99 : vector<128x8xf32> to vector<2x8x8x8xf32>
    %c0_105 = arith.constant 0 : index
    %c0_106 = arith.constant 0 : index
    %c0_107 = arith.constant 0 : index
    %c0_108 = arith.constant 0 : index
    %101 = vector.load %arg5[%c0_105, %c0_106, %c0_107, %c0_108] : memref<3x3x8x8xbf16, #tpu.memory_space<vmem>>, vector<3x3x8x8xbf16>
    %c0_109 = arith.constant 0 : index
    %c1_110 = arith.constant 1 : index
    %c1_111 = arith.constant 1 : index
    %c0_112 = arith.constant 0 : index
    %102 = vector.load %arg14[%c0_109, %c1_110, %c1_111, %c0_112] : memref<2x10x10x8xf32, #tpu.memory_space<vmem>>, vector<2x8x8x8xf32>
    tpu.vector_store %arg14[%c0_109, %c1_110, %c1_111, %c0_112], %100 {strides = array<i32>} : memref<2x10x10x8xf32, #tpu.memory_space<vmem>>, vector<2x8x8x8xf32>,
    %c0_113 = arith.constant 0 : index
    %c0_114 = arith.constant 0 : index
    %c0_115 = arith.constant 0 : index
    %c0_116 = arith.constant 0 : index
    %103 = vector.load %arg14[%c0_113, %c0_114, %c0_115, %c0_116] : memref<2x10x10x8xf32, #tpu.memory_space<vmem>>, vector<2x8x8x8xf32>
    %104 = vector.shape_cast %103 : vector<2x8x8x8xf32> to vector<128x8xf32>
    %105 = arith.truncf %104 : vector<128x8xf32> to vector<128x8xbf16>
    %106 = vector.extract_strided_slice %101 {offsets = [0, 0, 0, 0], sizes = [1, 1, 8, 8], strides = [1, 1, 1, 1]} : vector<3x3x8x8xbf16> to vector<1x1x8x8xbf16>
    %107 = vector.shape_cast %106 : vector<1x1x8x8xbf16> to vector<8x8xbf16>
    %cst_117 = arith.constant dense<0.000000e+00> : vector<128x8xf32>
    %108 = tpu.matmul %105, %107, %cst_117 {dimension_numbers = #tpu.dot_dimension_numbers<[1], [0], [0], [1], [0, 0, 1, 1], [], []>} : vector<128x8xbf16>, vector<8x8xbf16>, vector<128x8xf32> -> vector<128x8xf32>
    %c0_118 = arith.constant 0 : index
    %c0_119 = arith.constant 0 : index
    %c1_120 = arith.constant 1 : index
    %c0_121 = arith.constant 0 : index
    %109 = vector.load %arg14[%c0_118, %c0_119, %c1_120, %c0_121] : memref<2x10x10x8xf32, #tpu.memory_space<vmem>>, vector<2x8x8x8xf32>
    %110 = vector.shape_cast %109 : vector<2x8x8x8xf32> to vector<128x8xf32>
    %111 = arith.truncf %110 : vector<128x8xf32> to vector<128x8xbf16>
    %112 = vector.extract_strided_slice %101 {offsets = [0, 1, 0, 0], sizes = [1, 1, 8, 8], strides = [1, 1, 1, 1]} : vector<3x3x8x8xbf16> to vector<1x1x8x8xbf16>
    %113 = vector.shape_cast %112 : vector<1x1x8x8xbf16> to vector<8x8xbf16>
    %cst_122 = arith.constant dense<0.000000e+00> : vector<128x8xf32>
    %114 = tpu.matmul %111, %113, %cst_122 {dimension_numbers = #tpu.dot_dimension_numbers<[1], [0], [0], [1], [0, 0, 1, 1], [], []>} : vector<128x8xbf16>, vector<8x8xbf16>, vector<128x8xf32> -> vector<128x8xf32>
    %115 = arith.addf %108, %114 : vector<128x8xf32>
    %c0_123 = arith.constant 0 : index
    %c0_124 = arith.constant 0 : index
    %c2_125 = arith.constant 2 : index
    %c0_126 = arith.constant 0 : index
    %116 = vector.load %arg14[%c0_123, %c0_124, %c2_125, %c0_126] : memref<2x10x10x8xf32, #tpu.memory_space<vmem>>, vector<2x8x8x8xf32>
    %117 = vector.shape_cast %116 : vector<2x8x8x8xf32> to vector<128x8xf32>
    %118 = arith.truncf %117 : vector<128x8xf32> to vector<128x8xbf16>
    %119 = vector.extract_strided_slice %101 {offsets = [0, 2, 0, 0], sizes = [1, 1, 8, 8], strides = [1, 1, 1, 1]} : vector<3x3x8x8xbf16> to vector<1x1x8x8xbf16>
    %120 = vector.shape_cast %119 : vector<1x1x8x8xbf16> to vector<8x8xbf16>
    %cst_127 = arith.constant dense<0.000000e+00> : vector<128x8xf32>
    %121 = tpu.matmul %118, %120, %cst_127 {dimension_numbers = #tpu.dot_dimension_numbers<[1], [0], [0], [1], [0, 0, 1, 1], [], []>} : vector<128x8xbf16>, vector<8x8xbf16>, vector<128x8xf32> -> vector<128x8xf32>
    %122 = arith.addf %115, %121 : vector<128x8xf32>
    %c0_128 = arith.constant 0 : index
    %c1_129 = arith.constant 1 : index
    %c0_130 = arith.constant 0 : index
    %c0_131 = arith.constant 0 : index
    %123 = vector.load %arg14[%c0_128, %c1_129, %c0_130, %c0_131] : memref<2x10x10x8xf32, #tpu.memory_space<vmem>>, vector<2x8x8x8xf32>
    %124 = vector.shape_cast %123 : vector<2x8x8x8xf32> to vector<128x8xf32>
    %125 = arith.truncf %124 : vector<128x8xf32> to vector<128x8xbf16>
    %126 = vector.extract_strided_slice %101 {offsets = [1, 0, 0, 0], sizes = [1, 1, 8, 8], strides = [1, 1, 1, 1]} : vector<3x3x8x8xbf16> to vector<1x1x8x8xbf16>
    %127 = vector.shape_cast %126 : vector<1x1x8x8xbf16> to vector<8x8xbf16>
    %cst_132 = arith.constant dense<0.000000e+00> : vector<128x8xf32>
    %128 = tpu.matmul %125, %127, %cst_132 {dimension_numbers = #tpu.dot_dimension_numbers<[1], [0], [0], [1], [0, 0, 1, 1], [], []>} : vector<128x8xbf16>, vector<8x8xbf16>, vector<128x8xf32> -> vector<128x8xf32>
    %129 = arith.addf %122, %128 : vector<128x8xf32>
    %c0_133 = arith.constant 0 : index
    %c1_134 = arith.constant 1 : index
    %c1_135 = arith.constant 1 : index
    %c0_136 = arith.constant 0 : index
    %130 = vector.load %arg14[%c0_133, %c1_134, %c1_135, %c0_136] : memref<2x10x10x8xf32, #tpu.memory_space<vmem>>, vector<2x8x8x8xf32>
    %131 = vector.shape_cast %130 : vector<2x8x8x8xf32> to vector<128x8xf32>
    %132 = arith.truncf %131 : vector<128x8xf32> to vector<128x8xbf16>
    %133 = vector.extract_strided_slice %101 {offsets = [1, 1, 0, 0], sizes = [1, 1, 8, 8], strides = [1, 1, 1, 1]} : vector<3x3x8x8xbf16> to vector<1x1x8x8xbf16>
    %134 = vector.shape_cast %133 : vector<1x1x8x8xbf16> to vector<8x8xbf16>
    %cst_137 = arith.constant dense<0.000000e+00> : vector<128x8xf32>
    %135 = tpu.matmul %132, %134, %cst_137 {dimension_numbers = #tpu.dot_dimension_numbers<[1], [0], [0], [1], [0, 0, 1, 1], [], []>} : vector<128x8xbf16>, vector<8x8xbf16>, vector<128x8xf32> -> vector<128x8xf32>
    %136 = arith.addf %129, %135 : vector<128x8xf32>
    %c0_138 = arith.constant 0 : index
    %c1_139 = arith.constant 1 : index
    %c2_140 = arith.constant 2 : index
    %c0_141 = arith.constant 0 : index
    %137 = vector.load %arg14[%c0_138, %c1_139, %c2_140, %c0_141] : memref<2x10x10x8xf32, #tpu.memory_space<vmem>>, vector<2x8x8x8xf32>
    %138 = vector.shape_cast %137 : vector<2x8x8x8xf32> to vector<128x8xf32>
    %139 = arith.truncf %138 : vector<128x8xf32> to vector<128x8xbf16>
    %140 = vector.extract_strided_slice %101 {offsets = [1, 2, 0, 0], sizes = [1, 1, 8, 8], strides = [1, 1, 1, 1]} : vector<3x3x8x8xbf16> to vector<1x1x8x8xbf16>
    %141 = vector.shape_cast %140 : vector<1x1x8x8xbf16> to vector<8x8xbf16>
    %cst_142 = arith.constant dense<0.000000e+00> : vector<128x8xf32>
    %142 = tpu.matmul %139, %141, %cst_142 {dimension_numbers = #tpu.dot_dimension_numbers<[1], [0], [0], [1], [0, 0, 1, 1], [], []>} : vector<128x8xbf16>, vector<8x8xbf16>, vector<128x8xf32> -> vector<128x8xf32>
    %143 = arith.addf %136, %142 : vector<128x8xf32>
    %c0_143 = arith.constant 0 : index
    %c2_144 = arith.constant 2 : index
    %c0_145 = arith.constant 0 : index
    %c0_146 = arith.constant 0 : index
    %144 = vector.load %arg14[%c0_143, %c2_144, %c0_145, %c0_146] : memref<2x10x10x8xf32, #tpu.memory_space<vmem>>, vector<2x8x8x8xf32>
    %145 = vector.shape_cast %144 : vector<2x8x8x8xf32> to vector<128x8xf32>
    %146 = arith.truncf %145 : vector<128x8xf32> to vector<128x8xbf16>
    %147 = vector.extract_strided_slice %101 {offsets = [2, 0, 0, 0], sizes = [1, 1, 8, 8], strides = [1, 1, 1, 1]} : vector<3x3x8x8xbf16> to vector<1x1x8x8xbf16>
    %148 = vector.shape_cast %147 : vector<1x1x8x8xbf16> to vector<8x8xbf16>
    %cst_147 = arith.constant dense<0.000000e+00> : vector<128x8xf32>
    %149 = tpu.matmul %146, %148, %cst_147 {dimension_numbers = #tpu.dot_dimension_numbers<[1], [0], [0], [1], [0, 0, 1, 1], [], []>} : vector<128x8xbf16>, vector<8x8xbf16>, vector<128x8xf32> -> vector<128x8xf32>
    %150 = arith.addf %143, %149 : vector<128x8xf32>
    %c0_148 = arith.constant 0 : index
    %c2_149 = arith.constant 2 : index
    %c1_150 = arith.constant 1 : index
    %c0_151 = arith.constant 0 : index
    %151 = vector.load %arg14[%c0_148, %c2_149, %c1_150, %c0_151] : memref<2x10x10x8xf32, #tpu.memory_space<vmem>>, vector<2x8x8x8xf32>
    %152 = vector.shape_cast %151 : vector<2x8x8x8xf32> to vector<128x8xf32>
    %153 = arith.truncf %152 : vector<128x8xf32> to vector<128x8xbf16>
    %154 = vector.extract_strided_slice %101 {offsets = [2, 1, 0, 0], sizes = [1, 1, 8, 8], strides = [1, 1, 1, 1]} : vector<3x3x8x8xbf16> to vector<1x1x8x8xbf16>
    %155 = vector.shape_cast %154 : vector<1x1x8x8xbf16> to vector<8x8xbf16>
    %cst_152 = arith.constant dense<0.000000e+00> : vector<128x8xf32>
    %156 = tpu.matmul %153, %155, %cst_152 {dimension_numbers = #tpu.dot_dimension_numbers<[1], [0], [0], [1], [0, 0, 1, 1], [], []>} : vector<128x8xbf16>, vector<8x8xbf16>, vector<128x8xf32> -> vector<128x8xf32>
    %157 = arith.addf %150, %156 : vector<128x8xf32>
    %c0_153 = arith.constant 0 : index
    %c2_154 = arith.constant 2 : index
    %c2_155 = arith.constant 2 : index
    %c0_156 = arith.constant 0 : index
    %158 = vector.load %arg14[%c0_153, %c2_154, %c2_155, %c0_156] : memref<2x10x10x8xf32, #tpu.memory_space<vmem>>, vector<2x8x8x8xf32>
    %159 = vector.shape_cast %158 : vector<2x8x8x8xf32> to vector<128x8xf32>
    %160 = arith.truncf %159 : vector<128x8xf32> to vector<128x8xbf16>
    %161 = vector.extract_strided_slice %101 {offsets = [2, 2, 0, 0], sizes = [1, 1, 8, 8], strides = [1, 1, 1, 1]} : vector<3x3x8x8xbf16> to vector<1x1x8x8xbf16>
    %162 = vector.shape_cast %161 : vector<1x1x8x8xbf16> to vector<8x8xbf16>
    %cst_157 = arith.constant dense<0.000000e+00> : vector<128x8xf32>
    %163 = tpu.matmul %160, %162, %cst_157 {dimension_numbers = #tpu.dot_dimension_numbers<[1], [0], [0], [1], [0, 0, 1, 1], [], []>} : vector<128x8xbf16>, vector<8x8xbf16>, vector<128x8xf32> -> vector<128x8xf32>
    %164 = arith.addf %157, %163 : vector<128x8xf32>
    %c0_158 = arith.constant 0 : index
    %c0_159 = arith.constant 0 : index
    %165 = vector.load %arg6[%c0_158, %c0_159] : memref<4x8xbf16, #tpu.memory_space<vmem>>, vector<4x8xbf16>
    %cst_160 = arith.constant dense<0.000000e+00> : vector<128x8xf32>
    %166 = tpu.matmul %59, %165, %cst_160 {dimension_numbers = #tpu.dot_dimension_numbers<[1], [0], [0], [1], [0, 0, 1, 1], [], []>} : vector<128x4xbf16>, vector<4x8xbf16>, vector<128x8xf32> -> vector<128x8xf32>
    %167 = arith.addf %164, %166 : vector<128x8xf32>
    %168 = vector.shape_cast %167 : vector<128x8xf32> to vector<2x8x8x8xf32>
    %c0_161 = arith.constant 0 : index
    %c0_162 = arith.constant 0 : index
    %c0_163 = arith.constant 0 : index
    %c0_164 = arith.constant 0 : index
    %169 = vector.load %arg7[%c0_161, %c0_162, %c0_163, %c0_164] : memref<1x1x1x8xf32, #tpu.memory_space<vmem>>, vector<1x1x1x8xf32>
    %170 = vector.broadcast %169 : vector<1x1x1x8xf32> to vector<2x8x8x8xf32>
    %171 = arith.mulf %168, %170 : vector<2x8x8x8xf32>
    %c0_165 = arith.constant 0 : index
    %c0_166 = arith.constant 0 : index
    %c0_167 = arith.constant 0 : index
    %c0_168 = arith.constant 0 : index
    %172 = vector.load %arg8[%c0_165, %c0_166, %c0_167, %c0_168] : memref<1x1x1x8xf32, #tpu.memory_space<vmem>>, vector<1x1x1x8xf32>
    %173 = vector.broadcast %172 : vector<1x1x1x8xf32> to vector<2x8x8x8xf32>
    %174 = arith.addf %171, %173 : vector<2x8x8x8xf32>
    %cst_169 = arith.constant 0.000000e+00 : f32
    %175 = vector.broadcast %cst_169 : f32 to vector<2x8x8x8xf32>
    %176 = arith.cmpf oge, %174, %175 : vector<2x8x8x8xf32>
    %cst_170 = arith.constant 1.000000e-01 : f32
    %177 = vector.broadcast %cst_170 : f32 to vector<2x8x8x8xf32>
    %178 = arith.mulf %177, %174 : vector<2x8x8x8xf32>
    %179 = arith.select %176, %174, %178 : vector<2x8x8x8xi1>, vector<2x8x8x8xf32>
    %c0_171 = arith.constant 0 : index
    %c0_172 = arith.constant 0 : index
    %c0_173 = arith.constant 0 : index
    %c0_174 = arith.constant 0 : index
    %180 = vector.load %arg9[%c0_171, %c0_172, %c0_173, %c0_174] : memref<3x3x8x8xbf16, #tpu.memory_space<vmem>>, vector<3x3x8x8xbf16>
    %c0_175 = arith.constant 0 : index
    %c1_176 = arith.constant 1 : index
    %c1_177 = arith.constant 1 : index
    %c0_178 = arith.constant 0 : index
    %181 = vector.load %arg14[%c0_175, %c1_176, %c1_177, %c0_178] : memref<2x10x10x8xf32, #tpu.memory_space<vmem>>, vector<2x8x8x8xf32>
    tpu.vector_store %arg14[%c0_175, %c1_176, %c1_177, %c0_178], %179 {strides = array<i32>} : memref<2x10x10x8xf32, #tpu.memory_space<vmem>>, vector<2x8x8x8xf32>,
    %c0_179 = arith.constant 0 : index
    %c0_180 = arith.constant 0 : index
    %c0_181 = arith.constant 0 : index
    %c0_182 = arith.constant 0 : index
    %182 = vector.load %arg14[%c0_179, %c0_180, %c0_181, %c0_182] : memref<2x10x10x8xf32, #tpu.memory_space<vmem>>, vector<2x8x8x8xf32>
    %183 = vector.shape_cast %182 : vector<2x8x8x8xf32> to vector<128x8xf32>
    %184 = arith.truncf %183 : vector<128x8xf32> to vector<128x8xbf16>
    %185 = vector.extract_strided_slice %180 {offsets = [0, 0, 0, 0], sizes = [1, 1, 8, 8], strides = [1, 1, 1, 1]} : vector<3x3x8x8xbf16> to vector<1x1x8x8xbf16>
    %186 = vector.shape_cast %185 : vector<1x1x8x8xbf16> to vector<8x8xbf16>
    %cst_183 = arith.constant dense<0.000000e+00> : vector<128x8xf32>
    %187 = tpu.matmul %184, %186, %cst_183 {dimension_numbers = #tpu.dot_dimension_numbers<[1], [0], [0], [1], [0, 0, 1, 1], [], []>} : vector<128x8xbf16>, vector<8x8xbf16>, vector<128x8xf32> -> vector<128x8xf32>
    %c0_184 = arith.constant 0 : index
    %c0_185 = arith.constant 0 : index
    %c1_186 = arith.constant 1 : index
    %c0_187 = arith.constant 0 : index
    %188 = vector.load %arg14[%c0_184, %c0_185, %c1_186, %c0_187] : memref<2x10x10x8xf32, #tpu.memory_space<vmem>>, vector<2x8x8x8xf32>
    %189 = vector.shape_cast %188 : vector<2x8x8x8xf32> to vector<128x8xf32>
    %190 = arith.truncf %189 : vector<128x8xf32> to vector<128x8xbf16>
    %191 = vector.extract_strided_slice %180 {offsets = [0, 1, 0, 0], sizes = [1, 1, 8, 8], strides = [1, 1, 1, 1]} : vector<3x3x8x8xbf16> to vector<1x1x8x8xbf16>
    %192 = vector.shape_cast %191 : vector<1x1x8x8xbf16> to vector<8x8xbf16>
    %cst_188 = arith.constant dense<0.000000e+00> : vector<128x8xf32>
    %193 = tpu.matmul %190, %192, %cst_188 {dimension_numbers = #tpu.dot_dimension_numbers<[1], [0], [0], [1], [0, 0, 1, 1], [], []>} : vector<128x8xbf16>, vector<8x8xbf16>, vector<128x8xf32> -> vector<128x8xf32>
    %194 = arith.addf %187, %193 : vector<128x8xf32>
    %c0_189 = arith.constant 0 : index
    %c0_190 = arith.constant 0 : index
    %c2_191 = arith.constant 2 : index
    %c0_192 = arith.constant 0 : index
    %195 = vector.load %arg14[%c0_189, %c0_190, %c2_191, %c0_192] : memref<2x10x10x8xf32, #tpu.memory_space<vmem>>, vector<2x8x8x8xf32>
    %196 = vector.shape_cast %195 : vector<2x8x8x8xf32> to vector<128x8xf32>
    %197 = arith.truncf %196 : vector<128x8xf32> to vector<128x8xbf16>
    %198 = vector.extract_strided_slice %180 {offsets = [0, 2, 0, 0], sizes = [1, 1, 8, 8], strides = [1, 1, 1, 1]} : vector<3x3x8x8xbf16> to vector<1x1x8x8xbf16>
    %199 = vector.shape_cast %198 : vector<1x1x8x8xbf16> to vector<8x8xbf16>
    %cst_193 = arith.constant dense<0.000000e+00> : vector<128x8xf32>
    %200 = tpu.matmul %197, %199, %cst_193 {dimension_numbers = #tpu.dot_dimension_numbers<[1], [0], [0], [1], [0, 0, 1, 1], [], []>} : vector<128x8xbf16>, vector<8x8xbf16>, vector<128x8xf32> -> vector<128x8xf32>
    %201 = arith.addf %194, %200 : vector<128x8xf32>
    %c0_194 = arith.constant 0 : index
    %c1_195 = arith.constant 1 : index
    %c0_196 = arith.constant 0 : index
    %c0_197 = arith.constant 0 : index
    %202 = vector.load %arg14[%c0_194, %c1_195, %c0_196, %c0_197] : memref<2x10x10x8xf32, #tpu.memory_space<vmem>>, vector<2x8x8x8xf32>
    %203 = vector.shape_cast %202 : vector<2x8x8x8xf32> to vector<128x8xf32>
    %204 = arith.truncf %203 : vector<128x8xf32> to vector<128x8xbf16>
    %205 = vector.extract_strided_slice %180 {offsets = [1, 0, 0, 0], sizes = [1, 1, 8, 8], strides = [1, 1, 1, 1]} : vector<3x3x8x8xbf16> to vector<1x1x8x8xbf16>
    %206 = vector.shape_cast %205 : vector<1x1x8x8xbf16> to vector<8x8xbf16>
    %cst_198 = arith.constant dense<0.000000e+00> : vector<128x8xf32>
    %207 = tpu.matmul %204, %206, %cst_198 {dimension_numbers = #tpu.dot_dimension_numbers<[1], [0], [0], [1], [0, 0, 1, 1], [], []>} : vector<128x8xbf16>, vector<8x8xbf16>, vector<128x8xf32> -> vector<128x8xf32>
    %208 = arith.addf %201, %207 : vector<128x8xf32>
    %c0_199 = arith.constant 0 : index
    %c1_200 = arith.constant 1 : index
    %c1_201 = arith.constant 1 : index
    %c0_202 = arith.constant 0 : index
    %209 = vector.load %arg14[%c0_199, %c1_200, %c1_201, %c0_202] : memref<2x10x10x8xf32, #tpu.memory_space<vmem>>, vector<2x8x8x8xf32>
    %210 = vector.shape_cast %209 : vector<2x8x8x8xf32> to vector<128x8xf32>
    %211 = arith.truncf %210 : vector<128x8xf32> to vector<128x8xbf16>
    %212 = vector.extract_strided_slice %180 {offsets = [1, 1, 0, 0], sizes = [1, 1, 8, 8], strides = [1, 1, 1, 1]} : vector<3x3x8x8xbf16> to vector<1x1x8x8xbf16>
    %213 = vector.shape_cast %212 : vector<1x1x8x8xbf16> to vector<8x8xbf16>
    %cst_203 = arith.constant dense<0.000000e+00> : vector<128x8xf32>
    %214 = tpu.matmul %211, %213, %cst_203 {dimension_numbers = #tpu.dot_dimension_numbers<[1], [0], [0], [1], [0, 0, 1, 1], [], []>} : vector<128x8xbf16>, vector<8x8xbf16>, vector<128x8xf32> -> vector<128x8xf32>
    %215 = arith.addf %208, %214 : vector<128x8xf32>
    %c0_204 = arith.constant 0 : index
    %c1_205 = arith.constant 1 : index
    %c2_206 = arith.constant 2 : index
    %c0_207 = arith.constant 0 : index
    %216 = vector.load %arg14[%c0_204, %c1_205, %c2_206, %c0_207] : memref<2x10x10x8xf32, #tpu.memory_space<vmem>>, vector<2x8x8x8xf32>
    %217 = vector.shape_cast %216 : vector<2x8x8x8xf32> to vector<128x8xf32>
    %218 = arith.truncf %217 : vector<128x8xf32> to vector<128x8xbf16>
    %219 = vector.extract_strided_slice %180 {offsets = [1, 2, 0, 0], sizes = [1, 1, 8, 8], strides = [1, 1, 1, 1]} : vector<3x3x8x8xbf16> to vector<1x1x8x8xbf16>
    %220 = vector.shape_cast %219 : vector<1x1x8x8xbf16> to vector<8x8xbf16>
    %cst_208 = arith.constant dense<0.000000e+00> : vector<128x8xf32>
    %221 = tpu.matmul %218, %220, %cst_208 {dimension_numbers = #tpu.dot_dimension_numbers<[1], [0], [0], [1], [0, 0, 1, 1], [], []>} : vector<128x8xbf16>, vector<8x8xbf16>, vector<128x8xf32> -> vector<128x8xf32>
    %222 = arith.addf %215, %221 : vector<128x8xf32>
    %c0_209 = arith.constant 0 : index
    %c2_210 = arith.constant 2 : index
    %c0_211 = arith.constant 0 : index
    %c0_212 = arith.constant 0 : index
    %223 = vector.load %arg14[%c0_209, %c2_210, %c0_211, %c0_212] : memref<2x10x10x8xf32, #tpu.memory_space<vmem>>, vector<2x8x8x8xf32>
    %224 = vector.shape_cast %223 : vector<2x8x8x8xf32> to vector<128x8xf32>
    %225 = arith.truncf %224 : vector<128x8xf32> to vector<128x8xbf16>
    %226 = vector.extract_strided_slice %180 {offsets = [2, 0, 0, 0], sizes = [1, 1, 8, 8], strides = [1, 1, 1, 1]} : vector<3x3x8x8xbf16> to vector<1x1x8x8xbf16>
    %227 = vector.shape_cast %226 : vector<1x1x8x8xbf16> to vector<8x8xbf16>
    %cst_213 = arith.constant dense<0.000000e+00> : vector<128x8xf32>
    %228 = tpu.matmul %225, %227, %cst_213 {dimension_numbers = #tpu.dot_dimension_numbers<[1], [0], [0], [1], [0, 0, 1, 1], [], []>} : vector<128x8xbf16>, vector<8x8xbf16>, vector<128x8xf32> -> vector<128x8xf32>
    %229 = arith.addf %222, %228 : vector<128x8xf32>
    %c0_214 = arith.constant 0 : index
    %c2_215 = arith.constant 2 : index
    %c1_216 = arith.constant 1 : index
    %c0_217 = arith.constant 0 : index
    %230 = vector.load %arg14[%c0_214, %c2_215, %c1_216, %c0_217] : memref<2x10x10x8xf32, #tpu.memory_space<vmem>>, vector<2x8x8x8xf32>
    %231 = vector.shape_cast %230 : vector<2x8x8x8xf32> to vector<128x8xf32>
    %232 = arith.truncf %231 : vector<128x8xf32> to vector<128x8xbf16>
    %233 = vector.extract_strided_slice %180 {offsets = [2, 1, 0, 0], sizes = [1, 1, 8, 8], strides = [1, 1, 1, 1]} : vector<3x3x8x8xbf16> to vector<1x1x8x8xbf16>
    %234 = vector.shape_cast %233 : vector<1x1x8x8xbf16> to vector<8x8xbf16>
    %cst_218 = arith.constant dense<0.000000e+00> : vector<128x8xf32>
    %235 = tpu.matmul %232, %234, %cst_218 {dimension_numbers = #tpu.dot_dimension_numbers<[1], [0], [0], [1], [0, 0, 1, 1], [], []>} : vector<128x8xbf16>, vector<8x8xbf16>, vector<128x8xf32> -> vector<128x8xf32>
    %236 = arith.addf %229, %235 : vector<128x8xf32>
    %c0_219 = arith.constant 0 : index
    %c2_220 = arith.constant 2 : index
    %c2_221 = arith.constant 2 : index
    %c0_222 = arith.constant 0 : index
    %237 = vector.load %arg14[%c0_219, %c2_220, %c2_221, %c0_222] : memref<2x10x10x8xf32, #tpu.memory_space<vmem>>, vector<2x8x8x8xf32>
    %238 = vector.shape_cast %237 : vector<2x8x8x8xf32> to vector<128x8xf32>
    %239 = arith.truncf %238 : vector<128x8xf32> to vector<128x8xbf16>
    %240 = vector.extract_strided_slice %180 {offsets = [2, 2, 0, 0], sizes = [1, 1, 8, 8], strides = [1, 1, 1, 1]} : vector<3x3x8x8xbf16> to vector<1x1x8x8xbf16>
    %241 = vector.shape_cast %240 : vector<1x1x8x8xbf16> to vector<8x8xbf16>
    %cst_223 = arith.constant dense<0.000000e+00> : vector<128x8xf32>
    %242 = tpu.matmul %239, %241, %cst_223 {dimension_numbers = #tpu.dot_dimension_numbers<[1], [0], [0], [1], [0, 0, 1, 1], [], []>} : vector<128x8xbf16>, vector<8x8xbf16>, vector<128x8xf32> -> vector<128x8xf32>
    %243 = arith.addf %236, %242 : vector<128x8xf32>
    %c0_224 = arith.constant 0 : index
    %c0_225 = arith.constant 0 : index
    %244 = vector.load %arg10[%c0_224, %c0_225] : memref<1x8xf32, #tpu.memory_space<vmem>>, vector<1x8xf32>
    %245 = vector.broadcast %244 : vector<1x8xf32> to vector<128x8xf32>
    %246 = arith.addf %243, %245 : vector<128x8xf32>
    %cst_226 = arith.constant 0.000000e+00 : f32
    %247 = vector.broadcast %cst_226 : f32 to vector<128x8xf32>
    %248 = arith.cmpf oge, %246, %247 : vector<128x8xf32>
    %cst_227 = arith.constant 1.000000e-01 : f32
    %249 = vector.broadcast %cst_227 : f32 to vector<128x8xf32>
    %250 = arith.mulf %249, %246 : vector<128x8xf32>
    %251 = arith.select %248, %246, %250 : vector<128x8xi1>, vector<128x8xf32>
    %252 = vector.shape_cast %251 : vector<128x8xf32> to vector<2x8x8x8xf32>
    %c0_228 = arith.constant 0 : index
    %c0_229 = arith.constant 0 : index
    %c0_230 = arith.constant 0 : index
    %c0_231 = arith.constant 0 : index
    %253 = vector.load %arg11[%c0_228, %c0_229, %c0_230, %c0_231] : memref<3x3x8x8xbf16, #tpu.memory_space<vmem>>, vector<3x3x8x8xbf16>
    %c0_232 = arith.constant 0 : index
    %c1_233 = arith.constant 1 : index
    %c1_234 = arith.constant 1 : index
    %c0_235 = arith.constant 0 : index
    %254 = vector.load %arg14[%c0_232, %c1_233, %c1_234, %c0_235] : memref<2x10x10x8xf32, #tpu.memory_space<vmem>>, vector<2x8x8x8xf32>
    tpu.vector_store %arg14[%c0_232, %c1_233, %c1_234, %c0_235], %252 {strides = array<i32>} : memref<2x10x10x8xf32, #tpu.memory_space<vmem>>, vector<2x8x8x8xf32>,
    %c0_236 = arith.constant 0 : index
    %c0_237 = arith.constant 0 : index
    %c0_238 = arith.constant 0 : index
    %c0_239 = arith.constant 0 : index
    %255 = vector.load %arg14[%c0_236, %c0_237, %c0_238, %c0_239] : memref<2x10x10x8xf32, #tpu.memory_space<vmem>>, vector<2x8x8x8xf32>
    %256 = vector.shape_cast %255 : vector<2x8x8x8xf32> to vector<128x8xf32>
    %257 = arith.truncf %256 : vector<128x8xf32> to vector<128x8xbf16>
    %258 = vector.extract_strided_slice %253 {offsets = [0, 0, 0, 0], sizes = [1, 1, 8, 8], strides = [1, 1, 1, 1]} : vector<3x3x8x8xbf16> to vector<1x1x8x8xbf16>
    %259 = vector.shape_cast %258 : vector<1x1x8x8xbf16> to vector<8x8xbf16>
    %cst_240 = arith.constant dense<0.000000e+00> : vector<128x8xf32>
    %260 = tpu.matmul %257, %259, %cst_240 {dimension_numbers = #tpu.dot_dimension_numbers<[1], [0], [0], [1], [0, 0, 1, 1], [], []>} : vector<128x8xbf16>, vector<8x8xbf16>, vector<128x8xf32> -> vector<128x8xf32>
    %c0_241 = arith.constant 0 : index
    %c0_242 = arith.constant 0 : index
    %c1_243 = arith.constant 1 : index
    %c0_244 = arith.constant 0 : index
    %261 = vector.load %arg14[%c0_241, %c0_242, %c1_243, %c0_244] : memref<2x10x10x8xf32, #tpu.memory_space<vmem>>, vector<2x8x8x8xf32>
    %262 = vector.shape_cast %261 : vector<2x8x8x8xf32> to vector<128x8xf32>
    %263 = arith.truncf %262 : vector<128x8xf32> to vector<128x8xbf16>
    %264 = vector.extract_strided_slice %253 {offsets = [0, 1, 0, 0], sizes = [1, 1, 8, 8], strides = [1, 1, 1, 1]} : vector<3x3x8x8xbf16> to vector<1x1x8x8xbf16>
    %265 = vector.shape_cast %264 : vector<1x1x8x8xbf16> to vector<8x8xbf16>
    %cst_245 = arith.constant dense<0.000000e+00> : vector<128x8xf32>
    %266 = tpu.matmul %263, %265, %cst_245 {dimension_numbers = #tpu.dot_dimension_numbers<[1], [0], [0], [1], [0, 0, 1, 1], [], []>} : vector<128x8xbf16>, vector<8x8xbf16>, vector<128x8xf32> -> vector<128x8xf32>
    %267 = arith.addf %260, %266 : vector<128x8xf32>
    %c0_246 = arith.constant 0 : index
    %c0_247 = arith.constant 0 : index
    %c2_248 = arith.constant 2 : index
    %c0_249 = arith.constant 0 : index
    %268 = vector.load %arg14[%c0_246, %c0_247, %c2_248, %c0_249] : memref<2x10x10x8xf32, #tpu.memory_space<vmem>>, vector<2x8x8x8xf32>
    %269 = vector.shape_cast %268 : vector<2x8x8x8xf32> to vector<128x8xf32>
    %270 = arith.truncf %269 : vector<128x8xf32> to vector<128x8xbf16>
    %271 = vector.extract_strided_slice %253 {offsets = [0, 2, 0, 0], sizes = [1, 1, 8, 8], strides = [1, 1, 1, 1]} : vector<3x3x8x8xbf16> to vector<1x1x8x8xbf16>
    %272 = vector.shape_cast %271 : vector<1x1x8x8xbf16> to vector<8x8xbf16>
    %cst_250 = arith.constant dense<0.000000e+00> : vector<128x8xf32>
    %273 = tpu.matmul %270, %272, %cst_250 {dimension_numbers = #tpu.dot_dimension_numbers<[1], [0], [0], [1], [0, 0, 1, 1], [], []>} : vector<128x8xbf16>, vector<8x8xbf16>, vector<128x8xf32> -> vector<128x8xf32>
    %274 = arith.addf %267, %273 : vector<128x8xf32>
    %c0_251 = arith.constant 0 : index
    %c1_252 = arith.constant 1 : index
    %c0_253 = arith.constant 0 : index
    %c0_254 = arith.constant 0 : index
    %275 = vector.load %arg14[%c0_251, %c1_252, %c0_253, %c0_254] : memref<2x10x10x8xf32, #tpu.memory_space<vmem>>, vector<2x8x8x8xf32>
    %276 = vector.shape_cast %275 : vector<2x8x8x8xf32> to vector<128x8xf32>
    %277 = arith.truncf %276 : vector<128x8xf32> to vector<128x8xbf16>
    %278 = vector.extract_strided_slice %253 {offsets = [1, 0, 0, 0], sizes = [1, 1, 8, 8], strides = [1, 1, 1, 1]} : vector<3x3x8x8xbf16> to vector<1x1x8x8xbf16>
    %279 = vector.shape_cast %278 : vector<1x1x8x8xbf16> to vector<8x8xbf16>
    %cst_255 = arith.constant dense<0.000000e+00> : vector<128x8xf32>
    %280 = tpu.matmul %277, %279, %cst_255 {dimension_numbers = #tpu.dot_dimension_numbers<[1], [0], [0], [1], [0, 0, 1, 1], [], []>} : vector<128x8xbf16>, vector<8x8xbf16>, vector<128x8xf32> -> vector<128x8xf32>
    %281 = arith.addf %274, %280 : vector<128x8xf32>
    %c0_256 = arith.constant 0 : index
    %c1_257 = arith.constant 1 : index
    %c1_258 = arith.constant 1 : index
    %c0_259 = arith.constant 0 : index
    %282 = vector.load %arg14[%c0_256, %c1_257, %c1_258, %c0_259] : memref<2x10x10x8xf32, #tpu.memory_space<vmem>>, vector<2x8x8x8xf32>
    %283 = vector.shape_cast %282 : vector<2x8x8x8xf32> to vector<128x8xf32>
    %284 = arith.truncf %283 : vector<128x8xf32> to vector<128x8xbf16>
    %285 = vector.extract_strided_slice %253 {offsets = [1, 1, 0, 0], sizes = [1, 1, 8, 8], strides = [1, 1, 1, 1]} : vector<3x3x8x8xbf16> to vector<1x1x8x8xbf16>
    %286 = vector.shape_cast %285 : vector<1x1x8x8xbf16> to vector<8x8xbf16>
    %cst_260 = arith.constant dense<0.000000e+00> : vector<128x8xf32>
    %287 = tpu.matmul %284, %286, %cst_260 {dimension_numbers = #tpu.dot_dimension_numbers<[1], [0], [0], [1], [0, 0, 1, 1], [], []>} : vector<128x8xbf16>, vector<8x8xbf16>, vector<128x8xf32> -> vector<128x8xf32>
    %288 = arith.addf %281, %287 : vector<128x8xf32>
    %c0_261 = arith.constant 0 : index
    %c1_262 = arith.constant 1 : index
    %c2_263 = arith.constant 2 : index
    %c0_264 = arith.constant 0 : index
    %289 = vector.load %arg14[%c0_261, %c1_262, %c2_263, %c0_264] : memref<2x10x10x8xf32, #tpu.memory_space<vmem>>, vector<2x8x8x8xf32>
    %290 = vector.shape_cast %289 : vector<2x8x8x8xf32> to vector<128x8xf32>
    %291 = arith.truncf %290 : vector<128x8xf32> to vector<128x8xbf16>
    %292 = vector.extract_strided_slice %253 {offsets = [1, 2, 0, 0], sizes = [1, 1, 8, 8], strides = [1, 1, 1, 1]} : vector<3x3x8x8xbf16> to vector<1x1x8x8xbf16>
    %293 = vector.shape_cast %292 : vector<1x1x8x8xbf16> to vector<8x8xbf16>
    %cst_265 = arith.constant dense<0.000000e+00> : vector<128x8xf32>
    %294 = tpu.matmul %291, %293, %cst_265 {dimension_numbers = #tpu.dot_dimension_numbers<[1], [0], [0], [1], [0, 0, 1, 1], [], []>} : vector<128x8xbf16>, vector<8x8xbf16>, vector<128x8xf32> -> vector<128x8xf32>
    %295 = arith.addf %288, %294 : vector<128x8xf32>
    %c0_266 = arith.constant 0 : index
    %c2_267 = arith.constant 2 : index
    %c0_268 = arith.constant 0 : index
    %c0_269 = arith.constant 0 : index
    %296 = vector.load %arg14[%c0_266, %c2_267, %c0_268, %c0_269] : memref<2x10x10x8xf32, #tpu.memory_space<vmem>>, vector<2x8x8x8xf32>
    %297 = vector.shape_cast %296 : vector<2x8x8x8xf32> to vector<128x8xf32>
    %298 = arith.truncf %297 : vector<128x8xf32> to vector<128x8xbf16>
    %299 = vector.extract_strided_slice %253 {offsets = [2, 0, 0, 0], sizes = [1, 1, 8, 8], strides = [1, 1, 1, 1]} : vector<3x3x8x8xbf16> to vector<1x1x8x8xbf16>
    %300 = vector.shape_cast %299 : vector<1x1x8x8xbf16> to vector<8x8xbf16>
    %cst_270 = arith.constant dense<0.000000e+00> : vector<128x8xf32>
    %301 = tpu.matmul %298, %300, %cst_270 {dimension_numbers = #tpu.dot_dimension_numbers<[1], [0], [0], [1], [0, 0, 1, 1], [], []>} : vector<128x8xbf16>, vector<8x8xbf16>, vector<128x8xf32> -> vector<128x8xf32>
    %302 = arith.addf %295, %301 : vector<128x8xf32>
    %c0_271 = arith.constant 0 : index
    %c2_272 = arith.constant 2 : index
    %c1_273 = arith.constant 1 : index
    %c0_274 = arith.constant 0 : index
    %303 = vector.load %arg14[%c0_271, %c2_272, %c1_273, %c0_274] : memref<2x10x10x8xf32, #tpu.memory_space<vmem>>, vector<2x8x8x8xf32>
    %304 = vector.shape_cast %303 : vector<2x8x8x8xf32> to vector<128x8xf32>
    %305 = arith.truncf %304 : vector<128x8xf32> to vector<128x8xbf16>
    %306 = vector.extract_strided_slice %253 {offsets = [2, 1, 0, 0], sizes = [1, 1, 8, 8], strides = [1, 1, 1, 1]} : vector<3x3x8x8xbf16> to vector<1x1x8x8xbf16>
    %307 = vector.shape_cast %306 : vector<1x1x8x8xbf16> to vector<8x8xbf16>
    %cst_275 = arith.constant dense<0.000000e+00> : vector<128x8xf32>
    %308 = tpu.matmul %305, %307, %cst_275 {dimension_numbers = #tpu.dot_dimension_numbers<[1], [0], [0], [1], [0, 0, 1, 1], [], []>} : vector<128x8xbf16>, vector<8x8xbf16>, vector<128x8xf32> -> vector<128x8xf32>
    %309 = arith.addf %302, %308 : vector<128x8xf32>
    %c0_276 = arith.constant 0 : index
    %c2_277 = arith.constant 2 : index
    %c2_278 = arith.constant 2 : index
    %c0_279 = arith.constant 0 : index
    %310 = vector.load %arg14[%c0_276, %c2_277, %c2_278, %c0_279] : memref<2x10x10x8xf32, #tpu.memory_space<vmem>>, vector<2x8x8x8xf32>
    %311 = vector.shape_cast %310 : vector<2x8x8x8xf32> to vector<128x8xf32>
    %312 = arith.truncf %311 : vector<128x8xf32> to vector<128x8xbf16>
    %313 = vector.extract_strided_slice %253 {offsets = [2, 2, 0, 0], sizes = [1, 1, 8, 8], strides = [1, 1, 1, 1]} : vector<3x3x8x8xbf16> to vector<1x1x8x8xbf16>
    %314 = vector.shape_cast %313 : vector<1x1x8x8xbf16> to vector<8x8xbf16>
    %cst_280 = arith.constant dense<0.000000e+00> : vector<128x8xf32>
    %315 = tpu.matmul %312, %314, %cst_280 {dimension_numbers = #tpu.dot_dimension_numbers<[1], [0], [0], [1], [0, 0, 1, 1], [], []>} : vector<128x8xbf16>, vector<8x8xbf16>, vector<128x8xf32> -> vector<128x8xf32>
    %316 = arith.addf %309, %315 : vector<128x8xf32>
    %317 = vector.shape_cast %168 : vector<2x8x8x8xf32> to vector<128x8xf32>
    %318 = arith.addf %316, %317 : vector<128x8xf32>
    %319 = vector.shape_cast %318 : vector<128x8xf32> to vector<2x8x8x8xf32>
    %c0_281 = arith.constant 0 : index
    %c0_282 = arith.constant 0 : index
    %c0_283 = arith.constant 0 : index
    %c0_284 = arith.constant 0 : index
    %320 = vector.load %arg12[%c0_281, %c0_282, %c0_283, %c0_284] : memref<2x8x8x8xf32, #tpu.memory_space<vmem>>, vector<2x8x8x8xf32>
    tpu.vector_store %arg12[%c0_281, %c0_282, %c0_283, %c0_284], %319 {strides = array<i32>} : memref<2x8x8x8xf32, #tpu.memory_space<vmem>>, vector<2x8x8x8xf32>,
    return
  }
}

</mosaic_0001>

<llo_original>
// kernel: network_block_forward.1
$region0: #{network_block_forward.1}
  #allocation0 [shape = 'u32[]', space=smem, size = 0x4, offset = 0x4, fixed_abs, tag = 'smem constant byte address 0x4 - core index']
  #allocation1 [shape = 'u32[144,128]{1,0:T(1,128)}', space=vmem, size = 0x12000, scoped, tag = 'internal scratch']
  #allocation2 [shape = 'f32[2,18,18,4]{3,2,1,0:T(8,128)}', space=vmem, size = 0x6c000, scoped, tag = 'scratch operand']
  #allocation3 [shape = 'f32[2,10,10,8]{3,2,1,0:T(8,128)}', space=vmem, size = 0x28000, scoped, tag = 'scratch operand']
  %s0 = inlined_call_operand.vmem [shape: f32[2,16,16,4], index: 0, kind: input, shape index: {}]
  %s1 = inlined_call_operand.vmem [shape: f32[1,1,1,4], index: 1, kind: input, shape index: {}]
  %s2 = inlined_call_operand.vmem [shape: f32[1,1,1,4], index: 2, kind: input, shape index: {}]
  %s3 = inlined_call_operand.vmem [shape: bf16[3,3,4,8], index: 3, kind: input, shape index: {}]
  %s4 = inlined_call_operand.vmem [shape: f32[1,8], index: 4, kind: input, shape index: {}]
  %s5 = inlined_call_operand.vmem [shape: bf16[3,3,8,8], index: 5, kind: input, shape index: {}]
  %s6 = inlined_call_operand.vmem [shape: bf16[4,8], index: 6, kind: input, shape index: {}]
  %s7 = inlined_call_operand.vmem [shape: f32[1,1,1,8], index: 7, kind: input, shape index: {}]
  %s8 = inlined_call_operand.vmem [shape: f32[1,1,1,8], index: 8, kind: input, shape index: {}]
  %s9 = inlined_call_operand.vmem [shape: bf16[3,3,8,8], index: 9, kind: input, shape index: {}]
  %s10 = inlined_call_operand.vmem [shape: f32[1,8], index: 10, kind: input, shape index: {}]
  %s11 = inlined_call_operand.vmem [shape: bf16[3,3,8,8], index: 11, kind: input, shape index: {}]
  %s12 = inlined_call_operand.hbm [shape: f32[2,8,8,8], index: 12, kind: output, shape index: {}]
  %s13 = sld [smem:[#allocation0]]
  $region58: #{network_block_forward.1} parent=0
    _
  %s15 = ssub.s32 1, %s13
  %s16 = scalar_select 0, %s15, %s13
  $region1: #{network_block_forward.1} parent=0
    #allocation4 [shape = 'u8[65536]{0}', space=vmem, size = 0x10000, scoped, tag = 'output window, operand 0, single buffered']
    #allocation5 [shape = 's32[1]{0}', space=sflag, size = 0x4, scoped, tag = 'scoped memory for network_block_forward.1']
    %17 = vsyncpa [#allocation5], 0
    // Predicated region
    $region2: #{network_block_forward.1} parent=1 // pred_check
      _
    $region3: #{network_block_forward.1} parent=1 // pred_check_branch
      %19 = sbr.rel (0) target = $region5
    $region4: #{network_block_forward.1} parent=1 // pred_region
      _
    $region5: #{network_block_forward.1} parent=1 // pred_fallthru
      _
    // Predicated region
    $region6: #{network_block_forward.1} parent=1 // pred_check
      _
    $region7: #{network_block_forward.1} parent=1 // pred_check_branch
      %21 = sbr.rel (0) target = $region9
    $region8: #{network_block_forward.1} parent=1 // pred_region
      _
    $region9: #{network_block_forward.1} parent=1 // pred_fallthru
      _
    // Predicated region
    $region10: #{network_block_forward.1} parent=1 // pred_check
      _
    $region11: #{network_block_forward.1} parent=1 // pred_check_branch
      %23 = sbr.rel (0) target = $region13
    $region12: #{network_block_forward.1} parent=1 // pred_region
      _
    $region13: #{network_block_forward.1} parent=1 // pred_fallthru
      _
    // Predicated region
    $region14: #{network_block_forward.1} parent=1 // pred_check
      _
    $region15: #{network_block_forward.1} parent=1 // pred_check_branch
      %25 = sbr.rel (0) target = $region17
    $region16: #{network_block_forward.1} parent=1 // pred_region
      _
    $region17: #{network_block_forward.1} parent=1 // pred_fallthru
      _
    // Predicated region
    $region18: #{network_block_forward.1} parent=1 // pred_check
      _
    $region19: #{network_block_forward.1} parent=1 // pred_check_branch
      %27 = sbr.rel (0) target = $region21
    $region20: #{network_block_forward.1} parent=1 // pred_region
      _
    $region21: #{network_block_forward.1} parent=1 // pred_fallthru
      _
    // Predicated region
    $region22: #{network_block_forward.1} parent=1 // pred_check
      _
    $region23: #{network_block_forward.1} parent=1 // pred_check_branch
      %29 = sbr.rel (0) target = $region25
    $region24: #{network_block_forward.1} parent=1 // pred_region
      _
    $region25: #{network_block_forward.1} parent=1 // pred_fallthru
      _
    // Predicated region
    $region26: #{network_block_forward.1} parent=1 // pred_check
      _
    $region27: #{network_block_forward.1} parent=1 // pred_check_branch
      %31 = sbr.rel (0) target = $region29
    $region28: #{network_block_forward.1} parent=1 // pred_region
      _
    $region29: #{network_block_forward.1} parent=1 // pred_fallthru
      _
    // Predicated region
    $region30: #{network_block_forward.1} parent=1 // pred_check
      _
    $region31: #{network_block_forward.1} parent=1 // pred_check_branch
      %33 = sbr.rel (0) target = $region33
    $region32: #{network_block_forward.1} parent=1 // pred_region
      _
    $region33: #{network_block_forward.1} parent=1 // pred_fallthru
      _
    // Predicated region
    $region34: #{network_block_forward.1} parent=1 // pred_check
      _
    $region35: #{network_block_forward.1} parent=1 // pred_check_branch
      %35 = sbr.rel (0) target = $region37
    $region36: #{network_block_forward.1} parent=1 // pred_region
      _
    $region37: #{network_block_forward.1} parent=1 // pred_fallthru
      _
    // Predicated region
    $region38: #{network_block_forward.1} parent=1 // pred_check
      _
    $region39: #{network_block_forward.1} parent=1 // pred_check_branch
      %37 = sbr.rel (0) target = $region41
    $region40: #{network_block_forward.1} parent=1 // pred_region
      _
    $region41: #{network_block_forward.1} parent=1 // pred_fallthru
      _
    // Predicated region
    $region42: #{network_block_forward.1} parent=1 // pred_check
      _
    $region43: #{network_block_forward.1} parent=1 // pred_check_branch
      %39 = sbr.rel (0) target = $region45
    $region44: #{network_block_forward.1} parent=1 // pred_region
      _
    $region45: #{network_block_forward.1} parent=1 // pred_fallthru
      _
    // Predicated region
    $region46: #{network_block_forward.1} parent=1 // pred_check
      _
    $region47: #{network_block_forward.1} parent=1 // pred_check_branch
      %41 = sbr.rel (0) target = $region49
    $region48: #{network_block_forward.1} parent=1 // pred_region
      _
    $region49: #{network_block_forward.1} parent=1 // pred_fallthru
      _
    %vm43 = vcmask 31744
    %44 = vst.msk [vmem:[#allocation2] sm:$0xff] %vm43, 0.0
    %45 = vst.msk [vmem:[#allocation2 + $0x8] sm:$0xff] %vm43, 0.0
    %vm46 = vcmask 25600
    %47 = vst.msk [vmem:[#allocation2 + $0x10] sm:$0x3] %vm46, 0.0
    %48 = vst.msk [vmem:[#allocation2 + $0x1b0] sm:$0xff] %vm43, 0.0
    %49 = vst.msk [vmem:[#allocation2 + $0x1b8] sm:$0xff] %vm43, 0.0
    %50 = vst.msk [vmem:[#allocation2 + $0x1c0] sm:$0x3] %vm46, 0.0
    %s51 = scalar_lea.vmem [#allocation2], 408
    %52 = vst.msk [vmem:[%s51] sm:$0xff] %vm43, 0.0
    %53 = vst.msk [vmem:[%s51 + $0x8] sm:$0xff] %vm43, 0.0
    %54 = vst.msk [vmem:[%s51 + $0x10] sm:$0x3] %vm46, 0.0
    %55 = vst.msk [vmem:[%s51 + $0x1b0] sm:$0xff] %vm43, 0.0
    %56 = vst.msk [vmem:[%s51 + $0x1b8] sm:$0xff] %vm43, 0.0
    %57 = vst.msk [vmem:[%s51 + $0x1c0] sm:$0x3] %vm46, 0.0
    %vm58 = vcmask 24576
    %59 = vst.msk [vmem:[#allocation2] sm:$0x1] %vm58, 0.0
    %60 = vst.msk [vmem:[#allocation2 + $0x18] sm:$0x1] %vm58, 0.0
    %61 = vst.msk [vmem:[#allocation2 + $0x30] sm:$0x1] %vm58, 0.0
    %62 = vst.msk [vmem:[#allocation2 + $0x48] sm:$0x1] %vm58, 0.0
    %63 = vst.msk [vmem:[#allocation2 + $0x60] sm:$0x1] %vm58, 0.0
    %64 = vst.msk [vmem:[#allocation2 + $0x78] sm:$0x1] %vm58, 0.0
    %65 = vst.msk [vmem:[#allocation2 + $0x90] sm:$0x1] %vm58, 0.0
    %66 = vst.msk [vmem:[#allocation2 + $0xa8] sm:$0x1] %vm58, 0.0
    %67 = vst.msk [vmem:[#allocation2 + $0xc0] sm:$0x1] %vm58, 0.0
    %68 = vst.msk [vmem:[#allocation2 + $0xd8] sm:$0x1] %vm58, 0.0
    %69 = vst.msk [vmem:[#allocation2 + $0xf0] sm:$0x1] %vm58, 0.0
    %70 = vst.msk [vmem:[#allocation2 + $0x108] sm:$0x1] %vm58, 0.0
    %71 = vst.msk [vmem:[#allocation2 + $0x120] sm:$0x1] %vm58, 0.0
    %72 = vst.msk [vmem:[#allocation2 + $0x138] sm:$0x1] %vm58, 0.0
    %73 = vst.msk [vmem:[#allocation2 + $0x150] sm:$0x1] %vm58, 0.0
    %74 = vst.msk [vmem:[#allocation2 + $0x168] sm:$0x1] %vm58, 0.0
    %75 = vst.msk [vmem:[#allocation2 + $0x180] sm:$0x1] %vm58, 0.0
    %76 = vst.msk [vmem:[#allocation2 + $0x198] sm:$0x1] %vm58, 0.0
    %77 = vst.msk [vmem:[#allocation2 + $0x1b0] sm:$0x1] %vm58, 0.0
    %78 = vst.msk [vmem:[#allocation2 + $0x1c8] sm:$0x1] %vm58, 0.0
    %79 = vst.msk [vmem:[#allocation2 + $0x1e0] sm:$0x1] %vm58, 0.0
    %80 = vst.msk [vmem:[#allocation2 + $0x1f8] sm:$0x1] %vm58, 0.0
    %81 = vst.msk [vmem:[#allocation2 + $0x210] sm:$0x1] %vm58, 0.0
    %82 = vst.msk [vmem:[#allocation2 + $0x228] sm:$0x1] %vm58, 0.0
    %83 = vst.msk [vmem:[#allocation2 + $0x240] sm:$0x1] %vm58, 0.0
    %84 = vst.msk [vmem:[#allocation2 + $0x258] sm:$0x1] %vm58, 0.0
    %85 = vst.msk [vmem:[#allocation2 + $0x270] sm:$0x1] %vm58, 0.0
    %86 = vst.msk [vmem:[#allocation2 + $0x288] sm:$0x1] %vm58, 0.0
    %87 = vst.msk [vmem:[#allocation2 + $0x2a0] sm:$0x1] %vm58, 0.0
    %88 = vst.msk [vmem:[#allocation2 + $0x2b8] sm:$0x1] %vm58, 0.0
    %89 = vst.msk [vmem:[#allocation2 + $0x2d0] sm:$0x1] %vm58, 0.0
    %90 = vst.msk [vmem:[#allocation2 + $0x2e8] sm:$0x1] %vm58, 0.0
    %91 = vst.msk [vmem:[#allocation2 + $0x300] sm:$0x1] %vm58, 0.0
    %92 = vst.msk [vmem:[#allocation2 + $0x318] sm:$0x1] %vm58, 0.0
    %93 = vst.msk [vmem:[#allocation2 + $0x330] sm:$0x1] %vm58, 0.0
    %94 = vst.msk [vmem:[#allocation2 + $0x348] sm:$0x1] %vm58, 0.0
    %95 = vst.msk [vmem:[#allocation2 + $0x11] sm:$0x1] %vm58, 0.0
    %96 = vst.msk [vmem:[#allocation2 + $0x29] sm:$0x1] %vm58, 0.0
    %97 = vst.msk [vmem:[#allocation2 + $0x41] sm:$0x1] %vm58, 0.0
    %98 = vst.msk [vmem:[#allocation2 + $0x59] sm:$0x1] %vm58, 0.0
    %99 = vst.msk [vmem:[#allocation2 + $0x71] sm:$0x1] %vm58, 0.0
    %100 = vst.msk [vmem:[#allocation2 + $0x89] sm:$0x1] %vm58, 0.0
    %101 = vst.msk [vmem:[#allocation2 + $0xa1] sm:$0x1] %vm58, 0.0
    %102 = vst.msk [vmem:[#allocation2 + $0xb9] sm:$0x1] %vm58, 0.0
    %103 = vst.msk [vmem:[#allocation2 + $0xd1] sm:$0x1] %vm58, 0.0
    %104 = vst.msk [vmem:[#allocation2 + $0xe9] sm:$0x1] %vm58, 0.0
    %105 = vst.msk [vmem:[#allocation2 + $0x101] sm:$0x1] %vm58, 0.0
    %106 = vst.msk [vmem:[#allocation2 + $0x119] sm:$0x1] %vm58, 0.0
    %107 = vst.msk [vmem:[#allocation2 + $0x131] sm:$0x1] %vm58, 0.0
    %108 = vst.msk [vmem:[#allocation2 + $0x149] sm:$0x1] %vm58, 0.0
    %109 = vst.msk [vmem:[#allocation2 + $0x161] sm:$0x1] %vm58, 0.0
    %110 = vst.msk [vmem:[#allocation2 + $0x179] sm:$0x1] %vm58, 0.0
    %111 = vst.msk [vmem:[#allocation2 + $0x191] sm:$0x1] %vm58, 0.0
    %112 = vst.msk [vmem:[#allocation2 + $0x1a9] sm:$0x1] %vm58, 0.0
    %113 = vst.msk [vmem:[#allocation2 + $0x1c1] sm:$0x1] %vm58, 0.0
    %114 = vst.msk [vmem:[#allocation2 + $0x1d9] sm:$0x1] %vm58, 0.0
    %115 = vst.msk [vmem:[#allocation2 + $0x1f1] sm:$0x1] %vm58, 0.0
    %116 = vst.msk [vmem:[#allocation2 + $0x209] sm:$0x1] %vm58, 0.0
    %117 = vst.msk [vmem:[#allocation2 + $0x221] sm:$0x1] %vm58, 0.0
    %118 = vst.msk [vmem:[#allocation2 + $0x239] sm:$0x1] %vm58, 0.0
    %119 = vst.msk [vmem:[#allocation2 + $0x251] sm:$0x1] %vm58, 0.0
    %120 = vst.msk [vmem:[#allocation2 + $0x269] sm:$0x1] %vm58, 0.0
    %121 = vst.msk [vmem:[#allocation2 + $0x281] sm:$0x1] %vm58, 0.0
    %122 = vst.msk [vmem:[#allocation2 + $0x299] sm:$0x1] %vm58, 0.0
    %123 = vst.msk [vmem:[#allocation2 + $0x2b1] sm:$0x1] %vm58, 0.0
    %124 = vst.msk [vmem:[#allocation2 + $0x2c9] sm:$0x1] %vm58, 0.0
    %125 = vst.msk [vmem:[#allocation2 + $0x2e1] sm:$0x1] %vm58, 0.0
    %126 = vst.msk [vmem:[#allocation2 + $0x2f9] sm:$0x1] %vm58, 0.0
    %127 = vst.msk [vmem:[#allocation2 + $0x311] sm:$0x1] %vm58, 0.0
    %128 = vst.msk [vmem:[#allocation2 + $0x329] sm:$0x1] %vm58, 0.0
    %129 = vst.msk [vmem:[#allocation2 + $0x341] sm:$0x1] %vm58, 0.0
    %130 = vst.msk [vmem:[#allocation2 + $0x359] sm:$0x1] %vm58, 0.0
    %vm131 = vcmask 64512
    %132 = vst.msk [vmem:[#allocation3] sm:$0xff] %vm131, 0.0
    %vm133 = vcmask 58368
    %134 = vst.msk [vmem:[#allocation3 + $0x8] sm:$0x3] %vm133, 0.0
    %135 = vst.msk [vmem:[#allocation3 + $0xa0] sm:$0xff] %vm131, 0.0
    %136 = vst.msk [vmem:[#allocation3 + $0xa8] sm:$0x3] %vm133, 0.0
    %s137 = scalar_lea.vmem [#allocation3], 144
    %138 = vst.msk [vmem:[%s137] sm:$0xff] %vm131, 0.0
    %139 = vst.msk [vmem:[%s137 + $0x8] sm:$0x3] %vm133, 0.0
    %140 = vst.msk [vmem:[%s137 + $0xa0] sm:$0xff] %vm131, 0.0
    %141 = vst.msk [vmem:[%s137 + $0xa8] sm:$0x3] %vm133, 0.0
    %vm142 = vcmask 57344
    %143 = vst.msk [vmem:[#allocation3] sm:$0x1] %vm142, 0.0
    %144 = vst.msk [vmem:[#allocation3 + $0x10] sm:$0x1] %vm142, 0.0
    %145 = vst.msk [vmem:[#allocation3 + $0x20] sm:$0x1] %vm142, 0.0
    %146 = vst.msk [vmem:[#allocation3 + $0x30] sm:$0x1] %vm142, 0.0
    %147 = vst.msk [vmem:[#allocation3 + $0x40] sm:$0x1] %vm142, 0.0
    %148 = vst.msk [vmem:[#allocation3 + $0x50] sm:$0x1] %vm142, 0.0
    %149 = vst.msk [vmem:[#allocation3 + $0x60] sm:$0x1] %vm142, 0.0
    %150 = vst.msk [vmem:[#allocation3 + $0x70] sm:$0x1] %vm142, 0.0
    %151 = vst.msk [vmem:[#allocation3 + $0x80] sm:$0x1] %vm142, 0.0
    %152 = vst.msk [vmem:[#allocation3 + $0x90] sm:$0x1] %vm142, 0.0
    %153 = vst.msk [vmem:[#allocation3 + $0xa0] sm:$0x1] %vm142, 0.0
    %154 = vst.msk [vmem:[#allocation3 + $0xb0] sm:$0x1] %vm142, 0.0
    %155 = vst.msk [vmem:[#allocation3 + $0xc0] sm:$0x1] %vm142, 0.0
    %156 = vst.msk [vmem:[#allocation3 + $0xd0] sm:$0x1] %vm142, 0.0
    %157 = vst.msk [vmem:[#allocation3 + $0xe0] sm:$0x1] %vm142, 0.0
    %158 = vst.msk [vmem:[#allocation3 + $0xf0] sm:$0x1] %vm142, 0.0
    %159 = vst.msk [vmem:[#allocation3 + $0x100] sm:$0x1] %vm142, 0.0
    %160 = vst.msk [vmem:[#allocation3 + $0x110] sm:$0x1] %vm142, 0.0
    %161 = vst.msk [vmem:[#allocation3 + $0x120] sm:$0x1] %vm142, 0.0
    %162 = vst.msk [vmem:[#allocation3 + $0x130] sm:$0x1] %vm142, 0.0
    %163 = vst.msk [vmem:[#allocation3 + $0x9] sm:$0x1] %vm142, 0.0
    %164 = vst.msk [vmem:[#allocation3 + $0x19] sm:$0x1] %vm142, 0.0
    %165 = vst.msk [vmem:[#allocation3 + $0x29] sm:$0x1] %vm142, 0.0
    %166 = vst.msk [vmem:[#allocation3 + $0x39] sm:$0x1] %vm142, 0.0
    %167 = vst.msk [vmem:[#allocation3 + $0x49] sm:$0x1] %vm142, 0.0
    %168 = vst.msk [vmem:[#allocation3 + $0x59] sm:$0x1] %vm142, 0.0
    %169 = vst.msk [vmem:[#allocation3 + $0x69] sm:$0x1] %vm142, 0.0
    %170 = vst.msk [vmem:[#allocation3 + $0x79] sm:$0x1] %vm142, 0.0
    %171 = vst.msk [vmem:[#allocation3 + $0x89] sm:$0x1] %vm142, 0.0
    %172 = vst.msk [vmem:[#allocation3 + $0x99] sm:$0x1] %vm142, 0.0
    %173 = vst.msk [vmem:[#allocation3 + $0xa9] sm:$0x1] %vm142, 0.0
    %174 = vst.msk [vmem:[#allocation3 + $0xb9] sm:$0x1] %vm142, 0.0
    %175 = vst.msk [vmem:[#allocation3 + $0xc9] sm:$0x1] %vm142, 0.0
    %176 = vst.msk [vmem:[#allocation3 + $0xd9] sm:$0x1] %vm142, 0.0
    %177 = vst.msk [vmem:[#allocation3 + $0xe9] sm:$0x1] %vm142, 0.0
    %178 = vst.msk [vmem:[#allocation3 + $0xf9] sm:$0x1] %vm142, 0.0
    %179 = vst.msk [vmem:[#allocation3 + $0x109] sm:$0x1] %vm142, 0.0
    %180 = vst.msk [vmem:[#allocation3 + $0x119] sm:$0x1] %vm142, 0.0
    %181 = vst.msk [vmem:[#allocation3 + $0x129] sm:$0x1] %vm142, 0.0
    %182 = vst.msk [vmem:[#allocation3 + $0x139] sm:$0x1] %vm142, 0.0
    %v183 = vld [vmem:[%s0] sm:$0xff]
    %v184 = vld [vmem:[%s0 + $0x8] sm:$0xff]
    %v185 = vld [vmem:[%s0 + $0x10] sm:$0xff]
    %v186 = vld [vmem:[%s0 + $0x18] sm:$0xff]
    %v187 = vld [vmem:[%s0 + $0x20] sm:$0xff]
    %v188 = vld [vmem:[%s0 + $0x28] sm:$0xff]
    %v189 = vld [vmem:[%s0 + $0x30] sm:$0xff]
    %v190 = vld [vmem:[%s0 + $0x38] sm:$0xff]
    %v191 = vld [vmem:[%s0 + $0x40] sm:$0xff]
    %v192 = vld [vmem:[%s0 + $0x48] sm:$0xff]
    %v193 = vld [vmem:[%s0 + $0x50] sm:$0xff]
    %v194 = vld [vmem:[%s0 + $0x58] sm:$0xff]
    %v195 = vld [vmem:[%s0 + $0x60] sm:$0xff]
    %v196 = vld [vmem:[%s0 + $0x68] sm:$0xff]
    %v197 = vld [vmem:[%s0 + $0x70] sm:$0xff]
    %v198 = vld [vmem:[%s0 + $0x78] sm:$0xff]
    %v199 = vld [vmem:[%s0 + $0x80] sm:$0xff]
    %v200 = vld [vmem:[%s0 + $0x88] sm:$0xff]
    %v201 = vld [vmem:[%s0 + $0x90] sm:$0xff]
    %v202 = vld [vmem:[%s0 + $0x98] sm:$0xff]
    %v203 = vld [vmem:[%s0 + $0xa0] sm:$0xff]
    %v204 = vld [vmem:[%s0 + $0xa8] sm:$0xff]
    %v205 = vld [vmem:[%s0 + $0xb0] sm:$0xff]
    %v206 = vld [vmem:[%s0 + $0xb8] sm:$0xff]
    %v207 = vld [vmem:[%s0 + $0xc0] sm:$0xff]
    %v208 = vld [vmem:[%s0 + $0xc8] sm:$0xff]
    %v209 = vld [vmem:[%s0 + $0xd0] sm:$0xff]
    %v210 = vld [vmem:[%s0 + $0xd8] sm:$0xff]
    %v211 = vld [vmem:[%s0 + $0xe0] sm:$0xff]
    %v212 = vld [vmem:[%s0 + $0xe8] sm:$0xff]
    %v213 = vld [vmem:[%s0 + $0xf0] sm:$0xff]
    %v214 = vld [vmem:[%s0 + $0xf8] sm:$0xff]
    %v215 = vld [vmem:[%s0 + $0x100] sm:$0xff]
    %v216 = vld [vmem:[%s0 + $0x108] sm:$0xff]
    %v217 = vld [vmem:[%s0 + $0x110] sm:$0xff]
    %v218 = vld [vmem:[%s0 + $0x118] sm:$0xff]
    %v219 = vld [vmem:[%s0 + $0x120] sm:$0xff]
    %v220 = vld [vmem:[%s0 + $0x128] sm:$0xff]
    %v221 = vld [vmem:[%s0 + $0x130] sm:$0xff]
    %v222 = vld [vmem:[%s0 + $0x138] sm:$0xff]
    %v223 = vld [vmem:[%s0 + $0x140] sm:$0xff]
    %v224 = vld [vmem:[%s0 + $0x148] sm:$0xff]
    %v225 = vld [vmem:[%s0 + $0x150] sm:$0xff]
    %v226 = vld [vmem:[%s0 + $0x158] sm:$0xff]
    %v227 = vld [vmem:[%s0 + $0x160] sm:$0xff]
    %v228 = vld [vmem:[%s0 + $0x168] sm:$0xff]
    %v229 = vld [vmem:[%s0 + $0x170] sm:$0xff]
    %v230 = vld [vmem:[%s0 + $0x178] sm:$0xff]
    %v231 = vld [vmem:[%s0 + $0x180] sm:$0xff]
    %v232 = vld [vmem:[%s0 + $0x188] sm:$0xff]
    %v233 = vld [vmem:[%s0 + $0x190] sm:$0xff]
    %v234 = vld [vmem:[%s0 + $0x198] sm:$0xff]
    %v235 = vld [vmem:[%s0 + $0x1a0] sm:$0xff]
    %v236 = vld [vmem:[%s0 + $0x1a8] sm:$0xff]
    %v237 = vld [vmem:[%s0 + $0x1b0] sm:$0xff]
    %v238 = vld [vmem:[%s0 + $0x1b8] sm:$0xff]
    %v239 = vld [vmem:[%s0 + $0x1c0] sm:$0xff]
    %v240 = vld [vmem:[%s0 + $0x1c8] sm:$0xff]
    %v241 = vld [vmem:[%s0 + $0x1d0] sm:$0xff]
    %v242 = vld [vmem:[%s0 + $0x1d8] sm:$0xff]
    %v243 = vld [vmem:[%s0 + $0x1e0] sm:$0xff]
    %v244 = vld [vmem:[%s0 + $0x1e8] sm:$0xff]
    %v245 = vld [vmem:[%s0 + $0x1f0] sm:$0xff]
    %v246 = vld [vmem:[%s0 + $0x1f8] sm:$0xff]
    %v247 = vld [vmem:[%s1] sm:$0x1]
    %v249 = vlaneseq
    %v250 = vshrl.u32 %v249, 7
    %v251 = vsub.s32 0, %v250
    %v252 = vrot.slane %v247, %v251
    %v254 = vmul.f32 %v183, %v252
    %v255 = vmul.f32 %v184, %v252
    %v256 = vmul.f32 %v185, %v252
    %v257 = vmul.f32 %v186, %v252
    %v258 = vmul.f32 %v187, %v252
    %v259 = vmul.f32 %v188, %v252
    %v260 = vmul.f32 %v189, %v252
    %v261 = vmul.f32 %v190, %v252
    %v262 = vmul.f32 %v191, %v252
    %v263 = vmul.f32 %v192, %v252
    %v264 = vmul.f32 %v193, %v252
    %v265 = vmul.f32 %v194, %v252
    %v266 = vmul.f32 %v195, %v252
    %v267 = vmul.f32 %v196, %v252
    %v268 = vmul.f32 %v197, %v252
    %v269 = vmul.f32 %v198, %v252
    %v270 = vmul.f32 %v199, %v252
    %v271 = vmul.f32 %v200, %v252
    %v272 = vmul.f32 %v201, %v252
    %v273 = vmul.f32 %v202, %v252
    %v274 = vmul.f32 %v203, %v252
    %v275 = vmul.f32 %v204, %v252
    %v276 = vmul.f32 %v205, %v252
    %v277 = vmul.f32 %v206, %v252
    %v278 = vmul.f32 %v207, %v252
    %v279 = vmul.f32 %v208, %v252
    %v280 = vmul.f32 %v209, %v252
    %v281 = vmul.f32 %v210, %v252
    %v282 = vmul.f32 %v211, %v252
    %v283 = vmul.f32 %v212, %v252
    %v284 = vmul.f32 %v213, %v252
    %v285 = vmul.f32 %v214, %v252
    %v286 = vmul.f32 %v215, %v252
    %v287 = vmul.f32 %v216, %v252
    %v288 = vmul.f32 %v217, %v252
    %v289 = vmul.f32 %v218, %v252
    %v290 = vmul.f32 %v219, %v252
    %v291 = vmul.f32 %v220, %v252
    %v292 = vmul.f32 %v221, %v252
    %v293 = vmul.f32 %v222, %v252
    %v294 = vmul.f32 %v223, %v252
    %v295 = vmul.f32 %v224, %v252
    %v296 = vmul.f32 %v225, %v252
    %v297 = vmul.f32 %v226, %v252
    %v298 = vmul.f32 %v227, %v252
    %v299 = vmul.f32 %v228, %v252
    %v300 = vmul.f32 %v229, %v252
    %v301 = vmul.f32 %v230, %v252
    %v302 = vmul.f32 %v231, %v252
    %v303 = vmul.f32 %v232, %v252
    %v304 = vmul.f32 %v233, %v252
    %v305 = vmul.f32 %v234, %v252
    %v306 = vmul.f32 %v235, %v252
    %v307 = vmul.f32 %v236, %v252
    %v308 = vmul.f32 %v237, %v252
    %v309 = vmul.f32 %v238, %v252
    %v310 = vmul.f32 %v239, %v252
    %v311 = vmul.f32 %v240, %v252
    %v312 = vmul.f32 %v241, %v252
    %v313 = vmul.f32 %v242, %v252
    %v314 = vmul.f32 %v243, %v252
    %v315 = vmul.f32 %v244, %v252
    %v316 = vmul.f32 %v245, %v252
    %v317 = vmul.f32 %v246, %v252
    %v318 = vld [vmem:[%s2] sm:$0x1]
    %v320 = vlaneseq
    %v321 = vshrl.u32 %v320, 7
    %v322 = vsub.s32 0, %v321
    %v323 = vrot.slane %v318, %v322
    %v325 = vadd.f32 %v254, %v323
    %v326 = vadd.f32 %v255, %v323
    %v327 = vadd.f32 %v256, %v323
    %v328 = vadd.f32 %v257, %v323
    %v329 = vadd.f32 %v258, %v323
    %v330 = vadd.f32 %v259, %v323
    %v331 = vadd.f32 %v260, %v323
    %v332 = vadd.f32 %v261, %v323
    %v333 = vadd.f32 %v262, %v323
    %v334 = vadd.f32 %v263, %v323
    %v335 = vadd.f32 %v264, %v323
    %v336 = vadd.f32 %v265, %v323
    %v337 = vadd.f32 %v266, %v323
    %v338 = vadd.f32 %v267, %v323
    %v339 = vadd.f32 %v268, %v323
    %v340 = vadd.f32 %v269, %v323
    %v341 = vadd.f32 %v270, %v323
    %v342 = vadd.f32 %v271, %v323
    %v343 = vadd.f32 %v272, %v323
    %v344 = vadd.f32 %v273, %v323
    %v345 = vadd.f32 %v274, %v323
    %v346 = vadd.f32 %v275, %v323
    %v347 = vadd.f32 %v276, %v323
    %v348 = vadd.f32 %v277, %v323
    %v349 = vadd.f32 %v278, %v323
    %v350 = vadd.f32 %v279, %v323
    %v351 = vadd.f32 %v280, %v323
    %v352 = vadd.f32 %v281, %v323
    %v353 = vadd.f32 %v282, %v323
    %v354 = vadd.f32 %v283, %v323
    %v355 = vadd.f32 %v284, %v323
    %v356 = vadd.f32 %v285, %v323
    %v357 = vadd.f32 %v286, %v323
    %v358 = vadd.f32 %v287, %v323
    %v359 = vadd.f32 %v288, %v323
    %v360 = vadd.f32 %v289, %v323
    %v361 = vadd.f32 %v290, %v323
    %v362 = vadd.f32 %v291, %v323
    %v363 = vadd.f32 %v292, %v323
    %v364 = vadd.f32 %v293, %v323
    %v365 = vadd.f32 %v294, %v323
    %v366 = vadd.f32 %v295, %v323
    %v367 = vadd.f32 %v296, %v323
    %v368 = vadd.f32 %v297, %v323
    %v369 = vadd.f32 %v298, %v323
    %v370 = vadd.f32 %v299, %v323
    %v371 = vadd.f32 %v300, %v323
    %v372 = vadd.f32 %v301, %v323
    %v373 = vadd.f32 %v302, %v323
    %v374 = vadd.f32 %v303, %v323
    %v375 = vadd.f32 %v304, %v323
    %v376 = vadd.f32 %v305, %v323
    %v377 = vadd.f32 %v306, %v323
    %v378 = vadd.f32 %v307, %v323
    %v379 = vadd.f32 %v308, %v323
    %v380 = vadd.f32 %v309, %v323
    %v381 = vadd.f32 %v310, %v323
    %v382 = vadd.f32 %v311, %v323
    %v383 = vadd.f32 %v312, %v323
    %v384 = vadd.f32 %v313, %v323
    %v385 = vadd.f32 %v314, %v323
    %v386 = vadd.f32 %v315, %v323
    %v387 = vadd.f32 %v316, %v323
    %v388 = vadd.f32 %v317, %v323
    %vm389 = vcmp.ge.f32.partialorder %v325, 0.0
    %vm390 = vcmp.ge.f32.partialorder %v326, 0.0
    %vm391 = vcmp.ge.f32.partialorder %v327, 0.0
    %vm392 = vcmp.ge.f32.partialorder %v328, 0.0
    %vm393 = vcmp.ge.f32.partialorder %v329, 0.0
    %vm394 = vcmp.ge.f32.partialorder %v330, 0.0
    %vm395 = vcmp.ge.f32.partialorder %v331, 0.0
    %vm396 = vcmp.ge.f32.partialorder %v332, 0.0
    %vm397 = vcmp.ge.f32.partialorder %v333, 0.0
    %vm398 = vcmp.ge.f32.partialorder %v334, 0.0
    %vm399 = vcmp.ge.f32.partialorder %v335, 0.0
    %vm400 = vcmp.ge.f32.partialorder %v336, 0.0
    %vm401 = vcmp.ge.f32.partialorder %v337, 0.0
    %vm402 = vcmp.ge.f32.partialorder %v338, 0.0
    %vm403 = vcmp.ge.f32.partialorder %v339, 0.0
    %vm404 = vcmp.ge.f32.partialorder %v340, 0.0
    %vm405 = vcmp.ge.f32.partialorder %v341, 0.0
    %vm406 = vcmp.ge.f32.partialorder %v342, 0.0
    %vm407 = vcmp.ge.f32.partialorder %v343, 0.0
    %vm408 = vcmp.ge.f32.partialorder %v344, 0.0
    %vm409 = vcmp.ge.f32.partialorder %v345, 0.0
    %vm410 = vcmp.ge.f32.partialorder %v346, 0.0
    %vm411 = vcmp.ge.f32.partialorder %v347, 0.0
    %vm412 = vcmp.ge.f32.partialorder %v348, 0.0
    %vm413 = vcmp.ge.f32.partialorder %v349, 0.0
    %vm414 = vcmp.ge.f32.partialorder %v350, 0.0
    %vm415 = vcmp.ge.f32.partialorder %v351, 0.0
    %vm416 = vcmp.ge.f32.partialorder %v352, 0.0
    %vm417 = vcmp.ge.f32.partialorder %v353, 0.0
    %vm418 = vcmp.ge.f32.partialorder %v354, 0.0
    %vm419 = vcmp.ge.f32.partialorder %v355, 0.0
    %vm420 = vcmp.ge.f32.partialorder %v356, 0.0
    %vm421 = vcmp.ge.f32.partialorder %v357, 0.0
    %vm422 = vcmp.ge.f32.partialorder %v358, 0.0
    %vm423 = vcmp.ge.f32.partialorder %v359, 0.0
    %vm424 = vcmp.ge.f32.partialorder %v360, 0.0
    %vm425 = vcmp.ge.f32.partialorder %v361, 0.0
    %vm426 = vcmp.ge.f32.partialorder %v362, 0.0
    %vm427 = vcmp.ge.f32.partialorder %v363, 0.0
    %vm428 = vcmp.ge.f32.partialorder %v364, 0.0
    %vm429 = vcmp.ge.f32.partialorder %v365, 0.0
    %vm430 = vcmp.ge.f32.partialorder %v366, 0.0
    %vm431 = vcmp.ge.f32.partialorder %v367, 0.0
    %vm432 = vcmp.ge.f32.partialorder %v368, 0.0
    %vm433 = vcmp.ge.f32.partialorder %v369, 0.0
    %vm434 = vcmp.ge.f32.partialorder %v370, 0.0
    %vm435 = vcmp.ge.f32.partialorder %v371, 0.0
    %vm436 = vcmp.ge.f32.partialorder %v372, 0.0
    %vm437 = vcmp.ge.f32.partialorder %v373, 0.0
    %vm438 = vcmp.ge.f32.partialorder %v374, 0.0
    %vm439 = vcmp.ge.f32.partialorder %v375, 0.0
    %vm440 = vcmp.ge.f32.partialorder %v376, 0.0
    %vm441 = vcmp.ge.f32.partialorder %v377, 0.0
    %vm442 = vcmp.ge.f32.partialorder %v378, 0.0
    %vm443 = vcmp.ge.f32.partialorder %v379, 0.0
    %vm444 = vcmp.ge.f32.partialorder %v380, 0.0
    %vm445 = vcmp.ge.f32.partialorder %v381, 0.0
    %vm446 = vcmp.ge.f32.partialorder %v382, 0.0
    %vm447 = vcmp.ge.f32.partialorder %v383, 0.0
    %vm448 = vcmp.ge.f32.partialorder %v384, 0.0
    %vm449 = vcmp.ge.f32.partialorder %v385, 0.0
    %vm450 = vcmp.ge.f32.partialorder %v386, 0.0
    %vm451 = vcmp.ge.f32.partialorder %v387, 0.0
    %vm452 = vcmp.ge.f32.partialorder %v388, 0.0
    %v453 = vmul.f32 %v325, 0.1
    %v454 = vmul.f32 %v326, 0.1
    %v455 = vmul.f32 %v327, 0.1
    %v456 = vmul.f32 %v328, 0.1
    %v457 = vmul.f32 %v329, 0.1
    %v458 = vmul.f32 %v330, 0.1
    %v459 = vmul.f32 %v331, 0.1
    %v460 = vmul.f32 %v332, 0.1
    %v461 = vmul.f32 %v333, 0.1
    %v462 = vmul.f32 %v334, 0.1
    %v463 = vmul.f32 %v335, 0.1
    %v464 = vmul.f32 %v336, 0.1
    %v465 = vmul.f32 %v337, 0.1
    %v466 = vmul.f32 %v338, 0.1
    %v467 = vmul.f32 %v339, 0.1
    %v468 = vmul.f32 %v340, 0.1
    %v469 = vmul.f32 %v341, 0.1
    %v470 = vmul.f32 %v342, 0.1
    %v471 = vmul.f32 %v343, 0.1
    %v472 = vmul.f32 %v344, 0.1
    %v473 = vmul.f32 %v345, 0.1
    %v474 = vmul.f32 %v346, 0.1
    %v475 = vmul.f32 %v347, 0.1
    %v476 = vmul.f32 %v348, 0.1
    %v477 = vmul.f32 %v349, 0.1
    %v478 = vmul.f32 %v350, 0.1
    %v479 = vmul.f32 %v351, 0.1
    %v480 = vmul.f32 %v352, 0.1
    %v481 = vmul.f32 %v353, 0.1
    %v482 = vmul.f32 %v354, 0.1
    %v483 = vmul.f32 %v355, 0.1
    %v484 = vmul.f32 %v356, 0.1
    %v485 = vmul.f32 %v357, 0.1
    %v486 = vmul.f32 %v358, 0.1
    %v487 = vmul.f32 %v359, 0.1
    %v488 = vmul.f32 %v360, 0.1
    %v489 = vmul.f32 %v361, 0.1
    %v490 = vmul.f32 %v362, 0.1
    %v491 = vmul.f32 %v363, 0.1
    %v492 = vmul.f32 %v364, 0.1
    %v493 = vmul.f32 %v365, 0.1
    %v494 = vmul.f32 %v366, 0.1
    %v495 = vmul.f32 %v367, 0.1
    %v496 = vmul.f32 %v368, 0.1
    %v497 = vmul.f32 %v369, 0.1
    %v498 = vmul.f32 %v370, 0.1
    %v499 = vmul.f32 %v371, 0.1
    %v500 = vmul.f32 %v372, 0.1
    %v501 = vmul.f32 %v373, 0.1
    %v502 = vmul.f32 %v374, 0.1
    %v503 = vmul.f32 %v375, 0.1
    %v504 = vmul.f32 %v376, 0.1
    %v505 = vmul.f32 %v377, 0.1
    %v506 = vmul.f32 %v378, 0.1
    %v507 = vmul.f32 %v379, 0.1
    %v508 = vmul.f32 %v380, 0.1
    %v509 = vmul.f32 %v381, 0.1
    %v510 = vmul.f32 %v382, 0.1
    %v511 = vmul.f32 %v383, 0.1
    %v512 = vmul.f32 %v384, 0.1
    %v513 = vmul.f32 %v385, 0.1
    %v514 = vmul.f32 %v386, 0.1
    %v515 = vmul.f32 %v387, 0.1
    %v516 = vmul.f32 %v388, 0.1
    %v517 = vsel %vm389, %v325, %v453
    %v518 = vsel %vm390, %v326, %v454
    %v519 = vsel %vm391, %v327, %v455
    %v520 = vsel %vm392, %v328, %v456
    %v521 = vsel %vm393, %v329, %v457
    %v522 = vsel %vm394, %v330, %v458
    %v523 = vsel %vm395, %v331, %v459
    %v524 = vsel %vm396, %v332, %v460
    %v525 = vsel %vm397, %v333, %v461
    %v526 = vsel %vm398, %v334, %v462
    %v527 = vsel %vm399, %v335, %v463
    %v528 = vsel %vm400, %v336, %v464
    %v529 = vsel %vm401, %v337, %v465
    %v530 = vsel %vm402, %v338, %v466
    %v531 = vsel %vm403, %v339, %v467
    %v532 = vsel %vm404, %v340, %v468
    %v533 = vsel %vm405, %v341, %v469
    %v534 = vsel %vm406, %v342, %v470
    %v535 = vsel %vm407, %v343, %v471
    %v536 = vsel %vm408, %v344, %v472
    %v537 = vsel %vm409, %v345, %v473
    %v538 = vsel %vm410, %v346, %v474
    %v539 = vsel %vm411, %v347, %v475
    %v540 = vsel %vm412, %v348, %v476
    %v541 = vsel %vm413, %v349, %v477
    %v542 = vsel %vm414, %v350, %v478
    %v543 = vsel %vm415, %v351, %v479
    %v544 = vsel %vm416, %v352, %v480
    %v545 = vsel %vm417, %v353, %v481
    %v546 = vsel %vm418, %v354, %v482
    %v547 = vsel %vm419, %v355, %v483
    %v548 = vsel %vm420, %v356, %v484
    %v549 = vsel %vm421, %v357, %v485
    %v550 = vsel %vm422, %v358, %v486
    %v551 = vsel %vm423, %v359, %v487
    %v552 = vsel %vm424, %v360, %v488
    %v553 = vsel %vm425, %v361, %v489
    %v554 = vsel %vm426, %v362, %v490
    %v555 = vsel %vm427, %v363, %v491
    %v556 = vsel %vm428, %v364, %v492
    %v557 = vsel %vm429, %v365, %v493
    %v558 = vsel %vm430, %v366, %v494
    %v559 = vsel %vm431, %v367, %v495
    %v560 = vsel %vm432, %v368, %v496
    %v561 = vsel %vm433, %v369, %v497
    %v562 = vsel %vm434, %v370, %v498
    %v563 = vsel %vm435, %v371, %v499
    %v564 = vsel %vm436, %v372, %v500
    %v565 = vsel %vm437, %v373, %v501
    %v566 = vsel %vm438, %v374, %v502
    %v567 = vsel %vm439, %v375, %v503
    %v568 = vsel %vm440, %v376, %v504
    %v569 = vsel %vm441, %v377, %v505
    %v570 = vsel %vm442, %v378, %v506
    %v571 = vsel %vm443, %v379, %v507
    %v572 = vsel %vm444, %v380, %v508
    %v573 = vsel %vm445, %v381, %v509
    %v574 = vsel %vm446, %v382, %v510
    %v575 = vsel %vm447, %v383, %v511
    %v576 = vsel %vm448, %v384, %v512
    %v577 = vsel %vm449, %v385, %v513
    %v578 = vsel %vm450, %v386, %v514
    %v579 = vsel %vm451, %v387, %v515
    %v580 = vsel %vm452, %v388, %v516
    %v581 = vld [vmem:[%s3] sm:$0x3]
    %v582 = vld [vmem:[%s3 + $0x2] sm:$0x3]
    %v583 = vld [vmem:[%s3 + $0x4] sm:$0x3]
    %v584 = vld [vmem:[%s3 + $0x6] sm:$0x3]
    %v585 = vld [vmem:[%s3 + $0x8] sm:$0x3]
    %v586 = vld [vmem:[%s3 + $0xa] sm:$0x3]
    %v587 = vld [vmem:[%s3 + $0xc] sm:$0x3]
    %v588 = vld [vmem:[%s3 + $0xe] sm:$0x3]
    %v589 = vld [vmem:[%s3 + $0x10] sm:$0x3]
    %s590 = scalar_lea.vmem [#allocation2], 24
    %591 = vst.msk [vmem:[%s590 + $0x1] sm:$0xff] %vm43, %v517
    %592 = vst.msk [vmem:[%s590 + $0x9] sm:$0xff] %vm43, %v518
    %593 = vst.msk [vmem:[%s590 + $0x19] sm:$0xff] %vm43, %v519
    %594 = vst.msk [vmem:[%s590 + $0x21] sm:$0xff] %vm43, %v520
    %595 = vst.msk [vmem:[%s590 + $0x31] sm:$0xff] %vm43, %v521
    %596 = vst.msk [vmem:[%s590 + $0x39] sm:$0xff] %vm43, %v522
    %597 = vst.msk [vmem:[%s590 + $0x49] sm:$0xff] %vm43, %v523
    %598 = vst.msk [vmem:[%s590 + $0x51] sm:$0xff] %vm43, %v524
    %599 = vst.msk [vmem:[%s590 + $0x61] sm:$0xff] %vm43, %v525
    %600 = vst.msk [vmem:[%s590 + $0x69] sm:$0xff] %vm43, %v526
    %601 = vst.msk [vmem:[%s590 + $0x79] sm:$0xff] %vm43, %v527
    %602 = vst.msk [vmem:[%s590 + $0x81] sm:$0xff] %vm43, %v528
    %603 = vst.msk [vmem:[%s590 + $0x91] sm:$0xff] %vm43, %v529
    %604 = vst.msk [vmem:[%s590 + $0x99] sm:$0xff] %vm43, %v530
    %605 = vst.msk [vmem:[%s590 + $0xa9] sm:$0xff] %vm43, %v531
    %606 = vst.msk [vmem:[%s590 + $0xb1] sm:$0xff] %vm43, %v532
    %607 = vst.msk [vmem:[%s590 + $0xc1] sm:$0xff] %vm43, %v533
    %608 = vst.msk [vmem:[%s590 + $0xc9] sm:$0xff] %vm43, %v534
    %609 = vst.msk [vmem:[%s590 + $0xd9] sm:$0xff] %vm43, %v535
    %610 = vst.msk [vmem:[%s590 + $0xe1] sm:$0xff] %vm43, %v536
    %611 = vst.msk [vmem:[%s590 + $0xf1] sm:$0xff] %vm43, %v537
    %612 = vst.msk [vmem:[%s590 + $0xf9] sm:$0xff] %vm43, %v538
    %613 = vst.msk [vmem:[%s590 + $0x109] sm:$0xff] %vm43, %v539
    %614 = vst.msk [vmem:[%s590 + $0x111] sm:$0xff] %vm43, %v540
    %615 = vst.msk [vmem:[%s590 + $0x121] sm:$0xff] %vm43, %v541
    %616 = vst.msk [vmem:[%s590 + $0x129] sm:$0xff] %vm43, %v542
    %617 = vst.msk [vmem:[%s590 + $0x139] sm:$0xff] %vm43, %v543
    %618 = vst.msk [vmem:[%s590 + $0x141] sm:$0xff] %vm43, %v544
    %619 = vst.msk [vmem:[%s590 + $0x151] sm:$0xff] %vm43, %v545
    %620 = vst.msk [vmem:[%s590 + $0x159] sm:$0xff] %vm43, %v546
    %621 = vst.msk [vmem:[%s590 + $0x169] sm:$0xff] %vm43, %v547
    %622 = vst.msk [vmem:[%s590 + $0x171] sm:$0xff] %vm43, %v548
    %623 = vst.msk [vmem:[%s590 + $0x1b1] sm:$0xff] %vm43, %v549
    %624 = vst.msk [vmem:[%s590 + $0x1b9] sm:$0xff] %vm43, %v550
    %625 = vst.msk [vmem:[%s590 + $0x1c9] sm:$0xff] %vm43, %v551
    %626 = vst.msk [vmem:[%s590 + $0x1d1] sm:$0xff] %vm43, %v552
    %627 = vst.msk [vmem:[%s590 + $0x1e1] sm:$0xff] %vm43, %v553
    %628 = vst.msk [vmem:[%s590 + $0x1e9] sm:$0xff] %vm43, %v554
    %629 = vst.msk [vmem:[%s590 + $0x1f9] sm:$0xff] %vm43, %v555
    %630 = vst.msk [vmem:[%s590 + $0x201] sm:$0xff] %vm43, %v556
    %631 = vst.msk [vmem:[%s590 + $0x211] sm:$0xff] %vm43, %v557
    %632 = vst.msk [vmem:[%s590 + $0x219] sm:$0xff] %vm43, %v558
    %633 = vst.msk [vmem:[%s590 + $0x229] sm:$0xff] %vm43, %v559
    %634 = vst.msk [vmem:[%s590 + $0x231] sm:$0xff] %vm43, %v560
    %635 = vst.msk [vmem:[%s590 + $0x241] sm:$0xff] %vm43, %v561
    %636 = vst.msk [vmem:[%s590 + $0x249] sm:$0xff] %vm43, %v562
    %637 = vst.msk [vmem:[%s590 + $0x259] sm:$0xff] %vm43, %v563
    %638 = vst.msk [vmem:[%s590 + $0x261] sm:$0xff] %vm43, %v564
    %639 = vst.msk [vmem:[%s590 + $0x271] sm:$0xff] %vm43, %v565
    %640 = vst.msk [vmem:[%s590 + $0x279] sm:$0xff] %vm43, %v566
    %641 = vst.msk [vmem:[%s590 + $0x289] sm:$0xff] %vm43, %v567
    %642 = vst.msk [vmem:[%s590 + $0x291] sm:$0xff] %vm43, %v568
    %643 = vst.msk [vmem:[%s590 + $0x2a1] sm:$0xff] %vm43, %v569
    %644 = vst.msk [vmem:[%s590 + $0x2a9] sm:$0xff] %vm43, %v570
    %645 = vst.msk [vmem:[%s590 + $0x2b9] sm:$0xff] %vm43, %v571
    %646 = vst.msk [vmem:[%s590 + $0x2c1] sm:$0xff] %vm43, %v572
    %647 = vst.msk [vmem:[%s590 + $0x2d1] sm:$0xff] %vm43, %v573
    %648 = vst.msk [vmem:[%s590 + $0x2d9] sm:$0xff] %vm43, %v574
    %649 = vst.msk [vmem:[%s590 + $0x2e9] sm:$0xff] %vm43, %v575
    %650 = vst.msk [vmem:[%s590 + $0x2f1] sm:$0xff] %vm43, %v576
    %651 = vst.msk [vmem:[%s590 + $0x301] sm:$0xff] %vm43, %v577
    %652 = vst.msk [vmem:[%s590 + $0x309] sm:$0xff] %vm43, %v578
    %653 = vst.msk [vmem:[%s590 + $0x319] sm:$0xff] %vm43, %v579
    %654 = vst.msk [vmem:[%s590 + $0x321] sm:$0xff] %vm43, %v580
    %v655 = vld [vmem:[#allocation2] ss:$2 sm:$0xff]
    %s656 = scalar_lea.vmem [#allocation2], 48
    %v657 = vld [vmem:[%s656] ss:$2 sm:$0xff]
    %s658 = scalar_lea.vmem [#allocation2], 96
    %v659 = vld [vmem:[%s658] ss:$2 sm:$0xff]
    %s660 = scalar_lea.vmem [#allocation2], 144
    %v661 = vld [vmem:[%s660] ss:$2 sm:$0xff]
    %s662 = scalar_lea.vmem [#allocation2], 192
    %v663 = vld [vmem:[%s662] ss:$2 sm:$0xff]
    %s664 = scalar_lea.vmem [#allocation2], 240
    %v665 = vld [vmem:[%s664] ss:$2 sm:$0xff]
    %s666 = scalar_lea.vmem [#allocation2], 288
    %v667 = vld [vmem:[%s666] ss:$2 sm:$0xff]
    %s668 = scalar_lea.vmem [#allocation2], 336
    %v669 = vld [vmem:[%s668] ss:$2 sm:$0xff]
    %s670 = scalar_lea.vmem [#allocation2], 432
    %v671 = vld [vmem:[%s670] ss:$2 sm:$0xff]
    %s672 = scalar_lea.vmem [#allocation2], 480
    %v673 = vld [vmem:[%s672] ss:$2 sm:$0xff]
    %s674 = scalar_lea.vmem [#allocation2], 528
    %v675 = vld [vmem:[%s674] ss:$2 sm:$0xff]
    %s676 = scalar_lea.vmem [#allocation2], 576
    %v677 = vld [vmem:[%s676] ss:$2 sm:$0xff]
    %s678 = scalar_lea.vmem [#allocation2], 624
    %v679 = vld [vmem:[%s678] ss:$2 sm:$0xff]
    %s680 = scalar_lea.vmem [#allocation2], 672
    %v681 = vld [vmem:[%s680] ss:$2 sm:$0xff]
    %s682 = scalar_lea.vmem [#allocation2], 720
    %v683 = vld [vmem:[%s682] ss:$2 sm:$0xff]
    %s684 = scalar_lea.vmem [#allocation2], 768
    %v685 = vld [vmem:[%s684] ss:$2 sm:$0xff]
    %v686 = vpack.c.bf16 %v657, %v655
    %v687 = vpack.c.bf16 %v661, %v659
    %v688 = vpack.c.bf16 %v665, %v663
    %v689 = vpack.c.bf16 %v669, %v667
    %v690 = vpack.c.bf16 %v673, %v671
    %v691 = vpack.c.bf16 %v677, %v675
    %v692 = vpack.c.bf16 %v681, %v679
    %v693 = vpack.c.bf16 %v685, %v683
    %s694 = scalar_lea.vmem [#allocation2], 1
    %v695 = vld [vmem:[%s694] ss:$2 sm:$0xff]
    %s696 = scalar_lea.vmem [#allocation2], 49
    %v697 = vld [vmem:[%s696] ss:$2 sm:$0xff]
    %s698 = scalar_lea.vmem [#allocation2], 97
    %v699 = vld [vmem:[%s698] ss:$2 sm:$0xff]
    %s700 = scalar_lea.vmem [#allocation2], 145
    %v701 = vld [vmem:[%s700] ss:$2 sm:$0xff]
    %s702 = scalar_lea.vmem [#allocation2], 193
    %v703 = vld [vmem:[%s702] ss:$2 sm:$0xff]
    %s704 = scalar_lea.vmem [#allocation2], 241
    %v705 = vld [vmem:[%s704] ss:$2 sm:$0xff]
    %s706 = scalar_lea.vmem [#allocation2], 289
    %v707 = vld [vmem:[%s706] ss:$2 sm:$0xff]
    %s708 = scalar_lea.vmem [#allocation2], 337
    %v709 = vld [vmem:[%s708] ss:$2 sm:$0xff]
    %s710 = scalar_lea.vmem [#allocation2], 433
    %v711 = vld [vmem:[%s710] ss:$2 sm:$0xff]
    %s712 = scalar_lea.vmem [#allocation2], 481
    %v713 = vld [vmem:[%s712] ss:$2 sm:$0xff]
    %s714 = scalar_lea.vmem [#allocation2], 529
    %v715 = vld [vmem:[%s714] ss:$2 sm:$0xff]
    %s716 = scalar_lea.vmem [#allocation2], 577
    %v717 = vld [vmem:[%s716] ss:$2 sm:$0xff]
    %s718 = scalar_lea.vmem [#allocation2], 625
    %v719 = vld [vmem:[%s718] ss:$2 sm:$0xff]
    %s720 = scalar_lea.vmem [#allocation2], 673
    %v721 = vld [vmem:[%s720] ss:$2 sm:$0xff]
    %s722 = scalar_lea.vmem [#allocation2], 721
    %v723 = vld [vmem:[%s722] ss:$2 sm:$0xff]
    %s724 = scalar_lea.vmem [#allocation2], 769
    %v725 = vld [vmem:[%s724] ss:$2 sm:$0xff]
    %v726 = vpack.c.bf16 %v697, %v695
    %v727 = vpack.c.bf16 %v701, %v699
    %v728 = vpack.c.bf16 %v705, %v703
    %v729 = vpack.c.bf16 %v709, %v707
    %v730 = vpack.c.bf16 %v713, %v711
    %v731 = vpack.c.bf16 %v717, %v715
    %v732 = vpack.c.bf16 %v721, %v719
    %v733 = vpack.c.bf16 %v725, %v723
    %v735 = vsel %vm43, %v726, 0
    %v738 = vsel %vm43, %v727, 0
    %v741 = vsel %vm43, %v728, 0
    %v744 = vsel %vm43, %v729, 0
    %v747 = vsel %vm43, %v730, 0
    %v750 = vsel %vm43, %v731, 0
    %v753 = vsel %vm43, %v732, 0
    %v756 = vsel %vm43, %v733, 0
    %vm758 = vcmask 1041408
    %v760 = vsel %vm758, %v582, 0
    %762 = vmatprep.subr.bf16.mxu0 0
    %763 = vmatpush1.bf16.msra.mxu0 %v760
    %764 = vmatprep.subr.bf16.mxu0 0
    %765 = vmatpush1.bf16.msra.mxu0 0
    %766 = vmatprep.subr.bf16.mxu0 0
    %767 = vmatpush1.bf16.msra.mxu0 0
    %768 = vmatprep.subr.bf16.mxu0 0
    %769 = vmatpush1.bf16.msra.mxu0 0
    %770 = vmatprep.subr.bf16.mxu0 0
    %771 = vmatpush1.bf16.msra.mxu0 0
    %772 = vmatprep.subr.bf16.mxu0 0
    %773 = vmatpush1.bf16.msra.mxu0 0
    %774 = vmatprep.subr.bf16.mxu0 0
    %775 = vmatpush1.bf16.msra.mxu0 0
    %776 = vmatprep.subr.bf16.mxu0 0
    %777 = vmatpush1.bf16.msra.mxu0 0
    %778 = vmatprep.subr.bf16.mxu0 0
    %779 = vmatpush1.bf16.msra.mxu0 0
    %780 = vmatprep.subr.bf16.mxu0 0
    %781 = vmatpush1.bf16.msra.mxu0 0
    %782 = vmatprep.subr.bf16.mxu0 0
    %783 = vmatpush1.bf16.msra.mxu0 0
    %784 = vmatprep.subr.bf16.mxu0 0
    %785 = vmatpush1.bf16.msra.mxu0 0
    %786 = vmatprep.subr.bf16.mxu0 0
    %787 = vmatpush1.bf16.msra.mxu0 0
    %788 = vmatprep.subr.bf16.mxu0 0
    %789 = vmatpush1.bf16.msra.mxu0 0
    %790 = vmatprep.subr.bf16.mxu0 0
    %791 = vmatpush1.bf16.msra.mxu0 0
    %792 = vmatprep.subr.bf16.mxu0 0
    %793 = vmatpush1.bf16.msra.mxu0 0
    %794 = vmatprep.mubr.bf16.mxu0 0
    %795 = vmatmul.mubr.bf16.gmra.mrb[0].mxu0 %v735
    %v796 = vpop.f32.mrb[0].mxu0
    %v797 = vadd.f32 0.0, %v796
    %v798 = vpop.f32.mrb[0].mxu0
    %v799 = vpop.f32.mrb[0].mxu0
    %v800 = vadd.f32 0.0, %v799
    %v801 = vpop.f32.mrb[0].mxu0
    %802 = vmatprep.mubr.bf16.mxu0 0
    %803 = vmatmul.mubr.bf16.gmra.mrb[0].mxu0 %v738
    %v804 = vpop.f32.mrb[0].mxu0
    %v805 = vadd.f32 0.0, %v804
    %v806 = vpop.f32.mrb[0].mxu0
    %v807 = vpop.f32.mrb[0].mxu0
    %v808 = vadd.f32 0.0, %v807
    %v809 = vpop.f32.mrb[0].mxu0
    %810 = vmatprep.mubr.bf16.mxu0 0
    %811 = vmatmul.mubr.bf16.gmra.mrb[0].mxu0 %v741
    %v812 = vpop.f32.mrb[0].mxu0
    %v813 = vadd.f32 0.0, %v812
    %v814 = vpop.f32.mrb[0].mxu0
    %v815 = vpop.f32.mrb[0].mxu0
    %v816 = vadd.f32 0.0, %v815
    %v817 = vpop.f32.mrb[0].mxu0
    %818 = vmatprep.mubr.bf16.mxu0 0
    %819 = vmatmul.mubr.bf16.gmra.mrb[0].mxu0 %v744
    %v820 = vpop.f32.mrb[0].mxu0
    %v821 = vadd.f32 0.0, %v820
    %v822 = vpop.f32.mrb[0].mxu0
    %v823 = vpop.f32.mrb[0].mxu0
    %v824 = vadd.f32 0.0, %v823
    %v825 = vpop.f32.mrb[0].mxu0
    %826 = vmatprep.mubr.bf16.mxu0 0
    %827 = vmatmul.mubr.bf16.gmra.mrb[0].mxu0 %v747
    %v828 = vpop.f32.mrb[0].mxu0
    %v829 = vadd.f32 0.0, %v828
    %v830 = vpop.f32.mrb[0].mxu0
    %v831 = vpop.f32.mrb[0].mxu0
    %v832 = vadd.f32 0.0, %v831
    %v833 = vpop.f32.mrb[0].mxu0
    %834 = vmatprep.mubr.bf16.mxu0 0
    %835 = vmatmul.mubr.bf16.gmra.mrb[0].mxu0 %v750
    %v836 = vpop.f32.mrb[0].mxu0
    %v837 = vadd.f32 0.0, %v836
    %v838 = vpop.f32.mrb[0].mxu0
    %v839 = vpop.f32.mrb[0].mxu0
    %v840 = vadd.f32 0.0, %v839
    %v841 = vpop.f32.mrb[0].mxu0
    %842 = vmatprep.mubr.bf16.mxu0 0
    %843 = vmatmul.mubr.bf16.gmra.mrb[0].mxu0 %v753
    %v844 = vpop.f32.mrb[0].mxu0
    %v845 = vadd.f32 0.0, %v844
    %v846 = vpop.f32.mrb[0].mxu0
    %v847 = vpop.f32.mrb[0].mxu0
    %v848 = vadd.f32 0.0, %v847
    %v849 = vpop.f32.mrb[0].mxu0
    %850 = vmatprep.mubr.bf16.mxu0 0
    %851 = vmatmul.mubr.bf16.gmra.mrb[0].mxu0 %v756
    %v852 = vpop.f32.mrb[0].mxu0
    %v853 = vadd.f32 0.0, %v852
    %v854 = vpop.f32.mrb[0].mxu0
    %v855 = vpop.f32.mrb[0].mxu0
    %v856 = vadd.f32 0.0, %v855
    %v857 = vpop.f32.mrb[0].mxu0
    %858 = vdwg.mxu0
    %v860 = vsel %vm43, %v686, 0
    %v863 = vsel %vm43, %v687, 0
    %v866 = vsel %vm43, %v688, 0
    %v869 = vsel %vm43, %v689, 0
    %v872 = vsel %vm43, %v690, 0
    %v875 = vsel %vm43, %v691, 0
    %v878 = vsel %vm43, %v692, 0
    %v881 = vsel %vm43, %v693, 0
    %v884 = vsel %vm758, %v581, 0
    %886 = vmatprep.subr.bf16.mxu0 0
    %887 = vmatpush1.bf16.msra.mxu0 %v884
    %888 = vmatprep.subr.bf16.mxu0 0
    %889 = vmatpush1.bf16.msra.mxu0 0
    %890 = vmatprep.subr.bf16.mxu0 0
    %891 = vmatpush1.bf16.msra.mxu0 0
    %892 = vmatprep.subr.bf16.mxu0 0
    %893 = vmatpush1.bf16.msra.mxu0 0
    %894 = vmatprep.subr.bf16.mxu0 0
    %895 = vmatpush1.bf16.msra.mxu0 0
    %896 = vmatprep.subr.bf16.mxu0 0
    %897 = vmatpush1.bf16.msra.mxu0 0
    %898 = vmatprep.subr.bf16.mxu0 0
    %899 = vmatpush1.bf16.msra.mxu0 0
    %900 = vmatprep.subr.bf16.mxu0 0
    %901 = vmatpush1.bf16.msra.mxu0 0
    %902 = vmatprep.subr.bf16.mxu0 0
    %903 = vmatpush1.bf16.msra.mxu0 0
    %904 = vmatprep.subr.bf16.mxu0 0
    %905 = vmatpush1.bf16.msra.mxu0 0
    %906 = vmatprep.subr.bf16.mxu0 0
    %907 = vmatpush1.bf16.msra.mxu0 0
    %908 = vmatprep.subr.bf16.mxu0 0
    %909 = vmatpush1.bf16.msra.mxu0 0
    %910 = vmatprep.subr.bf16.mxu0 0
    %911 = vmatpush1.bf16.msra.mxu0 0
    %912 = vmatprep.subr.bf16.mxu0 0
    %913 = vmatpush1.bf16.msra.mxu0 0
    %914 = vmatprep.subr.bf16.mxu0 0
    %915 = vmatpush1.bf16.msra.mxu0 0
    %916 = vmatprep.subr.bf16.mxu0 0
    %917 = vmatpush1.bf16.msra.mxu0 0
    %918 = vmatprep.mubr.bf16.mxu0 0
    %919 = vmatmul.mubr.bf16.gmra.mrb[0].mxu0 %v860
    %v920 = vpop.f32.mrb[0].mxu0
    %v921 = vadd.f32 %v797, %v920
    %v922 = vpop.f32.mrb[0].mxu0
    %v923 = vpop.f32.mrb[0].mxu0
    %v924 = vadd.f32 %v800, %v923
    %v925 = vpop.f32.mrb[0].mxu0
    %926 = vmatprep.mubr.bf16.mxu0 0
    %927 = vmatmul.mubr.bf16.gmra.mrb[0].mxu0 %v863
    %v928 = vpop.f32.mrb[0].mxu0
    %v929 = vadd.f32 %v805, %v928
    %v930 = vpop.f32.mrb[0].mxu0
    %v931 = vpop.f32.mrb[0].mxu0
    %v932 = vadd.f32 %v808, %v931
    %v933 = vpop.f32.mrb[0].mxu0
    %934 = vmatprep.mubr.bf16.mxu0 0
    %935 = vmatmul.mubr.bf16.gmra.mrb[0].mxu0 %v866
    %v936 = vpop.f32.mrb[0].mxu0
    %v937 = vadd.f32 %v813, %v936
    %v938 = vpop.f32.mrb[0].mxu0
    %v939 = vpop.f32.mrb[0].mxu0
    %v940 = vadd.f32 %v816, %v939
    %v941 = vpop.f32.mrb[0].mxu0
    %942 = vmatprep.mubr.bf16.mxu0 0
    %943 = vmatmul.mubr.bf16.gmra.mrb[0].mxu0 %v869
    %v944 = vpop.f32.mrb[0].mxu0
    %v945 = vadd.f32 %v821, %v944
    %v946 = vpop.f32.mrb[0].mxu0
    %v947 = vpop.f32.mrb[0].mxu0
    %v948 = vadd.f32 %v824, %v947
    %v949 = vpop.f32.mrb[0].mxu0
    %950 = vmatprep.mubr.bf16.mxu0 0
    %951 = vmatmul.mubr.bf16.gmra.mrb[0].mxu0 %v872
    %v952 = vpop.f32.mrb[0].mxu0
    %v953 = vadd.f32 %v829, %v952
    %v954 = vpop.f32.mrb[0].mxu0
    %v955 = vpop.f32.mrb[0].mxu0
    %v956 = vadd.f32 %v832, %v955
    %v957 = vpop.f32.mrb[0].mxu0
    %958 = vmatprep.mubr.bf16.mxu0 0
    %959 = vmatmul.mubr.bf16.gmra.mrb[0].mxu0 %v875
    %v960 = vpop.f32.mrb[0].mxu0
    %v961 = vadd.f32 %v837, %v960
    %v962 = vpop.f32.mrb[0].mxu0
    %v963 = vpop.f32.mrb[0].mxu0
    %v964 = vadd.f32 %v840, %v963
    %v965 = vpop.f32.mrb[0].mxu0
    %966 = vmatprep.mubr.bf16.mxu0 0
    %967 = vmatmul.mubr.bf16.gmra.mrb[0].mxu0 %v878
    %v968 = vpop.f32.mrb[0].mxu0
    %v969 = vadd.f32 %v845, %v968
    %v970 = vpop.f32.mrb[0].mxu0
    %v971 = vpop.f32.mrb[0].mxu0
    %v972 = vadd.f32 %v848, %v971
    %v973 = vpop.f32.mrb[0].mxu0
    %974 = vmatprep.mubr.bf16.mxu0 0
    %975 = vmatmul.mubr.bf16.gmra.mrb[0].mxu0 %v881
    %v976 = vpop.f32.mrb[0].mxu0
    %v977 = vadd.f32 %v853, %v976
    %v978 = vpop.f32.mrb[0].mxu0
    %v979 = vpop.f32.mrb[0].mxu0
    %v980 = vadd.f32 %v856, %v979
    %v981 = vpop.f32.mrb[0].mxu0
    %982 = vdwg.mxu0
    %s983 = scalar_lea.vmem [#allocation2], 2
    %v984 = vld [vmem:[%s983] ss:$2 sm:$0xff]
    %s985 = scalar_lea.vmem [#allocation2], 50
    %v986 = vld [vmem:[%s985] ss:$2 sm:$0xff]
    %s987 = scalar_lea.vmem [#allocation2], 98
    %v988 = vld [vmem:[%s987] ss:$2 sm:$0xff]
    %s989 = scalar_lea.vmem [#allocation2], 146
    %v990 = vld [vmem:[%s989] ss:$2 sm:$0xff]
    %s991 = scalar_lea.vmem [#allocation2], 194
    %v992 = vld [vmem:[%s991] ss:$2 sm:$0xff]
    %s993 = scalar_lea.vmem [#allocation2], 242
    %v994 = vld [vmem:[%s993] ss:$2 sm:$0xff]
    %s995 = scalar_lea.vmem [#allocation2], 290
    %v996 = vld [vmem:[%s995] ss:$2 sm:$0xff]
    %s997 = scalar_lea.vmem [#allocation2], 338
    %v998 = vld [vmem:[%s997] ss:$2 sm:$0xff]
    %s999 = scalar_lea.vmem [#allocation2], 434
    %v1000 = vld [vmem:[%s999] ss:$2 sm:$0xff]
    %s1001 = scalar_lea.vmem [#allocation2], 482
    %v1002 = vld [vmem:[%s1001] ss:$2 sm:$0xff]
    %s1003 = scalar_lea.vmem [#allocation2], 530
    %v1004 = vld [vmem:[%s1003] ss:$2 sm:$0xff]
    %s1005 = scalar_lea.vmem [#allocation2], 578
    %v1006 = vld [vmem:[%s1005] ss:$2 sm:$0xff]
    %s1007 = scalar_lea.vmem [#allocation2], 626
    %v1008 = vld [vmem:[%s1007] ss:$2 sm:$0xff]
    %s1009 = scalar_lea.vmem [#allocation2], 674
    %v1010 = vld [vmem:[%s1009] ss:$2 sm:$0xff]
    %s1011 = scalar_lea.vmem [#allocation2], 722
    %v1012 = vld [vmem:[%s1011] ss:$2 sm:$0xff]
    %s1013 = scalar_lea.vmem [#allocation2], 770
    %v1014 = vld [vmem:[%s1013] ss:$2 sm:$0xff]
    %v1015 = vpack.c.bf16 %v986, %v984
    %v1016 = vpack.c.bf16 %v990, %v988
    %v1017 = vpack.c.bf16 %v994, %v992
    %v1018 = vpack.c.bf16 %v998, %v996
    %v1019 = vpack.c.bf16 %v1002, %v1000
    %v1020 = vpack.c.bf16 %v1006, %v1004
    %v1021 = vpack.c.bf16 %v1010, %v1008
    %v1022 = vpack.c.bf16 %v1014, %v1012
    %v1024 = vsel %vm43, %v1015, 0
    %v1027 = vsel %vm43, %v1016, 0
    %v1030 = vsel %vm43, %v1017, 0
    %v1033 = vsel %vm43, %v1018, 0
    %v1036 = vsel %vm43, %v1019, 0
    %v1039 = vsel %vm43, %v1020, 0
    %v1042 = vsel %vm43, %v1021, 0
    %v1045 = vsel %vm43, %v1022, 0
    %v1048 = vsel %vm758, %v583, 0
    %1050 = vmatprep.subr.bf16.mxu0 0
    %1051 = vmatpush1.bf16.msra.mxu0 %v1048
    %1052 = vmatprep.subr.bf16.mxu0 0
    %1053 = vmatpush1.bf16.msra.mxu0 0
    %1054 = vmatprep.subr.bf16.mxu0 0
    %1055 = vmatpush1.bf16.msra.mxu0 0
    %1056 = vmatprep.subr.bf16.mxu0 0
    %1057 = vmatpush1.bf16.msra.mxu0 0
    %1058 = vmatprep.subr.bf16.mxu0 0
    %1059 = vmatpush1.bf16.msra.mxu0 0
    %1060 = vmatprep.subr.bf16.mxu0 0
    %1061 = vmatpush1.bf16.msra.mxu0 0
    %1062 = vmatprep.subr.bf16.mxu0 0
    %1063 = vmatpush1.bf16.msra.mxu0 0
    %1064 = vmatprep.subr.bf16.mxu0 0
    %1065 = vmatpush1.bf16.msra.mxu0 0
    %1066 = vmatprep.subr.bf16.mxu0 0
    %1067 = vmatpush1.bf16.msra.mxu0 0
    %1068 = vmatprep.subr.bf16.mxu0 0
    %1069 = vmatpush1.bf16.msra.mxu0 0
    %1070 = vmatprep.subr.bf16.mxu0 0
    %1071 = vmatpush1.bf16.msra.mxu0 0
    %1072 = vmatprep.subr.bf16.mxu0 0
    %1073 = vmatpush1.bf16.msra.mxu0 0
    %1074 = vmatprep.subr.bf16.mxu0 0
    %1075 = vmatpush1.bf16.msra.mxu0 0
    %1076 = vmatprep.subr.bf16.mxu0 0
    %1077 = vmatpush1.bf16.msra.mxu0 0
    %1078 = vmatprep.subr.bf16.mxu0 0
    %1079 = vmatpush1.bf16.msra.mxu0 0
    %1080 = vmatprep.subr.bf16.mxu0 0
    %1081 = vmatpush1.bf16.msra.mxu0 0
    %1082 = vmatprep.mubr.bf16.mxu0 0
    %1083 = vmatmul.mubr.bf16.gmra.mrb[0].mxu0 %v1024
    %v1084 = vpop.f32.mrb[0].mxu0
    %v1085 = vadd.f32 0.0, %v1084
    %v1086 = vpop.f32.mrb[0].mxu0
    %v1087 = vpop.f32.mrb[0].mxu0
    %v1088 = vadd.f32 0.0, %v1087
    %v1089 = vpop.f32.mrb[0].mxu0
    %1090 = vmatprep.mubr.bf16.mxu0 0
    %1091 = vmatmul.mubr.bf16.gmra.mrb[0].mxu0 %v1027
    %v1092 = vpop.f32.mrb[0].mxu0
    %v1093 = vadd.f32 0.0, %v1092
    %v1094 = vpop.f32.mrb[0].mxu0
    %v1095 = vpop.f32.mrb[0].mxu0
    %v1096 = vadd.f32 0.0, %v1095
    %v1097 = vpop.f32.mrb[0].mxu0
    %1098 = vmatprep.mubr.bf16.mxu0 0
    %1099 = vmatmul.mubr.bf16.gmra.mrb[0].mxu0 %v1030
    %v1100 = vpop.f32.mrb[0].mxu0
    %v1101 = vadd.f32 0.0, %v1100
    %v1102 = vpop.f32.mrb[0].mxu0
    %v1103 = vpop.f32.mrb[0].mxu0
    %v1104 = vadd.f32 0.0, %v1103
    %v1105 = vpop.f32.mrb[0].mxu0
    %1106 = vmatprep.mubr.bf16.mxu0 0
    %1107 = vmatmul.mubr.bf16.gmra.mrb[0].mxu0 %v1033
    %v1108 = vpop.f32.mrb[0].mxu0
    %v1109 = vadd.f32 0.0, %v1108
    %v1110 = vpop.f32.mrb[0].mxu0
    %v1111 = vpop.f32.mrb[0].mxu0
    %v1112 = vadd.f32 0.0, %v1111
    %v1113 = vpop.f32.mrb[0].mxu0
    %1114 = vmatprep.mubr.bf16.mxu0 0
    %1115 = vmatmul.mubr.bf16.gmra.mrb[0].mxu0 %v1036
    %v1116 = vpop.f32.mrb[0].mxu0
    %v1117 = vadd.f32 0.0, %v1116
    %v1118 = vpop.f32.mrb[0].mxu0
    %v1119 = vpop.f32.mrb[0].mxu0
    %v1120 = vadd.f32 0.0, %v1119
    %v1121 = vpop.f32.mrb[0].mxu0
    %1122 = vmatprep.mubr.bf16.mxu0 0
    %1123 = vmatmul.mubr.bf16.gmra.mrb[0].mxu0 %v1039
    %v1124 = vpop.f32.mrb[0].mxu0
    %v1125 = vadd.f32 0.0, %v1124
    %v1126 = vpop.f32.mrb[0].mxu0
    %v1127 = vpop.f32.mrb[0].mxu0
    %v1128 = vadd.f32 0.0, %v1127
    %v1129 = vpop.f32.mrb[0].mxu0
    %1130 = vmatprep.mubr.bf16.mxu0 0
    %1131 = vmatmul.mubr.bf16.gmra.mrb[0].mxu0 %v1042
    %v1132 = vpop.f32.mrb[0].mxu0
    %v1133 = vadd.f32 0.0, %v1132
    %v1134 = vpop.f32.mrb[0].mxu0
    %v1135 = vpop.f32.mrb[0].mxu0
    %v1136 = vadd.f32 0.0, %v1135
    %v1137 = vpop.f32.mrb[0].mxu0
    %1138 = vmatprep.mubr.bf16.mxu0 0
    %1139 = vmatmul.mubr.bf16.gmra.mrb[0].mxu0 %v1045
    %v1140 = vpop.f32.mrb[0].mxu0
    %v1141 = vadd.f32 0.0, %v1140
    %v1142 = vpop.f32.mrb[0].mxu0
    %v1143 = vpop.f32.mrb[0].mxu0
    %v1144 = vadd.f32 0.0, %v1143
    %v1145 = vpop.f32.mrb[0].mxu0
    %1146 = vdwg.mxu0
    %v1147 = vadd.f32 %v921, %v1085
    %v1148 = vadd.f32 %v924, %v1088
    %v1149 = vadd.f32 %v929, %v1093
    %v1150 = vadd.f32 %v932, %v1096
    %v1151 = vadd.f32 %v937, %v1101
    %v1152 = vadd.f32 %v940, %v1104
    %v1153 = vadd.f32 %v945, %v1109
    %v1154 = vadd.f32 %v948, %v1112
    %v1155 = vadd.f32 %v953, %v1117
    %v1156 = vadd.f32 %v956, %v1120
    %v1157 = vadd.f32 %v961, %v1125
    %v1158 = vadd.f32 %v964, %v1128
    %v1159 = vadd.f32 %v969, %v1133
    %v1160 = vadd.f32 %v972, %v1136
    %v1161 = vadd.f32 %v977, %v1141
    %v1162 = vadd.f32 %v980, %v1144
    %v1163 = vld [vmem:[%s590] ss:$2 sm:$0xff]
    %s1164 = scalar_lea.vmem %s590, 48 [#allocation2]
    %v1165 = vld [vmem:[%s1164] ss:$2 sm:$0xff]
    %s1166 = scalar_lea.vmem %s590, 96 [#allocation2]
    %v1167 = vld [vmem:[%s1166] ss:$2 sm:$0xff]
    %s1168 = scalar_lea.vmem %s590, 144 [#allocation2]
    %v1169 = vld [vmem:[%s1168] ss:$2 sm:$0xff]
    %s1170 = scalar_lea.vmem %s590, 192 [#allocation2]
    %v1171 = vld [vmem:[%s1170] ss:$2 sm:$0xff]
    %s1172 = scalar_lea.vmem %s590, 240 [#allocation2]
    %v1173 = vld [vmem:[%s1172] ss:$2 sm:$0xff]
    %s1174 = scalar_lea.vmem %s590, 288 [#allocation2]
    %v1175 = vld [vmem:[%s1174] ss:$2 sm:$0xff]
    %s1176 = scalar_lea.vmem %s590, 336 [#allocation2]
    %v1177 = vld [vmem:[%s1176] ss:$2 sm:$0xff]
    %s1178 = scalar_lea.vmem %s590, 432 [#allocation2]
    %v1179 = vld [vmem:[%s1178] ss:$2 sm:$0xff]
    %s1180 = scalar_lea.vmem %s590, 480 [#allocation2]
    %v1181 = vld [vmem:[%s1180] ss:$2 sm:$0xff]
    %s1182 = scalar_lea.vmem %s590, 528 [#allocation2]
    %v1183 = vld [vmem:[%s1182] ss:$2 sm:$0xff]
    %s1184 = scalar_lea.vmem %s590, 576 [#allocation2]
    %v1185 = vld [vmem:[%s1184] ss:$2 sm:$0xff]
    %s1186 = scalar_lea.vmem %s590, 624 [#allocation2]
    %v1187 = vld [vmem:[%s1186] ss:$2 sm:$0xff]
    %s1188 = scalar_lea.vmem %s590, 672 [#allocation2]
    %v1189 = vld [vmem:[%s1188] ss:$2 sm:$0xff]
    %s1190 = scalar_lea.vmem %s590, 720 [#allocation2]
    %v1191 = vld [vmem:[%s1190] ss:$2 sm:$0xff]
    %s1192 = scalar_lea.vmem %s590, 768 [#allocation2]
    %v1193 = vld [vmem:[%s1192] ss:$2 sm:$0xff]
    %v1194 = vpack.c.bf16 %v1165, %v1163
    %v1195 = vpack.c.bf16 %v1169, %v1167
    %v1196 = vpack.c.bf16 %v1173, %v1171
    %v1197 = vpack.c.bf16 %v1177, %v1175
    %v1198 = vpack.c.bf16 %v1181, %v1179
    %v1199 = vpack.c.bf16 %v1185, %v1183
    %v1200 = vpack.c.bf16 %v1189, %v1187
    %v1201 = vpack.c.bf16 %v1193, %v1191
    %v1203 = vsel %vm43, %v1194, 0
    %v1206 = vsel %vm43, %v1195, 0
    %v1209 = vsel %vm43, %v1196, 0
    %v1212 = vsel %vm43, %v1197, 0
    %v1215 = vsel %vm43, %v1198, 0
    %v1218 = vsel %vm43, %v1199, 0
    %v1221 = vsel %vm43, %v1200, 0
    %v1224 = vsel %vm43, %v1201, 0
    %v1227 = vsel %vm758, %v584, 0
    %1229 = vmatprep.subr.bf16.mxu0 0
    %1230 = vmatpush1.bf16.msra.mxu0 %v1227
    %1231 = vmatprep.subr.bf16.mxu0 0
    %1232 = vmatpush1.bf16.msra.mxu0 0
    %1233 = vmatprep.subr.bf16.mxu0 0
    %1234 = vmatpush1.bf16.msra.mxu0 0
    %1235 = vmatprep.subr.bf16.mxu0 0
    %1236 = vmatpush1.bf16.msra.mxu0 0
    %1237 = vmatprep.subr.bf16.mxu0 0
    %1238 = vmatpush1.bf16.msra.mxu0 0
    %1239 = vmatprep.subr.bf16.mxu0 0
    %1240 = vmatpush1.bf16.msra.mxu0 0
    %1241 = vmatprep.subr.bf16.mxu0 0
    %1242 = vmatpush1.bf16.msra.mxu0 0
    %1243 = vmatprep.subr.bf16.mxu0 0
    %1244 = vmatpush1.bf16.msra.mxu0 0
    %1245 = vmatprep.subr.bf16.mxu0 0
    %1246 = vmatpush1.bf16.msra.mxu0 0
    %1247 = vmatprep.subr.bf16.mxu0 0
    %1248 = vmatpush1.bf16.msra.mxu0 0
    %1249 = vmatprep.subr.bf16.mxu0 0
    %1250 = vmatpush1.bf16.msra.mxu0 0
    %1251 = vmatprep.subr.bf16.mxu0 0
    %1252 = vmatpush1.bf16.msra.mxu0 0
    %1253 = vmatprep.subr.bf16.mxu0 0
    %1254 = vmatpush1.bf16.msra.mxu0 0
    %1255 = vmatprep.subr.bf16.mxu0 0
    %1256 = vmatpush1.bf16.msra.mxu0 0
    %1257 = vmatprep.subr.bf16.mxu0 0
    %1258 = vmatpush1.bf16.msra.mxu0 0
    %1259 = vmatprep.subr.bf16.mxu0 0
    %1260 = vmatpush1.bf16.msra.mxu0 0
    %1261 = vmatprep.mubr.bf16.mxu0 0
    %1262 = vmatmul.mubr.bf16.gmra.mrb[0].mxu0 %v1203
    %v1263 = vpop.f32.mrb[0].mxu0
    %v1264 = vadd.f32 0.0, %v1263
    %v1265 = vpop.f32.mrb[0].mxu0
    %v1266 = vpop.f32.mrb[0].mxu0
    %v1267 = vadd.f32 0.0, %v1266
    %v1268 = vpop.f32.mrb[0].mxu0
    %1269 = vmatprep.mubr.bf16.mxu0 0
    %1270 = vmatmul.mubr.bf16.gmra.mrb[0].mxu0 %v1206
    %v1271 = vpop.f32.mrb[0].mxu0
    %v1272 = vadd.f32 0.0, %v1271
    %v1273 = vpop.f32.mrb[0].mxu0
    %v1274 = vpop.f32.mrb[0].mxu0
    %v1275 = vadd.f32 0.0, %v1274
    %v1276 = vpop.f32.mrb[0].mxu0
    %1277 = vmatprep.mubr.bf16.mxu0 0
    %1278 = vmatmul.mubr.bf16.gmra.mrb[0].mxu0 %v1209
    %v1279 = vpop.f32.mrb[0].mxu0
    %v1280 = vadd.f32 0.0, %v1279
    %v1281 = vpop.f32.mrb[0].mxu0
    %v1282 = vpop.f32.mrb[0].mxu0
    %v1283 = vadd.f32 0.0, %v1282
    %v1284 = vpop.f32.mrb[0].mxu0
    %1285 = vmatprep.mubr.bf16.mxu0 0
    %1286 = vmatmul.mubr.bf16.gmra.mrb[0].mxu0 %v1212
    %v1287 = vpop.f32.mrb[0].mxu0
    %v1288 = vadd.f32 0.0, %v1287
    %v1289 = vpop.f32.mrb[0].mxu0
    %v1290 = vpop.f32.mrb[0].mxu0
    %v1291 = vadd.f32 0.0, %v1290
    %v1292 = vpop.f32.mrb[0].mxu0
    %1293 = vmatprep.mubr.bf16.mxu0 0
    %1294 = vmatmul.mubr.bf16.gmra.mrb[0].mxu0 %v1215
    %v1295 = vpop.f32.mrb[0].mxu0
    %v1296 = vadd.f32 0.0, %v1295
    %v1297 = vpop.f32.mrb[0].mxu0
    %v1298 = vpop.f32.mrb[0].mxu0
    %v1299 = vadd.f32 0.0, %v1298
    %v1300 = vpop.f32.mrb[0].mxu0
    %1301 = vmatprep.mubr.bf16.mxu0 0
    %1302 = vmatmul.mubr.bf16.gmra.mrb[0].mxu0 %v1218
    %v1303 = vpop.f32.mrb[0].mxu0
    %v1304 = vadd.f32 0.0, %v1303
    %v1305 = vpop.f32.mrb[0].mxu0
    %v1306 = vpop.f32.mrb[0].mxu0
    %v1307 = vadd.f32 0.0, %v1306
    %v1308 = vpop.f32.mrb[0].mxu0
    %1309 = vmatprep.mubr.bf16.mxu0 0
    %1310 = vmatmul.mubr.bf16.gmra.mrb[0].mxu0 %v1221
    %v1311 = vpop.f32.mrb[0].mxu0
    %v1312 = vadd.f32 0.0, %v1311
    %v1313 = vpop.f32.mrb[0].mxu0
    %v1314 = vpop.f32.mrb[0].mxu0
    %v1315 = vadd.f32 0.0, %v1314
    %v1316 = vpop.f32.mrb[0].mxu0
    %1317 = vmatprep.mubr.bf16.mxu0 0
    %1318 = vmatmul.mubr.bf16.gmra.mrb[0].mxu0 %v1224
    %v1319 = vpop.f32.mrb[0].mxu0
    %v1320 = vadd.f32 0.0, %v1319
    %v1321 = vpop.f32.mrb[0].mxu0
    %v1322 = vpop.f32.mrb[0].mxu0
    %v1323 = vadd.f32 0.0, %v1322
    %v1324 = vpop.f32.mrb[0].mxu0
    %1325 = vdwg.mxu0
    %v1326 = vadd.f32 %v1147, %v1264
    %v1327 = vadd.f32 %v1148, %v1267
    %v1328 = vadd.f32 %v1149, %v1272
    %v1329 = vadd.f32 %v1150, %v1275
    %v1330 = vadd.f32 %v1151, %v1280
    %v1331 = vadd.f32 %v1152, %v1283
    %v1332 = vadd.f32 %v1153, %v1288
    %v1333 = vadd.f32 %v1154, %v1291
    %v1334 = vadd.f32 %v1155, %v1296
    %v1335 = vadd.f32 %v1156, %v1299
    %v1336 = vadd.f32 %v1157, %v1304
    %v1337 = vadd.f32 %v1158, %v1307
    %v1338 = vadd.f32 %v1159, %v1312
    %v1339 = vadd.f32 %v1160, %v1315
    %v1340 = vadd.f32 %v1161, %v1320
    %v1341 = vadd.f32 %v1162, %v1323
    %s1342 = scalar_lea.vmem %s590, 1 [#allocation2]
    %v1343 = vld [vmem:[%s1342] ss:$2 sm:$0xff]
    %s1344 = scalar_lea.vmem %s590, 49 [#allocation2]
    %v1345 = vld [vmem:[%s1344] ss:$2 sm:$0xff]
    %s1346 = scalar_lea.vmem %s590, 97 [#allocation2]
    %v1347 = vld [vmem:[%s1346] ss:$2 sm:$0xff]
    %s1348 = scalar_lea.vmem %s590, 145 [#allocation2]
    %v1349 = vld [vmem:[%s1348] ss:$2 sm:$0xff]
    %s1350 = scalar_lea.vmem %s590, 193 [#allocation2]
    %v1351 = vld [vmem:[%s1350] ss:$2 sm:$0xff]
    %s1352 = scalar_lea.vmem %s590, 241 [#allocation2]
    %v1353 = vld [vmem:[%s1352] ss:$2 sm:$0xff]
    %s1354 = scalar_lea.vmem %s590, 289 [#allocation2]
    %v1355 = vld [vmem:[%s1354] ss:$2 sm:$0xff]
    %s1356 = scalar_lea.vmem %s590, 337 [#allocation2]
    %v1357 = vld [vmem:[%s1356] ss:$2 sm:$0xff]
    %s1358 = scalar_lea.vmem %s590, 433 [#allocation2]
    %v1359 = vld [vmem:[%s1358] ss:$2 sm:$0xff]
    %s1360 = scalar_lea.vmem %s590, 481 [#allocation2]
    %v1361 = vld [vmem:[%s1360] ss:$2 sm:$0xff]
    %s1362 = scalar_lea.vmem %s590, 529 [#allocation2]
    %v1363 = vld [vmem:[%s1362] ss:$2 sm:$0xff]
    %s1364 = scalar_lea.vmem %s590, 577 [#allocation2]
    %v1365 = vld [vmem:[%s1364] ss:$2 sm:$0xff]
    %s1366 = scalar_lea.vmem %s590, 625 [#allocation2]
    %v1367 = vld [vmem:[%s1366] ss:$2 sm:$0xff]
    %s1368 = scalar_lea.vmem %s590, 673 [#allocation2]
    %v1369 = vld [vmem:[%s1368] ss:$2 sm:$0xff]
    %s1370 = scalar_lea.vmem %s590, 721 [#allocation2]
    %v1371 = vld [vmem:[%s1370] ss:$2 sm:$0xff]
    %s1372 = scalar_lea.vmem %s590, 769 [#allocation2]
    %v1373 = vld [vmem:[%s1372] ss:$2 sm:$0xff]
    %v1374 = vpack.c.bf16 %v1345, %v1343
    %v1375 = vpack.c.bf16 %v1349, %v1347
    %v1376 = vpack.c.bf16 %v1353, %v1351
    %v1377 = vpack.c.bf16 %v1357, %v1355
    %v1378 = vpack.c.bf16 %v1361, %v1359
    %v1379 = vpack.c.bf16 %v1365, %v1363
    %v1380 = vpack.c.bf16 %v1369, %v1367
    %v1381 = vpack.c.bf16 %v1373, %v1371
    %v1383 = vsel %vm43, %v1374, 0
    %v1386 = vsel %vm43, %v1375, 0
    %v1389 = vsel %vm43, %v1376, 0
    %v1392 = vsel %vm43, %v1377, 0
    %v1395 = vsel %vm43, %v1378, 0
    %v1398 = vsel %vm43, %v1379, 0
    %v1401 = vsel %vm43, %v1380, 0
    %v1404 = vsel %vm43, %v1381, 0
    %v1407 = vsel %vm758, %v585, 0
    %1409 = vmatprep.subr.bf16.mxu0 0
    %1410 = vmatpush1.bf16.msra.mxu0 %v1407
    %1411 = vmatprep.subr.bf16.mxu0 0
    %1412 = vmatpush1.bf16.msra.mxu0 0
    %1413 = vmatprep.subr.bf16.mxu0 0
    %1414 = vmatpush1.bf16.msra.mxu0 0
    %1415 = vmatprep.subr.bf16.mxu0 0
    %1416 = vmatpush1.bf16.msra.mxu0 0
    %1417 = vmatprep.subr.bf16.mxu0 0
    %1418 = vmatpush1.bf16.msra.mxu0 0
    %1419 = vmatprep.subr.bf16.mxu0 0
    %1420 = vmatpush1.bf16.msra.mxu0 0
    %1421 = vmatprep.subr.bf16.mxu0 0
    %1422 = vmatpush1.bf16.msra.mxu0 0
    %1423 = vmatprep.subr.bf16.mxu0 0
    %1424 = vmatpush1.bf16.msra.mxu0 0
    %1425 = vmatprep.subr.bf16.mxu0 0
    %1426 = vmatpush1.bf16.msra.mxu0 0
    %1427 = vmatprep.subr.bf16.mxu0 0
    %1428 = vmatpush1.bf16.msra.mxu0 0
    %1429 = vmatprep.subr.bf16.mxu0 0
    %1430 = vmatpush1.bf16.msra.mxu0 0
    %1431 = vmatprep.subr.bf16.mxu0 0
    %1432 = vmatpush1.bf16.msra.mxu0 0
    %1433 = vmatprep.subr.bf16.mxu0 0
    %1434 = vmatpush1.bf16.msra.mxu0 0
    %1435 = vmatprep.subr.bf16.mxu0 0
    %1436 = vmatpush1.bf16.msra.mxu0 0
    %1437 = vmatprep.subr.bf16.mxu0 0
    %1438 = vmatpush1.bf16.msra.mxu0 0
    %1439 = vmatprep.subr.bf16.mxu0 0
    %1440 = vmatpush1.bf16.msra.mxu0 0
    %1441 = vmatprep.mubr.bf16.mxu0 0
    %1442 = vmatmul.mubr.bf16.gmra.mrb[0].mxu0 %v1383
    %v1443 = vpop.f32.mrb[0].mxu0
    %v1444 = vadd.f32 0.0, %v1443
    %v1445 = vpop.f32.mrb[0].mxu0
    %v1446 = vpop.f32.mrb[0].mxu0
    %v1447 = vadd.f32 0.0, %v1446
    %v1448 = vpop.f32.mrb[0].mxu0
    %1449 = vmatprep.mubr.bf16.mxu0 0
    %1450 = vmatmul.mubr.bf16.gmra.mrb[0].mxu0 %v1386
    %v1451 = vpop.f32.mrb[0].mxu0
    %v1452 = vadd.f32 0.0, %v1451
    %v1453 = vpop.f32.mrb[0].mxu0
    %v1454 = vpop.f32.mrb[0].mxu0
    %v1455 = vadd.f32 0.0, %v1454
    %v1456 = vpop.f32.mrb[0].mxu0
    %1457 = vmatprep.mubr.bf16.mxu0 0
    %1458 = vmatmul.mubr.bf16.gmra.mrb[0].mxu0 %v1389
    %v1459 = vpop.f32.mrb[0].mxu0
    %v1460 = vadd.f32 0.0, %v1459
    %v1461 = vpop.f32.mrb[0].mxu0
    %v1462 = vpop.f32.mrb[0].mxu0
    %v1463 = vadd.f32 0.0, %v1462
    %v1464 = vpop.f32.mrb[0].mxu0
    %1465 = vmatprep.mubr.bf16.mxu0 0
    %1466 = vmatmul.mubr.bf16.gmra.mrb[0].mxu0 %v1392
    %v1467 = vpop.f32.mrb[0].mxu0
    %v1468 = vadd.f32 0.0, %v1467
    %v1469 = vpop.f32.mrb[0].mxu0
    %v1470 = vpop.f32.mrb[0].mxu0
    %v1471 = vadd.f32 0.0, %v1470
    %v1472 = vpop.f32.mrb[0].mxu0
    %1473 = vmatprep.mubr.bf16.mxu0 0
    %1474 = vmatmul.mubr.bf16.gmra.mrb[0].mxu0 %v1395
    %v1475 = vpop.f32.mrb[0].mxu0
    %v1476 = vadd.f32 0.0, %v1475
    %v1477 = vpop.f32.mrb[0].mxu0
    %v1478 = vpop.f32.mrb[0].mxu0
    %v1479 = vadd.f32 0.0, %v1478
    %v1480 = vpop.f32.mrb[0].mxu0
    %1481 = vmatprep.mubr.bf16.mxu0 0
    %1482 = vmatmul.mubr.bf16.gmra.mrb[0].mxu0 %v1398
    %v1483 = vpop.f32.mrb[0].mxu0
    %v1484 = vadd.f32 0.0, %v1483
    %v1485 = vpop.f32.mrb[0].mxu0
    %v1486 = vpop.f32.mrb[0].mxu0
    %v1487 = vadd.f32 0.0, %v1486
    %v1488 = vpop.f32.mrb[0].mxu0
    %1489 = vmatprep.mubr.bf16.mxu0 0
    %1490 = vmatmul.mubr.bf16.gmra.mrb[0].mxu0 %v1401
    %v1491 = vpop.f32.mrb[0].mxu0
    %v1492 = vadd.f32 0.0, %v1491
    %v1493 = vpop.f32.mrb[0].mxu0
    %v1494 = vpop.f32.mrb[0].mxu0
    %v1495 = vadd.f32 0.0, %v1494
    %v1496 = vpop.f32.mrb[0].mxu0
    %1497 = vmatprep.mubr.bf16.mxu0 0
    %1498 = vmatmul.mubr.bf16.gmra.mrb[0].mxu0 %v1404
    %v1499 = vpop.f32.mrb[0].mxu0
    %v1500 = vadd.f32 0.0, %v1499
    %v1501 = vpop.f32.mrb[0].mxu0
    %v1502 = vpop.f32.mrb[0].mxu0
    %v1503 = vadd.f32 0.0, %v1502
    %v1504 = vpop.f32.mrb[0].mxu0
    %1505 = vdwg.mxu0
    %v1506 = vadd.f32 %v1326, %v1444
    %v1507 = vadd.f32 %v1327, %v1447
    %v1508 = vadd.f32 %v1328, %v1452
    %v1509 = vadd.f32 %v1329, %v1455
    %v1510 = vadd.f32 %v1330, %v1460
    %v1511 = vadd.f32 %v1331, %v1463
    %v1512 = vadd.f32 %v1332, %v1468
    %v1513 = vadd.f32 %v1333, %v1471
    %v1514 = vadd.f32 %v1334, %v1476
    %v1515 = vadd.f32 %v1335, %v1479
    %v1516 = vadd.f32 %v1336, %v1484
    %v1517 = vadd.f32 %v1337, %v1487
    %v1518 = vadd.f32 %v1338, %v1492
    %v1519 = vadd.f32 %v1339, %v1495
    %v1520 = vadd.f32 %v1340, %v1500
    %v1521 = vadd.f32 %v1341, %v1503
    %s1522 = scalar_lea.vmem %s590, 2 [#allocation2]
    %v1523 = vld [vmem:[%s1522] ss:$2 sm:$0xff]
    %s1524 = scalar_lea.vmem %s590, 50 [#allocation2]
    %v1525 = vld [vmem:[%s1524] ss:$2 sm:$0xff]
    %s1526 = scalar_lea.vmem %s590, 98 [#allocation2]
    %v1527 = vld [vmem:[%s1526] ss:$2 sm:$0xff]
    %s1528 = scalar_lea.vmem %s590, 146 [#allocation2]
    %v1529 = vld [vmem:[%s1528] ss:$2 sm:$0xff]
    %s1530 = scalar_lea.vmem %s590, 194 [#allocation2]
    %v1531 = vld [vmem:[%s1530] ss:$2 sm:$0xff]
    %s1532 = scalar_lea.vmem %s590, 242 [#allocation2]
    %v1533 = vld [vmem:[%s1532] ss:$2 sm:$0xff]
    %s1534 = scalar_lea.vmem %s590, 290 [#allocation2]
    %v1535 = vld [vmem:[%s1534] ss:$2 sm:$0xff]
    %s1536 = scalar_lea.vmem %s590, 338 [#allocation2]
    %v1537 = vld [vmem:[%s1536] ss:$2 sm:$0xff]
    %s1538 = scalar_lea.vmem %s590, 434 [#allocation2]
    %v1539 = vld [vmem:[%s1538] ss:$2 sm:$0xff]
    %s1540 = scalar_lea.vmem %s590, 482 [#allocation2]
    %v1541 = vld [vmem:[%s1540] ss:$2 sm:$0xff]
    %s1542 = scalar_lea.vmem %s590, 530 [#allocation2]
    %v1543 = vld [vmem:[%s1542] ss:$2 sm:$0xff]
    %s1544 = scalar_lea.vmem %s590, 578 [#allocation2]
    %v1545 = vld [vmem:[%s1544] ss:$2 sm:$0xff]
    %s1546 = scalar_lea.vmem %s590, 626 [#allocation2]
    %v1547 = vld [vmem:[%s1546] ss:$2 sm:$0xff]
    %s1548 = scalar_lea.vmem %s590, 674 [#allocation2]
    %v1549 = vld [vmem:[%s1548] ss:$2 sm:$0xff]
    %s1550 = scalar_lea.vmem %s590, 722 [#allocation2]
    %v1551 = vld [vmem:[%s1550] ss:$2 sm:$0xff]
    %s1552 = scalar_lea.vmem %s590, 770 [#allocation2]
    %v1553 = vld [vmem:[%s1552] ss:$2 sm:$0xff]
    %v1554 = vpack.c.bf16 %v1525, %v1523
    %v1555 = vpack.c.bf16 %v1529, %v1527
    %v1556 = vpack.c.bf16 %v1533, %v1531
    %v1557 = vpack.c.bf16 %v1537, %v1535
    %v1558 = vpack.c.bf16 %v1541, %v1539
    %v1559 = vpack.c.bf16 %v1545, %v1543
    %v1560 = vpack.c.bf16 %v1549, %v1547
    %v1561 = vpack.c.bf16 %v1553, %v1551
    %v1563 = vsel %vm43, %v1554, 0
    %v1566 = vsel %vm43, %v1555, 0
    %v1569 = vsel %vm43, %v1556, 0
    %v1572 = vsel %vm43, %v1557, 0
    %v1575 = vsel %vm43, %v1558, 0
    %v1578 = vsel %vm43, %v1559, 0
    %v1581 = vsel %vm43, %v1560, 0
    %v1584 = vsel %vm43, %v1561, 0
    %v1587 = vsel %vm758, %v586, 0
    %1589 = vmatprep.subr.bf16.mxu0 0
    %1590 = vmatpush1.bf16.msra.mxu0 %v1587
    %1591 = vmatprep.subr.bf16.mxu0 0
    %1592 = vmatpush1.bf16.msra.mxu0 0
    %1593 = vmatprep.subr.bf16.mxu0 0
    %1594 = vmatpush1.bf16.msra.mxu0 0
    %1595 = vmatprep.subr.bf16.mxu0 0
    %1596 = vmatpush1.bf16.msra.mxu0 0
    %1597 = vmatprep.subr.bf16.mxu0 0
    %1598 = vmatpush1.bf16.msra.mxu0 0
    %1599 = vmatprep.subr.bf16.mxu0 0
    %1600 = vmatpush1.bf16.msra.mxu0 0
    %1601 = vmatprep.subr.bf16.mxu0 0
    %1602 = vmatpush1.bf16.msra.mxu0 0
    %1603 = vmatprep.subr.bf16.mxu0 0
    %1604 = vmatpush1.bf16.msra.mxu0 0
    %1605 = vmatprep.subr.bf16.mxu0 0
    %1606 = vmatpush1.bf16.msra.mxu0 0
    %1607 = vmatprep.subr.bf16.mxu0 0
    %1608 = vmatpush1.bf16.msra.mxu0 0
    %1609 = vmatprep.subr.bf16.mxu0 0
    %1610 = vmatpush1.bf16.msra.mxu0 0
    %1611 = vmatprep.subr.bf16.mxu0 0
    %1612 = vmatpush1.bf16.msra.mxu0 0
    %1613 = vmatprep.subr.bf16.mxu0 0
    %1614 = vmatpush1.bf16.msra.mxu0 0
    %1615 = vmatprep.subr.bf16.mxu0 0
    %1616 = vmatpush1.bf16.msra.mxu0 0
    %1617 = vmatprep.subr.bf16.mxu0 0
    %1618 = vmatpush1.bf16.msra.mxu0 0
    %1619 = vmatprep.subr.bf16.mxu0 0
    %1620 = vmatpush1.bf16.msra.mxu0 0
    %1621 = vmatprep.mubr.bf16.mxu0 0
    %1622 = vmatmul.mubr.bf16.gmra.mrb[0].mxu0 %v1563
    %v1623 = vpop.f32.mrb[0].mxu0
    %v1624 = vadd.f32 0.0, %v1623
    %v1625 = vpop.f32.mrb[0].mxu0
    %v1626 = vpop.f32.mrb[0].mxu0
    %v1627 = vadd.f32 0.0, %v1626
    %v1628 = vpop.f32.mrb[0].mxu0
    %1629 = vmatprep.mubr.bf16.mxu0 0
    %1630 = vmatmul.mubr.bf16.gmra.mrb[0].mxu0 %v1566
    %v1631 = vpop.f32.mrb[0].mxu0
    %v1632 = vadd.f32 0.0, %v1631
    %v1633 = vpop.f32.mrb[0].mxu0
    %v1634 = vpop.f32.mrb[0].mxu0
    %v1635 = vadd.f32 0.0, %v1634
    %v1636 = vpop.f32.mrb[0].mxu0
    %1637 = vmatprep.mubr.bf16.mxu0 0
    %1638 = vmatmul.mubr.bf16.gmra.mrb[0].mxu0 %v1569
    %v1639 = vpop.f32.mrb[0].mxu0
    %v1640 = vadd.f32 0.0, %v1639
    %v1641 = vpop.f32.mrb[0].mxu0
    %v1642 = vpop.f32.mrb[0].mxu0
    %v1643 = vadd.f32 0.0, %v1642
    %v1644 = vpop.f32.mrb[0].mxu0
    %1645 = vmatprep.mubr.bf16.mxu0 0
    %1646 = vmatmul.mubr.bf16.gmra.mrb[0].mxu0 %v1572
    %v1647 = vpop.f32.mrb[0].mxu0
    %v1648 = vadd.f32 0.0, %v1647
    %v1649 = vpop.f32.mrb[0].mxu0
    %v1650 = vpop.f32.mrb[0].mxu0
    %v1651 = vadd.f32 0.0, %v1650
    %v1652 = vpop.f32.mrb[0].mxu0
    %1653 = vmatprep.mubr.bf16.mxu0 0
    %1654 = vmatmul.mubr.bf16.gmra.mrb[0].mxu0 %v1575
    %v1655 = vpop.f32.mrb[0].mxu0
    %v1656 = vadd.f32 0.0, %v1655
    %v1657 = vpop.f32.mrb[0].mxu0
    %v1658 = vpop.f32.mrb[0].mxu0
    %v1659 = vadd.f32 0.0, %v1658
    %v1660 = vpop.f32.mrb[0].mxu0
    %1661 = vmatprep.mubr.bf16.mxu0 0
    %1662 = vmatmul.mubr.bf16.gmra.mrb[0].mxu0 %v1578
    %v1663 = vpop.f32.mrb[0].mxu0
    %v1664 = vadd.f32 0.0, %v1663
    %v1665 = vpop.f32.mrb[0].mxu0
    %v1666 = vpop.f32.mrb[0].mxu0
    %v1667 = vadd.f32 0.0, %v1666
    %v1668 = vpop.f32.mrb[0].mxu0
    %1669 = vmatprep.mubr.bf16.mxu0 0
    %1670 = vmatmul.mubr.bf16.gmra.mrb[0].mxu0 %v1581
    %v1671 = vpop.f32.mrb[0].mxu0
    %v1672 = vadd.f32 0.0, %v1671
    %v1673 = vpop.f32.mrb[0].mxu0
    %v1674 = vpop.f32.mrb[0].mxu0
    %v1675 = vadd.f32 0.0, %v1674
    %v1676 = vpop.f32.mrb[0].mxu0
    %1677 = vmatprep.mubr.bf16.mxu0 0
    %1678 = vmatmul.mubr.bf16.gmra.mrb[0].mxu0 %v1584
    %v1679 = vpop.f32.mrb[0].mxu0
    %v1680 = vadd.f32 0.0, %v1679
    %v1681 = vpop.f32.mrb[0].mxu0
    %v1682 = vpop.f32.mrb[0].mxu0
    %v1683 = vadd.f32 0.0, %v1682
    %v1684 = vpop.f32.mrb[0].mxu0
    %1685 = vdwg.mxu0
    %v1686 = vadd.f32 %v1506, %v1624
    %v1687 = vadd.f32 %v1507, %v1627
    %v1688 = vadd.f32 %v1508, %v1632
    %v1689 = vadd.f32 %v1509, %v1635
    %v1690 = vadd.f32 %v1510, %v1640
    %v1691 = vadd.f32 %v1511, %v1643
    %v1692 = vadd.f32 %v1512, %v1648
    %v1693 = vadd.f32 %v1513, %v1651
    %v1694 = vadd.f32 %v1514, %v1656
    %v1695 = vadd.f32 %v1515, %v1659
    %v1696 = vadd.f32 %v1516, %v1664
    %v1697 = vadd.f32 %v1517, %v1667
    %v1698 = vadd.f32 %v1518, %v1672
    %v1699 = vadd.f32 %v1519, %v1675
    %v1700 = vadd.f32 %v1520, %v1680
    %v1701 = vadd.f32 %v1521, %v1683
    %s1702 = scalar_lea.vmem [#allocation2], 48
    %v1703 = vld [vmem:[%s1702] ss:$2 sm:$0xff]
    %s1704 = scalar_lea.vmem %s1702, 48 [#allocation2]
    %v1705 = vld [vmem:[%s1704] ss:$2 sm:$0xff]
    %s1706 = scalar_lea.vmem %s1702, 96 [#allocation2]
    %v1707 = vld [vmem:[%s1706] ss:$2 sm:$0xff]
    %s1708 = scalar_lea.vmem %s1702, 144 [#allocation2]
    %v1709 = vld [vmem:[%s1708] ss:$2 sm:$0xff]
    %s1710 = scalar_lea.vmem %s1702, 192 [#allocation2]
    %v1711 = vld [vmem:[%s1710] ss:$2 sm:$0xff]
    %s1712 = scalar_lea.vmem %s1702, 240 [#allocation2]
    %v1713 = vld [vmem:[%s1712] ss:$2 sm:$0xff]
    %s1714 = scalar_lea.vmem %s1702, 288 [#allocation2]
    %v1715 = vld [vmem:[%s1714] ss:$2 sm:$0xff]
    %s1716 = scalar_lea.vmem %s1702, 336 [#allocation2]
    %v1717 = vld [vmem:[%s1716] ss:$2 sm:$0xff]
    %s1718 = scalar_lea.vmem %s1702, 432 [#allocation2]
    %v1719 = vld [vmem:[%s1718] ss:$2 sm:$0xff]
    %s1720 = scalar_lea.vmem %s1702, 480 [#allocation2]
    %v1721 = vld [vmem:[%s1720] ss:$2 sm:$0xff]
    %s1722 = scalar_lea.vmem %s1702, 528 [#allocation2]
    %v1723 = vld [vmem:[%s1722] ss:$2 sm:$0xff]
    %s1724 = scalar_lea.vmem %s1702, 576 [#allocation2]
    %v1725 = vld [vmem:[%s1724] ss:$2 sm:$0xff]
    %s1726 = scalar_lea.vmem %s1702, 624 [#allocation2]
    %v1727 = vld [vmem:[%s1726] ss:$2 sm:$0xff]
    %s1728 = scalar_lea.vmem %s1702, 672 [#allocation2]
    %v1729 = vld [vmem:[%s1728] ss:$2 sm:$0xff]
    %s1730 = scalar_lea.vmem %s1702, 720 [#allocation2]
    %v1731 = vld [vmem:[%s1730] ss:$2 sm:$0xff]
    %s1732 = scalar_lea.vmem %s1702, 768 [#allocation2]
    %v1733 = vld [vmem:[%s1732] ss:$2 sm:$0xff]
    %v1734 = vpack.c.bf16 %v1705, %v1703
    %v1735 = vpack.c.bf16 %v1709, %v1707
    %v1736 = vpack.c.bf16 %v1713, %v1711
    %v1737 = vpack.c.bf16 %v1717, %v1715
    %v1738 = vpack.c.bf16 %v1721, %v1719
    %v1739 = vpack.c.bf16 %v1725, %v1723
    %v1740 = vpack.c.bf16 %v1729, %v1727
    %v1741 = vpack.c.bf16 %v1733, %v1731
    %v1743 = vsel %vm43, %v1734, 0
    %v1746 = vsel %vm43, %v1735, 0
    %v1749 = vsel %vm43, %v1736, 0
    %v1752 = vsel %vm43, %v1737, 0
    %v1755 = vsel %vm43, %v1738, 0
    %v1758 = vsel %vm43, %v1739, 0
    %v1761 = vsel %vm43, %v1740, 0
    %v1764 = vsel %vm43, %v1741, 0
    %v1767 = vsel %vm758, %v587, 0
    %1769 = vmatprep.subr.bf16.mxu0 0
    %1770 = vmatpush1.bf16.msra.mxu0 %v1767
    %1771 = vmatprep.subr.bf16.mxu0 0
    %1772 = vmatpush1.bf16.msra.mxu0 0
    %1773 = vmatprep.subr.bf16.mxu0 0
    %1774 = vmatpush1.bf16.msra.mxu0 0
    %1775 = vmatprep.subr.bf16.mxu0 0
    %1776 = vmatpush1.bf16.msra.mxu0 0
    %1777 = vmatprep.subr.bf16.mxu0 0
    %1778 = vmatpush1.bf16.msra.mxu0 0
    %1779 = vmatprep.subr.bf16.mxu0 0
    %1780 = vmatpush1.bf16.msra.mxu0 0
    %1781 = vmatprep.subr.bf16.mxu0 0
    %1782 = vmatpush1.bf16.msra.mxu0 0
    %1783 = vmatprep.subr.bf16.mxu0 0
    %1784 = vmatpush1.bf16.msra.mxu0 0
    %1785 = vmatprep.subr.bf16.mxu0 0
    %1786 = vmatpush1.bf16.msra.mxu0 0
    %1787 = vmatprep.subr.bf16.mxu0 0
    %1788 = vmatpush1.bf16.msra.mxu0 0
    %1789 = vmatprep.subr.bf16.mxu0 0
    %1790 = vmatpush1.bf16.msra.mxu0 0
    %1791 = vmatprep.subr.bf16.mxu0 0
    %1792 = vmatpush1.bf16.msra.mxu0 0
    %1793 = vmatprep.subr.bf16.mxu0 0
    %1794 = vmatpush1.bf16.msra.mxu0 0
    %1795 = vmatprep.subr.bf16.mxu0 0
    %1796 = vmatpush1.bf16.msra.mxu0 0
    %1797 = vmatprep.subr.bf16.mxu0 0
    %1798 = vmatpush1.bf16.msra.mxu0 0
    %1799 = vmatprep.subr.bf16.mxu0 0
    %1800 = vmatpush1.bf16.msra.mxu0 0
    %1801 = vmatprep.mubr.bf16.mxu0 0
    %1802 = vmatmul.mubr.bf16.gmra.mrb[0].mxu0 %v1743
    %v1803 = vpop.f32.mrb[0].mxu0
    %v1804 = vadd.f32 0.0, %v1803
    %v1805 = vpop.f32.mrb[0].mxu0
    %v1806 = vpop.f32.mrb[0].mxu0
    %v1807 = vadd.f32 0.0, %v1806
    %v1808 = vpop.f32.mrb[0].mxu0
    %1809 = vmatprep.mubr.bf16.mxu0 0
    %1810 = vmatmul.mubr.bf16.gmra.mrb[0].mxu0 %v1746
    %v1811 = vpop.f32.mrb[0].mxu0
    %v1812 = vadd.f32 0.0, %v1811
    %v1813 = vpop.f32.mrb[0].mxu0
    %v1814 = vpop.f32.mrb[0].mxu0
    %v1815 = vadd.f32 0.0, %v1814
    %v1816 = vpop.f32.mrb[0].mxu0
    %1817 = vmatprep.mubr.bf16.mxu0 0
    %1818 = vmatmul.mubr.bf16.gmra.mrb[0].mxu0 %v1749
    %v1819 = vpop.f32.mrb[0].mxu0
    %v1820 = vadd.f32 0.0, %v1819
    %v1821 = vpop.f32.mrb[0].mxu0
    %v1822 = vpop.f32.mrb[0].mxu0
    %v1823 = vadd.f32 0.0, %v1822
    %v1824 = vpop.f32.mrb[0].mxu0
    %1825 = vmatprep.mubr.bf16.mxu0 0
    %1826 = vmatmul.mubr.bf16.gmra.mrb[0].mxu0 %v1752
    %v1827 = vpop.f32.mrb[0].mxu0
    %v1828 = vadd.f32 0.0, %v1827
    %v1829 = vpop.f32.mrb[0].mxu0
    %v1830 = vpop.f32.mrb[0].mxu0
    %v1831 = vadd.f32 0.0, %v1830
    %v1832 = vpop.f32.mrb[0].mxu0
    %1833 = vmatprep.mubr.bf16.mxu0 0
    %1834 = vmatmul.mubr.bf16.gmra.mrb[0].mxu0 %v1755
    %v1835 = vpop.f32.mrb[0].mxu0
    %v1836 = vadd.f32 0.0, %v1835
    %v1837 = vpop.f32.mrb[0].mxu0
    %v1838 = vpop.f32.mrb[0].mxu0
    %v1839 = vadd.f32 0.0, %v1838
    %v1840 = vpop.f32.mrb[0].mxu0
    %1841 = vmatprep.mubr.bf16.mxu0 0
    %1842 = vmatmul.mubr.bf16.gmra.mrb[0].mxu0 %v1758
    %v1843 = vpop.f32.mrb[0].mxu0
    %v1844 = vadd.f32 0.0, %v1843
    %v1845 = vpop.f32.mrb[0].mxu0
    %v1846 = vpop.f32.mrb[0].mxu0
    %v1847 = vadd.f32 0.0, %v1846
    %v1848 = vpop.f32.mrb[0].mxu0
    %1849 = vmatprep.mubr.bf16.mxu0 0
    %1850 = vmatmul.mubr.bf16.gmra.mrb[0].mxu0 %v1761
    %v1851 = vpop.f32.mrb[0].mxu0
    %v1852 = vadd.f32 0.0, %v1851
    %v1853 = vpop.f32.mrb[0].mxu0
    %v1854 = vpop.f32.mrb[0].mxu0
    %v1855 = vadd.f32 0.0, %v1854
    %v1856 = vpop.f32.mrb[0].mxu0
    %1857 = vmatprep.mubr.bf16.mxu0 0
    %1858 = vmatmul.mubr.bf16.gmra.mrb[0].mxu0 %v1764
    %v1859 = vpop.f32.mrb[0].mxu0
    %v1860 = vadd.f32 0.0, %v1859
    %v1861 = vpop.f32.mrb[0].mxu0
    %v1862 = vpop.f32.mrb[0].mxu0
    %v1863 = vadd.f32 0.0, %v1862
    %v1864 = vpop.f32.mrb[0].mxu0
    %1865 = vdwg.mxu0
    %v1866 = vadd.f32 %v1686, %v1804
    %v1867 = vadd.f32 %v1687, %v1807
    %v1868 = vadd.f32 %v1688, %v1812
    %v1869 = vadd.f32 %v1689, %v1815
    %v1870 = vadd.f32 %v1690, %v1820
    %v1871 = vadd.f32 %v1691, %v1823
    %v1872 = vadd.f32 %v1692, %v1828
    %v1873 = vadd.f32 %v1693, %v1831
    %v1874 = vadd.f32 %v1694, %v1836
    %v1875 = vadd.f32 %v1695, %v1839
    %v1876 = vadd.f32 %v1696, %v1844
    %v1877 = vadd.f32 %v1697, %v1847
    %v1878 = vadd.f32 %v1698, %v1852
    %v1879 = vadd.f32 %v1699, %v1855
    %v1880 = vadd.f32 %v1700, %v1860
    %v1881 = vadd.f32 %v1701, %v1863
    %s1882 = scalar_lea.vmem %s1702, 1 [#allocation2]
    %v1883 = vld [vmem:[%s1882] ss:$2 sm:$0xff]
    %s1884 = scalar_lea.vmem %s1702, 49 [#allocation2]
    %v1885 = vld [vmem:[%s1884] ss:$2 sm:$0xff]
    %s1886 = scalar_lea.vmem %s1702, 97 [#allocation2]
    %v1887 = vld [vmem:[%s1886] ss:$2 sm:$0xff]
    %s1888 = scalar_lea.vmem %s1702, 145 [#allocation2]
    %v1889 = vld [vmem:[%s1888] ss:$2 sm:$0xff]
    %s1890 = scalar_lea.vmem %s1702, 193 [#allocation2]
    %v1891 = vld [vmem:[%s1890] ss:$2 sm:$0xff]
    %s1892 = scalar_lea.vmem %s1702, 241 [#allocation2]
    %v1893 = vld [vmem:[%s1892] ss:$2 sm:$0xff]
    %s1894 = scalar_lea.vmem %s1702, 289 [#allocation2]
    %v1895 = vld [vmem:[%s1894] ss:$2 sm:$0xff]
    %s1896 = scalar_lea.vmem %s1702, 337 [#allocation2]
    %v1897 = vld [vmem:[%s1896] ss:$2 sm:$0xff]
    %s1898 = scalar_lea.vmem %s1702, 433 [#allocation2]
    %v1899 = vld [vmem:[%s1898] ss:$2 sm:$0xff]
    %s1900 = scalar_lea.vmem %s1702, 481 [#allocation2]
    %v1901 = vld [vmem:[%s1900] ss:$2 sm:$0xff]
    %s1902 = scalar_lea.vmem %s1702, 529 [#allocation2]
    %v1903 = vld [vmem:[%s1902] ss:$2 sm:$0xff]
    %s1904 = scalar_lea.vmem %s1702, 577 [#allocation2]
    %v1905 = vld [vmem:[%s1904] ss:$2 sm:$0xff]
    %s1906 = scalar_lea.vmem %s1702, 625 [#allocation2]
    %v1907 = vld [vmem:[%s1906] ss:$2 sm:$0xff]
    %s1908 = scalar_lea.vmem %s1702, 673 [#allocation2]
    %v1909 = vld [vmem:[%s1908] ss:$2 sm:$0xff]
    %s1910 = scalar_lea.vmem %s1702, 721 [#allocation2]
    %v1911 = vld [vmem:[%s1910] ss:$2 sm:$0xff]
    %s1912 = scalar_lea.vmem %s1702, 769 [#allocation2]
    %v1913 = vld [vmem:[%s1912] ss:$2 sm:$0xff]
    %v1914 = vpack.c.bf16 %v1885, %v1883
    %v1915 = vpack.c.bf16 %v1889, %v1887
    %v1916 = vpack.c.bf16 %v1893, %v1891
    %v1917 = vpack.c.bf16 %v1897, %v1895
    %v1918 = vpack.c.bf16 %v1901, %v1899
    %v1919 = vpack.c.bf16 %v1905, %v1903
    %v1920 = vpack.c.bf16 %v1909, %v1907
    %v1921 = vpack.c.bf16 %v1913, %v1911
    %v1923 = vsel %vm43, %v1914, 0
    %v1926 = vsel %vm43, %v1915, 0
    %v1929 = vsel %vm43, %v1916, 0
    %v1932 = vsel %vm43, %v1917, 0
    %v1935 = vsel %vm43, %v1918, 0
    %v1938 = vsel %vm43, %v1919, 0
    %v1941 = vsel %vm43, %v1920, 0
    %v1944 = vsel %vm43, %v1921, 0
    %v1947 = vsel %vm758, %v588, 0
    %1949 = vmatprep.subr.bf16.mxu0 0
    %1950 = vmatpush1.bf16.msra.mxu0 %v1947
    %1951 = vmatprep.subr.bf16.mxu0 0
    %1952 = vmatpush1.bf16.msra.mxu0 0
    %1953 = vmatprep.subr.bf16.mxu0 0
    %1954 = vmatpush1.bf16.msra.mxu0 0
    %1955 = vmatprep.subr.bf16.mxu0 0
    %1956 = vmatpush1.bf16.msra.mxu0 0
    %1957 = vmatprep.subr.bf16.mxu0 0
    %1958 = vmatpush1.bf16.msra.mxu0 0
    %1959 = vmatprep.subr.bf16.mxu0 0
    %1960 = vmatpush1.bf16.msra.mxu0 0
    %1961 = vmatprep.subr.bf16.mxu0 0
    %1962 = vmatpush1.bf16.msra.mxu0 0
    %1963 = vmatprep.subr.bf16.mxu0 0
    %1964 = vmatpush1.bf16.msra.mxu0 0
    %1965 = vmatprep.subr.bf16.mxu0 0
    %1966 = vmatpush1.bf16.msra.mxu0 0
    %1967 = vmatprep.subr.bf16.mxu0 0
    %1968 = vmatpush1.bf16.msra.mxu0 0
    %1969 = vmatprep.subr.bf16.mxu0 0
    %1970 = vmatpush1.bf16.msra.mxu0 0
    %1971 = vmatprep.subr.bf16.mxu0 0
    %1972 = vmatpush1.bf16.msra.mxu0 0
    %1973 = vmatprep.subr.bf16.mxu0 0
    %1974 = vmatpush1.bf16.msra.mxu0 0
    %1975 = vmatprep.subr.bf16.mxu0 0
    %1976 = vmatpush1.bf16.msra.mxu0 0
    %1977 = vmatprep.subr.bf16.mxu0 0
    %1978 = vmatpush1.bf16.msra.mxu0 0
    %1979 = vmatprep.subr.bf16.mxu0 0
    %1980 = vmatpush1.bf16.msra.mxu0 0
    %1981 = vmatprep.mubr.bf16.mxu0 0
    %1982 = vmatmul.mubr.bf16.gmra.mrb[0].mxu0 %v1923
    %v1983 = vpop.f32.mrb[0].mxu0
    %v1984 = vadd.f32 0.0, %v1983
    %v1985 = vpop.f32.mrb[0].mxu0
    %v1986 = vpop.f32.mrb[0].mxu0
    %v1987 = vadd.f32 0.0, %v1986
    %v1988 = vpop.f32.mrb[0].mxu0
    %1989 = vmatprep.mubr.bf16.mxu0 0
    %1990 = vmatmul.mubr.bf16.gmra.mrb[0].mxu0 %v1926
    %v1991 = vpop.f32.mrb[0].mxu0
    %v1992 = vadd.f32 0.0, %v1991
    %v1993 = vpop.f32.mrb[0].mxu0
    %v1994 = vpop.f32.mrb[0].mxu0
    %v1995 = vadd.f32 0.0, %v1994
    %v1996 = vpop.f32.mrb[0].mxu0
    %1997 = vmatprep.mubr.bf16.mxu0 0
    %1998 = vmatmul.mubr.bf16.gmra.mrb[0].mxu0 %v1929
    %v1999 = vpop.f32.mrb[0].mxu0
    %v2000 = vadd.f32 0.0, %v1999
    %v2001 = vpop.f32.mrb[0].mxu0
    %v2002 = vpop.f32.mrb[0].mxu0
    %v2003 = vadd.f32 0.0, %v2002
    %v2004 = vpop.f32.mrb[0].mxu0
    %2005 = vmatprep.mubr.bf16.mxu0 0
    %2006 = vmatmul.mubr.bf16.gmra.mrb[0].mxu0 %v1932
    %v2007 = vpop.f32.mrb[0].mxu0
    %v2008 = vadd.f32 0.0, %v2007
    %v2009 = vpop.f32.mrb[0].mxu0
    %v2010 = vpop.f32.mrb[0].mxu0
    %v2011 = vadd.f32 0.0, %v2010
    %v2012 = vpop.f32.mrb[0].mxu0
    %2013 = vmatprep.mubr.bf16.mxu0 0
    %2014 = vmatmul.mubr.bf16.gmra.mrb[0].mxu0 %v1935
    %v2015 = vpop.f32.mrb[0].mxu0
    %v2016 = vadd.f32 0.0, %v2015
    %v2017 = vpop.f32.mrb[0].mxu0
    %v2018 = vpop.f32.mrb[0].mxu0
    %v2019 = vadd.f32 0.0, %v2018
    %v2020 = vpop.f32.mrb[0].mxu0
    %2021 = vmatprep.mubr.bf16.mxu0 0
    %2022 = vmatmul.mubr.bf16.gmra.mrb[0].mxu0 %v1938
    %v2023 = vpop.f32.mrb[0].mxu0
    %v2024 = vadd.f32 0.0, %v2023
    %v2025 = vpop.f32.mrb[0].mxu0
    %v2026 = vpop.f32.mrb[0].mxu0
    %v2027 = vadd.f32 0.0, %v2026
    %v2028 = vpop.f32.mrb[0].mxu0
    %2029 = vmatprep.mubr.bf16.mxu0 0
    %2030 = vmatmul.mubr.bf16.gmra.mrb[0].mxu0 %v1941
    %v2031 = vpop.f32.mrb[0].mxu0
    %v2032 = vadd.f32 0.0, %v2031
    %v2033 = vpop.f32.mrb[0].mxu0
    %v2034 = vpop.f32.mrb[0].mxu0
    %v2035 = vadd.f32 0.0, %v2034
    %v2036 = vpop.f32.mrb[0].mxu0
    %2037 = vmatprep.mubr.bf16.mxu0 0
    %2038 = vmatmul.mubr.bf16.gmra.mrb[0].mxu0 %v1944
    %v2039 = vpop.f32.mrb[0].mxu0
    %v2040 = vadd.f32 0.0, %v2039
    %v2041 = vpop.f32.mrb[0].mxu0
    %v2042 = vpop.f32.mrb[0].mxu0
    %v2043 = vadd.f32 0.0, %v2042
    %v2044 = vpop.f32.mrb[0].mxu0
    %2045 = vdwg.mxu0
    %v2046 = vadd.f32 %v1866, %v1984
    %v2047 = vadd.f32 %v1867, %v1987
    %v2048 = vadd.f32 %v1868, %v1992
    %v2049 = vadd.f32 %v1869, %v1995
    %v2050 = vadd.f32 %v1870, %v2000
    %v2051 = vadd.f32 %v1871, %v2003
    %v2052 = vadd.f32 %v1872, %v2008
    %v2053 = vadd.f32 %v1873, %v2011
    %v2054 = vadd.f32 %v1874, %v2016
    %v2055 = vadd.f32 %v1875, %v2019
    %v2056 = vadd.f32 %v1876, %v2024
    %v2057 = vadd.f32 %v1877, %v2027
    %v2058 = vadd.f32 %v1878, %v2032
    %v2059 = vadd.f32 %v1879, %v2035
    %v2060 = vadd.f32 %v1880, %v2040
    %v2061 = vadd.f32 %v1881, %v2043
    %s2062 = scalar_lea.vmem %s1702, 2 [#allocation2]
    %v2063 = vld [vmem:[%s2062] ss:$2 sm:$0xff]
    %s2064 = scalar_lea.vmem %s1702, 50 [#allocation2]
    %v2065 = vld [vmem:[%s2064] ss:$2 sm:$0xff]
    %s2066 = scalar_lea.vmem %s1702, 98 [#allocation2]
    %v2067 = vld [vmem:[%s2066] ss:$2 sm:$0xff]
    %s2068 = scalar_lea.vmem %s1702, 146 [#allocation2]
    %v2069 = vld [vmem:[%s2068] ss:$2 sm:$0xff]
    %s2070 = scalar_lea.vmem %s1702, 194 [#allocation2]
    %v2071 = vld [vmem:[%s2070] ss:$2 sm:$0xff]
    %s2072 = scalar_lea.vmem %s1702, 242 [#allocation2]
    %v2073 = vld [vmem:[%s2072] ss:$2 sm:$0xff]
    %s2074 = scalar_lea.vmem %s1702, 290 [#allocation2]
    %v2075 = vld [vmem:[%s2074] ss:$2 sm:$0xff]
    %s2076 = scalar_lea.vmem %s1702, 338 [#allocation2]
    %v2077 = vld [vmem:[%s2076] ss:$2 sm:$0xff]
    %s2078 = scalar_lea.vmem %s1702, 434 [#allocation2]
    %v2079 = vld [vmem:[%s2078] ss:$2 sm:$0xff]
    %s2080 = scalar_lea.vmem %s1702, 482 [#allocation2]
    %v2081 = vld [vmem:[%s2080] ss:$2 sm:$0xff]
    %s2082 = scalar_lea.vmem %s1702, 530 [#allocation2]
    %v2083 = vld [vmem:[%s2082] ss:$2 sm:$0xff]
    %s2084 = scalar_lea.vmem %s1702, 578 [#allocation2]
    %v2085 = vld [vmem:[%s2084] ss:$2 sm:$0xff]
    %s2086 = scalar_lea.vmem %s1702, 626 [#allocation2]
    %v2087 = vld [vmem:[%s2086] ss:$2 sm:$0xff]
    %s2088 = scalar_lea.vmem %s1702, 674 [#allocation2]
    %v2089 = vld [vmem:[%s2088] ss:$2 sm:$0xff]
    %s2090 = scalar_lea.vmem %s1702, 722 [#allocation2]
    %v2091 = vld [vmem:[%s2090] ss:$2 sm:$0xff]
    %s2092 = scalar_lea.vmem %s1702, 770 [#allocation2]
    %v2093 = vld [vmem:[%s2092] ss:$2 sm:$0xff]
    %v2094 = vpack.c.bf16 %v2065, %v2063
    %v2095 = vpack.c.bf16 %v2069, %v2067
    %v2096 = vpack.c.bf16 %v2073, %v2071
    %v2097 = vpack.c.bf16 %v2077, %v2075
    %v2098 = vpack.c.bf16 %v2081, %v2079
    %v2099 = vpack.c.bf16 %v2085, %v2083
    %v2100 = vpack.c.bf16 %v2089, %v2087
    %v2101 = vpack.c.bf16 %v2093, %v2091
    %v2103 = vsel %vm43, %v2094, 0
    %v2106 = vsel %vm43, %v2095, 0
    %v2109 = vsel %vm43, %v2096, 0
    %v2112 = vsel %vm43, %v2097, 0
    %v2115 = vsel %vm43, %v2098, 0
    %v2118 = vsel %vm43, %v2099, 0
    %v2121 = vsel %vm43, %v2100, 0
    %v2124 = vsel %vm43, %v2101, 0
    %v2127 = vsel %vm758, %v589, 0
    %2129 = vmatprep.subr.bf16.mxu0 0
    %2130 = vmatpush1.bf16.msra.mxu0 %v2127
    %2131 = vmatprep.subr.bf16.mxu0 0
    %2132 = vmatpush1.bf16.msra.mxu0 0
    %2133 = vmatprep.subr.bf16.mxu0 0
    %2134 = vmatpush1.bf16.msra.mxu0 0
    %2135 = vmatprep.subr.bf16.mxu0 0
    %2136 = vmatpush1.bf16.msra.mxu0 0
    %2137 = vmatprep.subr.bf16.mxu0 0
    %2138 = vmatpush1.bf16.msra.mxu0 0
    %2139 = vmatprep.subr.bf16.mxu0 0
    %2140 = vmatpush1.bf16.msra.mxu0 0
    %2141 = vmatprep.subr.bf16.mxu0 0
    %2142 = vmatpush1.bf16.msra.mxu0 0
    %2143 = vmatprep.subr.bf16.mxu0 0
    %2144 = vmatpush1.bf16.msra.mxu0 0
    %2145 = vmatprep.subr.bf16.mxu0 0
    %2146 = vmatpush1.bf16.msra.mxu0 0
    %2147 = vmatprep.subr.bf16.mxu0 0
    %2148 = vmatpush1.bf16.msra.mxu0 0
    %2149 = vmatprep.subr.bf16.mxu0 0
    %2150 = vmatpush1.bf16.msra.mxu0 0
    %2151 = vmatprep.subr.bf16.mxu0 0
    %2152 = vmatpush1.bf16.msra.mxu0 0
    %2153 = vmatprep.subr.bf16.mxu0 0
    %2154 = vmatpush1.bf16.msra.mxu0 0
    %2155 = vmatprep.subr.bf16.mxu0 0
    %2156 = vmatpush1.bf16.msra.mxu0 0
    %2157 = vmatprep.subr.bf16.mxu0 0
    %2158 = vmatpush1.bf16.msra.mxu0 0
    %2159 = vmatprep.subr.bf16.mxu0 0
    %2160 = vmatpush1.bf16.msra.mxu0 0
    %2161 = vmatprep.mubr.bf16.mxu0 0
    %2162 = vmatmul.mubr.bf16.gmra.mrb[0].mxu0 %v2103
    %v2163 = vpop.f32.mrb[0].mxu0
    %v2164 = vadd.f32 0.0, %v2163
    %v2165 = vpop.f32.mrb[0].mxu0
    %v2166 = vpop.f32.mrb[0].mxu0
    %v2167 = vadd.f32 0.0, %v2166
    %v2168 = vpop.f32.mrb[0].mxu0
    %2169 = vmatprep.mubr.bf16.mxu0 0
    %2170 = vmatmul.mubr.bf16.gmra.mrb[0].mxu0 %v2106
    %v2171 = vpop.f32.mrb[0].mxu0
    %v2172 = vadd.f32 0.0, %v2171
    %v2173 = vpop.f32.mrb[0].mxu0
    %v2174 = vpop.f32.mrb[0].mxu0
    %v2175 = vadd.f32 0.0, %v2174
    %v2176 = vpop.f32.mrb[0].mxu0
    %2177 = vmatprep.mubr.bf16.mxu0 0
    %2178 = vmatmul.mubr.bf16.gmra.mrb[0].mxu0 %v2109
    %v2179 = vpop.f32.mrb[0].mxu0
    %v2180 = vadd.f32 0.0, %v2179
    %v2181 = vpop.f32.mrb[0].mxu0
    %v2182 = vpop.f32.mrb[0].mxu0
    %v2183 = vadd.f32 0.0, %v2182
    %v2184 = vpop.f32.mrb[0].mxu0
    %2185 = vmatprep.mubr.bf16.mxu0 0
    %2186 = vmatmul.mubr.bf16.gmra.mrb[0].mxu0 %v2112
    %v2187 = vpop.f32.mrb[0].mxu0
    %v2188 = vadd.f32 0.0, %v2187
    %v2189 = vpop.f32.mrb[0].mxu0
    %v2190 = vpop.f32.mrb[0].mxu0
    %v2191 = vadd.f32 0.0, %v2190
    %v2192 = vpop.f32.mrb[0].mxu0
    %2193 = vmatprep.mubr.bf16.mxu0 0
    %2194 = vmatmul.mubr.bf16.gmra.mrb[0].mxu0 %v2115
    %v2195 = vpop.f32.mrb[0].mxu0
    %v2196 = vadd.f32 0.0, %v2195
    %v2197 = vpop.f32.mrb[0].mxu0
    %v2198 = vpop.f32.mrb[0].mxu0
    %v2199 = vadd.f32 0.0, %v2198
    %v2200 = vpop.f32.mrb[0].mxu0
    %2201 = vmatprep.mubr.bf16.mxu0 0
    %2202 = vmatmul.mubr.bf16.gmra.mrb[0].mxu0 %v2118
    %v2203 = vpop.f32.mrb[0].mxu0
    %v2204 = vadd.f32 0.0, %v2203
    %v2205 = vpop.f32.mrb[0].mxu0
    %v2206 = vpop.f32.mrb[0].mxu0
    %v2207 = vadd.f32 0.0, %v2206
    %v2208 = vpop.f32.mrb[0].mxu0
    %2209 = vmatprep.mubr.bf16.mxu0 0
    %2210 = vmatmul.mubr.bf16.gmra.mrb[0].mxu0 %v2121
    %v2211 = vpop.f32.mrb[0].mxu0
    %v2212 = vadd.f32 0.0, %v2211
    %v2213 = vpop.f32.mrb[0].mxu0
    %v2214 = vpop.f32.mrb[0].mxu0
    %v2215 = vadd.f32 0.0, %v2214
    %v2216 = vpop.f32.mrb[0].mxu0
    %2217 = vmatprep.mubr.bf16.mxu0 0
    %2218 = vmatmul.mubr.bf16.gmra.mrb[0].mxu0 %v2124
    %v2219 = vpop.f32.mrb[0].mxu0
    %v2220 = vadd.f32 0.0, %v2219
    %v2221 = vpop.f32.mrb[0].mxu0
    %v2222 = vpop.f32.mrb[0].mxu0
    %v2223 = vadd.f32 0.0, %v2222
    %v2224 = vpop.f32.mrb[0].mxu0
    %2225 = vdwg.mxu0
    %v2226 = vadd.f32 %v2046, %v2164
    %v2227 = vadd.f32 %v2047, %v2167
    %v2228 = vadd.f32 %v2048, %v2172
    %v2229 = vadd.f32 %v2049, %v2175
    %v2230 = vadd.f32 %v2050, %v2180
    %v2231 = vadd.f32 %v2051, %v2183
    %v2232 = vadd.f32 %v2052, %v2188
    %v2233 = vadd.f32 %v2053, %v2191
    %v2234 = vadd.f32 %v2054, %v2196
    %v2235 = vadd.f32 %v2055, %v2199
    %v2236 = vadd.f32 %v2056, %v2204
    %v2237 = vadd.f32 %v2057, %v2207
    %v2238 = vadd.f32 %v2058, %v2212
    %v2239 = vadd.f32 %v2059, %v2215
    %v2240 = vadd.f32 %v2060, %v2220
    %v2241 = vadd.f32 %v2061, %v2223
    %v2242 = vld [vmem:[%s4] sm:$0x1]
    %v2244 = vlaneseq
    %v2245 = vshrl.u32 %v2244, 7
    %v2246 = vsub.s32 0, %v2245
    %v2247 = vrot.slane %v2242, %v2246
    %v2249 = vadd.f32 %v2226, %v2247
    %v2250 = vadd.f32 %v2227, %v2247
    %v2251 = vadd.f32 %v2228, %v2247
    %v2252 = vadd.f32 %v2229, %v2247
    %v2253 = vadd.f32 %v2230, %v2247
    %v2254 = vadd.f32 %v2231, %v2247
    %v2255 = vadd.f32 %v2232, %v2247
    %v2256 = vadd.f32 %v2233, %v2247
    %v2257 = vadd.f32 %v2234, %v2247
    %v2258 = vadd.f32 %v2235, %v2247
    %v2259 = vadd.f32 %v2236, %v2247
    %v2260 = vadd.f32 %v2237, %v2247
    %v2261 = vadd.f32 %v2238, %v2247
    %v2262 = vadd.f32 %v2239, %v2247
    %v2263 = vadd.f32 %v2240, %v2247
    %v2264 = vadd.f32 %v2241, %v2247
    %vm2265 = vcmp.ge.f32.partialorder %v2249, 0.0
    %vm2266 = vcmp.ge.f32.partialorder %v2250, 0.0
    %vm2267 = vcmp.ge.f32.partialorder %v2251, 0.0
    %vm2268 = vcmp.ge.f32.partialorder %v2252, 0.0
    %vm2269 = vcmp.ge.f32.partialorder %v2253, 0.0
    %vm2270 = vcmp.ge.f32.partialorder %v2254, 0.0
    %vm2271 = vcmp.ge.f32.partialorder %v2255, 0.0
    %vm2272 = vcmp.ge.f32.partialorder %v2256, 0.0
    %vm2273 = vcmp.ge.f32.partialorder %v2257, 0.0
    %vm2274 = vcmp.ge.f32.partialorder %v2258, 0.0
    %vm2275 = vcmp.ge.f32.partialorder %v2259, 0.0
    %vm2276 = vcmp.ge.f32.partialorder %v2260, 0.0
    %vm2277 = vcmp.ge.f32.partialorder %v2261, 0.0
    %vm2278 = vcmp.ge.f32.partialorder %v2262, 0.0
    %vm2279 = vcmp.ge.f32.partialorder %v2263, 0.0
    %vm2280 = vcmp.ge.f32.partialorder %v2264, 0.0
    %v2281 = vmul.f32 %v2249, 0.1
    %v2282 = vmul.f32 %v2250, 0.1
    %v2283 = vmul.f32 %v2251, 0.1
    %v2284 = vmul.f32 %v2252, 0.1
    %v2285 = vmul.f32 %v2253, 0.1
    %v2286 = vmul.f32 %v2254, 0.1
    %v2287 = vmul.f32 %v2255, 0.1
    %v2288 = vmul.f32 %v2256, 0.1
    %v2289 = vmul.f32 %v2257, 0.1
    %v2290 = vmul.f32 %v2258, 0.1
    %v2291 = vmul.f32 %v2259, 0.1
    %v2292 = vmul.f32 %v2260, 0.1
    %v2293 = vmul.f32 %v2261, 0.1
    %v2294 = vmul.f32 %v2262, 0.1
    %v2295 = vmul.f32 %v2263, 0.1
    %v2296 = vmul.f32 %v2264, 0.1
    %v2297 = vsel %vm2265, %v2249, %v2281
    %v2298 = vsel %vm2266, %v2250, %v2282
    %v2299 = vsel %vm2267, %v2251, %v2283
    %v2300 = vsel %vm2268, %v2252, %v2284
    %v2301 = vsel %vm2269, %v2253, %v2285
    %v2302 = vsel %vm2270, %v2254, %v2286
    %v2303 = vsel %vm2271, %v2255, %v2287
    %v2304 = vsel %vm2272, %v2256, %v2288
    %v2305 = vsel %vm2273, %v2257, %v2289
    %v2306 = vsel %vm2274, %v2258, %v2290
    %v2307 = vsel %vm2275, %v2259, %v2291
    %v2308 = vsel %vm2276, %v2260, %v2292
    %v2309 = vsel %vm2277, %v2261, %v2293
    %v2310 = vsel %vm2278, %v2262, %v2294
    %v2311 = vsel %vm2279, %v2263, %v2295
    %v2312 = vsel %vm2280, %v2264, %v2296
    %v2313 = vld [vmem:[%s5] sm:$0xf]
    %v2314 = vld [vmem:[%s5 + $0x4] sm:$0xf]
    %v2315 = vld [vmem:[%s5 + $0x8] sm:$0xf]
    %v2316 = vld [vmem:[%s5 + $0xc] sm:$0xf]
    %v2317 = vld [vmem:[%s5 + $0x10] sm:$0xf]
    %v2318 = vld [vmem:[%s5 + $0x14] sm:$0xf]
    %v2319 = vld [vmem:[%s5 + $0x18] sm:$0xf]
    %v2320 = vld [vmem:[%s5 + $0x1c] sm:$0xf]
    %v2321 = vld [vmem:[%s5 + $0x20] sm:$0xf]
    %s2322 = scalar_lea.vmem [#allocation3], 16
    %2323 = vst.msk [vmem:[%s2322 + $0x1] sm:$0xff] %vm131, %v2297
    %2324 = vst.msk [vmem:[%s2322 + $0x11] sm:$0xff] %vm131, %v2298
    %2325 = vst.msk [vmem:[%s2322 + $0x21] sm:$0xff] %vm131, %v2299
    %2326 = vst.msk [vmem:[%s2322 + $0x31] sm:$0xff] %vm131, %v2300
    %2327 = vst.msk [vmem:[%s2322 + $0x41] sm:$0xff] %vm131, %v2301
    %2328 = vst.msk [vmem:[%s2322 + $0x51] sm:$0xff] %vm131, %v2302
    %2329 = vst.msk [vmem:[%s2322 + $0x61] sm:$0xff] %vm131, %v2303
    %2330 = vst.msk [vmem:[%s2322 + $0x71] sm:$0xff] %vm131, %v2304
    %2331 = vst.msk [vmem:[%s2322 + $0xa1] sm:$0xff] %vm131, %v2305
    %2332 = vst.msk [vmem:[%s2322 + $0xb1] sm:$0xff] %vm131, %v2306
    %2333 = vst.msk [vmem:[%s2322 + $0xc1] sm:$0xff] %vm131, %v2307
    %2334 = vst.msk [vmem:[%s2322 + $0xd1] sm:$0xff] %vm131, %v2308
    %2335 = vst.msk [vmem:[%s2322 + $0xe1] sm:$0xff] %vm131, %v2309
    %2336 = vst.msk [vmem:[%s2322 + $0xf1] sm:$0xff] %vm131, %v2310
    %2337 = vst.msk [vmem:[%s2322 + $0x101] sm:$0xff] %vm131, %v2311
    %2338 = vst.msk [vmem:[%s2322 + $0x111] sm:$0xff] %vm131, %v2312
    %v2339 = vld [vmem:[#allocation3] sm:$0xff]
    %v2340 = vld [vmem:[#allocation3 + $0x10] sm:$0xff]
    %v2341 = vld [vmem:[#allocation3 + $0x20] sm:$0xff]
    %v2342 = vld [vmem:[#allocation3 + $0x30] sm:$0xff]
    %v2343 = vld [vmem:[#allocation3 + $0x40] sm:$0xff]
    %v2344 = vld [vmem:[#allocation3 + $0x50] sm:$0xff]
    %v2345 = vld [vmem:[#allocation3 + $0x60] sm:$0xff]
    %v2346 = vld [vmem:[#allocation3 + $0x70] sm:$0xff]
    %v2347 = vld [vmem:[#allocation3 + $0xa0] sm:$0xff]
    %v2348 = vld [vmem:[#allocation3 + $0xb0] sm:$0xff]
    %v2349 = vld [vmem:[#allocation3 + $0xc0] sm:$0xff]
    %v2350 = vld [vmem:[#allocation3 + $0xd0] sm:$0xff]
    %v2351 = vld [vmem:[#allocation3 + $0xe0] sm:$0xff]
    %v2352 = vld [vmem:[#allocation3 + $0xf0] sm:$0xff]
    %v2353 = vld [vmem:[#allocation3 + $0x100] sm:$0xff]
    %v2354 = vld [vmem:[#allocation3 + $0x110] sm:$0xff]
    %v2355 = vpack.c.bf16 %v2340, %v2339
    %v2356 = vpack.c.bf16 %v2342, %v2341
    %v2357 = vpack.c.bf16 %v2344, %v2343
    %v2358 = vpack.c.bf16 %v2346, %v2345
    %v2359 = vpack.c.bf16 %v2348, %v2347
    %v2360 = vpack.c.bf16 %v2350, %v2349
    %v2361 = vpack.c.bf16 %v2352, %v2351
    %v2362 = vpack.c.bf16 %v2354, %v2353
    %v2363 = vld [vmem:[#allocation3 + $0x1] sm:$0xff]
    %v2364 = vld [vmem:[#allocation3 + $0x11] sm:$0xff]
    %v2365 = vld [vmem:[#allocation3 + $0x21] sm:$0xff]
    %v2366 = vld [vmem:[#allocation3 + $0x31] sm:$0xff]
    %v2367 = vld [vmem:[#allocation3 + $0x41] sm:$0xff]
    %v2368 = vld [vmem:[#allocation3 + $0x51] sm:$0xff]
    %v2369 = vld [vmem:[#allocation3 + $0x61] sm:$0xff]
    %v2370 = vld [vmem:[#allocation3 + $0x71] sm:$0xff]
    %v2371 = vld [vmem:[#allocation3 + $0xa1] sm:$0xff]
    %v2372 = vld [vmem:[#allocation3 + $0xb1] sm:$0xff]
    %v2373 = vld [vmem:[#allocation3 + $0xc1] sm:$0xff]
    %v2374 = vld [vmem:[#allocation3 + $0xd1] sm:$0xff]
    %v2375 = vld [vmem:[#allocation3 + $0xe1] sm:$0xff]
    %v2376 = vld [vmem:[#allocation3 + $0xf1] sm:$0xff]
    %v2377 = vld [vmem:[#allocation3 + $0x101] sm:$0xff]
    %v2378 = vld [vmem:[#allocation3 + $0x111] sm:$0xff]
    %v2379 = vpack.c.bf16 %v2364, %v2363
    %v2380 = vpack.c.bf16 %v2366, %v2365
    %v2381 = vpack.c.bf16 %v2368, %v2367
    %v2382 = vpack.c.bf16 %v2370, %v2369
    %v2383 = vpack.c.bf16 %v2372, %v2371
    %v2384 = vpack.c.bf16 %v2374, %v2373
    %v2385 = vpack.c.bf16 %v2376, %v2375
    %v2386 = vpack.c.bf16 %v2378, %v2377
    %v2388 = vsel %vm131, %v2379, 0
    %v2391 = vsel %vm131, %v2380, 0
    %v2394 = vsel %vm131, %v2381, 0
    %v2397 = vsel %vm131, %v2382, 0
    %v2400 = vsel %vm131, %v2383, 0
    %v2403 = vsel %vm131, %v2384, 0
    %v2406 = vsel %vm131, %v2385, 0
    %v2409 = vsel %vm131, %v2386, 0
    %vm2411 = vcmask 1043456
    %v2413 = vsel %vm2411, %v2314, 0
    %2415 = vmatprep.subr.bf16.mxu0 0
    %2416 = vmatpush1.bf16.msra.mxu0 %v2413
    %2417 = vmatprep.subr.bf16.mxu0 0
    %2418 = vmatpush1.bf16.msra.mxu0 0
    %2419 = vmatprep.subr.bf16.mxu0 0
    %2420 = vmatpush1.bf16.msra.mxu0 0
    %2421 = vmatprep.subr.bf16.mxu0 0
    %2422 = vmatpush1.bf16.msra.mxu0 0
    %2423 = vmatprep.subr.bf16.mxu0 0
    %2424 = vmatpush1.bf16.msra.mxu0 0
    %2425 = vmatprep.subr.bf16.mxu0 0
    %2426 = vmatpush1.bf16.msra.mxu0 0
    %2427 = vmatprep.subr.bf16.mxu0 0
    %2428 = vmatpush1.bf16.msra.mxu0 0
    %2429 = vmatprep.subr.bf16.mxu0 0
    %2430 = vmatpush1.bf16.msra.mxu0 0
    %2431 = vmatprep.subr.bf16.mxu0 0
    %2432 = vmatpush1.bf16.msra.mxu0 0
    %2433 = vmatprep.subr.bf16.mxu0 0
    %2434 = vmatpush1.bf16.msra.mxu0 0
    %2435 = vmatprep.subr.bf16.mxu0 0
    %2436 = vmatpush1.bf16.msra.mxu0 0
    %2437 = vmatprep.subr.bf16.mxu0 0
    %2438 = vmatpush1.bf16.msra.mxu0 0
    %2439 = vmatprep.subr.bf16.mxu0 0
    %2440 = vmatpush1.bf16.msra.mxu0 0
    %2441 = vmatprep.subr.bf16.mxu0 0
    %2442 = vmatpush1.bf16.msra.mxu0 0
    %2443 = vmatprep.subr.bf16.mxu0 0
    %2444 = vmatpush1.bf16.msra.mxu0 0
    %2445 = vmatprep.subr.bf16.mxu0 0
    %2446 = vmatpush1.bf16.msra.mxu0 0
    %2447 = vmatprep.mubr.bf16.mxu0 0
    %2448 = vmatmul.mubr.bf16.gmra.mrb[0].mxu0 %v2388
    %v2449 = vpop.f32.mrb[0].mxu0
    %v2450 = vadd.f32 0.0, %v2449
    %v2451 = vpop.f32.mrb[0].mxu0
    %v2452 = vpop.f32.mrb[0].mxu0
    %v2453 = vadd.f32 0.0, %v2452
    %v2454 = vpop.f32.mrb[0].mxu0
    %2455 = vmatprep.mubr.bf16.mxu0 0
    %2456 = vmatmul.mubr.bf16.gmra.mrb[0].mxu0 %v2391
    %v2457 = vpop.f32.mrb[0].mxu0
    %v2458 = vadd.f32 0.0, %v2457
    %v2459 = vpop.f32.mrb[0].mxu0
    %v2460 = vpop.f32.mrb[0].mxu0
    %v2461 = vadd.f32 0.0, %v2460
    %v2462 = vpop.f32.mrb[0].mxu0
    %2463 = vmatprep.mubr.bf16.mxu0 0
    %2464 = vmatmul.mubr.bf16.gmra.mrb[0].mxu0 %v2394
    %v2465 = vpop.f32.mrb[0].mxu0
    %v2466 = vadd.f32 0.0, %v2465
    %v2467 = vpop.f32.mrb[0].mxu0
    %v2468 = vpop.f32.mrb[0].mxu0
    %v2469 = vadd.f32 0.0, %v2468
    %v2470 = vpop.f32.mrb[0].mxu0
    %2471 = vmatprep.mubr.bf16.mxu0 0
    %2472 = vmatmul.mubr.bf16.gmra.mrb[0].mxu0 %v2397
    %v2473 = vpop.f32.mrb[0].mxu0
    %v2474 = vadd.f32 0.0, %v2473
    %v2475 = vpop.f32.mrb[0].mxu0
    %v2476 = vpop.f32.mrb[0].mxu0
    %v2477 = vadd.f32 0.0, %v2476
    %v2478 = vpop.f32.mrb[0].mxu0
    %2479 = vmatprep.mubr.bf16.mxu0 0
    %2480 = vmatmul.mubr.bf16.gmra.mrb[0].mxu0 %v2400
    %v2481 = vpop.f32.mrb[0].mxu0
    %v2482 = vadd.f32 0.0, %v2481
    %v2483 = vpop.f32.mrb[0].mxu0
    %v2484 = vpop.f32.mrb[0].mxu0
    %v2485 = vadd.f32 0.0, %v2484
    %v2486 = vpop.f32.mrb[0].mxu0
    %2487 = vmatprep.mubr.bf16.mxu0 0
    %2488 = vmatmul.mubr.bf16.gmra.mrb[0].mxu0 %v2403
    %v2489 = vpop.f32.mrb[0].mxu0
    %v2490 = vadd.f32 0.0, %v2489
    %v2491 = vpop.f32.mrb[0].mxu0
    %v2492 = vpop.f32.mrb[0].mxu0
    %v2493 = vadd.f32 0.0, %v2492
    %v2494 = vpop.f32.mrb[0].mxu0
    %2495 = vmatprep.mubr.bf16.mxu0 0
    %2496 = vmatmul.mubr.bf16.gmra.mrb[0].mxu0 %v2406
    %v2497 = vpop.f32.mrb[0].mxu0
    %v2498 = vadd.f32 0.0, %v2497
    %v2499 = vpop.f32.mrb[0].mxu0
    %v2500 = vpop.f32.mrb[0].mxu0
    %v2501 = vadd.f32 0.0, %v2500
    %v2502 = vpop.f32.mrb[0].mxu0
    %2503 = vmatprep.mubr.bf16.mxu0 0
    %2504 = vmatmul.mubr.bf16.gmra.mrb[0].mxu0 %v2409
    %v2505 = vpop.f32.mrb[0].mxu0
    %v2506 = vadd.f32 0.0, %v2505
    %v2507 = vpop.f32.mrb[0].mxu0
    %v2508 = vpop.f32.mrb[0].mxu0
    %v2509 = vadd.f32 0.0, %v2508
    %v2510 = vpop.f32.mrb[0].mxu0
    %2511 = vdwg.mxu0
    %v2513 = vsel %vm131, %v2355, 0
    %v2516 = vsel %vm131, %v2356, 0
    %v2519 = vsel %vm131, %v2357, 0
    %v2522 = vsel %vm131, %v2358, 0
    %v2525 = vsel %vm131, %v2359, 0
    %v2528 = vsel %vm131, %v2360, 0
    %v2531 = vsel %vm131, %v2361, 0
    %v2534 = vsel %vm131, %v2362, 0
    %v2537 = vsel %vm2411, %v2313, 0
    %2539 = vmatprep.subr.bf16.mxu0 0
    %2540 = vmatpush1.bf16.msra.mxu0 %v2537
    %2541 = vmatprep.subr.bf16.mxu0 0
    %2542 = vmatpush1.bf16.msra.mxu0 0
    %2543 = vmatprep.subr.bf16.mxu0 0
    %2544 = vmatpush1.bf16.msra.mxu0 0
    %2545 = vmatprep.subr.bf16.mxu0 0
    %2546 = vmatpush1.bf16.msra.mxu0 0
    %2547 = vmatprep.subr.bf16.mxu0 0
    %2548 = vmatpush1.bf16.msra.mxu0 0
    %2549 = vmatprep.subr.bf16.mxu0 0
    %2550 = vmatpush1.bf16.msra.mxu0 0
    %2551 = vmatprep.subr.bf16.mxu0 0
    %2552 = vmatpush1.bf16.msra.mxu0 0
    %2553 = vmatprep.subr.bf16.mxu0 0
    %2554 = vmatpush1.bf16.msra.mxu0 0
    %2555 = vmatprep.subr.bf16.mxu0 0
    %2556 = vmatpush1.bf16.msra.mxu0 0
    %2557 = vmatprep.subr.bf16.mxu0 0
    %2558 = vmatpush1.bf16.msra.mxu0 0
    %2559 = vmatprep.subr.bf16.mxu0 0
    %2560 = vmatpush1.bf16.msra.mxu0 0
    %2561 = vmatprep.subr.bf16.mxu0 0
    %2562 = vmatpush1.bf16.msra.mxu0 0
    %2563 = vmatprep.subr.bf16.mxu0 0
    %2564 = vmatpush1.bf16.msra.mxu0 0
    %2565 = vmatprep.subr.bf16.mxu0 0
    %2566 = vmatpush1.bf16.msra.mxu0 0
    %2567 = vmatprep.subr.bf16.mxu0 0
    %2568 = vmatpush1.bf16.msra.mxu0 0
    %2569 = vmatprep.subr.bf16.mxu0 0
    %2570 = vmatpush1.bf16.msra.mxu0 0
    %2571 = vmatprep.mubr.bf16.mxu0 0
    %2572 = vmatmul.mubr.bf16.gmra.mrb[0].mxu0 %v2513
    %v2573 = vpop.f32.mrb[0].mxu0
    %v2574 = vadd.f32 %v2450, %v2573
    %v2575 = vpop.f32.mrb[0].mxu0
    %v2576 = vpop.f32.mrb[0].mxu0
    %v2577 = vadd.f32 %v2453, %v2576
    %v2578 = vpop.f32.mrb[0].mxu0
    %2579 = vmatprep.mubr.bf16.mxu0 0
    %2580 = vmatmul.mubr.bf16.gmra.mrb[0].mxu0 %v2516
    %v2581 = vpop.f32.mrb[0].mxu0
    %v2582 = vadd.f32 %v2458, %v2581
    %v2583 = vpop.f32.mrb[0].mxu0
    %v2584 = vpop.f32.mrb[0].mxu0
    %v2585 = vadd.f32 %v2461, %v2584
    %v2586 = vpop.f32.mrb[0].mxu0
    %2587 = vmatprep.mubr.bf16.mxu0 0
    %2588 = vmatmul.mubr.bf16.gmra.mrb[0].mxu0 %v2519
    %v2589 = vpop.f32.mrb[0].mxu0
    %v2590 = vadd.f32 %v2466, %v2589
    %v2591 = vpop.f32.mrb[0].mxu0
    %v2592 = vpop.f32.mrb[0].mxu0
    %v2593 = vadd.f32 %v2469, %v2592
    %v2594 = vpop.f32.mrb[0].mxu0
    %2595 = vmatprep.mubr.bf16.mxu0 0
    %2596 = vmatmul.mubr.bf16.gmra.mrb[0].mxu0 %v2522
    %v2597 = vpop.f32.mrb[0].mxu0
    %v2598 = vadd.f32 %v2474, %v2597
    %v2599 = vpop.f32.mrb[0].mxu0
    %v2600 = vpop.f32.mrb[0].mxu0
    %v2601 = vadd.f32 %v2477, %v2600
    %v2602 = vpop.f32.mrb[0].mxu0
    %2603 = vmatprep.mubr.bf16.mxu0 0
    %2604 = vmatmul.mubr.bf16.gmra.mrb[0].mxu0 %v2525
    %v2605 = vpop.f32.mrb[0].mxu0
    %v2606 = vadd.f32 %v2482, %v2605
    %v2607 = vpop.f32.mrb[0].mxu0
    %v2608 = vpop.f32.mrb[0].mxu0
    %v2609 = vadd.f32 %v2485, %v2608
    %v2610 = vpop.f32.mrb[0].mxu0
    %2611 = vmatprep.mubr.bf16.mxu0 0
    %2612 = vmatmul.mubr.bf16.gmra.mrb[0].mxu0 %v2528
    %v2613 = vpop.f32.mrb[0].mxu0
    %v2614 = vadd.f32 %v2490, %v2613
    %v2615 = vpop.f32.mrb[0].mxu0
    %v2616 = vpop.f32.mrb[0].mxu0
    %v2617 = vadd.f32 %v2493, %v2616
    %v2618 = vpop.f32.mrb[0].mxu0
    %2619 = vmatprep.mubr.bf16.mxu0 0
    %2620 = vmatmul.mubr.bf16.gmra.mrb[0].mxu0 %v2531
    %v2621 = vpop.f32.mrb[0].mxu0
    %v2622 = vadd.f32 %v2498, %v2621
    %v2623 = vpop.f32.mrb[0].mxu0
    %v2624 = vpop.f32.mrb[0].mxu0
    %v2625 = vadd.f32 %v2501, %v2624
    %v2626 = vpop.f32.mrb[0].mxu0
    %2627 = vmatprep.mubr.bf16.mxu0 0
    %2628 = vmatmul.mubr.bf16.gmra.mrb[0].mxu0 %v2534
    %v2629 = vpop.f32.mrb[0].mxu0
    %v2630 = vadd.f32 %v2506, %v2629
    %v2631 = vpop.f32.mrb[0].mxu0
    %v2632 = vpop.f32.mrb[0].mxu0
    %v2633 = vadd.f32 %v2509, %v2632
    %v2634 = vpop.f32.mrb[0].mxu0
    %2635 = vdwg.mxu0
    %v2636 = vld [vmem:[#allocation3 + $0x2] sm:$0xff]
    %v2637 = vld [vmem:[#allocation3 + $0x12] sm:$0xff]
    %v2638 = vld [vmem:[#allocation3 + $0x22] sm:$0xff]
    %v2639 = vld [vmem:[#allocation3 + $0x32] sm:$0xff]
    %v2640 = vld [vmem:[#allocation3 + $0x42] sm:$0xff]
    %v2641 = vld [vmem:[#allocation3 + $0x52] sm:$0xff]
    %v2642 = vld [vmem:[#allocation3 + $0x62] sm:$0xff]
    %v2643 = vld [vmem:[#allocation3 + $0x72] sm:$0xff]
    %v2644 = vld [vmem:[#allocation3 + $0xa2] sm:$0xff]
    %v2645 = vld [vmem:[#allocation3 + $0xb2] sm:$0xff]
    %v2646 = vld [vmem:[#allocation3 + $0xc2] sm:$0xff]
    %v2647 = vld [vmem:[#allocation3 + $0xd2] sm:$0xff]
    %v2648 = vld [vmem:[#allocation3 + $0xe2] sm:$0xff]
    %v2649 = vld [vmem:[#allocation3 + $0xf2] sm:$0xff]
    %v2650 = vld [vmem:[#allocation3 + $0x102] sm:$0xff]
    %v2651 = vld [vmem:[#allocation3 + $0x112] sm:$0xff]
    %v2652 = vpack.c.bf16 %v2637, %v2636
    %v2653 = vpack.c.bf16 %v2639, %v2638
    %v2654 = vpack.c.bf16 %v2641, %v2640
    %v2655 = vpack.c.bf16 %v2643, %v2642
    %v2656 = vpack.c.bf16 %v2645, %v2644
    %v2657 = vpack.c.bf16 %v2647, %v2646
    %v2658 = vpack.c.bf16 %v2649, %v2648
    %v2659 = vpack.c.bf16 %v2651, %v2650
    %v2661 = vsel %vm131, %v2652, 0
    %v2664 = vsel %vm131, %v2653, 0
    %v2667 = vsel %vm131, %v2654, 0
    %v2670 = vsel %vm131, %v2655, 0
    %v2673 = vsel %vm131, %v2656, 0
    %v2676 = vsel %vm131, %v2657, 0
    %v2679 = vsel %vm131, %v2658, 0
    %v2682 = vsel %vm131, %v2659, 0
    %v2685 = vsel %vm2411, %v2315, 0
    %2687 = vmatprep.subr.bf16.mxu0 0
    %2688 = vmatpush1.bf16.msra.mxu0 %v2685
    %2689 = vmatprep.subr.bf16.mxu0 0
    %2690 = vmatpush1.bf16.msra.mxu0 0
    %2691 = vmatprep.subr.bf16.mxu0 0
    %2692 = vmatpush1.bf16.msra.mxu0 0
    %2693 = vmatprep.subr.bf16.mxu0 0
    %2694 = vmatpush1.bf16.msra.mxu0 0
    %2695 = vmatprep.subr.bf16.mxu0 0
    %2696 = vmatpush1.bf16.msra.mxu0 0
    %2697 = vmatprep.subr.bf16.mxu0 0
    %2698 = vmatpush1.bf16.msra.mxu0 0
    %2699 = vmatprep.subr.bf16.mxu0 0
    %2700 = vmatpush1.bf16.msra.mxu0 0
    %2701 = vmatprep.subr.bf16.mxu0 0
    %2702 = vmatpush1.bf16.msra.mxu0 0
    %2703 = vmatprep.subr.bf16.mxu0 0
    %2704 = vmatpush1.bf16.msra.mxu0 0
    %2705 = vmatprep.subr.bf16.mxu0 0
    %2706 = vmatpush1.bf16.msra.mxu0 0
    %2707 = vmatprep.subr.bf16.mxu0 0
    %2708 = vmatpush1.bf16.msra.mxu0 0
    %2709 = vmatprep.subr.bf16.mxu0 0
    %2710 = vmatpush1.bf16.msra.mxu0 0
    %2711 = vmatprep.subr.bf16.mxu0 0
    %2712 = vmatpush1.bf16.msra.mxu0 0
    %2713 = vmatprep.subr.bf16.mxu0 0
    %2714 = vmatpush1.bf16.msra.mxu0 0
    %2715 = vmatprep.subr.bf16.mxu0 0
    %2716 = vmatpush1.bf16.msra.mxu0 0
    %2717 = vmatprep.subr.bf16.mxu0 0
    %2718 = vmatpush1.bf16.msra.mxu0 0
    %2719 = vmatprep.mubr.bf16.mxu0 0
    %2720 = vmatmul.mubr.bf16.gmra.mrb[0].mxu0 %v2661
    %v2721 = vpop.f32.mrb[0].mxu0
    %v2722 = vadd.f32 0.0, %v2721
    %v2723 = vpop.f32.mrb[0].mxu0
    %v2724 = vpop.f32.mrb[0].mxu0
    %v2725 = vadd.f32 0.0, %v2724
    %v2726 = vpop.f32.mrb[0].mxu0
    %2727 = vmatprep.mubr.bf16.mxu0 0
    %2728 = vmatmul.mubr.bf16.gmra.mrb[0].mxu0 %v2664
    %v2729 = vpop.f32.mrb[0].mxu0
    %v2730 = vadd.f32 0.0, %v2729
    %v2731 = vpop.f32.mrb[0].mxu0
    %v2732 = vpop.f32.mrb[0].mxu0
    %v2733 = vadd.f32 0.0, %v2732
    %v2734 = vpop.f32.mrb[0].mxu0
    %2735 = vmatprep.mubr.bf16.mxu0 0
    %2736 = vmatmul.mubr.bf16.gmra.mrb[0].mxu0 %v2667
    %v2737 = vpop.f32.mrb[0].mxu0
    %v2738 = vadd.f32 0.0, %v2737
    %v2739 = vpop.f32.mrb[0].mxu0
    %v2740 = vpop.f32.mrb[0].mxu0
    %v2741 = vadd.f32 0.0, %v2740
    %v2742 = vpop.f32.mrb[0].mxu0
    %2743 = vmatprep.mubr.bf16.mxu0 0
    %2744 = vmatmul.mubr.bf16.gmra.mrb[0].mxu0 %v2670
    %v2745 = vpop.f32.mrb[0].mxu0
    %v2746 = vadd.f32 0.0, %v2745
    %v2747 = vpop.f32.mrb[0].mxu0
    %v2748 = vpop.f32.mrb[0].mxu0
    %v2749 = vadd.f32 0.0, %v2748
    %v2750 = vpop.f32.mrb[0].mxu0
    %2751 = vmatprep.mubr.bf16.mxu0 0
    %2752 = vmatmul.mubr.bf16.gmra.mrb[0].mxu0 %v2673
    %v2753 = vpop.f32.mrb[0].mxu0
    %v2754 = vadd.f32 0.0, %v2753
    %v2755 = vpop.f32.mrb[0].mxu0
    %v2756 = vpop.f32.mrb[0].mxu0
    %v2757 = vadd.f32 0.0, %v2756
    %v2758 = vpop.f32.mrb[0].mxu0
    %2759 = vmatprep.mubr.bf16.mxu0 0
    %2760 = vmatmul.mubr.bf16.gmra.mrb[0].mxu0 %v2676
    %v2761 = vpop.f32.mrb[0].mxu0
    %v2762 = vadd.f32 0.0, %v2761
    %v2763 = vpop.f32.mrb[0].mxu0
    %v2764 = vpop.f32.mrb[0].mxu0
    %v2765 = vadd.f32 0.0, %v2764
    %v2766 = vpop.f32.mrb[0].mxu0
    %2767 = vmatprep.mubr.bf16.mxu0 0
    %2768 = vmatmul.mubr.bf16.gmra.mrb[0].mxu0 %v2679
    %v2769 = vpop.f32.mrb[0].mxu0
    %v2770 = vadd.f32 0.0, %v2769
    %v2771 = vpop.f32.mrb[0].mxu0
    %v2772 = vpop.f32.mrb[0].mxu0
    %v2773 = vadd.f32 0.0, %v2772
    %v2774 = vpop.f32.mrb[0].mxu0
    %2775 = vmatprep.mubr.bf16.mxu0 0
    %2776 = vmatmul.mubr.bf16.gmra.mrb[0].mxu0 %v2682
    %v2777 = vpop.f32.mrb[0].mxu0
    %v2778 = vadd.f32 0.0, %v2777
    %v2779 = vpop.f32.mrb[0].mxu0
    %v2780 = vpop.f32.mrb[0].mxu0
    %v2781 = vadd.f32 0.0, %v2780
    %v2782 = vpop.f32.mrb[0].mxu0
    %2783 = vdwg.mxu0
    %v2784 = vadd.f32 %v2574, %v2722
    %v2785 = vadd.f32 %v2577, %v2725
    %v2786 = vadd.f32 %v2582, %v2730
    %v2787 = vadd.f32 %v2585, %v2733
    %v2788 = vadd.f32 %v2590, %v2738
    %v2789 = vadd.f32 %v2593, %v2741
    %v2790 = vadd.f32 %v2598, %v2746
    %v2791 = vadd.f32 %v2601, %v2749
    %v2792 = vadd.f32 %v2606, %v2754
    %v2793 = vadd.f32 %v2609, %v2757
    %v2794 = vadd.f32 %v2614, %v2762
    %v2795 = vadd.f32 %v2617, %v2765
    %v2796 = vadd.f32 %v2622, %v2770
    %v2797 = vadd.f32 %v2625, %v2773
    %v2798 = vadd.f32 %v2630, %v2778
    %v2799 = vadd.f32 %v2633, %v2781
    %v2800 = vld [vmem:[%s2322] sm:$0xff]
    %v2801 = vld [vmem:[%s2322 + $0x10] sm:$0xff]
    %v2802 = vld [vmem:[%s2322 + $0x20] sm:$0xff]
    %v2803 = vld [vmem:[%s2322 + $0x30] sm:$0xff]
    %v2804 = vld [vmem:[%s2322 + $0x40] sm:$0xff]
    %v2805 = vld [vmem:[%s2322 + $0x50] sm:$0xff]
    %v2806 = vld [vmem:[%s2322 + $0x60] sm:$0xff]
    %v2807 = vld [vmem:[%s2322 + $0x70] sm:$0xff]
    %v2808 = vld [vmem:[%s2322 + $0xa0] sm:$0xff]
    %v2809 = vld [vmem:[%s2322 + $0xb0] sm:$0xff]
    %v2810 = vld [vmem:[%s2322 + $0xc0] sm:$0xff]
    %v2811 = vld [vmem:[%s2322 + $0xd0] sm:$0xff]
    %v2812 = vld [vmem:[%s2322 + $0xe0] sm:$0xff]
    %v2813 = vld [vmem:[%s2322 + $0xf0] sm:$0xff]
    %v2814 = vld [vmem:[%s2322 + $0x100] sm:$0xff]
    %v2815 = vld [vmem:[%s2322 + $0x110] sm:$0xff]
    %v2816 = vpack.c.bf16 %v2801, %v2800
    %v2817 = vpack.c.bf16 %v2803, %v2802
    %v2818 = vpack.c.bf16 %v2805, %v2804
    %v2819 = vpack.c.bf16 %v2807, %v2806
    %v2820 = vpack.c.bf16 %v2809, %v2808
    %v2821 = vpack.c.bf16 %v2811, %v2810
    %v2822 = vpack.c.bf16 %v2813, %v2812
    %v2823 = vpack.c.bf16 %v2815, %v2814
    %v2825 = vsel %vm131, %v2816, 0
    %v2828 = vsel %vm131, %v2817, 0
    %v2831 = vsel %vm131, %v2818, 0
    %v2834 = vsel %vm131, %v2819, 0
    %v2837 = vsel %vm131, %v2820, 0
    %v2840 = vsel %vm131, %v2821, 0
    %v2843 = vsel %vm131, %v2822, 0
    %v2846 = vsel %vm131, %v2823, 0
    %v2849 = vsel %vm2411, %v2316, 0
    %2851 = vmatprep.subr.bf16.mxu0 0
    %2852 = vmatpush1.bf16.msra.mxu0 %v2849
    %2853 = vmatprep.subr.bf16.mxu0 0
    %2854 = vmatpush1.bf16.msra.mxu0 0
    %2855 = vmatprep.subr.bf16.mxu0 0
    %2856 = vmatpush1.bf16.msra.mxu0 0
    %2857 = vmatprep.subr.bf16.mxu0 0
    %2858 = vmatpush1.bf16.msra.mxu0 0
    %2859 = vmatprep.subr.bf16.mxu0 0
    %2860 = vmatpush1.bf16.msra.mxu0 0
    %2861 = vmatprep.subr.bf16.mxu0 0
    %2862 = vmatpush1.bf16.msra.mxu0 0
    %2863 = vmatprep.subr.bf16.mxu0 0
    %2864 = vmatpush1.bf16.msra.mxu0 0
    %2865 = vmatprep.subr.bf16.mxu0 0
    %2866 = vmatpush1.bf16.msra.mxu0 0
    %2867 = vmatprep.subr.bf16.mxu0 0
    %2868 = vmatpush1.bf16.msra.mxu0 0
    %2869 = vmatprep.subr.bf16.mxu0 0
    %2870 = vmatpush1.bf16.msra.mxu0 0
    %2871 = vmatprep.subr.bf16.mxu0 0
    %2872 = vmatpush1.bf16.msra.mxu0 0
    %2873 = vmatprep.subr.bf16.mxu0 0
    %2874 = vmatpush1.bf16.msra.mxu0 0
    %2875 = vmatprep.subr.bf16.mxu0 0
    %2876 = vmatpush1.bf16.msra.mxu0 0
    %2877 = vmatprep.subr.bf16.mxu0 0
    %2878 = vmatpush1.bf16.msra.mxu0 0
    %2879 = vmatprep.subr.bf16.mxu0 0
    %2880 = vmatpush1.bf16.msra.mxu0 0
    %2881 = vmatprep.subr.bf16.mxu0 0
    %2882 = vmatpush1.bf16.msra.mxu0 0
    %2883 = vmatprep.mubr.bf16.mxu0 0
    %2884 = vmatmul.mubr.bf16.gmra.mrb[0].mxu0 %v2825
    %v2885 = vpop.f32.mrb[0].mxu0
    %v2886 = vadd.f32 0.0, %v2885
    %v2887 = vpop.f32.mrb[0].mxu0
    %v2888 = vpop.f32.mrb[0].mxu0
    %v2889 = vadd.f32 0.0, %v2888
    %v2890 = vpop.f32.mrb[0].mxu0
    %2891 = vmatprep.mubr.bf16.mxu0 0
    %2892 = vmatmul.mubr.bf16.gmra.mrb[0].mxu0 %v2828
    %v2893 = vpop.f32.mrb[0].mxu0
    %v2894 = vadd.f32 0.0, %v2893
    %v2895 = vpop.f32.mrb[0].mxu0
    %v2896 = vpop.f32.mrb[0].mxu0
    %v2897 = vadd.f32 0.0, %v2896
    %v2898 = vpop.f32.mrb[0].mxu0
    %2899 = vmatprep.mubr.bf16.mxu0 0
    %2900 = vmatmul.mubr.bf16.gmra.mrb[0].mxu0 %v2831
    %v2901 = vpop.f32.mrb[0].mxu0
    %v2902 = vadd.f32 0.0, %v2901
    %v2903 = vpop.f32.mrb[0].mxu0
    %v2904 = vpop.f32.mrb[0].mxu0
    %v2905 = vadd.f32 0.0, %v2904
    %v2906 = vpop.f32.mrb[0].mxu0
    %2907 = vmatprep.mubr.bf16.mxu0 0
    %2908 = vmatmul.mubr.bf16.gmra.mrb[0].mxu0 %v2834
    %v2909 = vpop.f32.mrb[0].mxu0
    %v2910 = vadd.f32 0.0, %v2909
    %v2911 = vpop.f32.mrb[0].mxu0
    %v2912 = vpop.f32.mrb[0].mxu0
    %v2913 = vadd.f32 0.0, %v2912
    %v2914 = vpop.f32.mrb[0].mxu0
    %2915 = vmatprep.mubr.bf16.mxu0 0
    %2916 = vmatmul.mubr.bf16.gmra.mrb[0].mxu0 %v2837
    %v2917 = vpop.f32.mrb[0].mxu0
    %v2918 = vadd.f32 0.0, %v2917
    %v2919 = vpop.f32.mrb[0].mxu0
    %v2920 = vpop.f32.mrb[0].mxu0
    %v2921 = vadd.f32 0.0, %v2920
    %v2922 = vpop.f32.mrb[0].mxu0
    %2923 = vmatprep.mubr.bf16.mxu0 0
    %2924 = vmatmul.mubr.bf16.gmra.mrb[0].mxu0 %v2840
    %v2925 = vpop.f32.mrb[0].mxu0
    %v2926 = vadd.f32 0.0, %v2925
    %v2927 = vpop.f32.mrb[0].mxu0
    %v2928 = vpop.f32.mrb[0].mxu0
    %v2929 = vadd.f32 0.0, %v2928
    %v2930 = vpop.f32.mrb[0].mxu0
    %2931 = vmatprep.mubr.bf16.mxu0 0
    %2932 = vmatmul.mubr.bf16.gmra.mrb[0].mxu0 %v2843
    %v2933 = vpop.f32.mrb[0].mxu0
    %v2934 = vadd.f32 0.0, %v2933
    %v2935 = vpop.f32.mrb[0].mxu0
    %v2936 = vpop.f32.mrb[0].mxu0
    %v2937 = vadd.f32 0.0, %v2936
    %v2938 = vpop.f32.mrb[0].mxu0
    %2939 = vmatprep.mubr.bf16.mxu0 0
    %2940 = vmatmul.mubr.bf16.gmra.mrb[0].mxu0 %v2846
    %v2941 = vpop.f32.mrb[0].mxu0
    %v2942 = vadd.f32 0.0, %v2941
    %v2943 = vpop.f32.mrb[0].mxu0
    %v2944 = vpop.f32.mrb[0].mxu0
    %v2945 = vadd.f32 0.0, %v2944
    %v2946 = vpop.f32.mrb[0].mxu0
    %2947 = vdwg.mxu0
    %v2948 = vadd.f32 %v2784, %v2886
    %v2949 = vadd.f32 %v2785, %v2889
    %v2950 = vadd.f32 %v2786, %v2894
    %v2951 = vadd.f32 %v2787, %v2897
    %v2952 = vadd.f32 %v2788, %v2902
    %v2953 = vadd.f32 %v2789, %v2905
    %v2954 = vadd.f32 %v2790, %v2910
    %v2955 = vadd.f32 %v2791, %v2913
    %v2956 = vadd.f32 %v2792, %v2918
    %v2957 = vadd.f32 %v2793, %v2921
    %v2958 = vadd.f32 %v2794, %v2926
    %v2959 = vadd.f32 %v2795, %v2929
    %v2960 = vadd.f32 %v2796, %v2934
    %v2961 = vadd.f32 %v2797, %v2937
    %v2962 = vadd.f32 %v2798, %v2942
    %v2963 = vadd.f32 %v2799, %v2945
    %v2964 = vld [vmem:[%s2322 + $0x1] sm:$0xff]
    %v2965 = vld [vmem:[%s2322 + $0x11] sm:$0xff]
    %v2966 = vld [vmem:[%s2322 + $0x21] sm:$0xff]
    %v2967 = vld [vmem:[%s2322 + $0x31] sm:$0xff]
    %v2968 = vld [vmem:[%s2322 + $0x41] sm:$0xff]
    %v2969 = vld [vmem:[%s2322 + $0x51] sm:$0xff]
    %v2970 = vld [vmem:[%s2322 + $0x61] sm:$0xff]
    %v2971 = vld [vmem:[%s2322 + $0x71] sm:$0xff]
    %v2972 = vld [vmem:[%s2322 + $0xa1] sm:$0xff]
    %v2973 = vld [vmem:[%s2322 + $0xb1] sm:$0xff]
    %v2974 = vld [vmem:[%s2322 + $0xc1] sm:$0xff]
    %v2975 = vld [vmem:[%s2322 + $0xd1] sm:$0xff]
    %v2976 = vld [vmem:[%s2322 + $0xe1] sm:$0xff]
    %v2977 = vld [vmem:[%s2322 + $0xf1] sm:$0xff]
    %v2978 = vld [vmem:[%s2322 + $0x101] sm:$0xff]
    %v2979 = vld [vmem:[%s2322 + $0x111] sm:$0xff]
    %v2980 = vpack.c.bf16 %v2965, %v2964
    %v2981 = vpack.c.bf16 %v2967, %v2966
    %v2982 = vpack.c.bf16 %v2969, %v2968
    %v2983 = vpack.c.bf16 %v2971, %v2970
    %v2984 = vpack.c.bf16 %v2973, %v2972
    %v2985 = vpack.c.bf16 %v2975, %v2974
    %v2986 = vpack.c.bf16 %v2977, %v2976
    %v2987 = vpack.c.bf16 %v2979, %v2978
    %v2989 = vsel %vm131, %v2980, 0
    %v2992 = vsel %vm131, %v2981, 0
    %v2995 = vsel %vm131, %v2982, 0
    %v2998 = vsel %vm131, %v2983, 0
    %v3001 = vsel %vm131, %v2984, 0
    %v3004 = vsel %vm131, %v2985, 0
    %v3007 = vsel %vm131, %v2986, 0
    %v3010 = vsel %vm131, %v2987, 0
    %v3013 = vsel %vm2411, %v2317, 0
    %3015 = vmatprep.subr.bf16.mxu0 0
    %3016 = vmatpush1.bf16.msra.mxu0 %v3013
    %3017 = vmatprep.subr.bf16.mxu0 0
    %3018 = vmatpush1.bf16.msra.mxu0 0
    %3019 = vmatprep.subr.bf16.mxu0 0
    %3020 = vmatpush1.bf16.msra.mxu0 0
    %3021 = vmatprep.subr.bf16.mxu0 0
    %3022 = vmatpush1.bf16.msra.mxu0 0
    %3023 = vmatprep.subr.bf16.mxu0 0
    %3024 = vmatpush1.bf16.msra.mxu0 0
    %3025 = vmatprep.subr.bf16.mxu0 0
    %3026 = vmatpush1.bf16.msra.mxu0 0
    %3027 = vmatprep.subr.bf16.mxu0 0
    %3028 = vmatpush1.bf16.msra.mxu0 0
    %3029 = vmatprep.subr.bf16.mxu0 0
    %3030 = vmatpush1.bf16.msra.mxu0 0
    %3031 = vmatprep.subr.bf16.mxu0 0
    %3032 = vmatpush1.bf16.msra.mxu0 0
    %3033 = vmatprep.subr.bf16.mxu0 0
    %3034 = vmatpush1.bf16.msra.mxu0 0
    %3035 = vmatprep.subr.bf16.mxu0 0
    %3036 = vmatpush1.bf16.msra.mxu0 0
    %3037 = vmatprep.subr.bf16.mxu0 0
    %3038 = vmatpush1.bf16.msra.mxu0 0
    %3039 = vmatprep.subr.bf16.mxu0 0
    %3040 = vmatpush1.bf16.msra.mxu0 0
    %3041 = vmatprep.subr.bf16.mxu0 0
    %3042 = vmatpush1.bf16.msra.mxu0 0
    %3043 = vmatprep.subr.bf16.mxu0 0
    %3044 = vmatpush1.bf16.msra.mxu0 0
    %3045 = vmatprep.subr.bf16.mxu0 0
    %3046 = vmatpush1.bf16.msra.mxu0 0
    %3047 = vmatprep.mubr.bf16.mxu0 0
    %3048 = vmatmul.mubr.bf16.gmra.mrb[0].mxu0 %v2989
    %v3049 = vpop.f32.mrb[0].mxu0
    %v3050 = vadd.f32 0.0, %v3049
    %v3051 = vpop.f32.mrb[0].mxu0
    %v3052 = vpop.f32.mrb[0].mxu0
    %v3053 = vadd.f32 0.0, %v3052
    %v3054 = vpop.f32.mrb[0].mxu0
    %3055 = vmatprep.mubr.bf16.mxu0 0
    %3056 = vmatmul.mubr.bf16.gmra.mrb[0].mxu0 %v2992
    %v3057 = vpop.f32.mrb[0].mxu0
    %v3058 = vadd.f32 0.0, %v3057
    %v3059 = vpop.f32.mrb[0].mxu0
    %v3060 = vpop.f32.mrb[0].mxu0
    %v3061 = vadd.f32 0.0, %v3060
    %v3062 = vpop.f32.mrb[0].mxu0
    %3063 = vmatprep.mubr.bf16.mxu0 0
    %3064 = vmatmul.mubr.bf16.gmra.mrb[0].mxu0 %v2995
    %v3065 = vpop.f32.mrb[0].mxu0
    %v3066 = vadd.f32 0.0, %v3065
    %v3067 = vpop.f32.mrb[0].mxu0
    %v3068 = vpop.f32.mrb[0].mxu0
    %v3069 = vadd.f32 0.0, %v3068
    %v3070 = vpop.f32.mrb[0].mxu0
    %3071 = vmatprep.mubr.bf16.mxu0 0
    %3072 = vmatmul.mubr.bf16.gmra.mrb[0].mxu0 %v2998
    %v3073 = vpop.f32.mrb[0].mxu0
    %v3074 = vadd.f32 0.0, %v3073
    %v3075 = vpop.f32.mrb[0].mxu0
    %v3076 = vpop.f32.mrb[0].mxu0
    %v3077 = vadd.f32 0.0, %v3076
    %v3078 = vpop.f32.mrb[0].mxu0
    %3079 = vmatprep.mubr.bf16.mxu0 0
    %3080 = vmatmul.mubr.bf16.gmra.mrb[0].mxu0 %v3001
    %v3081 = vpop.f32.mrb[0].mxu0
    %v3082 = vadd.f32 0.0, %v3081
    %v3083 = vpop.f32.mrb[0].mxu0
    %v3084 = vpop.f32.mrb[0].mxu0
    %v3085 = vadd.f32 0.0, %v3084
    %v3086 = vpop.f32.mrb[0].mxu0
    %3087 = vmatprep.mubr.bf16.mxu0 0
    %3088 = vmatmul.mubr.bf16.gmra.mrb[0].mxu0 %v3004
    %v3089 = vpop.f32.mrb[0].mxu0
    %v3090 = vadd.f32 0.0, %v3089
    %v3091 = vpop.f32.mrb[0].mxu0
    %v3092 = vpop.f32.mrb[0].mxu0
    %v3093 = vadd.f32 0.0, %v3092
    %v3094 = vpop.f32.mrb[0].mxu0
    %3095 = vmatprep.mubr.bf16.mxu0 0
    %3096 = vmatmul.mubr.bf16.gmra.mrb[0].mxu0 %v3007
    %v3097 = vpop.f32.mrb[0].mxu0
    %v3098 = vadd.f32 0.0, %v3097
    %v3099 = vpop.f32.mrb[0].mxu0
    %v3100 = vpop.f32.mrb[0].mxu0
    %v3101 = vadd.f32 0.0, %v3100
    %v3102 = vpop.f32.mrb[0].mxu0
    %3103 = vmatprep.mubr.bf16.mxu0 0
    %3104 = vmatmul.mubr.bf16.gmra.mrb[0].mxu0 %v3010
    %v3105 = vpop.f32.mrb[0].mxu0
    %v3106 = vadd.f32 0.0, %v3105
    %v3107 = vpop.f32.mrb[0].mxu0
    %v3108 = vpop.f32.mrb[0].mxu0
    %v3109 = vadd.f32 0.0, %v3108
    %v3110 = vpop.f32.mrb[0].mxu0
    %3111 = vdwg.mxu0
    %v3112 = vadd.f32 %v2948, %v3050
    %v3113 = vadd.f32 %v2949, %v3053
    %v3114 = vadd.f32 %v2950, %v3058
    %v3115 = vadd.f32 %v2951, %v3061
    %v3116 = vadd.f32 %v2952, %v3066
    %v3117 = vadd.f32 %v2953, %v3069
    %v3118 = vadd.f32 %v2954, %v3074
    %v3119 = vadd.f32 %v2955, %v3077
    %v3120 = vadd.f32 %v2956, %v3082
    %v3121 = vadd.f32 %v2957, %v3085
    %v3122 = vadd.f32 %v2958, %v3090
    %v3123 = vadd.f32 %v2959, %v3093
    %v3124 = vadd.f32 %v2960, %v3098
    %v3125 = vadd.f32 %v2961, %v3101
    %v3126 = vadd.f32 %v2962, %v3106
    %v3127 = vadd.f32 %v2963, %v3109
    %v3128 = vld [vmem:[%s2322 + $0x2] sm:$0xff]
    %v3129 = vld [vmem:[%s2322 + $0x12] sm:$0xff]
    %v3130 = vld [vmem:[%s2322 + $0x22] sm:$0xff]
    %v3131 = vld [vmem:[%s2322 + $0x32] sm:$0xff]
    %v3132 = vld [vmem:[%s2322 + $0x42] sm:$0xff]
    %v3133 = vld [vmem:[%s2322 + $0x52] sm:$0xff]
    %v3134 = vld [vmem:[%s2322 + $0x62] sm:$0xff]
    %v3135 = vld [vmem:[%s2322 + $0x72] sm:$0xff]
    %v3136 = vld [vmem:[%s2322 + $0xa2] sm:$0xff]
    %v3137 = vld [vmem:[%s2322 + $0xb2] sm:$0xff]
    %v3138 = vld [vmem:[%s2322 + $0xc2] sm:$0xff]
    %v3139 = vld [vmem:[%s2322 + $0xd2] sm:$0xff]
    %v3140 = vld [vmem:[%s2322 + $0xe2] sm:$0xff]
    %v3141 = vld [vmem:[%s2322 + $0xf2] sm:$0xff]
    %v3142 = vld [vmem:[%s2322 + $0x102] sm:$0xff]
    %v3143 = vld [vmem:[%s2322 + $0x112] sm:$0xff]
    %v3144 = vpack.c.bf16 %v3129, %v3128
    %v3145 = vpack.c.bf16 %v3131, %v3130
    %v3146 = vpack.c.bf16 %v3133, %v3132
    %v3147 = vpack.c.bf16 %v3135, %v3134
    %v3148 = vpack.c.bf16 %v3137, %v3136
    %v3149 = vpack.c.bf16 %v3139, %v3138
    %v3150 = vpack.c.bf16 %v3141, %v3140
    %v3151 = vpack.c.bf16 %v3143, %v3142
    %v3153 = vsel %vm131, %v3144, 0
    %v3156 = vsel %vm131, %v3145, 0
    %v3159 = vsel %vm131, %v3146, 0
    %v3162 = vsel %vm131, %v3147, 0
    %v3165 = vsel %vm131, %v3148, 0
    %v3168 = vsel %vm131, %v3149, 0
    %v3171 = vsel %vm131, %v3150, 0
    %v3174 = vsel %vm131, %v3151, 0
    %v3177 = vsel %vm2411, %v2318, 0
    %3179 = vmatprep.subr.bf16.mxu0 0
    %3180 = vmatpush1.bf16.msra.mxu0 %v3177
    %3181 = vmatprep.subr.bf16.mxu0 0
    %3182 = vmatpush1.bf16.msra.mxu0 0
    %3183 = vmatprep.subr.bf16.mxu0 0
    %3184 = vmatpush1.bf16.msra.mxu0 0
    %3185 = vmatprep.subr.bf16.mxu0 0
    %3186 = vmatpush1.bf16.msra.mxu0 0
    %3187 = vmatprep.subr.bf16.mxu0 0
    %3188 = vmatpush1.bf16.msra.mxu0 0
    %3189 = vmatprep.subr.bf16.mxu0 0
    %3190 = vmatpush1.bf16.msra.mxu0 0
    %3191 = vmatprep.subr.bf16.mxu0 0
    %3192 = vmatpush1.bf16.msra.mxu0 0
    %3193 = vmatprep.subr.bf16.mxu0 0
    %3194 = vmatpush1.bf16.msra.mxu0 0
    %3195 = vmatprep.subr.bf16.mxu0 0
    %3196 = vmatpush1.bf16.msra.mxu0 0
    %3197 = vmatprep.subr.bf16.mxu0 0
    %3198 = vmatpush1.bf16.msra.mxu0 0
    %3199 = vmatprep.subr.bf16.mxu0 0
    %3200 = vmatpush1.bf16.msra.mxu0 0
    %3201 = vmatprep.subr.bf16.mxu0 0
    %3202 = vmatpush1.bf16.msra.mxu0 0
    %3203 = vmatprep.subr.bf16.mxu0 0
    %3204 = vmatpush1.bf16.msra.mxu0 0
    %3205 = vmatprep.subr.bf16.mxu0 0
    %3206 = vmatpush1.bf16.msra.mxu0 0
    %3207 = vmatprep.subr.bf16.mxu0 0
    %3208 = vmatpush1.bf16.msra.mxu0 0
    %3209 = vmatprep.subr.bf16.mxu0 0
    %3210 = vmatpush1.bf16.msra.mxu0 0
    %3211 = vmatprep.mubr.bf16.mxu0 0
    %3212 = vmatmul.mubr.bf16.gmra.mrb[0].mxu0 %v3153
    %v3213 = vpop.f32.mrb[0].mxu0
    %v3214 = vadd.f32 0.0, %v3213
    %v3215 = vpop.f32.mrb[0].mxu0
    %v3216 = vpop.f32.mrb[0].mxu0
    %v3217 = vadd.f32 0.0, %v3216
    %v3218 = vpop.f32.mrb[0].mxu0
    %3219 = vmatprep.mubr.bf16.mxu0 0
    %3220 = vmatmul.mubr.bf16.gmra.mrb[0].mxu0 %v3156
    %v3221 = vpop.f32.mrb[0].mxu0
    %v3222 = vadd.f32 0.0, %v3221
    %v3223 = vpop.f32.mrb[0].mxu0
    %v3224 = vpop.f32.mrb[0].mxu0
    %v3225 = vadd.f32 0.0, %v3224
    %v3226 = vpop.f32.mrb[0].mxu0
    %3227 = vmatprep.mubr.bf16.mxu0 0
    %3228 = vmatmul.mubr.bf16.gmra.mrb[0].mxu0 %v3159
    %v3229 = vpop.f32.mrb[0].mxu0
    %v3230 = vadd.f32 0.0, %v3229
    %v3231 = vpop.f32.mrb[0].mxu0
    %v3232 = vpop.f32.mrb[0].mxu0
    %v3233 = vadd.f32 0.0, %v3232
    %v3234 = vpop.f32.mrb[0].mxu0
    %3235 = vmatprep.mubr.bf16.mxu0 0
    %3236 = vmatmul.mubr.bf16.gmra.mrb[0].mxu0 %v3162
    %v3237 = vpop.f32.mrb[0].mxu0
    %v3238 = vadd.f32 0.0, %v3237
    %v3239 = vpop.f32.mrb[0].mxu0
    %v3240 = vpop.f32.mrb[0].mxu0
    %v3241 = vadd.f32 0.0, %v3240
    %v3242 = vpop.f32.mrb[0].mxu0
    %3243 = vmatprep.mubr.bf16.mxu0 0
    %3244 = vmatmul.mubr.bf16.gmra.mrb[0].mxu0 %v3165
    %v3245 = vpop.f32.mrb[0].mxu0
    %v3246 = vadd.f32 0.0, %v3245
    %v3247 = vpop.f32.mrb[0].mxu0
    %v3248 = vpop.f32.mrb[0].mxu0
    %v3249 = vadd.f32 0.0, %v3248
    %v3250 = vpop.f32.mrb[0].mxu0
    %3251 = vmatprep.mubr.bf16.mxu0 0
    %3252 = vmatmul.mubr.bf16.gmra.mrb[0].mxu0 %v3168
    %v3253 = vpop.f32.mrb[0].mxu0
    %v3254 = vadd.f32 0.0, %v3253
    %v3255 = vpop.f32.mrb[0].mxu0
    %v3256 = vpop.f32.mrb[0].mxu0
    %v3257 = vadd.f32 0.0, %v3256
    %v3258 = vpop.f32.mrb[0].mxu0
    %3259 = vmatprep.mubr.bf16.mxu0 0
    %3260 = vmatmul.mubr.bf16.gmra.mrb[0].mxu0 %v3171
    %v3261 = vpop.f32.mrb[0].mxu0
    %v3262 = vadd.f32 0.0, %v3261
    %v3263 = vpop.f32.mrb[0].mxu0
    %v3264 = vpop.f32.mrb[0].mxu0
    %v3265 = vadd.f32 0.0, %v3264
    %v3266 = vpop.f32.mrb[0].mxu0
    %3267 = vmatprep.mubr.bf16.mxu0 0
    %3268 = vmatmul.mubr.bf16.gmra.mrb[0].mxu0 %v3174
    %v3269 = vpop.f32.mrb[0].mxu0
    %v3270 = vadd.f32 0.0, %v3269
    %v3271 = vpop.f32.mrb[0].mxu0
    %v3272 = vpop.f32.mrb[0].mxu0
    %v3273 = vadd.f32 0.0, %v3272
    %v3274 = vpop.f32.mrb[0].mxu0
    %3275 = vdwg.mxu0
    %v3276 = vadd.f32 %v3112, %v3214
    %v3277 = vadd.f32 %v3113, %v3217
    %v3278 = vadd.f32 %v3114, %v3222
    %v3279 = vadd.f32 %v3115, %v3225
    %v3280 = vadd.f32 %v3116, %v3230
    %v3281 = vadd.f32 %v3117, %v3233
    %v3282 = vadd.f32 %v3118, %v3238
    %v3283 = vadd.f32 %v3119, %v3241
    %v3284 = vadd.f32 %v3120, %v3246
    %v3285 = vadd.f32 %v3121, %v3249
    %v3286 = vadd.f32 %v3122, %v3254
    %v3287 = vadd.f32 %v3123, %v3257
    %v3288 = vadd.f32 %v3124, %v3262
    %v3289 = vadd.f32 %v3125, %v3265
    %v3290 = vadd.f32 %v3126, %v3270
    %v3291 = vadd.f32 %v3127, %v3273
    %s3292 = scalar_lea.vmem [#allocation3], 32
    %v3293 = vld [vmem:[%s3292] sm:$0xff]
    %v3294 = vld [vmem:[%s3292 + $0x10] sm:$0xff]
    %v3295 = vld [vmem:[%s3292 + $0x20] sm:$0xff]
    %v3296 = vld [vmem:[%s3292 + $0x30] sm:$0xff]
    %v3297 = vld [vmem:[%s3292 + $0x40] sm:$0xff]
    %v3298 = vld [vmem:[%s3292 + $0x50] sm:$0xff]
    %v3299 = vld [vmem:[%s3292 + $0x60] sm:$0xff]
    %v3300 = vld [vmem:[%s3292 + $0x70] sm:$0xff]
    %v3301 = vld [vmem:[%s3292 + $0xa0] sm:$0xff]
    %v3302 = vld [vmem:[%s3292 + $0xb0] sm:$0xff]
    %v3303 = vld [vmem:[%s3292 + $0xc0] sm:$0xff]
    %v3304 = vld [vmem:[%s3292 + $0xd0] sm:$0xff]
    %v3305 = vld [vmem:[%s3292 + $0xe0] sm:$0xff]
    %v3306 = vld [vmem:[%s3292 + $0xf0] sm:$0xff]
    %v3307 = vld [vmem:[%s3292 + $0x100] sm:$0xff]
    %v3308 = vld [vmem:[%s3292 + $0x110] sm:$0xff]
    %v3309 = vpack.c.bf16 %v3294, %v3293
    %v3310 = vpack.c.bf16 %v3296, %v3295
    %v3311 = vpack.c.bf16 %v3298, %v3297
    %v3312 = vpack.c.bf16 %v3300, %v3299
    %v3313 = vpack.c.bf16 %v3302, %v3301
    %v3314 = vpack.c.bf16 %v3304, %v3303
    %v3315 = vpack.c.bf16 %v3306, %v3305
    %v3316 = vpack.c.bf16 %v3308, %v3307
    %v3318 = vsel %vm131, %v3309, 0
    %v3321 = vsel %vm131, %v3310, 0
    %v3324 = vsel %vm131, %v3311, 0
    %v3327 = vsel %vm131, %v3312, 0
    %v3330 = vsel %vm131, %v3313, 0
    %v3333 = vsel %vm131, %v3314, 0
    %v3336 = vsel %vm131, %v3315, 0
    %v3339 = vsel %vm131, %v3316, 0
    %v3342 = vsel %vm2411, %v2319, 0
    %3344 = vmatprep.subr.bf16.mxu0 0
    %3345 = vmatpush1.bf16.msra.mxu0 %v3342
    %3346 = vmatprep.subr.bf16.mxu0 0
    %3347 = vmatpush1.bf16.msra.mxu0 0
    %3348 = vmatprep.subr.bf16.mxu0 0
    %3349 = vmatpush1.bf16.msra.mxu0 0
    %3350 = vmatprep.subr.bf16.mxu0 0
    %3351 = vmatpush1.bf16.msra.mxu0 0
    %3352 = vmatprep.subr.bf16.mxu0 0
    %3353 = vmatpush1.bf16.msra.mxu0 0
    %3354 = vmatprep.subr.bf16.mxu0 0
    %3355 = vmatpush1.bf16.msra.mxu0 0
    %3356 = vmatprep.subr.bf16.mxu0 0
    %3357 = vmatpush1.bf16.msra.mxu0 0
    %3358 = vmatprep.subr.bf16.mxu0 0
    %3359 = vmatpush1.bf16.msra.mxu0 0
    %3360 = vmatprep.subr.bf16.mxu0 0
    %3361 = vmatpush1.bf16.msra.mxu0 0
    %3362 = vmatprep.subr.bf16.mxu0 0
    %3363 = vmatpush1.bf16.msra.mxu0 0
    %3364 = vmatprep.subr.bf16.mxu0 0
    %3365 = vmatpush1.bf16.msra.mxu0 0
    %3366 = vmatprep.subr.bf16.mxu0 0
    %3367 = vmatpush1.bf16.msra.mxu0 0
    %3368 = vmatprep.subr.bf16.mxu0 0
    %3369 = vmatpush1.bf16.msra.mxu0 0
    %3370 = vmatprep.subr.bf16.mxu0 0
    %3371 = vmatpush1.bf16.msra.mxu0 0
    %3372 = vmatprep.subr.bf16.mxu0 0
    %3373 = vmatpush1.bf16.msra.mxu0 0
    %3374 = vmatprep.subr.bf16.mxu0 0
    %3375 = vmatpush1.bf16.msra.mxu0 0
    %3376 = vmatprep.mubr.bf16.mxu0 0
    %3377 = vmatmul.mubr.bf16.gmra.mrb[0].mxu0 %v3318
    %v3378 = vpop.f32.mrb[0].mxu0
    %v3379 = vadd.f32 0.0, %v3378
    %v3380 = vpop.f32.mrb[0].mxu0
    %v3381 = vpop.f32.mrb[0].mxu0
    %v3382 = vadd.f32 0.0, %v3381
    %v3383 = vpop.f32.mrb[0].mxu0
    %3384 = vmatprep.mubr.bf16.mxu0 0
    %3385 = vmatmul.mubr.bf16.gmra.mrb[0].mxu0 %v3321
    %v3386 = vpop.f32.mrb[0].mxu0
    %v3387 = vadd.f32 0.0, %v3386
    %v3388 = vpop.f32.mrb[0].mxu0
    %v3389 = vpop.f32.mrb[0].mxu0
    %v3390 = vadd.f32 0.0, %v3389
    %v3391 = vpop.f32.mrb[0].mxu0
    %3392 = vmatprep.mubr.bf16.mxu0 0
    %3393 = vmatmul.mubr.bf16.gmra.mrb[0].mxu0 %v3324
    %v3394 = vpop.f32.mrb[0].mxu0
    %v3395 = vadd.f32 0.0, %v3394
    %v3396 = vpop.f32.mrb[0].mxu0
    %v3397 = vpop.f32.mrb[0].mxu0
    %v3398 = vadd.f32 0.0, %v3397
    %v3399 = vpop.f32.mrb[0].mxu0
    %3400 = vmatprep.mubr.bf16.mxu0 0
    %3401 = vmatmul.mubr.bf16.gmra.mrb[0].mxu0 %v3327
    %v3402 = vpop.f32.mrb[0].mxu0
    %v3403 = vadd.f32 0.0, %v3402
    %v3404 = vpop.f32.mrb[0].mxu0
    %v3405 = vpop.f32.mrb[0].mxu0
    %v3406 = vadd.f32 0.0, %v3405
    %v3407 = vpop.f32.mrb[0].mxu0
    %3408 = vmatprep.mubr.bf16.mxu0 0
    %3409 = vmatmul.mubr.bf16.gmra.mrb[0].mxu0 %v3330
    %v3410 = vpop.f32.mrb[0].mxu0
    %v3411 = vadd.f32 0.0, %v3410
    %v3412 = vpop.f32.mrb[0].mxu0
    %v3413 = vpop.f32.mrb[0].mxu0
    %v3414 = vadd.f32 0.0, %v3413
    %v3415 = vpop.f32.mrb[0].mxu0
    %3416 = vmatprep.mubr.bf16.mxu0 0
    %3417 = vmatmul.mubr.bf16.gmra.mrb[0].mxu0 %v3333
    %v3418 = vpop.f32.mrb[0].mxu0
    %v3419 = vadd.f32 0.0, %v3418
    %v3420 = vpop.f32.mrb[0].mxu0
    %v3421 = vpop.f32.mrb[0].mxu0
    %v3422 = vadd.f32 0.0, %v3421
    %v3423 = vpop.f32.mrb[0].mxu0
    %3424 = vmatprep.mubr.bf16.mxu0 0
    %3425 = vmatmul.mubr.bf16.gmra.mrb[0].mxu0 %v3336
    %v3426 = vpop.f32.mrb[0].mxu0
    %v3427 = vadd.f32 0.0, %v3426
    %v3428 = vpop.f32.mrb[0].mxu0
    %v3429 = vpop.f32.mrb[0].mxu0
    %v3430 = vadd.f32 0.0, %v3429
    %v3431 = vpop.f32.mrb[0].mxu0
    %3432 = vmatprep.mubr.bf16.mxu0 0
    %3433 = vmatmul.mubr.bf16.gmra.mrb[0].mxu0 %v3339
    %v3434 = vpop.f32.mrb[0].mxu0
    %v3435 = vadd.f32 0.0, %v3434
    %v3436 = vpop.f32.mrb[0].mxu0
    %v3437 = vpop.f32.mrb[0].mxu0
    %v3438 = vadd.f32 0.0, %v3437
    %v3439 = vpop.f32.mrb[0].mxu0
    %3440 = vdwg.mxu0
    %v3441 = vadd.f32 %v3276, %v3379
    %v3442 = vadd.f32 %v3277, %v3382
    %v3443 = vadd.f32 %v3278, %v3387
    %v3444 = vadd.f32 %v3279, %v3390
    %v3445 = vadd.f32 %v3280, %v3395
    %v3446 = vadd.f32 %v3281, %v3398
    %v3447 = vadd.f32 %v3282, %v3403
    %v3448 = vadd.f32 %v3283, %v3406
    %v3449 = vadd.f32 %v3284, %v3411
    %v3450 = vadd.f32 %v3285, %v3414
    %v3451 = vadd.f32 %v3286, %v3419
    %v3452 = vadd.f32 %v3287, %v3422
    %v3453 = vadd.f32 %v3288, %v3427
    %v3454 = vadd.f32 %v3289, %v3430
    %v3455 = vadd.f32 %v3290, %v3435
    %v3456 = vadd.f32 %v3291, %v3438
    %v3457 = vld [vmem:[%s3292 + $0x1] sm:$0xff]
    %v3458 = vld [vmem:[%s3292 + $0x11] sm:$0xff]
    %v3459 = vld [vmem:[%s3292 + $0x21] sm:$0xff]
    %v3460 = vld [vmem:[%s3292 + $0x31] sm:$0xff]
    %v3461 = vld [vmem:[%s3292 + $0x41] sm:$0xff]
    %v3462 = vld [vmem:[%s3292 + $0x51] sm:$0xff]
    %v3463 = vld [vmem:[%s3292 + $0x61] sm:$0xff]
    %v3464 = vld [vmem:[%s3292 + $0x71] sm:$0xff]
    %v3465 = vld [vmem:[%s3292 + $0xa1] sm:$0xff]
    %v3466 = vld [vmem:[%s3292 + $0xb1] sm:$0xff]
    %v3467 = vld [vmem:[%s3292 + $0xc1] sm:$0xff]
    %v3468 = vld [vmem:[%s3292 + $0xd1] sm:$0xff]
    %v3469 = vld [vmem:[%s3292 + $0xe1] sm:$0xff]
    %v3470 = vld [vmem:[%s3292 + $0xf1] sm:$0xff]
    %v3471 = vld [vmem:[%s3292 + $0x101] sm:$0xff]
    %v3472 = vld [vmem:[%s3292 + $0x111] sm:$0xff]
    %v3473 = vpack.c.bf16 %v3458, %v3457
    %v3474 = vpack.c.bf16 %v3460, %v3459
    %v3475 = vpack.c.bf16 %v3462, %v3461
    %v3476 = vpack.c.bf16 %v3464, %v3463
    %v3477 = vpack.c.bf16 %v3466, %v3465
    %v3478 = vpack.c.bf16 %v3468, %v3467
    %v3479 = vpack.c.bf16 %v3470, %v3469
    %v3480 = vpack.c.bf16 %v3472, %v3471
    %v3482 = vsel %vm131, %v3473, 0
    %v3485 = vsel %vm131, %v3474, 0
    %v3488 = vsel %vm131, %v3475, 0
    %v3491 = vsel %vm131, %v3476, 0
    %v3494 = vsel %vm131, %v3477, 0
    %v3497 = vsel %vm131, %v3478, 0
    %v3500 = vsel %vm131, %v3479, 0
    %v3503 = vsel %vm131, %v3480, 0
    %v3506 = vsel %vm2411, %v2320, 0
    %3508 = vmatprep.subr.bf16.mxu0 0
    %3509 = vmatpush1.bf16.msra.mxu0 %v3506
    %3510 = vmatprep.subr.bf16.mxu0 0
    %3511 = vmatpush1.bf16.msra.mxu0 0
    %3512 = vmatprep.subr.bf16.mxu0 0
    %3513 = vmatpush1.bf16.msra.mxu0 0
    %3514 = vmatprep.subr.bf16.mxu0 0
    %3515 = vmatpush1.bf16.msra.mxu0 0
    %3516 = vmatprep.subr.bf16.mxu0 0
    %3517 = vmatpush1.bf16.msra.mxu0 0
    %3518 = vmatprep.subr.bf16.mxu0 0
    %3519 = vmatpush1.bf16.msra.mxu0 0
    %3520 = vmatprep.subr.bf16.mxu0 0
    %3521 = vmatpush1.bf16.msra.mxu0 0
    %3522 = vmatprep.subr.bf16.mxu0 0
    %3523 = vmatpush1.bf16.msra.mxu0 0
    %3524 = vmatprep.subr.bf16.mxu0 0
    %3525 = vmatpush1.bf16.msra.mxu0 0
    %3526 = vmatprep.subr.bf16.mxu0 0
    %3527 = vmatpush1.bf16.msra.mxu0 0
    %3528 = vmatprep.subr.bf16.mxu0 0
    %3529 = vmatpush1.bf16.msra.mxu0 0
    %3530 = vmatprep.subr.bf16.mxu0 0
    %3531 = vmatpush1.bf16.msra.mxu0 0
    %3532 = vmatprep.subr.bf16.mxu0 0
    %3533 = vmatpush1.bf16.msra.mxu0 0
    %3534 = vmatprep.subr.bf16.mxu0 0
    %3535 = vmatpush1.bf16.msra.mxu0 0
    %3536 = vmatprep.subr.bf16.mxu0 0
    %3537 = vmatpush1.bf16.msra.mxu0 0
    %3538 = vmatprep.subr.bf16.mxu0 0
    %3539 = vmatpush1.bf16.msra.mxu0 0
    %3540 = vmatprep.mubr.bf16.mxu0 0
    %3541 = vmatmul.mubr.bf16.gmra.mrb[0].mxu0 %v3482
    %v3542 = vpop.f32.mrb[0].mxu0
    %v3543 = vadd.f32 0.0, %v3542
    %v3544 = vpop.f32.mrb[0].mxu0
    %v3545 = vpop.f32.mrb[0].mxu0
    %v3546 = vadd.f32 0.0, %v3545
    %v3547 = vpop.f32.mrb[0].mxu0
    %3548 = vmatprep.mubr.bf16.mxu0 0
    %3549 = vmatmul.mubr.bf16.gmra.mrb[0].mxu0 %v3485
    %v3550 = vpop.f32.mrb[0].mxu0
    %v3551 = vadd.f32 0.0, %v3550
    %v3552 = vpop.f32.mrb[0].mxu0
    %v3553 = vpop.f32.mrb[0].mxu0
    %v3554 = vadd.f32 0.0, %v3553
    %v3555 = vpop.f32.mrb[0].mxu0
    %3556 = vmatprep.mubr.bf16.mxu0 0
    %3557 = vmatmul.mubr.bf16.gmra.mrb[0].mxu0 %v3488
    %v3558 = vpop.f32.mrb[0].mxu0
    %v3559 = vadd.f32 0.0, %v3558
    %v3560 = vpop.f32.mrb[0].mxu0
    %v3561 = vpop.f32.mrb[0].mxu0
    %v3562 = vadd.f32 0.0, %v3561
    %v3563 = vpop.f32.mrb[0].mxu0
    %3564 = vmatprep.mubr.bf16.mxu0 0
    %3565 = vmatmul.mubr.bf16.gmra.mrb[0].mxu0 %v3491
    %v3566 = vpop.f32.mrb[0].mxu0
    %v3567 = vadd.f32 0.0, %v3566
    %v3568 = vpop.f32.mrb[0].mxu0
    %v3569 = vpop.f32.mrb[0].mxu0
    %v3570 = vadd.f32 0.0, %v3569
    %v3571 = vpop.f32.mrb[0].mxu0
    %3572 = vmatprep.mubr.bf16.mxu0 0
    %3573 = vmatmul.mubr.bf16.gmra.mrb[0].mxu0 %v3494
    %v3574 = vpop.f32.mrb[0].mxu0
    %v3575 = vadd.f32 0.0, %v3574
    %v3576 = vpop.f32.mrb[0].mxu0
    %v3577 = vpop.f32.mrb[0].mxu0
    %v3578 = vadd.f32 0.0, %v3577
    %v3579 = vpop.f32.mrb[0].mxu0
    %3580 = vmatprep.mubr.bf16.mxu0 0
    %3581 = vmatmul.mubr.bf16.gmra.mrb[0].mxu0 %v3497
    %v3582 = vpop.f32.mrb[0].mxu0
    %v3583 = vadd.f32 0.0, %v3582
    %v3584 = vpop.f32.mrb[0].mxu0
    %v3585 = vpop.f32.mrb[0].mxu0
    %v3586 = vadd.f32 0.0, %v3585
    %v3587 = vpop.f32.mrb[0].mxu0
    %3588 = vmatprep.mubr.bf16.mxu0 0
    %3589 = vmatmul.mubr.bf16.gmra.mrb[0].mxu0 %v3500
    %v3590 = vpop.f32.mrb[0].mxu0
    %v3591 = vadd.f32 0.0, %v3590
    %v3592 = vpop.f32.mrb[0].mxu0
    %v3593 = vpop.f32.mrb[0].mxu0
    %v3594 = vadd.f32 0.0, %v3593
    %v3595 = vpop.f32.mrb[0].mxu0
    %3596 = vmatprep.mubr.bf16.mxu0 0
    %3597 = vmatmul.mubr.bf16.gmra.mrb[0].mxu0 %v3503
    %v3598 = vpop.f32.mrb[0].mxu0
    %v3599 = vadd.f32 0.0, %v3598
    %v3600 = vpop.f32.mrb[0].mxu0
    %v3601 = vpop.f32.mrb[0].mxu0
    %v3602 = vadd.f32 0.0, %v3601
    %v3603 = vpop.f32.mrb[0].mxu0
    %3604 = vdwg.mxu0
    %v3605 = vadd.f32 %v3441, %v3543
    %v3606 = vadd.f32 %v3442, %v3546
    %v3607 = vadd.f32 %v3443, %v3551
    %v3608 = vadd.f32 %v3444, %v3554
    %v3609 = vadd.f32 %v3445, %v3559
    %v3610 = vadd.f32 %v3446, %v3562
    %v3611 = vadd.f32 %v3447, %v3567
    %v3612 = vadd.f32 %v3448, %v3570
    %v3613 = vadd.f32 %v3449, %v3575
    %v3614 = vadd.f32 %v3450, %v3578
    %v3615 = vadd.f32 %v3451, %v3583
    %v3616 = vadd.f32 %v3452, %v3586
    %v3617 = vadd.f32 %v3453, %v3591
    %v3618 = vadd.f32 %v3454, %v3594
    %v3619 = vadd.f32 %v3455, %v3599
    %v3620 = vadd.f32 %v3456, %v3602
    %v3621 = vld [vmem:[%s3292 + $0x2] sm:$0xff]
    %v3622 = vld [vmem:[%s3292 + $0x12] sm:$0xff]
    %v3623 = vld [vmem:[%s3292 + $0x22] sm:$0xff]
    %v3624 = vld [vmem:[%s3292 + $0x32] sm:$0xff]
    %v3625 = vld [vmem:[%s3292 + $0x42] sm:$0xff]
    %v3626 = vld [vmem:[%s3292 + $0x52] sm:$0xff]
    %v3627 = vld [vmem:[%s3292 + $0x62] sm:$0xff]
    %v3628 = vld [vmem:[%s3292 + $0x72] sm:$0xff]
    %v3629 = vld [vmem:[%s3292 + $0xa2] sm:$0xff]
    %v3630 = vld [vmem:[%s3292 + $0xb2] sm:$0xff]
    %v3631 = vld [vmem:[%s3292 + $0xc2] sm:$0xff]
    %v3632 = vld [vmem:[%s3292 + $0xd2] sm:$0xff]
    %v3633 = vld [vmem:[%s3292 + $0xe2] sm:$0xff]
    %v3634 = vld [vmem:[%s3292 + $0xf2] sm:$0xff]
    %v3635 = vld [vmem:[%s3292 + $0x102] sm:$0xff]
    %v3636 = vld [vmem:[%s3292 + $0x112] sm:$0xff]
    %v3637 = vpack.c.bf16 %v3622, %v3621
    %v3638 = vpack.c.bf16 %v3624, %v3623
    %v3639 = vpack.c.bf16 %v3626, %v3625
    %v3640 = vpack.c.bf16 %v3628, %v3627
    %v3641 = vpack.c.bf16 %v3630, %v3629
    %v3642 = vpack.c.bf16 %v3632, %v3631
    %v3643 = vpack.c.bf16 %v3634, %v3633
    %v3644 = vpack.c.bf16 %v3636, %v3635
    %v3646 = vsel %vm131, %v3637, 0
    %v3649 = vsel %vm131, %v3638, 0
    %v3652 = vsel %vm131, %v3639, 0
    %v3655 = vsel %vm131, %v3640, 0
    %v3658 = vsel %vm131, %v3641, 0
    %v3661 = vsel %vm131, %v3642, 0
    %v3664 = vsel %vm131, %v3643, 0
    %v3667 = vsel %vm131, %v3644, 0
    %v3670 = vsel %vm2411, %v2321, 0
    %3672 = vmatprep.subr.bf16.mxu0 0
    %3673 = vmatpush1.bf16.msra.mxu0 %v3670
    %3674 = vmatprep.subr.bf16.mxu0 0
    %3675 = vmatpush1.bf16.msra.mxu0 0
    %3676 = vmatprep.subr.bf16.mxu0 0
    %3677 = vmatpush1.bf16.msra.mxu0 0
    %3678 = vmatprep.subr.bf16.mxu0 0
    %3679 = vmatpush1.bf16.msra.mxu0 0
    %3680 = vmatprep.subr.bf16.mxu0 0
    %3681 = vmatpush1.bf16.msra.mxu0 0
    %3682 = vmatprep.subr.bf16.mxu0 0
    %3683 = vmatpush1.bf16.msra.mxu0 0
    %3684 = vmatprep.subr.bf16.mxu0 0
    %3685 = vmatpush1.bf16.msra.mxu0 0
    %3686 = vmatprep.subr.bf16.mxu0 0
    %3687 = vmatpush1.bf16.msra.mxu0 0
    %3688 = vmatprep.subr.bf16.mxu0 0
    %3689 = vmatpush1.bf16.msra.mxu0 0
    %3690 = vmatprep.subr.bf16.mxu0 0
    %3691 = vmatpush1.bf16.msra.mxu0 0
    %3692 = vmatprep.subr.bf16.mxu0 0
    %3693 = vmatpush1.bf16.msra.mxu0 0
    %3694 = vmatprep.subr.bf16.mxu0 0
    %3695 = vmatpush1.bf16.msra.mxu0 0
    %3696 = vmatprep.subr.bf16.mxu0 0
    %3697 = vmatpush1.bf16.msra.mxu0 0
    %3698 = vmatprep.subr.bf16.mxu0 0
    %3699 = vmatpush1.bf16.msra.mxu0 0
    %3700 = vmatprep.subr.bf16.mxu0 0
    %3701 = vmatpush1.bf16.msra.mxu0 0
    %3702 = vmatprep.subr.bf16.mxu0 0
    %3703 = vmatpush1.bf16.msra.mxu0 0
    %3704 = vmatprep.mubr.bf16.mxu0 0
    %3705 = vmatmul.mubr.bf16.gmra.mrb[0].mxu0 %v3646
    %v3706 = vpop.f32.mrb[0].mxu0
    %v3707 = vadd.f32 0.0, %v3706
    %v3708 = vpop.f32.mrb[0].mxu0
    %v3709 = vpop.f32.mrb[0].mxu0
    %v3710 = vadd.f32 0.0, %v3709
    %v3711 = vpop.f32.mrb[0].mxu0
    %3712 = vmatprep.mubr.bf16.mxu0 0
    %3713 = vmatmul.mubr.bf16.gmra.mrb[0].mxu0 %v3649
    %v3714 = vpop.f32.mrb[0].mxu0
    %v3715 = vadd.f32 0.0, %v3714
    %v3716 = vpop.f32.mrb[0].mxu0
    %v3717 = vpop.f32.mrb[0].mxu0
    %v3718 = vadd.f32 0.0, %v3717
    %v3719 = vpop.f32.mrb[0].mxu0
    %3720 = vmatprep.mubr.bf16.mxu0 0
    %3721 = vmatmul.mubr.bf16.gmra.mrb[0].mxu0 %v3652
    %v3722 = vpop.f32.mrb[0].mxu0
    %v3723 = vadd.f32 0.0, %v3722
    %v3724 = vpop.f32.mrb[0].mxu0
    %v3725 = vpop.f32.mrb[0].mxu0
    %v3726 = vadd.f32 0.0, %v3725
    %v3727 = vpop.f32.mrb[0].mxu0
    %3728 = vmatprep.mubr.bf16.mxu0 0
    %3729 = vmatmul.mubr.bf16.gmra.mrb[0].mxu0 %v3655
    %v3730 = vpop.f32.mrb[0].mxu0
    %v3731 = vadd.f32 0.0, %v3730
    %v3732 = vpop.f32.mrb[0].mxu0
    %v3733 = vpop.f32.mrb[0].mxu0
    %v3734 = vadd.f32 0.0, %v3733
    %v3735 = vpop.f32.mrb[0].mxu0
    %3736 = vmatprep.mubr.bf16.mxu0 0
    %3737 = vmatmul.mubr.bf16.gmra.mrb[0].mxu0 %v3658
    %v3738 = vpop.f32.mrb[0].mxu0
    %v3739 = vadd.f32 0.0, %v3738
    %v3740 = vpop.f32.mrb[0].mxu0
    %v3741 = vpop.f32.mrb[0].mxu0
    %v3742 = vadd.f32 0.0, %v3741
    %v3743 = vpop.f32.mrb[0].mxu0
    %3744 = vmatprep.mubr.bf16.mxu0 0
    %3745 = vmatmul.mubr.bf16.gmra.mrb[0].mxu0 %v3661
    %v3746 = vpop.f32.mrb[0].mxu0
    %v3747 = vadd.f32 0.0, %v3746
    %v3748 = vpop.f32.mrb[0].mxu0
    %v3749 = vpop.f32.mrb[0].mxu0
    %v3750 = vadd.f32 0.0, %v3749
    %v3751 = vpop.f32.mrb[0].mxu0
    %3752 = vmatprep.mubr.bf16.mxu0 0
    %3753 = vmatmul.mubr.bf16.gmra.mrb[0].mxu0 %v3664
    %v3754 = vpop.f32.mrb[0].mxu0
    %v3755 = vadd.f32 0.0, %v3754
    %v3756 = vpop.f32.mrb[0].mxu0
    %v3757 = vpop.f32.mrb[0].mxu0
    %v3758 = vadd.f32 0.0, %v3757
    %v3759 = vpop.f32.mrb[0].mxu0
    %3760 = vmatprep.mubr.bf16.mxu0 0
    %3761 = vmatmul.mubr.bf16.gmra.mrb[0].mxu0 %v3667
    %v3762 = vpop.f32.mrb[0].mxu0
    %v3763 = vadd.f32 0.0, %v3762
    %v3764 = vpop.f32.mrb[0].mxu0
    %v3765 = vpop.f32.mrb[0].mxu0
    %v3766 = vadd.f32 0.0, %v3765
    %v3767 = vpop.f32.mrb[0].mxu0
    %3768 = vdwg.mxu0
    %v3769 = vadd.f32 %v3605, %v3707
    %v3770 = vadd.f32 %v3606, %v3710
    %v3771 = vadd.f32 %v3607, %v3715
    %v3772 = vadd.f32 %v3608, %v3718
    %v3773 = vadd.f32 %v3609, %v3723
    %v3774 = vadd.f32 %v3610, %v3726
    %v3775 = vadd.f32 %v3611, %v3731
    %v3776 = vadd.f32 %v3612, %v3734
    %v3777 = vadd.f32 %v3613, %v3739
    %v3778 = vadd.f32 %v3614, %v3742
    %v3779 = vadd.f32 %v3615, %v3747
    %v3780 = vadd.f32 %v3616, %v3750
    %v3781 = vadd.f32 %v3617, %v3755
    %v3782 = vadd.f32 %v3618, %v3758
    %v3783 = vadd.f32 %v3619, %v3763
    %v3784 = vadd.f32 %v3620, %v3766
    %v3785 = vld [vmem:[%s6] sm:$0x3]
    %v3787 = vsel %vm758, %v3785, 0
    %3789 = vmatprep.subr.bf16.mxu0 0
    %3790 = vmatpush1.bf16.msra.mxu0 %v3787
    %3791 = vmatprep.subr.bf16.mxu0 0
    %3792 = vmatpush1.bf16.msra.mxu0 0
    %3793 = vmatprep.subr.bf16.mxu0 0
    %3794 = vmatpush1.bf16.msra.mxu0 0
    %3795 = vmatprep.subr.bf16.mxu0 0
    %3796 = vmatpush1.bf16.msra.mxu0 0
    %3797 = vmatprep.subr.bf16.mxu0 0
    %3798 = vmatpush1.bf16.msra.mxu0 0
    %3799 = vmatprep.subr.bf16.mxu0 0
    %3800 = vmatpush1.bf16.msra.mxu0 0
    %3801 = vmatprep.subr.bf16.mxu0 0
    %3802 = vmatpush1.bf16.msra.mxu0 0
    %3803 = vmatprep.subr.bf16.mxu0 0
    %3804 = vmatpush1.bf16.msra.mxu0 0
    %3805 = vmatprep.subr.bf16.mxu0 0
    %3806 = vmatpush1.bf16.msra.mxu0 0
    %3807 = vmatprep.subr.bf16.mxu0 0
    %3808 = vmatpush1.bf16.msra.mxu0 0
    %3809 = vmatprep.subr.bf16.mxu0 0
    %3810 = vmatpush1.bf16.msra.mxu0 0
    %3811 = vmatprep.subr.bf16.mxu0 0
    %3812 = vmatpush1.bf16.msra.mxu0 0
    %3813 = vmatprep.subr.bf16.mxu0 0
    %3814 = vmatpush1.bf16.msra.mxu0 0
    %3815 = vmatprep.subr.bf16.mxu0 0
    %3816 = vmatpush1.bf16.msra.mxu0 0
    %3817 = vmatprep.subr.bf16.mxu0 0
    %3818 = vmatpush1.bf16.msra.mxu0 0
    %3819 = vmatprep.subr.bf16.mxu0 0
    %3820 = vmatpush1.bf16.msra.mxu0 0
    %3821 = vmatprep.mubr.bf16.mxu0 0
    %3822 = vmatmul.mubr.bf16.gmra.mrb[0].mxu0 %v1383
    %v3823 = vpop.f32.mrb[0].mxu0
    %v3824 = vadd.f32 0.0, %v3823
    %v3825 = vpop.f32.mrb[0].mxu0
    %v3826 = vpop.f32.mrb[0].mxu0
    %v3827 = vadd.f32 0.0, %v3826
    %v3828 = vpop.f32.mrb[0].mxu0
    %3829 = vmatprep.mubr.bf16.mxu0 0
    %3830 = vmatmul.mubr.bf16.gmra.mrb[0].mxu0 %v1386
    %v3831 = vpop.f32.mrb[0].mxu0
    %v3832 = vadd.f32 0.0, %v3831
    %v3833 = vpop.f32.mrb[0].mxu0
    %v3834 = vpop.f32.mrb[0].mxu0
    %v3835 = vadd.f32 0.0, %v3834
    %v3836 = vpop.f32.mrb[0].mxu0
    %3837 = vmatprep.mubr.bf16.mxu0 0
    %3838 = vmatmul.mubr.bf16.gmra.mrb[0].mxu0 %v1389
    %v3839 = vpop.f32.mrb[0].mxu0
    %v3840 = vadd.f32 0.0, %v3839
    %v3841 = vpop.f32.mrb[0].mxu0
    %v3842 = vpop.f32.mrb[0].mxu0
    %v3843 = vadd.f32 0.0, %v3842
    %v3844 = vpop.f32.mrb[0].mxu0
    %3845 = vmatprep.mubr.bf16.mxu0 0
    %3846 = vmatmul.mubr.bf16.gmra.mrb[0].mxu0 %v1392
    %v3847 = vpop.f32.mrb[0].mxu0
    %v3848 = vadd.f32 0.0, %v3847
    %v3849 = vpop.f32.mrb[0].mxu0
    %v3850 = vpop.f32.mrb[0].mxu0
    %v3851 = vadd.f32 0.0, %v3850
    %v3852 = vpop.f32.mrb[0].mxu0
    %3853 = vmatprep.mubr.bf16.mxu0 0
    %3854 = vmatmul.mubr.bf16.gmra.mrb[0].mxu0 %v1395
    %v3855 = vpop.f32.mrb[0].mxu0
    %v3856 = vadd.f32 0.0, %v3855
    %v3857 = vpop.f32.mrb[0].mxu0
    %v3858 = vpop.f32.mrb[0].mxu0
    %v3859 = vadd.f32 0.0, %v3858
    %v3860 = vpop.f32.mrb[0].mxu0
    %3861 = vmatprep.mubr.bf16.mxu0 0
    %3862 = vmatmul.mubr.bf16.gmra.mrb[0].mxu0 %v1398
    %v3863 = vpop.f32.mrb[0].mxu0
    %v3864 = vadd.f32 0.0, %v3863
    %v3865 = vpop.f32.mrb[0].mxu0
    %v3866 = vpop.f32.mrb[0].mxu0
    %v3867 = vadd.f32 0.0, %v3866
    %v3868 = vpop.f32.mrb[0].mxu0
    %3869 = vmatprep.mubr.bf16.mxu0 0
    %3870 = vmatmul.mubr.bf16.gmra.mrb[0].mxu0 %v1401
    %v3871 = vpop.f32.mrb[0].mxu0
    %v3872 = vadd.f32 0.0, %v3871
    %v3873 = vpop.f32.mrb[0].mxu0
    %v3874 = vpop.f32.mrb[0].mxu0
    %v3875 = vadd.f32 0.0, %v3874
    %v3876 = vpop.f32.mrb[0].mxu0
    %3877 = vmatprep.mubr.bf16.mxu0 0
    %3878 = vmatmul.mubr.bf16.gmra.mrb[0].mxu0 %v1404
    %v3879 = vpop.f32.mrb[0].mxu0
    %v3880 = vadd.f32 0.0, %v3879
    %v3881 = vpop.f32.mrb[0].mxu0
    %v3882 = vpop.f32.mrb[0].mxu0
    %v3883 = vadd.f32 0.0, %v3882
    %v3884 = vpop.f32.mrb[0].mxu0
    %3885 = vdwg.mxu0
    %v3886 = vadd.f32 %v3769, %v3824
    %v3887 = vadd.f32 %v3770, %v3827
    %v3888 = vadd.f32 %v3771, %v3832
    %v3889 = vadd.f32 %v3772, %v3835
    %v3890 = vadd.f32 %v3773, %v3840
    %v3891 = vadd.f32 %v3774, %v3843
    %v3892 = vadd.f32 %v3775, %v3848
    %v3893 = vadd.f32 %v3776, %v3851
    %v3894 = vadd.f32 %v3777, %v3856
    %v3895 = vadd.f32 %v3778, %v3859
    %v3896 = vadd.f32 %v3779, %v3864
    %v3897 = vadd.f32 %v3780, %v3867
    %v3898 = vadd.f32 %v3781, %v3872
    %v3899 = vadd.f32 %v3782, %v3875
    %v3900 = vadd.f32 %v3783, %v3880
    %v3901 = vadd.f32 %v3784, %v3883
    %v3902 = vld [vmem:[%s7] sm:$0x1]
    %v3904 = vlaneseq
    %v3905 = vshrl.u32 %v3904, 7
    %v3906 = vsub.s32 0, %v3905
    %v3907 = vrot.slane %v3902, %v3906
    %v3909 = vmul.f32 %v3886, %v3907
    %v3910 = vmul.f32 %v3887, %v3907
    %v3911 = vmul.f32 %v3888, %v3907
    %v3912 = vmul.f32 %v3889, %v3907
    %v3913 = vmul.f32 %v3890, %v3907
    %v3914 = vmul.f32 %v3891, %v3907
    %v3915 = vmul.f32 %v3892, %v3907
    %v3916 = vmul.f32 %v3893, %v3907
    %v3917 = vmul.f32 %v3894, %v3907
    %v3918 = vmul.f32 %v3895, %v3907
    %v3919 = vmul.f32 %v3896, %v3907
    %v3920 = vmul.f32 %v3897, %v3907
    %v3921 = vmul.f32 %v3898, %v3907
    %v3922 = vmul.f32 %v3899, %v3907
    %v3923 = vmul.f32 %v3900, %v3907
    %v3924 = vmul.f32 %v3901, %v3907
    %v3925 = vld [vmem:[%s8] sm:$0x1]
    %v3927 = vlaneseq
    %v3928 = vshrl.u32 %v3927, 7
    %v3929 = vsub.s32 0, %v3928
    %v3930 = vrot.slane %v3925, %v3929
    %v3932 = vadd.f32 %v3909, %v3930
    %v3933 = vadd.f32 %v3910, %v3930
    %v3934 = vadd.f32 %v3911, %v3930
    %v3935 = vadd.f32 %v3912, %v3930
    %v3936 = vadd.f32 %v3913, %v3930
    %v3937 = vadd.f32 %v3914, %v3930
    %v3938 = vadd.f32 %v3915, %v3930
    %v3939 = vadd.f32 %v3916, %v3930
    %v3940 = vadd.f32 %v3917, %v3930
    %v3941 = vadd.f32 %v3918, %v3930
    %v3942 = vadd.f32 %v3919, %v3930
    %v3943 = vadd.f32 %v3920, %v3930
    %v3944 = vadd.f32 %v3921, %v3930
    %v3945 = vadd.f32 %v3922, %v3930
    %v3946 = vadd.f32 %v3923, %v3930
    %v3947 = vadd.f32 %v3924, %v3930
    %vm3948 = vcmp.ge.f32.partialorder %v3932, 0.0
    %vm3949 = vcmp.ge.f32.partialorder %v3933, 0.0
    %vm3950 = vcmp.ge.f32.partialorder %v3934, 0.0
    %vm3951 = vcmp.ge.f32.partialorder %v3935, 0.0
    %vm3952 = vcmp.ge.f32.partialorder %v3936, 0.0
    %vm3953 = vcmp.ge.f32.partialorder %v3937, 0.0
    %vm3954 = vcmp.ge.f32.partialorder %v3938, 0.0
    %vm3955 = vcmp.ge.f32.partialorder %v3939, 0.0
    %vm3956 = vcmp.ge.f32.partialorder %v3940, 0.0
    %vm3957 = vcmp.ge.f32.partialorder %v3941, 0.0
    %vm3958 = vcmp.ge.f32.partialorder %v3942, 0.0
    %vm3959 = vcmp.ge.f32.partialorder %v3943, 0.0
    %vm3960 = vcmp.ge.f32.partialorder %v3944, 0.0
    %vm3961 = vcmp.ge.f32.partialorder %v3945, 0.0
    %vm3962 = vcmp.ge.f32.partialorder %v3946, 0.0
    %vm3963 = vcmp.ge.f32.partialorder %v3947, 0.0
    %v3964 = vmul.f32 %v3932, 0.1
    %v3965 = vmul.f32 %v3933, 0.1
    %v3966 = vmul.f32 %v3934, 0.1
    %v3967 = vmul.f32 %v3935, 0.1
    %v3968 = vmul.f32 %v3936, 0.1
    %v3969 = vmul.f32 %v3937, 0.1
    %v3970 = vmul.f32 %v3938, 0.1
    %v3971 = vmul.f32 %v3939, 0.1
    %v3972 = vmul.f32 %v3940, 0.1
    %v3973 = vmul.f32 %v3941, 0.1
    %v3974 = vmul.f32 %v3942, 0.1
    %v3975 = vmul.f32 %v3943, 0.1
    %v3976 = vmul.f32 %v3944, 0.1
    %v3977 = vmul.f32 %v3945, 0.1
    %v3978 = vmul.f32 %v3946, 0.1
    %v3979 = vmul.f32 %v3947, 0.1
    %v3980 = vsel %vm3948, %v3932, %v3964
    %v3981 = vsel %vm3949, %v3933, %v3965
    %v3982 = vsel %vm3950, %v3934, %v3966
    %v3983 = vsel %vm3951, %v3935, %v3967
    %v3984 = vsel %vm3952, %v3936, %v3968
    %v3985 = vsel %vm3953, %v3937, %v3969
    %v3986 = vsel %vm3954, %v3938, %v3970
    %v3987 = vsel %vm3955, %v3939, %v3971
    %v3988 = vsel %vm3956, %v3940, %v3972
    %v3989 = vsel %vm3957, %v3941, %v3973
    %v3990 = vsel %vm3958, %v3942, %v3974
    %v3991 = vsel %vm3959, %v3943, %v3975
    %v3992 = vsel %vm3960, %v3944, %v3976
    %v3993 = vsel %vm3961, %v3945, %v3977
    %v3994 = vsel %vm3962, %v3946, %v3978
    %v3995 = vsel %vm3963, %v3947, %v3979
    %v3996 = vld [vmem:[%s9] sm:$0xf]
    %v3997 = vld [vmem:[%s9 + $0x4] sm:$0xf]
    %v3998 = vld [vmem:[%s9 + $0x8] sm:$0xf]
    %v3999 = vld [vmem:[%s9 + $0xc] sm:$0xf]
    %v4000 = vld [vmem:[%s9 + $0x10] sm:$0xf]
    %v4001 = vld [vmem:[%s9 + $0x14] sm:$0xf]
    %v4002 = vld [vmem:[%s9 + $0x18] sm:$0xf]
    %v4003 = vld [vmem:[%s9 + $0x1c] sm:$0xf]
    %v4004 = vld [vmem:[%s9 + $0x20] sm:$0xf]
    %4005 = vst.msk [vmem:[%s2322 + $0x1] sm:$0xff] %vm131, %v3980
    %4006 = vst.msk [vmem:[%s2322 + $0x11] sm:$0xff] %vm131, %v3981
    %4007 = vst.msk [vmem:[%s2322 + $0x21] sm:$0xff] %vm131, %v3982
    %4008 = vst.msk [vmem:[%s2322 + $0x31] sm:$0xff] %vm131, %v3983
    %4009 = vst.msk [vmem:[%s2322 + $0x41] sm:$0xff] %vm131, %v3984
    %4010 = vst.msk [vmem:[%s2322 + $0x51] sm:$0xff] %vm131, %v3985
    %4011 = vst.msk [vmem:[%s2322 + $0x61] sm:$0xff] %vm131, %v3986
    %4012 = vst.msk [vmem:[%s2322 + $0x71] sm:$0xff] %vm131, %v3987
    %4013 = vst.msk [vmem:[%s2322 + $0xa1] sm:$0xff] %vm131, %v3988
    %4014 = vst.msk [vmem:[%s2322 + $0xb1] sm:$0xff] %vm131, %v3989
    %4015 = vst.msk [vmem:[%s2322 + $0xc1] sm:$0xff] %vm131, %v3990
    %4016 = vst.msk [vmem:[%s2322 + $0xd1] sm:$0xff] %vm131, %v3991
    %4017 = vst.msk [vmem:[%s2322 + $0xe1] sm:$0xff] %vm131, %v3992
    %4018 = vst.msk [vmem:[%s2322 + $0xf1] sm:$0xff] %vm131, %v3993
    %4019 = vst.msk [vmem:[%s2322 + $0x101] sm:$0xff] %vm131, %v3994
    %4020 = vst.msk [vmem:[%s2322 + $0x111] sm:$0xff] %vm131, %v3995
    %v4021 = vld [vmem:[#allocation3] sm:$0xff]
    %v4022 = vld [vmem:[#allocation3 + $0x10] sm:$0xff]
    %v4023 = vld [vmem:[#allocation3 + $0x20] sm:$0xff]
    %v4024 = vld [vmem:[#allocation3 + $0x30] sm:$0xff]
    %v4025 = vld [vmem:[#allocation3 + $0x40] sm:$0xff]
    %v4026 = vld [vmem:[#allocation3 + $0x50] sm:$0xff]
    %v4027 = vld [vmem:[#allocation3 + $0x60] sm:$0xff]
    %v4028 = vld [vmem:[#allocation3 + $0x70] sm:$0xff]
    %v4029 = vld [vmem:[#allocation3 + $0xa0] sm:$0xff]
    %v4030 = vld [vmem:[#allocation3 + $0xb0] sm:$0xff]
    %v4031 = vld [vmem:[#allocation3 + $0xc0] sm:$0xff]
    %v4032 = vld [vmem:[#allocation3 + $0xd0] sm:$0xff]
    %v4033 = vld [vmem:[#allocation3 + $0xe0] sm:$0xff]
    %v4034 = vld [vmem:[#allocation3 + $0xf0] sm:$0xff]
    %v4035 = vld [vmem:[#allocation3 + $0x100] sm:$0xff]
    %v4036 = vld [vmem:[#allocation3 + $0x110] sm:$0xff]
    %v4037 = vpack.c.bf16 %v4022, %v4021
    %v4038 = vpack.c.bf16 %v4024, %v4023
    %v4039 = vpack.c.bf16 %v4026, %v4025
    %v4040 = vpack.c.bf16 %v4028, %v4027
    %v4041 = vpack.c.bf16 %v4030, %v4029
    %v4042 = vpack.c.bf16 %v4032, %v4031
    %v4043 = vpack.c.bf16 %v4034, %v4033
    %v4044 = vpack.c.bf16 %v4036, %v4035
    %v4045 = vld [vmem:[#allocation3 + $0x1] sm:$0xff]
    %v4046 = vld [vmem:[#allocation3 + $0x11] sm:$0xff]
    %v4047 = vld [vmem:[#allocation3 + $0x21] sm:$0xff]
    %v4048 = vld [vmem:[#allocation3 + $0x31] sm:$0xff]
    %v4049 = vld [vmem:[#allocation3 + $0x41] sm:$0xff]
    %v4050 = vld [vmem:[#allocation3 + $0x51] sm:$0xff]
    %v4051 = vld [vmem:[#allocation3 + $0x61] sm:$0xff]
    %v4052 = vld [vmem:[#allocation3 + $0x71] sm:$0xff]
    %v4053 = vld [vmem:[#allocation3 + $0xa1] sm:$0xff]
    %v4054 = vld [vmem:[#allocation3 + $0xb1] sm:$0xff]
    %v4055 = vld [vmem:[#allocation3 + $0xc1] sm:$0xff]
    %v4056 = vld [vmem:[#allocation3 + $0xd1] sm:$0xff]
    %v4057 = vld [vmem:[#allocation3 + $0xe1] sm:$0xff]
    %v4058 = vld [vmem:[#allocation3 + $0xf1] sm:$0xff]
    %v4059 = vld [vmem:[#allocation3 + $0x101] sm:$0xff]
    %v4060 = vld [vmem:[#allocation3 + $0x111] sm:$0xff]
    %v4061 = vpack.c.bf16 %v4046, %v4045
    %v4062 = vpack.c.bf16 %v4048, %v4047
    %v4063 = vpack.c.bf16 %v4050, %v4049
    %v4064 = vpack.c.bf16 %v4052, %v4051
    %v4065 = vpack.c.bf16 %v4054, %v4053
    %v4066 = vpack.c.bf16 %v4056, %v4055
    %v4067 = vpack.c.bf16 %v4058, %v4057
    %v4068 = vpack.c.bf16 %v4060, %v4059
    %v4070 = vsel %vm131, %v4061, 0
    %v4073 = vsel %vm131, %v4062, 0
    %v4076 = vsel %vm131, %v4063, 0
    %v4079 = vsel %vm131, %v4064, 0
    %v4082 = vsel %vm131, %v4065, 0
    %v4085 = vsel %vm131, %v4066, 0
    %v4088 = vsel %vm131, %v4067, 0
    %v4091 = vsel %vm131, %v4068, 0
    %v4094 = vsel %vm2411, %v3997, 0
    %4096 = vmatprep.subr.bf16.mxu0 0
    %4097 = vmatpush1.bf16.msra.mxu0 %v4094
    %4098 = vmatprep.subr.bf16.mxu0 0
    %4099 = vmatpush1.bf16.msra.mxu0 0
    %4100 = vmatprep.subr.bf16.mxu0 0
    %4101 = vmatpush1.bf16.msra.mxu0 0
    %4102 = vmatprep.subr.bf16.mxu0 0
    %4103 = vmatpush1.bf16.msra.mxu0 0
    %4104 = vmatprep.subr.bf16.mxu0 0
    %4105 = vmatpush1.bf16.msra.mxu0 0
    %4106 = vmatprep.subr.bf16.mxu0 0
    %4107 = vmatpush1.bf16.msra.mxu0 0
    %4108 = vmatprep.subr.bf16.mxu0 0
    %4109 = vmatpush1.bf16.msra.mxu0 0
    %4110 = vmatprep.subr.bf16.mxu0 0
    %4111 = vmatpush1.bf16.msra.mxu0 0
    %4112 = vmatprep.subr.bf16.mxu0 0
    %4113 = vmatpush1.bf16.msra.mxu0 0
    %4114 = vmatprep.subr.bf16.mxu0 0
    %4115 = vmatpush1.bf16.msra.mxu0 0
    %4116 = vmatprep.subr.bf16.mxu0 0
    %4117 = vmatpush1.bf16.msra.mxu0 0
    %4118 = vmatprep.subr.bf16.mxu0 0
    %4119 = vmatpush1.bf16.msra.mxu0 0
    %4120 = vmatprep.subr.bf16.mxu0 0
    %4121 = vmatpush1.bf16.msra.mxu0 0
    %4122 = vmatprep.subr.bf16.mxu0 0
    %4123 = vmatpush1.bf16.msra.mxu0 0
    %4124 = vmatprep.subr.bf16.mxu0 0
    %4125 = vmatpush1.bf16.msra.mxu0 0
    %4126 = vmatprep.subr.bf16.mxu0 0
    %4127 = vmatpush1.bf16.msra.mxu0 0
    %4128 = vmatprep.mubr.bf16.mxu0 0
    %4129 = vmatmul.mubr.bf16.gmra.mrb[0].mxu0 %v4070
    %v4130 = vpop.f32.mrb[0].mxu0
    %v4131 = vadd.f32 0.0, %v4130
    %v4132 = vpop.f32.mrb[0].mxu0
    %v4133 = vpop.f32.mrb[0].mxu0
    %v4134 = vadd.f32 0.0, %v4133
    %v4135 = vpop.f32.mrb[0].mxu0
    %4136 = vmatprep.mubr.bf16.mxu0 0
    %4137 = vmatmul.mubr.bf16.gmra.mrb[0].mxu0 %v4073
    %v4138 = vpop.f32.mrb[0].mxu0
    %v4139 = vadd.f32 0.0, %v4138
    %v4140 = vpop.f32.mrb[0].mxu0
    %v4141 = vpop.f32.mrb[0].mxu0
    %v4142 = vadd.f32 0.0, %v4141
    %v4143 = vpop.f32.mrb[0].mxu0
    %4144 = vmatprep.mubr.bf16.mxu0 0
    %4145 = vmatmul.mubr.bf16.gmra.mrb[0].mxu0 %v4076
    %v4146 = vpop.f32.mrb[0].mxu0
    %v4147 = vadd.f32 0.0, %v4146
    %v4148 = vpop.f32.mrb[0].mxu0
    %v4149 = vpop.f32.mrb[0].mxu0
    %v4150 = vadd.f32 0.0, %v4149
    %v4151 = vpop.f32.mrb[0].mxu0
    %4152 = vmatprep.mubr.bf16.mxu0 0
    %4153 = vmatmul.mubr.bf16.gmra.mrb[0].mxu0 %v4079
    %v4154 = vpop.f32.mrb[0].mxu0
    %v4155 = vadd.f32 0.0, %v4154
    %v4156 = vpop.f32.mrb[0].mxu0
    %v4157 = vpop.f32.mrb[0].mxu0
    %v4158 = vadd.f32 0.0, %v4157
    %v4159 = vpop.f32.mrb[0].mxu0
    %4160 = vmatprep.mubr.bf16.mxu0 0
    %4161 = vmatmul.mubr.bf16.gmra.mrb[0].mxu0 %v4082
    %v4162 = vpop.f32.mrb[0].mxu0
    %v4163 = vadd.f32 0.0, %v4162
    %v4164 = vpop.f32.mrb[0].mxu0
    %v4165 = vpop.f32.mrb[0].mxu0
    %v4166 = vadd.f32 0.0, %v4165
    %v4167 = vpop.f32.mrb[0].mxu0
    %4168 = vmatprep.mubr.bf16.mxu0 0
    %4169 = vmatmul.mubr.bf16.gmra.mrb[0].mxu0 %v4085
    %v4170 = vpop.f32.mrb[0].mxu0
    %v4171 = vadd.f32 0.0, %v4170
    %v4172 = vpop.f32.mrb[0].mxu0
    %v4173 = vpop.f32.mrb[0].mxu0
    %v4174 = vadd.f32 0.0, %v4173
    %v4175 = vpop.f32.mrb[0].mxu0
    %4176 = vmatprep.mubr.bf16.mxu0 0
    %4177 = vmatmul.mubr.bf16.gmra.mrb[0].mxu0 %v4088
    %v4178 = vpop.f32.mrb[0].mxu0
    %v4179 = vadd.f32 0.0, %v4178
    %v4180 = vpop.f32.mrb[0].mxu0
    %v4181 = vpop.f32.mrb[0].mxu0
    %v4182 = vadd.f32 0.0, %v4181
    %v4183 = vpop.f32.mrb[0].mxu0
    %4184 = vmatprep.mubr.bf16.mxu0 0
    %4185 = vmatmul.mubr.bf16.gmra.mrb[0].mxu0 %v4091
    %v4186 = vpop.f32.mrb[0].mxu0
    %v4187 = vadd.f32 0.0, %v4186
    %v4188 = vpop.f32.mrb[0].mxu0
    %v4189 = vpop.f32.mrb[0].mxu0
    %v4190 = vadd.f32 0.0, %v4189
    %v4191 = vpop.f32.mrb[0].mxu0
    %4192 = vdwg.mxu0
    %v4194 = vsel %vm131, %v4037, 0
    %v4197 = vsel %vm131, %v4038, 0
    %v4200 = vsel %vm131, %v4039, 0
    %v4203 = vsel %vm131, %v4040, 0
    %v4206 = vsel %vm131, %v4041, 0
    %v4209 = vsel %vm131, %v4042, 0
    %v4212 = vsel %vm131, %v4043, 0
    %v4215 = vsel %vm131, %v4044, 0
    %v4218 = vsel %vm2411, %v3996, 0
    %4220 = vmatprep.subr.bf16.mxu0 0
    %4221 = vmatpush1.bf16.msra.mxu0 %v4218
    %4222 = vmatprep.subr.bf16.mxu0 0
    %4223 = vmatpush1.bf16.msra.mxu0 0
    %4224 = vmatprep.subr.bf16.mxu0 0
    %4225 = vmatpush1.bf16.msra.mxu0 0
    %4226 = vmatprep.subr.bf16.mxu0 0
    %4227 = vmatpush1.bf16.msra.mxu0 0
    %4228 = vmatprep.subr.bf16.mxu0 0
    %4229 = vmatpush1.bf16.msra.mxu0 0
    %4230 = vmatprep.subr.bf16.mxu0 0
    %4231 = vmatpush1.bf16.msra.mxu0 0
    %4232 = vmatprep.subr.bf16.mxu0 0
    %4233 = vmatpush1.bf16.msra.mxu0 0
    %4234 = vmatprep.subr.bf16.mxu0 0
    %4235 = vmatpush1.bf16.msra.mxu0 0
    %4236 = vmatprep.subr.bf16.mxu0 0
    %4237 = vmatpush1.bf16.msra.mxu0 0
    %4238 = vmatprep.subr.bf16.mxu0 0
    %4239 = vmatpush1.bf16.msra.mxu0 0
    %4240 = vmatprep.subr.bf16.mxu0 0
    %4241 = vmatpush1.bf16.msra.mxu0 0
    %4242 = vmatprep.subr.bf16.mxu0 0
    %4243 = vmatpush1.bf16.msra.mxu0 0
    %4244 = vmatprep.subr.bf16.mxu0 0
    %4245 = vmatpush1.bf16.msra.mxu0 0
    %4246 = vmatprep.subr.bf16.mxu0 0
    %4247 = vmatpush1.bf16.msra.mxu0 0
    %4248 = vmatprep.subr.bf16.mxu0 0
    %4249 = vmatpush1.bf16.msra.mxu0 0
    %4250 = vmatprep.subr.bf16.mxu0 0
    %4251 = vmatpush1.bf16.msra.mxu0 0
    %4252 = vmatprep.mubr.bf16.mxu0 0
    %4253 = vmatmul.mubr.bf16.gmra.mrb[0].mxu0 %v4194
    %v4254 = vpop.f32.mrb[0].mxu0
    %v4255 = vadd.f32 %v4131, %v4254
    %v4256 = vpop.f32.mrb[0].mxu0
    %v4257 = vpop.f32.mrb[0].mxu0
    %v4258 = vadd.f32 %v4134, %v4257
    %v4259 = vpop.f32.mrb[0].mxu0
    %4260 = vmatprep.mubr.bf16.mxu0 0
    %4261 = vmatmul.mubr.bf16.gmra.mrb[0].mxu0 %v4197
    %v4262 = vpop.f32.mrb[0].mxu0
    %v4263 = vadd.f32 %v4139, %v4262
    %v4264 = vpop.f32.mrb[0].mxu0
    %v4265 = vpop.f32.mrb[0].mxu0
    %v4266 = vadd.f32 %v4142, %v4265
    %v4267 = vpop.f32.mrb[0].mxu0
    %4268 = vmatprep.mubr.bf16.mxu0 0
    %4269 = vmatmul.mubr.bf16.gmra.mrb[0].mxu0 %v4200
    %v4270 = vpop.f32.mrb[0].mxu0
    %v4271 = vadd.f32 %v4147, %v4270
    %v4272 = vpop.f32.mrb[0].mxu0
    %v4273 = vpop.f32.mrb[0].mxu0
    %v4274 = vadd.f32 %v4150, %v4273
    %v4275 = vpop.f32.mrb[0].mxu0
    %4276 = vmatprep.mubr.bf16.mxu0 0
    %4277 = vmatmul.mubr.bf16.gmra.mrb[0].mxu0 %v4203
    %v4278 = vpop.f32.mrb[0].mxu0
    %v4279 = vadd.f32 %v4155, %v4278
    %v4280 = vpop.f32.mrb[0].mxu0
    %v4281 = vpop.f32.mrb[0].mxu0
    %v4282 = vadd.f32 %v4158, %v4281
    %v4283 = vpop.f32.mrb[0].mxu0
    %4284 = vmatprep.mubr.bf16.mxu0 0
    %4285 = vmatmul.mubr.bf16.gmra.mrb[0].mxu0 %v4206
    %v4286 = vpop.f32.mrb[0].mxu0
    %v4287 = vadd.f32 %v4163, %v4286
    %v4288 = vpop.f32.mrb[0].mxu0
    %v4289 = vpop.f32.mrb[0].mxu0
    %v4290 = vadd.f32 %v4166, %v4289
    %v4291 = vpop.f32.mrb[0].mxu0
    %4292 = vmatprep.mubr.bf16.mxu0 0
    %4293 = vmatmul.mubr.bf16.gmra.mrb[0].mxu0 %v4209
    %v4294 = vpop.f32.mrb[0].mxu0
    %v4295 = vadd.f32 %v4171, %v4294
    %v4296 = vpop.f32.mrb[0].mxu0
    %v4297 = vpop.f32.mrb[0].mxu0
    %v4298 = vadd.f32 %v4174, %v4297
    %v4299 = vpop.f32.mrb[0].mxu0
    %4300 = vmatprep.mubr.bf16.mxu0 0
    %4301 = vmatmul.mubr.bf16.gmra.mrb[0].mxu0 %v4212
    %v4302 = vpop.f32.mrb[0].mxu0
    %v4303 = vadd.f32 %v4179, %v4302
    %v4304 = vpop.f32.mrb[0].mxu0
    %v4305 = vpop.f32.mrb[0].mxu0
    %v4306 = vadd.f32 %v4182, %v4305
    %v4307 = vpop.f32.mrb[0].mxu0
    %4308 = vmatprep.mubr.bf16.mxu0 0
    %4309 = vmatmul.mubr.bf16.gmra.mrb[0].mxu0 %v4215
    %v4310 = vpop.f32.mrb[0].mxu0
    %v4311 = vadd.f32 %v4187, %v4310
    %v4312 = vpop.f32.mrb[0].mxu0
    %v4313 = vpop.f32.mrb[0].mxu0
    %v4314 = vadd.f32 %v4190, %v4313
    %v4315 = vpop.f32.mrb[0].mxu0
    %4316 = vdwg.mxu0
    %v4317 = vld [vmem:[#allocation3 + $0x2] sm:$0xff]
    %v4318 = vld [vmem:[#allocation3 + $0x12] sm:$0xff]
    %v4319 = vld [vmem:[#allocation3 + $0x22] sm:$0xff]
    %v4320 = vld [vmem:[#allocation3 + $0x32] sm:$0xff]
    %v4321 = vld [vmem:[#allocation3 + $0x42] sm:$0xff]
    %v4322 = vld [vmem:[#allocation3 + $0x52] sm:$0xff]
    %v4323 = vld [vmem:[#allocation3 + $0x62] sm:$0xff]
    %v4324 = vld [vmem:[#allocation3 + $0x72] sm:$0xff]
    %v4325 = vld [vmem:[#allocation3 + $0xa2] sm:$0xff]
    %v4326 = vld [vmem:[#allocation3 + $0xb2] sm:$0xff]
    %v4327 = vld [vmem:[#allocation3 + $0xc2] sm:$0xff]
    %v4328 = vld [vmem:[#allocation3 + $0xd2] sm:$0xff]
    %v4329 = vld [vmem:[#allocation3 + $0xe2] sm:$0xff]
    %v4330 = vld [vmem:[#allocation3 + $0xf2] sm:$0xff]
    %v4331 = vld [vmem:[#allocation3 + $0x102] sm:$0xff]
    %v4332 = vld [vmem:[#allocation3 + $0x112] sm:$0xff]
    %v4333 = vpack.c.bf16 %v4318, %v4317
    %v4334 = vpack.c.bf16 %v4320, %v4319
    %v4335 = vpack.c.bf16 %v4322, %v4321
    %v4336 = vpack.c.bf16 %v4324, %v4323
    %v4337 = vpack.c.bf16 %v4326, %v4325
    %v4338 = vpack.c.bf16 %v4328, %v4327
    %v4339 = vpack.c.bf16 %v4330, %v4329
    %v4340 = vpack.c.bf16 %v4332, %v4331
    %v4342 = vsel %vm131, %v4333, 0
    %v4345 = vsel %vm131, %v4334, 0
    %v4348 = vsel %vm131, %v4335, 0
    %v4351 = vsel %vm131, %v4336, 0
    %v4354 = vsel %vm131, %v4337, 0
    %v4357 = vsel %vm131, %v4338, 0
    %v4360 = vsel %vm131, %v4339, 0
    %v4363 = vsel %vm131, %v4340, 0
    %v4366 = vsel %vm2411, %v3998, 0
    %4368 = vmatprep.subr.bf16.mxu0 0
    %4369 = vmatpush1.bf16.msra.mxu0 %v4366
    %4370 = vmatprep.subr.bf16.mxu0 0
    %4371 = vmatpush1.bf16.msra.mxu0 0
    %4372 = vmatprep.subr.bf16.mxu0 0
    %4373 = vmatpush1.bf16.msra.mxu0 0
    %4374 = vmatprep.subr.bf16.mxu0 0
    %4375 = vmatpush1.bf16.msra.mxu0 0
    %4376 = vmatprep.subr.bf16.mxu0 0
    %4377 = vmatpush1.bf16.msra.mxu0 0
    %4378 = vmatprep.subr.bf16.mxu0 0
    %4379 = vmatpush1.bf16.msra.mxu0 0
    %4380 = vmatprep.subr.bf16.mxu0 0
    %4381 = vmatpush1.bf16.msra.mxu0 0
    %4382 = vmatprep.subr.bf16.mxu0 0
    %4383 = vmatpush1.bf16.msra.mxu0 0
    %4384 = vmatprep.subr.bf16.mxu0 0
    %4385 = vmatpush1.bf16.msra.mxu0 0
    %4386 = vmatprep.subr.bf16.mxu0 0
    %4387 = vmatpush1.bf16.msra.mxu0 0
    %4388 = vmatprep.subr.bf16.mxu0 0
    %4389 = vmatpush1.bf16.msra.mxu0 0
    %4390 = vmatprep.subr.bf16.mxu0 0
    %4391 = vmatpush1.bf16.msra.mxu0 0
    %4392 = vmatprep.subr.bf16.mxu0 0
    %4393 = vmatpush1.bf16.msra.mxu0 0
    %4394 = vmatprep.subr.bf16.mxu0 0
    %4395 = vmatpush1.bf16.msra.mxu0 0
    %4396 = vmatprep.subr.bf16.mxu0 0
    %4397 = vmatpush1.bf16.msra.mxu0 0
    %4398 = vmatprep.subr.bf16.mxu0 0
    %4399 = vmatpush1.bf16.msra.mxu0 0
    %4400 = vmatprep.mubr.bf16.mxu0 0
    %4401 = vmatmul.mubr.bf16.gmra.mrb[0].mxu0 %v4342
    %v4402 = vpop.f32.mrb[0].mxu0
    %v4403 = vadd.f32 0.0, %v4402
    %v4404 = vpop.f32.mrb[0].mxu0
    %v4405 = vpop.f32.mrb[0].mxu0
    %v4406 = vadd.f32 0.0, %v4405
    %v4407 = vpop.f32.mrb[0].mxu0
    %4408 = vmatprep.mubr.bf16.mxu0 0
    %4409 = vmatmul.mubr.bf16.gmra.mrb[0].mxu0 %v4345
    %v4410 = vpop.f32.mrb[0].mxu0
    %v4411 = vadd.f32 0.0, %v4410
    %v4412 = vpop.f32.mrb[0].mxu0
    %v4413 = vpop.f32.mrb[0].mxu0
    %v4414 = vadd.f32 0.0, %v4413
    %v4415 = vpop.f32.mrb[0].mxu0
    %4416 = vmatprep.mubr.bf16.mxu0 0
    %4417 = vmatmul.mubr.bf16.gmra.mrb[0].mxu0 %v4348
    %v4418 = vpop.f32.mrb[0].mxu0
    %v4419 = vadd.f32 0.0, %v4418
    %v4420 = vpop.f32.mrb[0].mxu0
    %v4421 = vpop.f32.mrb[0].mxu0
    %v4422 = vadd.f32 0.0, %v4421
    %v4423 = vpop.f32.mrb[0].mxu0
    %4424 = vmatprep.mubr.bf16.mxu0 0
    %4425 = vmatmul.mubr.bf16.gmra.mrb[0].mxu0 %v4351
    %v4426 = vpop.f32.mrb[0].mxu0
    %v4427 = vadd.f32 0.0, %v4426
    %v4428 = vpop.f32.mrb[0].mxu0
    %v4429 = vpop.f32.mrb[0].mxu0
    %v4430 = vadd.f32 0.0, %v4429
    %v4431 = vpop.f32.mrb[0].mxu0
    %4432 = vmatprep.mubr.bf16.mxu0 0
    %4433 = vmatmul.mubr.bf16.gmra.mrb[0].mxu0 %v4354
    %v4434 = vpop.f32.mrb[0].mxu0
    %v4435 = vadd.f32 0.0, %v4434
    %v4436 = vpop.f32.mrb[0].mxu0
    %v4437 = vpop.f32.mrb[0].mxu0
    %v4438 = vadd.f32 0.0, %v4437
    %v4439 = vpop.f32.mrb[0].mxu0
    %4440 = vmatprep.mubr.bf16.mxu0 0
    %4441 = vmatmul.mubr.bf16.gmra.mrb[0].mxu0 %v4357
    %v4442 = vpop.f32.mrb[0].mxu0
    %v4443 = vadd.f32 0.0, %v4442
    %v4444 = vpop.f32.mrb[0].mxu0
    %v4445 = vpop.f32.mrb[0].mxu0
    %v4446 = vadd.f32 0.0, %v4445
    %v4447 = vpop.f32.mrb[0].mxu0
    %4448 = vmatprep.mubr.bf16.mxu0 0
    %4449 = vmatmul.mubr.bf16.gmra.mrb[0].mxu0 %v4360
    %v4450 = vpop.f32.mrb[0].mxu0
    %v4451 = vadd.f32 0.0, %v4450
    %v4452 = vpop.f32.mrb[0].mxu0
    %v4453 = vpop.f32.mrb[0].mxu0
    %v4454 = vadd.f32 0.0, %v4453
    %v4455 = vpop.f32.mrb[0].mxu0
    %4456 = vmatprep.mubr.bf16.mxu0 0
    %4457 = vmatmul.mubr.bf16.gmra.mrb[0].mxu0 %v4363
    %v4458 = vpop.f32.mrb[0].mxu0
    %v4459 = vadd.f32 0.0, %v4458
    %v4460 = vpop.f32.mrb[0].mxu0
    %v4461 = vpop.f32.mrb[0].mxu0
    %v4462 = vadd.f32 0.0, %v4461
    %v4463 = vpop.f32.mrb[0].mxu0
    %4464 = vdwg.mxu0
    %v4465 = vadd.f32 %v4255, %v4403
    %v4466 = vadd.f32 %v4258, %v4406
    %v4467 = vadd.f32 %v4263, %v4411
    %v4468 = vadd.f32 %v4266, %v4414
    %v4469 = vadd.f32 %v4271, %v4419
    %v4470 = vadd.f32 %v4274, %v4422
    %v4471 = vadd.f32 %v4279, %v4427
    %v4472 = vadd.f32 %v4282, %v4430
    %v4473 = vadd.f32 %v4287, %v4435
    %v4474 = vadd.f32 %v4290, %v4438
    %v4475 = vadd.f32 %v4295, %v4443
    %v4476 = vadd.f32 %v4298, %v4446
    %v4477 = vadd.f32 %v4303, %v4451
    %v4478 = vadd.f32 %v4306, %v4454
    %v4479 = vadd.f32 %v4311, %v4459
    %v4480 = vadd.f32 %v4314, %v4462
    %v4481 = vld [vmem:[%s2322] sm:$0xff]
    %v4482 = vld [vmem:[%s2322 + $0x10] sm:$0xff]
    %v4483 = vld [vmem:[%s2322 + $0x20] sm:$0xff]
    %v4484 = vld [vmem:[%s2322 + $0x30] sm:$0xff]
    %v4485 = vld [vmem:[%s2322 + $0x40] sm:$0xff]
    %v4486 = vld [vmem:[%s2322 + $0x50] sm:$0xff]
    %v4487 = vld [vmem:[%s2322 + $0x60] sm:$0xff]
    %v4488 = vld [vmem:[%s2322 + $0x70] sm:$0xff]
    %v4489 = vld [vmem:[%s2322 + $0xa0] sm:$0xff]
    %v4490 = vld [vmem:[%s2322 + $0xb0] sm:$0xff]
    %v4491 = vld [vmem:[%s2322 + $0xc0] sm:$0xff]
    %v4492 = vld [vmem:[%s2322 + $0xd0] sm:$0xff]
    %v4493 = vld [vmem:[%s2322 + $0xe0] sm:$0xff]
    %v4494 = vld [vmem:[%s2322 + $0xf0] sm:$0xff]
    %v4495 = vld [vmem:[%s2322 + $0x100] sm:$0xff]
    %v4496 = vld [vmem:[%s2322 + $0x110] sm:$0xff]
    %v4497 = vpack.c.bf16 %v4482, %v4481
    %v4498 = vpack.c.bf16 %v4484, %v4483
    %v4499 = vpack.c.bf16 %v4486, %v4485
    %v4500 = vpack.c.bf16 %v4488, %v4487
    %v4501 = vpack.c.bf16 %v4490, %v4489
    %v4502 = vpack.c.bf16 %v4492, %v4491
    %v4503 = vpack.c.bf16 %v4494, %v4493
    %v4504 = vpack.c.bf16 %v4496, %v4495
    %v4506 = vsel %vm131, %v4497, 0
    %v4509 = vsel %vm131, %v4498, 0
    %v4512 = vsel %vm131, %v4499, 0
    %v4515 = vsel %vm131, %v4500, 0
    %v4518 = vsel %vm131, %v4501, 0
    %v4521 = vsel %vm131, %v4502, 0
    %v4524 = vsel %vm131, %v4503, 0
    %v4527 = vsel %vm131, %v4504, 0
    %v4530 = vsel %vm2411, %v3999, 0
    %4532 = vmatprep.subr.bf16.mxu0 0
    %4533 = vmatpush1.bf16.msra.mxu0 %v4530
    %4534 = vmatprep.subr.bf16.mxu0 0
    %4535 = vmatpush1.bf16.msra.mxu0 0
    %4536 = vmatprep.subr.bf16.mxu0 0
    %4537 = vmatpush1.bf16.msra.mxu0 0
    %4538 = vmatprep.subr.bf16.mxu0 0
    %4539 = vmatpush1.bf16.msra.mxu0 0
    %4540 = vmatprep.subr.bf16.mxu0 0
    %4541 = vmatpush1.bf16.msra.mxu0 0
    %4542 = vmatprep.subr.bf16.mxu0 0
    %4543 = vmatpush1.bf16.msra.mxu0 0
    %4544 = vmatprep.subr.bf16.mxu0 0
    %4545 = vmatpush1.bf16.msra.mxu0 0
    %4546 = vmatprep.subr.bf16.mxu0 0
    %4547 = vmatpush1.bf16.msra.mxu0 0
    %4548 = vmatprep.subr.bf16.mxu0 0
    %4549 = vmatpush1.bf16.msra.mxu0 0
    %4550 = vmatprep.subr.bf16.mxu0 0
    %4551 = vmatpush1.bf16.msra.mxu0 0
    %4552 = vmatprep.subr.bf16.mxu0 0
    %4553 = vmatpush1.bf16.msra.mxu0 0
    %4554 = vmatprep.subr.bf16.mxu0 0
    %4555 = vmatpush1.bf16.msra.mxu0 0
    %4556 = vmatprep.subr.bf16.mxu0 0
    %4557 = vmatpush1.bf16.msra.mxu0 0
    %4558 = vmatprep.subr.bf16.mxu0 0
    %4559 = vmatpush1.bf16.msra.mxu0 0
    %4560 = vmatprep.subr.bf16.mxu0 0
    %4561 = vmatpush1.bf16.msra.mxu0 0
    %4562 = vmatprep.subr.bf16.mxu0 0
    %4563 = vmatpush1.bf16.msra.mxu0 0
    %4564 = vmatprep.mubr.bf16.mxu0 0
    %4565 = vmatmul.mubr.bf16.gmra.mrb[0].mxu0 %v4506
    %v4566 = vpop.f32.mrb[0].mxu0
    %v4567 = vadd.f32 0.0, %v4566
    %v4568 = vpop.f32.mrb[0].mxu0
    %v4569 = vpop.f32.mrb[0].mxu0
    %v4570 = vadd.f32 0.0, %v4569
    %v4571 = vpop.f32.mrb[0].mxu0
    %4572 = vmatprep.mubr.bf16.mxu0 0
    %4573 = vmatmul.mubr.bf16.gmra.mrb[0].mxu0 %v4509
    %v4574 = vpop.f32.mrb[0].mxu0
    %v4575 = vadd.f32 0.0, %v4574
    %v4576 = vpop.f32.mrb[0].mxu0
    %v4577 = vpop.f32.mrb[0].mxu0
    %v4578 = vadd.f32 0.0, %v4577
    %v4579 = vpop.f32.mrb[0].mxu0
    %4580 = vmatprep.mubr.bf16.mxu0 0
    %4581 = vmatmul.mubr.bf16.gmra.mrb[0].mxu0 %v4512
    %v4582 = vpop.f32.mrb[0].mxu0
    %v4583 = vadd.f32 0.0, %v4582
    %v4584 = vpop.f32.mrb[0].mxu0
    %v4585 = vpop.f32.mrb[0].mxu0
    %v4586 = vadd.f32 0.0, %v4585
    %v4587 = vpop.f32.mrb[0].mxu0
    %4588 = vmatprep.mubr.bf16.mxu0 0
    %4589 = vmatmul.mubr.bf16.gmra.mrb[0].mxu0 %v4515
    %v4590 = vpop.f32.mrb[0].mxu0
    %v4591 = vadd.f32 0.0, %v4590
    %v4592 = vpop.f32.mrb[0].mxu0
    %v4593 = vpop.f32.mrb[0].mxu0
    %v4594 = vadd.f32 0.0, %v4593
    %v4595 = vpop.f32.mrb[0].mxu0
    %4596 = vmatprep.mubr.bf16.mxu0 0
    %4597 = vmatmul.mubr.bf16.gmra.mrb[0].mxu0 %v4518
    %v4598 = vpop.f32.mrb[0].mxu0
    %v4599 = vadd.f32 0.0, %v4598
    %v4600 = vpop.f32.mrb[0].mxu0
    %v4601 = vpop.f32.mrb[0].mxu0
    %v4602 = vadd.f32 0.0, %v4601
    %v4603 = vpop.f32.mrb[0].mxu0
    %4604 = vmatprep.mubr.bf16.mxu0 0
    %4605 = vmatmul.mubr.bf16.gmra.mrb[0].mxu0 %v4521
    %v4606 = vpop.f32.mrb[0].mxu0
    %v4607 = vadd.f32 0.0, %v4606
    %v4608 = vpop.f32.mrb[0].mxu0
    %v4609 = vpop.f32.mrb[0].mxu0
    %v4610 = vadd.f32 0.0, %v4609
    %v4611 = vpop.f32.mrb[0].mxu0
    %4612 = vmatprep.mubr.bf16.mxu0 0
    %4613 = vmatmul.mubr.bf16.gmra.mrb[0].mxu0 %v4524
    %v4614 = vpop.f32.mrb[0].mxu0
    %v4615 = vadd.f32 0.0, %v4614
    %v4616 = vpop.f32.mrb[0].mxu0
    %v4617 = vpop.f32.mrb[0].mxu0
    %v4618 = vadd.f32 0.0, %v4617
    %v4619 = vpop.f32.mrb[0].mxu0
    %4620 = vmatprep.mubr.bf16.mxu0 0
    %4621 = vmatmul.mubr.bf16.gmra.mrb[0].mxu0 %v4527
    %v4622 = vpop.f32.mrb[0].mxu0
    %v4623 = vadd.f32 0.0, %v4622
    %v4624 = vpop.f32.mrb[0].mxu0
    %v4625 = vpop.f32.mrb[0].mxu0
    %v4626 = vadd.f32 0.0, %v4625
    %v4627 = vpop.f32.mrb[0].mxu0
    %4628 = vdwg.mxu0
    %v4629 = vadd.f32 %v4465, %v4567
    %v4630 = vadd.f32 %v4466, %v4570
    %v4631 = vadd.f32 %v4467, %v4575
    %v4632 = vadd.f32 %v4468, %v4578
    %v4633 = vadd.f32 %v4469, %v4583
    %v4634 = vadd.f32 %v4470, %v4586
    %v4635 = vadd.f32 %v4471, %v4591
    %v4636 = vadd.f32 %v4472, %v4594
    %v4637 = vadd.f32 %v4473, %v4599
    %v4638 = vadd.f32 %v4474, %v4602
    %v4639 = vadd.f32 %v4475, %v4607
    %v4640 = vadd.f32 %v4476, %v4610
    %v4641 = vadd.f32 %v4477, %v4615
    %v4642 = vadd.f32 %v4478, %v4618
    %v4643 = vadd.f32 %v4479, %v4623
    %v4644 = vadd.f32 %v4480, %v4626
    %v4645 = vld [vmem:[%s2322 + $0x1] sm:$0xff]
    %v4646 = vld [vmem:[%s2322 + $0x11] sm:$0xff]
    %v4647 = vld [vmem:[%s2322 + $0x21] sm:$0xff]
    %v4648 = vld [vmem:[%s2322 + $0x31] sm:$0xff]
    %v4649 = vld [vmem:[%s2322 + $0x41] sm:$0xff]
    %v4650 = vld [vmem:[%s2322 + $0x51] sm:$0xff]
    %v4651 = vld [vmem:[%s2322 + $0x61] sm:$0xff]
    %v4652 = vld [vmem:[%s2322 + $0x71] sm:$0xff]
    %v4653 = vld [vmem:[%s2322 + $0xa1] sm:$0xff]
    %v4654 = vld [vmem:[%s2322 + $0xb1] sm:$0xff]
    %v4655 = vld [vmem:[%s2322 + $0xc1] sm:$0xff]
    %v4656 = vld [vmem:[%s2322 + $0xd1] sm:$0xff]
    %v4657 = vld [vmem:[%s2322 + $0xe1] sm:$0xff]
    %v4658 = vld [vmem:[%s2322 + $0xf1] sm:$0xff]
    %v4659 = vld [vmem:[%s2322 + $0x101] sm:$0xff]
    %v4660 = vld [vmem:[%s2322 + $0x111] sm:$0xff]
    %v4661 = vpack.c.bf16 %v4646, %v4645
    %v4662 = vpack.c.bf16 %v4648, %v4647
    %v4663 = vpack.c.bf16 %v4650, %v4649
    %v4664 = vpack.c.bf16 %v4652, %v4651
    %v4665 = vpack.c.bf16 %v4654, %v4653
    %v4666 = vpack.c.bf16 %v4656, %v4655
    %v4667 = vpack.c.bf16 %v4658, %v4657
    %v4668 = vpack.c.bf16 %v4660, %v4659
    %v4670 = vsel %vm131, %v4661, 0
    %v4673 = vsel %vm131, %v4662, 0
    %v4676 = vsel %vm131, %v4663, 0
    %v4679 = vsel %vm131, %v4664, 0
    %v4682 = vsel %vm131, %v4665, 0
    %v4685 = vsel %vm131, %v4666, 0
    %v4688 = vsel %vm131, %v4667, 0
    %v4691 = vsel %vm131, %v4668, 0
    %v4694 = vsel %vm2411, %v4000, 0
    %4696 = vmatprep.subr.bf16.mxu0 0
    %4697 = vmatpush1.bf16.msra.mxu0 %v4694
    %4698 = vmatprep.subr.bf16.mxu0 0
    %4699 = vmatpush1.bf16.msra.mxu0 0
    %4700 = vmatprep.subr.bf16.mxu0 0
    %4701 = vmatpush1.bf16.msra.mxu0 0
    %4702 = vmatprep.subr.bf16.mxu0 0
    %4703 = vmatpush1.bf16.msra.mxu0 0
    %4704 = vmatprep.subr.bf16.mxu0 0
    %4705 = vmatpush1.bf16.msra.mxu0 0
    %4706 = vmatprep.subr.bf16.mxu0 0
    %4707 = vmatpush1.bf16.msra.mxu0 0
    %4708 = vmatprep.subr.bf16.mxu0 0
    %4709 = vmatpush1.bf16.msra.mxu0 0
    %4710 = vmatprep.subr.bf16.mxu0 0
    %4711 = vmatpush1.bf16.msra.mxu0 0
    %4712 = vmatprep.subr.bf16.mxu0 0
    %4713 = vmatpush1.bf16.msra.mxu0 0
    %4714 = vmatprep.subr.bf16.mxu0 0
    %4715 = vmatpush1.bf16.msra.mxu0 0
    %4716 = vmatprep.subr.bf16.mxu0 0
    %4717 = vmatpush1.bf16.msra.mxu0 0
    %4718 = vmatprep.subr.bf16.mxu0 0
    %4719 = vmatpush1.bf16.msra.mxu0 0
    %4720 = vmatprep.subr.bf16.mxu0 0
    %4721 = vmatpush1.bf16.msra.mxu0 0
    %4722 = vmatprep.subr.bf16.mxu0 0
    %4723 = vmatpush1.bf16.msra.mxu0 0
    %4724 = vmatprep.subr.bf16.mxu0 0
    %4725 = vmatpush1.bf16.msra.mxu0 0
    %4726 = vmatprep.subr.bf16.mxu0 0
    %4727 = vmatpush1.bf16.msra.mxu0 0
    %4728 = vmatprep.mubr.bf16.mxu0 0
    %4729 = vmatmul.mubr.bf16.gmra.mrb[0].mxu0 %v4670
    %v4730 = vpop.f32.mrb[0].mxu0
    %v4731 = vadd.f32 0.0, %v4730
    %v4732 = vpop.f32.mrb[0].mxu0
    %v4733 = vpop.f32.mrb[0].mxu0
    %v4734 = vadd.f32 0.0, %v4733
    %v4735 = vpop.f32.mrb[0].mxu0
    %4736 = vmatprep.mubr.bf16.mxu0 0
    %4737 = vmatmul.mubr.bf16.gmra.mrb[0].mxu0 %v4673
    %v4738 = vpop.f32.mrb[0].mxu0
    %v4739 = vadd.f32 0.0, %v4738
    %v4740 = vpop.f32.mrb[0].mxu0
    %v4741 = vpop.f32.mrb[0].mxu0
    %v4742 = vadd.f32 0.0, %v4741
    %v4743 = vpop.f32.mrb[0].mxu0
    %4744 = vmatprep.mubr.bf16.mxu0 0
    %4745 = vmatmul.mubr.bf16.gmra.mrb[0].mxu0 %v4676
    %v4746 = vpop.f32.mrb[0].mxu0
    %v4747 = vadd.f32 0.0, %v4746
    %v4748 = vpop.f32.mrb[0].mxu0
    %v4749 = vpop.f32.mrb[0].mxu0
    %v4750 = vadd.f32 0.0, %v4749
    %v4751 = vpop.f32.mrb[0].mxu0
    %4752 = vmatprep.mubr.bf16.mxu0 0
    %4753 = vmatmul.mubr.bf16.gmra.mrb[0].mxu0 %v4679
    %v4754 = vpop.f32.mrb[0].mxu0
    %v4755 = vadd.f32 0.0, %v4754
    %v4756 = vpop.f32.mrb[0].mxu0
    %v4757 = vpop.f32.mrb[0].mxu0
    %v4758 = vadd.f32 0.0, %v4757
    %v4759 = vpop.f32.mrb[0].mxu0
    %4760 = vmatprep.mubr.bf16.mxu0 0
    %4761 = vmatmul.mubr.bf16.gmra.mrb[0].mxu0 %v4682
    %v4762 = vpop.f32.mrb[0].mxu0
    %v4763 = vadd.f32 0.0, %v4762
    %v4764 = vpop.f32.mrb[0].mxu0
    %v4765 = vpop.f32.mrb[0].mxu0
    %v4766 = vadd.f32 0.0, %v4765
    %v4767 = vpop.f32.mrb[0].mxu0
    %4768 = vmatprep.mubr.bf16.mxu0 0
    %4769 = vmatmul.mubr.bf16.gmra.mrb[0].mxu0 %v4685
    %v4770 = vpop.f32.mrb[0].mxu0
    %v4771 = vadd.f32 0.0, %v4770
    %v4772 = vpop.f32.mrb[0].mxu0
    %v4773 = vpop.f32.mrb[0].mxu0
    %v4774 = vadd.f32 0.0, %v4773
    %v4775 = vpop.f32.mrb[0].mxu0
    %4776 = vmatprep.mubr.bf16.mxu0 0
    %4777 = vmatmul.mubr.bf16.gmra.mrb[0].mxu0 %v4688
    %v4778 = vpop.f32.mrb[0].mxu0
    %v4779 = vadd.f32 0.0, %v4778
    %v4780 = vpop.f32.mrb[0].mxu0
    %v4781 = vpop.f32.mrb[0].mxu0
    %v4782 = vadd.f32 0.0, %v4781
    %v4783 = vpop.f32.mrb[0].mxu0
    %4784 = vmatprep.mubr.bf16.mxu0 0
    %4785 = vmatmul.mubr.bf16.gmra.mrb[0].mxu0 %v4691
    %v4786 = vpop.f32.mrb[0].mxu0
    %v4787 = vadd.f32 0.0, %v4786
    %v4788 = vpop.f32.mrb[0].mxu0
    %v4789 = vpop.f32.mrb[0].mxu0
    %v4790 = vadd.f32 0.0, %v4789
    %v4791 = vpop.f32.mrb[0].mxu0
    %4792 = vdwg.mxu0
    %v4793 = vadd.f32 %v4629, %v4731
    %v4794 = vadd.f32 %v4630, %v4734
    %v4795 = vadd.f32 %v4631, %v4739
    %v4796 = vadd.f32 %v4632, %v4742
    %v4797 = vadd.f32 %v4633, %v4747
    %v4798 = vadd.f32 %v4634, %v4750
    %v4799 = vadd.f32 %v4635, %v4755
    %v4800 = vadd.f32 %v4636, %v4758
    %v4801 = vadd.f32 %v4637, %v4763
    %v4802 = vadd.f32 %v4638, %v4766
    %v4803 = vadd.f32 %v4639, %v4771
    %v4804 = vadd.f32 %v4640, %v4774
    %v4805 = vadd.f32 %v4641, %v4779
    %v4806 = vadd.f32 %v4642, %v4782
    %v4807 = vadd.f32 %v4643, %v4787
    %v4808 = vadd.f32 %v4644, %v4790
    %v4809 = vld [vmem:[%s2322 + $0x2] sm:$0xff]
    %v4810 = vld [vmem:[%s2322 + $0x12] sm:$0xff]
    %v4811 = vld [vmem:[%s2322 + $0x22] sm:$0xff]
    %v4812 = vld [vmem:[%s2322 + $0x32] sm:$0xff]
    %v4813 = vld [vmem:[%s2322 + $0x42] sm:$0xff]
    %v4814 = vld [vmem:[%s2322 + $0x52] sm:$0xff]
    %v4815 = vld [vmem:[%s2322 + $0x62] sm:$0xff]
    %v4816 = vld [vmem:[%s2322 + $0x72] sm:$0xff]
    %v4817 = vld [vmem:[%s2322 + $0xa2] sm:$0xff]
    %v4818 = vld [vmem:[%s2322 + $0xb2] sm:$0xff]
    %v4819 = vld [vmem:[%s2322 + $0xc2] sm:$0xff]
    %v4820 = vld [vmem:[%s2322 + $0xd2] sm:$0xff]
    %v4821 = vld [vmem:[%s2322 + $0xe2] sm:$0xff]
    %v4822 = vld [vmem:[%s2322 + $0xf2] sm:$0xff]
    %v4823 = vld [vmem:[%s2322 + $0x102] sm:$0xff]
    %v4824 = vld [vmem:[%s2322 + $0x112] sm:$0xff]
    %v4825 = vpack.c.bf16 %v4810, %v4809
    %v4826 = vpack.c.bf16 %v4812, %v4811
    %v4827 = vpack.c.bf16 %v4814, %v4813
    %v4828 = vpack.c.bf16 %v4816, %v4815
    %v4829 = vpack.c.bf16 %v4818, %v4817
    %v4830 = vpack.c.bf16 %v4820, %v4819
    %v4831 = vpack.c.bf16 %v4822, %v4821
    %v4832 = vpack.c.bf16 %v4824, %v4823
    %v4834 = vsel %vm131, %v4825, 0
    %v4837 = vsel %vm131, %v4826, 0
    %v4840 = vsel %vm131, %v4827, 0
    %v4843 = vsel %vm131, %v4828, 0
    %v4846 = vsel %vm131, %v4829, 0
    %v4849 = vsel %vm131, %v4830, 0
    %v4852 = vsel %vm131, %v4831, 0
    %v4855 = vsel %vm131, %v4832, 0
    %v4858 = vsel %vm2411, %v4001, 0
    %4860 = vmatprep.subr.bf16.mxu0 0
    %4861 = vmatpush1.bf16.msra.mxu0 %v4858
    %4862 = vmatprep.subr.bf16.mxu0 0
    %4863 = vmatpush1.bf16.msra.mxu0 0
    %4864 = vmatprep.subr.bf16.mxu0 0
    %4865 = vmatpush1.bf16.msra.mxu0 0
    %4866 = vmatprep.subr.bf16.mxu0 0
    %4867 = vmatpush1.bf16.msra.mxu0 0
    %4868 = vmatprep.subr.bf16.mxu0 0
    %4869 = vmatpush1.bf16.msra.mxu0 0
    %4870 = vmatprep.subr.bf16.mxu0 0
    %4871 = vmatpush1.bf16.msra.mxu0 0
    %4872 = vmatprep.subr.bf16.mxu0 0
    %4873 = vmatpush1.bf16.msra.mxu0 0
    %4874 = vmatprep.subr.bf16.mxu0 0
    %4875 = vmatpush1.bf16.msra.mxu0 0
    %4876 = vmatprep.subr.bf16.mxu0 0
    %4877 = vmatpush1.bf16.msra.mxu0 0
    %4878 = vmatprep.subr.bf16.mxu0 0
    %4879 = vmatpush1.bf16.msra.mxu0 0
    %4880 = vmatprep.subr.bf16.mxu0 0
    %4881 = vmatpush1.bf16.msra.mxu0 0
    %4882 = vmatprep.subr.bf16.mxu0 0
    %4883 = vmatpush1.bf16.msra.mxu0 0
    %4884 = vmatprep.subr.bf16.mxu0 0
    %4885 = vmatpush1.bf16.msra.mxu0 0
    %4886 = vmatprep.subr.bf16.mxu0 0
    %4887 = vmatpush1.bf16.msra.mxu0 0
    %4888 = vmatprep.subr.bf16.mxu0 0
    %4889 = vmatpush1.bf16.msra.mxu0 0
    %4890 = vmatprep.subr.bf16.mxu0 0
    %4891 = vmatpush1.bf16.msra.mxu0 0
    %4892 = vmatprep.mubr.bf16.mxu0 0
    %4893 = vmatmul.mubr.bf16.gmra.mrb[0].mxu0 %v4834
    %v4894 = vpop.f32.mrb[0].mxu0
    %v4895 = vadd.f32 0.0, %v4894
    %v4896 = vpop.f32.mrb[0].mxu0
    %v4897 = vpop.f32.mrb[0].mxu0
    %v4898 = vadd.f32 0.0, %v4897
    %v4899 = vpop.f32.mrb[0].mxu0
    %4900 = vmatprep.mubr.bf16.mxu0 0
    %4901 = vmatmul.mubr.bf16.gmra.mrb[0].mxu0 %v4837
    %v4902 = vpop.f32.mrb[0].mxu0
    %v4903 = vadd.f32 0.0, %v4902
    %v4904 = vpop.f32.mrb[0].mxu0
    %v4905 = vpop.f32.mrb[0].mxu0
    %v4906 = vadd.f32 0.0, %v4905
    %v4907 = vpop.f32.mrb[0].mxu0
    %4908 = vmatprep.mubr.bf16.mxu0 0
    %4909 = vmatmul.mubr.bf16.gmra.mrb[0].mxu0 %v4840
    %v4910 = vpop.f32.mrb[0].mxu0
    %v4911 = vadd.f32 0.0, %v4910
    %v4912 = vpop.f32.mrb[0].mxu0
    %v4913 = vpop.f32.mrb[0].mxu0
    %v4914 = vadd.f32 0.0, %v4913
    %v4915 = vpop.f32.mrb[0].mxu0
    %4916 = vmatprep.mubr.bf16.mxu0 0
    %4917 = vmatmul.mubr.bf16.gmra.mrb[0].mxu0 %v4843
    %v4918 = vpop.f32.mrb[0].mxu0
    %v4919 = vadd.f32 0.0, %v4918
    %v4920 = vpop.f32.mrb[0].mxu0
    %v4921 = vpop.f32.mrb[0].mxu0
    %v4922 = vadd.f32 0.0, %v4921
    %v4923 = vpop.f32.mrb[0].mxu0
    %4924 = vmatprep.mubr.bf16.mxu0 0
    %4925 = vmatmul.mubr.bf16.gmra.mrb[0].mxu0 %v4846
    %v4926 = vpop.f32.mrb[0].mxu0
    %v4927 = vadd.f32 0.0, %v4926
    %v4928 = vpop.f32.mrb[0].mxu0
    %v4929 = vpop.f32.mrb[0].mxu0
    %v4930 = vadd.f32 0.0, %v4929
    %v4931 = vpop.f32.mrb[0].mxu0
    %4932 = vmatprep.mubr.bf16.mxu0 0
    %4933 = vmatmul.mubr.bf16.gmra.mrb[0].mxu0 %v4849
    %v4934 = vpop.f32.mrb[0].mxu0
    %v4935 = vadd.f32 0.0, %v4934
    %v4936 = vpop.f32.mrb[0].mxu0
    %v4937 = vpop.f32.mrb[0].mxu0
    %v4938 = vadd.f32 0.0, %v4937
    %v4939 = vpop.f32.mrb[0].mxu0
    %4940 = vmatprep.mubr.bf16.mxu0 0
    %4941 = vmatmul.mubr.bf16.gmra.mrb[0].mxu0 %v4852
    %v4942 = vpop.f32.mrb[0].mxu0
    %v4943 = vadd.f32 0.0, %v4942
    %v4944 = vpop.f32.mrb[0].mxu0
    %v4945 = vpop.f32.mrb[0].mxu0
    %v4946 = vadd.f32 0.0, %v4945
    %v4947 = vpop.f32.mrb[0].mxu0
    %4948 = vmatprep.mubr.bf16.mxu0 0
    %4949 = vmatmul.mubr.bf16.gmra.mrb[0].mxu0 %v4855
    %v4950 = vpop.f32.mrb[0].mxu0
    %v4951 = vadd.f32 0.0, %v4950
    %v4952 = vpop.f32.mrb[0].mxu0
    %v4953 = vpop.f32.mrb[0].mxu0
    %v4954 = vadd.f32 0.0, %v4953
    %v4955 = vpop.f32.mrb[0].mxu0
    %4956 = vdwg.mxu0
    %v4957 = vadd.f32 %v4793, %v4895
    %v4958 = vadd.f32 %v4794, %v4898
    %v4959 = vadd.f32 %v4795, %v4903
    %v4960 = vadd.f32 %v4796, %v4906
    %v4961 = vadd.f32 %v4797, %v4911
    %v4962 = vadd.f32 %v4798, %v4914
    %v4963 = vadd.f32 %v4799, %v4919
    %v4964 = vadd.f32 %v4800, %v4922
    %v4965 = vadd.f32 %v4801, %v4927
    %v4966 = vadd.f32 %v4802, %v4930
    %v4967 = vadd.f32 %v4803, %v4935
    %v4968 = vadd.f32 %v4804, %v4938
    %v4969 = vadd.f32 %v4805, %v4943
    %v4970 = vadd.f32 %v4806, %v4946
    %v4971 = vadd.f32 %v4807, %v4951
    %v4972 = vadd.f32 %v4808, %v4954
    %v4973 = vld [vmem:[%s3292] sm:$0xff]
    %v4974 = vld [vmem:[%s3292 + $0x10] sm:$0xff]
    %v4975 = vld [vmem:[%s3292 + $0x20] sm:$0xff]
    %v4976 = vld [vmem:[%s3292 + $0x30] sm:$0xff]
    %v4977 = vld [vmem:[%s3292 + $0x40] sm:$0xff]
    %v4978 = vld [vmem:[%s3292 + $0x50] sm:$0xff]
    %v4979 = vld [vmem:[%s3292 + $0x60] sm:$0xff]
    %v4980 = vld [vmem:[%s3292 + $0x70] sm:$0xff]
    %v4981 = vld [vmem:[%s3292 + $0xa0] sm:$0xff]
    %v4982 = vld [vmem:[%s3292 + $0xb0] sm:$0xff]
    %v4983 = vld [vmem:[%s3292 + $0xc0] sm:$0xff]
    %v4984 = vld [vmem:[%s3292 + $0xd0] sm:$0xff]
    %v4985 = vld [vmem:[%s3292 + $0xe0] sm:$0xff]
    %v4986 = vld [vmem:[%s3292 + $0xf0] sm:$0xff]
    %v4987 = vld [vmem:[%s3292 + $0x100] sm:$0xff]
    %v4988 = vld [vmem:[%s3292 + $0x110] sm:$0xff]
    %v4989 = vpack.c.bf16 %v4974, %v4973
    %v4990 = vpack.c.bf16 %v4976, %v4975
    %v4991 = vpack.c.bf16 %v4978, %v4977
    %v4992 = vpack.c.bf16 %v4980, %v4979
    %v4993 = vpack.c.bf16 %v4982, %v4981
    %v4994 = vpack.c.bf16 %v4984, %v4983
    %v4995 = vpack.c.bf16 %v4986, %v4985
    %v4996 = vpack.c.bf16 %v4988, %v4987
    %v4998 = vsel %vm131, %v4989, 0
    %v5001 = vsel %vm131, %v4990, 0
    %v5004 = vsel %vm131, %v4991, 0
    %v5007 = vsel %vm131, %v4992, 0
    %v5010 = vsel %vm131, %v4993, 0
    %v5013 = vsel %vm131, %v4994, 0
    %v5016 = vsel %vm131, %v4995, 0
    %v5019 = vsel %vm131, %v4996, 0
    %v5022 = vsel %vm2411, %v4002, 0
    %5024 = vmatprep.subr.bf16.mxu0 0
    %5025 = vmatpush1.bf16.msra.mxu0 %v5022
    %5026 = vmatprep.subr.bf16.mxu0 0
    %5027 = vmatpush1.bf16.msra.mxu0 0
    %5028 = vmatprep.subr.bf16.mxu0 0
    %5029 = vmatpush1.bf16.msra.mxu0 0
    %5030 = vmatprep.subr.bf16.mxu0 0
    %5031 = vmatpush1.bf16.msra.mxu0 0
    %5032 = vmatprep.subr.bf16.mxu0 0
    %5033 = vmatpush1.bf16.msra.mxu0 0
    %5034 = vmatprep.subr.bf16.mxu0 0
    %5035 = vmatpush1.bf16.msra.mxu0 0
    %5036 = vmatprep.subr.bf16.mxu0 0
    %5037 = vmatpush1.bf16.msra.mxu0 0
    %5038 = vmatprep.subr.bf16.mxu0 0
    %5039 = vmatpush1.bf16.msra.mxu0 0
    %5040 = vmatprep.subr.bf16.mxu0 0
    %5041 = vmatpush1.bf16.msra.mxu0 0
    %5042 = vmatprep.subr.bf16.mxu0 0
    %5043 = vmatpush1.bf16.msra.mxu0 0
    %5044 = vmatprep.subr.bf16.mxu0 0
    %5045 = vmatpush1.bf16.msra.mxu0 0
    %5046 = vmatprep.subr.bf16.mxu0 0
    %5047 = vmatpush1.bf16.msra.mxu0 0
    %5048 = vmatprep.subr.bf16.mxu0 0
    %5049 = vmatpush1.bf16.msra.mxu0 0
    %5050 = vmatprep.subr.bf16.mxu0 0
    %5051 = vmatpush1.bf16.msra.mxu0 0
    %5052 = vmatprep.subr.bf16.mxu0 0
    %5053 = vmatpush1.bf16.msra.mxu0 0
    %5054 = vmatprep.subr.bf16.mxu0 0
    %5055 = vmatpush1.bf16.msra.mxu0 0
    %5056 = vmatprep.mubr.bf16.mxu0 0
    %5057 = vmatmul.mubr.bf16.gmra.mrb[0].mxu0 %v4998
    %v5058 = vpop.f32.mrb[0].mxu0
    %v5059 = vadd.f32 0.0, %v5058
    %v5060 = vpop.f32.mrb[0].mxu0
    %v5061 = vpop.f32.mrb[0].mxu0
    %v5062 = vadd.f32 0.0, %v5061
    %v5063 = vpop.f32.mrb[0].mxu0
    %5064 = vmatprep.mubr.bf16.mxu0 0
    %5065 = vmatmul.mubr.bf16.gmra.mrb[0].mxu0 %v5001
    %v5066 = vpop.f32.mrb[0].mxu0
    %v5067 = vadd.f32 0.0, %v5066
    %v5068 = vpop.f32.mrb[0].mxu0
    %v5069 = vpop.f32.mrb[0].mxu0
    %v5070 = vadd.f32 0.0, %v5069
    %v5071 = vpop.f32.mrb[0].mxu0
    %5072 = vmatprep.mubr.bf16.mxu0 0
    %5073 = vmatmul.mubr.bf16.gmra.mrb[0].mxu0 %v5004
    %v5074 = vpop.f32.mrb[0].mxu0
    %v5075 = vadd.f32 0.0, %v5074
    %v5076 = vpop.f32.mrb[0].mxu0
    %v5077 = vpop.f32.mrb[0].mxu0
    %v5078 = vadd.f32 0.0, %v5077
    %v5079 = vpop.f32.mrb[0].mxu0
    %5080 = vmatprep.mubr.bf16.mxu0 0
    %5081 = vmatmul.mubr.bf16.gmra.mrb[0].mxu0 %v5007
    %v5082 = vpop.f32.mrb[0].mxu0
    %v5083 = vadd.f32 0.0, %v5082
    %v5084 = vpop.f32.mrb[0].mxu0
    %v5085 = vpop.f32.mrb[0].mxu0
    %v5086 = vadd.f32 0.0, %v5085
    %v5087 = vpop.f32.mrb[0].mxu0
    %5088 = vmatprep.mubr.bf16.mxu0 0
    %5089 = vmatmul.mubr.bf16.gmra.mrb[0].mxu0 %v5010
    %v5090 = vpop.f32.mrb[0].mxu0
    %v5091 = vadd.f32 0.0, %v5090
    %v5092 = vpop.f32.mrb[0].mxu0
    %v5093 = vpop.f32.mrb[0].mxu0
    %v5094 = vadd.f32 0.0, %v5093
    %v5095 = vpop.f32.mrb[0].mxu0
    %5096 = vmatprep.mubr.bf16.mxu0 0
    %5097 = vmatmul.mubr.bf16.gmra.mrb[0].mxu0 %v5013
    %v5098 = vpop.f32.mrb[0].mxu0
    %v5099 = vadd.f32 0.0, %v5098
    %v5100 = vpop.f32.mrb[0].mxu0
    %v5101 = vpop.f32.mrb[0].mxu0
    %v5102 = vadd.f32 0.0, %v5101
    %v5103 = vpop.f32.mrb[0].mxu0
    %5104 = vmatprep.mubr.bf16.mxu0 0
    %5105 = vmatmul.mubr.bf16.gmra.mrb[0].mxu0 %v5016
    %v5106 = vpop.f32.mrb[0].mxu0
    %v5107 = vadd.f32 0.0, %v5106
    %v5108 = vpop.f32.mrb[0].mxu0
    %v5109 = vpop.f32.mrb[0].mxu0
    %v5110 = vadd.f32 0.0, %v5109
    %v5111 = vpop.f32.mrb[0].mxu0
    %5112 = vmatprep.mubr.bf16.mxu0 0
    %5113 = vmatmul.mubr.bf16.gmra.mrb[0].mxu0 %v5019
    %v5114 = vpop.f32.mrb[0].mxu0
    %v5115 = vadd.f32 0.0, %v5114
    %v5116 = vpop.f32.mrb[0].mxu0
    %v5117 = vpop.f32.mrb[0].mxu0
    %v5118 = vadd.f32 0.0, %v5117
    %v5119 = vpop.f32.mrb[0].mxu0
    %5120 = vdwg.mxu0
    %v5121 = vadd.f32 %v4957, %v5059
    %v5122 = vadd.f32 %v4958, %v5062
    %v5123 = vadd.f32 %v4959, %v5067
    %v5124 = vadd.f32 %v4960, %v5070
    %v5125 = vadd.f32 %v4961, %v5075
    %v5126 = vadd.f32 %v4962, %v5078
    %v5127 = vadd.f32 %v4963, %v5083
    %v5128 = vadd.f32 %v4964, %v5086
    %v5129 = vadd.f32 %v4965, %v5091
    %v5130 = vadd.f32 %v4966, %v5094
    %v5131 = vadd.f32 %v4967, %v5099
    %v5132 = vadd.f32 %v4968, %v5102
    %v5133 = vadd.f32 %v4969, %v5107
    %v5134 = vadd.f32 %v4970, %v5110
    %v5135 = vadd.f32 %v4971, %v5115
    %v5136 = vadd.f32 %v4972, %v5118
    %v5137 = vld [vmem:[%s3292 + $0x1] sm:$0xff]
    %v5138 = vld [vmem:[%s3292 + $0x11] sm:$0xff]
    %v5139 = vld [vmem:[%s3292 + $0x21] sm:$0xff]
    %v5140 = vld [vmem:[%s3292 + $0x31] sm:$0xff]
    %v5141 = vld [vmem:[%s3292 + $0x41] sm:$0xff]
    %v5142 = vld [vmem:[%s3292 + $0x51] sm:$0xff]
    %v5143 = vld [vmem:[%s3292 + $0x61] sm:$0xff]
    %v5144 = vld [vmem:[%s3292 + $0x71] sm:$0xff]
    %v5145 = vld [vmem:[%s3292 + $0xa1] sm:$0xff]
    %v5146 = vld [vmem:[%s3292 + $0xb1] sm:$0xff]
    %v5147 = vld [vmem:[%s3292 + $0xc1] sm:$0xff]
    %v5148 = vld [vmem:[%s3292 + $0xd1] sm:$0xff]
    %v5149 = vld [vmem:[%s3292 + $0xe1] sm:$0xff]
    %v5150 = vld [vmem:[%s3292 + $0xf1] sm:$0xff]
    %v5151 = vld [vmem:[%s3292 + $0x101] sm:$0xff]
    %v5152 = vld [vmem:[%s3292 + $0x111] sm:$0xff]
    %v5153 = vpack.c.bf16 %v5138, %v5137
    %v5154 = vpack.c.bf16 %v5140, %v5139
    %v5155 = vpack.c.bf16 %v5142, %v5141
    %v5156 = vpack.c.bf16 %v5144, %v5143
    %v5157 = vpack.c.bf16 %v5146, %v5145
    %v5158 = vpack.c.bf16 %v5148, %v5147
    %v5159 = vpack.c.bf16 %v5150, %v5149
    %v5160 = vpack.c.bf16 %v5152, %v5151
    %v5162 = vsel %vm131, %v5153, 0
    %v5165 = vsel %vm131, %v5154, 0
    %v5168 = vsel %vm131, %v5155, 0
    %v5171 = vsel %vm131, %v5156, 0
    %v5174 = vsel %vm131, %v5157, 0
    %v5177 = vsel %vm131, %v5158, 0
    %v5180 = vsel %vm131, %v5159, 0
    %v5183 = vsel %vm131, %v5160, 0
    %v5186 = vsel %vm2411, %v4003, 0
    %5188 = vmatprep.subr.bf16.mxu0 0
    %5189 = vmatpush1.bf16.msra.mxu0 %v5186
    %5190 = vmatprep.subr.bf16.mxu0 0
    %5191 = vmatpush1.bf16.msra.mxu0 0
    %5192 = vmatprep.subr.bf16.mxu0 0
    %5193 = vmatpush1.bf16.msra.mxu0 0
    %5194 = vmatprep.subr.bf16.mxu0 0
    %5195 = vmatpush1.bf16.msra.mxu0 0
    %5196 = vmatprep.subr.bf16.mxu0 0
    %5197 = vmatpush1.bf16.msra.mxu0 0
    %5198 = vmatprep.subr.bf16.mxu0 0
    %5199 = vmatpush1.bf16.msra.mxu0 0
    %5200 = vmatprep.subr.bf16.mxu0 0
    %5201 = vmatpush1.bf16.msra.mxu0 0
    %5202 = vmatprep.subr.bf16.mxu0 0
    %5203 = vmatpush1.bf16.msra.mxu0 0
    %5204 = vmatprep.subr.bf16.mxu0 0
    %5205 = vmatpush1.bf16.msra.mxu0 0
    %5206 = vmatprep.subr.bf16.mxu0 0
    %5207 = vmatpush1.bf16.msra.mxu0 0
    %5208 = vmatprep.subr.bf16.mxu0 0
    %5209 = vmatpush1.bf16.msra.mxu0 0
    %5210 = vmatprep.subr.bf16.mxu0 0
    %5211 = vmatpush1.bf16.msra.mxu0 0
    %5212 = vmatprep.subr.bf16.mxu0 0
    %5213 = vmatpush1.bf16.msra.mxu0 0
    %5214 = vmatprep.subr.bf16.mxu0 0
    %5215 = vmatpush1.bf16.msra.mxu0 0
    %5216 = vmatprep.subr.bf16.mxu0 0
    %5217 = vmatpush1.bf16.msra.mxu0 0
    %5218 = vmatprep.subr.bf16.mxu0 0
    %5219 = vmatpush1.bf16.msra.mxu0 0
    %5220 = vmatprep.mubr.bf16.mxu0 0
    %5221 = vmatmul.mubr.bf16.gmra.mrb[0].mxu0 %v5162
    %v5222 = vpop.f32.mrb[0].mxu0
    %v5223 = vadd.f32 0.0, %v5222
    %v5224 = vpop.f32.mrb[0].mxu0
    %v5225 = vpop.f32.mrb[0].mxu0
    %v5226 = vadd.f32 0.0, %v5225
    %v5227 = vpop.f32.mrb[0].mxu0
    %5228 = vmatprep.mubr.bf16.mxu0 0
    %5229 = vmatmul.mubr.bf16.gmra.mrb[0].mxu0 %v5165
    %v5230 = vpop.f32.mrb[0].mxu0
    %v5231 = vadd.f32 0.0, %v5230
    %v5232 = vpop.f32.mrb[0].mxu0
    %v5233 = vpop.f32.mrb[0].mxu0
    %v5234 = vadd.f32 0.0, %v5233
    %v5235 = vpop.f32.mrb[0].mxu0
    %5236 = vmatprep.mubr.bf16.mxu0 0
    %5237 = vmatmul.mubr.bf16.gmra.mrb[0].mxu0 %v5168
    %v5238 = vpop.f32.mrb[0].mxu0
    %v5239 = vadd.f32 0.0, %v5238
    %v5240 = vpop.f32.mrb[0].mxu0
    %v5241 = vpop.f32.mrb[0].mxu0
    %v5242 = vadd.f32 0.0, %v5241
    %v5243 = vpop.f32.mrb[0].mxu0
    %5244 = vmatprep.mubr.bf16.mxu0 0
    %5245 = vmatmul.mubr.bf16.gmra.mrb[0].mxu0 %v5171
    %v5246 = vpop.f32.mrb[0].mxu0
    %v5247 = vadd.f32 0.0, %v5246
    %v5248 = vpop.f32.mrb[0].mxu0
    %v5249 = vpop.f32.mrb[0].mxu0
    %v5250 = vadd.f32 0.0, %v5249
    %v5251 = vpop.f32.mrb[0].mxu0
    %5252 = vmatprep.mubr.bf16.mxu0 0
    %5253 = vmatmul.mubr.bf16.gmra.mrb[0].mxu0 %v5174
    %v5254 = vpop.f32.mrb[0].mxu0
    %v5255 = vadd.f32 0.0, %v5254
    %v5256 = vpop.f32.mrb[0].mxu0
    %v5257 = vpop.f32.mrb[0].mxu0
    %v5258 = vadd.f32 0.0, %v5257
    %v5259 = vpop.f32.mrb[0].mxu0
    %5260 = vmatprep.mubr.bf16.mxu0 0
    %5261 = vmatmul.mubr.bf16.gmra.mrb[0].mxu0 %v5177
    %v5262 = vpop.f32.mrb[0].mxu0
    %v5263 = vadd.f32 0.0, %v5262
    %v5264 = vpop.f32.mrb[0].mxu0
    %v5265 = vpop.f32.mrb[0].mxu0
    %v5266 = vadd.f32 0.0, %v5265
    %v5267 = vpop.f32.mrb[0].mxu0
    %5268 = vmatprep.mubr.bf16.mxu0 0
    %5269 = vmatmul.mubr.bf16.gmra.mrb[0].mxu0 %v5180
    %v5270 = vpop.f32.mrb[0].mxu0
    %v5271 = vadd.f32 0.0, %v5270
    %v5272 = vpop.f32.mrb[0].mxu0
    %v5273 = vpop.f32.mrb[0].mxu0
    %v5274 = vadd.f32 0.0, %v5273
    %v5275 = vpop.f32.mrb[0].mxu0
    %5276 = vmatprep.mubr.bf16.mxu0 0
    %5277 = vmatmul.mubr.bf16.gmra.mrb[0].mxu0 %v5183
    %v5278 = vpop.f32.mrb[0].mxu0
    %v5279 = vadd.f32 0.0, %v5278
    %v5280 = vpop.f32.mrb[0].mxu0
    %v5281 = vpop.f32.mrb[0].mxu0
    %v5282 = vadd.f32 0.0, %v5281
    %v5283 = vpop.f32.mrb[0].mxu0
    %5284 = vdwg.mxu0
    %v5285 = vadd.f32 %v5121, %v5223
    %v5286 = vadd.f32 %v5122, %v5226
    %v5287 = vadd.f32 %v5123, %v5231
    %v5288 = vadd.f32 %v5124, %v5234
    %v5289 = vadd.f32 %v5125, %v5239
    %v5290 = vadd.f32 %v5126, %v5242
    %v5291 = vadd.f32 %v5127, %v5247
    %v5292 = vadd.f32 %v5128, %v5250
    %v5293 = vadd.f32 %v5129, %v5255
    %v5294 = vadd.f32 %v5130, %v5258
    %v5295 = vadd.f32 %v5131, %v5263
    %v5296 = vadd.f32 %v5132, %v5266
    %v5297 = vadd.f32 %v5133, %v5271
    %v5298 = vadd.f32 %v5134, %v5274
    %v5299 = vadd.f32 %v5135, %v5279
    %v5300 = vadd.f32 %v5136, %v5282
    %v5301 = vld [vmem:[%s3292 + $0x2] sm:$0xff]
    %v5302 = vld [vmem:[%s3292 + $0x12] sm:$0xff]
    %v5303 = vld [vmem:[%s3292 + $0x22] sm:$0xff]
    %v5304 = vld [vmem:[%s3292 + $0x32] sm:$0xff]
    %v5305 = vld [vmem:[%s3292 + $0x42] sm:$0xff]
    %v5306 = vld [vmem:[%s3292 + $0x52] sm:$0xff]
    %v5307 = vld [vmem:[%s3292 + $0x62] sm:$0xff]
    %v5308 = vld [vmem:[%s3292 + $0x72] sm:$0xff]
    %v5309 = vld [vmem:[%s3292 + $0xa2] sm:$0xff]
    %v5310 = vld [vmem:[%s3292 + $0xb2] sm:$0xff]
    %v5311 = vld [vmem:[%s3292 + $0xc2] sm:$0xff]
    %v5312 = vld [vmem:[%s3292 + $0xd2] sm:$0xff]
    %v5313 = vld [vmem:[%s3292 + $0xe2] sm:$0xff]
    %v5314 = vld [vmem:[%s3292 + $0xf2] sm:$0xff]
    %v5315 = vld [vmem:[%s3292 + $0x102] sm:$0xff]
    %v5316 = vld [vmem:[%s3292 + $0x112] sm:$0xff]
    %v5317 = vpack.c.bf16 %v5302, %v5301
    %v5318 = vpack.c.bf16 %v5304, %v5303
    %v5319 = vpack.c.bf16 %v5306, %v5305
    %v5320 = vpack.c.bf16 %v5308, %v5307
    %v5321 = vpack.c.bf16 %v5310, %v5309
    %v5322 = vpack.c.bf16 %v5312, %v5311
    %v5323 = vpack.c.bf16 %v5314, %v5313
    %v5324 = vpack.c.bf16 %v5316, %v5315
    %v5326 = vsel %vm131, %v5317, 0
    %v5329 = vsel %vm131, %v5318, 0
    %v5332 = vsel %vm131, %v5319, 0
    %v5335 = vsel %vm131, %v5320, 0
    %v5338 = vsel %vm131, %v5321, 0
    %v5341 = vsel %vm131, %v5322, 0
    %v5344 = vsel %vm131, %v5323, 0
    %v5347 = vsel %vm131, %v5324, 0
    %v5350 = vsel %vm2411, %v4004, 0
    %5352 = vmatprep.subr.bf16.mxu0 0
    %5353 = vmatpush1.bf16.msra.mxu0 %v5350
    %5354 = vmatprep.subr.bf16.mxu0 0
    %5355 = vmatpush1.bf16.msra.mxu0 0
    %5356 = vmatprep.subr.bf16.mxu0 0
    %5357 = vmatpush1.bf16.msra.mxu0 0
    %5358 = vmatprep.subr.bf16.mxu0 0
    %5359 = vmatpush1.bf16.msra.mxu0 0
    %5360 = vmatprep.subr.bf16.mxu0 0
    %5361 = vmatpush1.bf16.msra.mxu0 0
    %5362 = vmatprep.subr.bf16.mxu0 0
    %5363 = vmatpush1.bf16.msra.mxu0 0
    %5364 = vmatprep.subr.bf16.mxu0 0
    %5365 = vmatpush1.bf16.msra.mxu0 0
    %5366 = vmatprep.subr.bf16.mxu0 0
    %5367 = vmatpush1.bf16.msra.mxu0 0
    %5368 = vmatprep.subr.bf16.mxu0 0
    %5369 = vmatpush1.bf16.msra.mxu0 0
    %5370 = vmatprep.subr.bf16.mxu0 0
    %5371 = vmatpush1.bf16.msra.mxu0 0
    %5372 = vmatprep.subr.bf16.mxu0 0
    %5373 = vmatpush1.bf16.msra.mxu0 0
    %5374 = vmatprep.subr.bf16.mxu0 0
    %5375 = vmatpush1.bf16.msra.mxu0 0
    %5376 = vmatprep.subr.bf16.mxu0 0
    %5377 = vmatpush1.bf16.msra.mxu0 0
    %5378 = vmatprep.subr.bf16.mxu0 0
    %5379 = vmatpush1.bf16.msra.mxu0 0
    %5380 = vmatprep.subr.bf16.mxu0 0
    %5381 = vmatpush1.bf16.msra.mxu0 0
    %5382 = vmatprep.subr.bf16.mxu0 0
    %5383 = vmatpush1.bf16.msra.mxu0 0
    %5384 = vmatprep.mubr.bf16.mxu0 0
    %5385 = vmatmul.mubr.bf16.gmra.mrb[0].mxu0 %v5326
    %v5386 = vpop.f32.mrb[0].mxu0
    %v5387 = vadd.f32 0.0, %v5386
    %v5388 = vpop.f32.mrb[0].mxu0
    %v5389 = vpop.f32.mrb[0].mxu0
    %v5390 = vadd.f32 0.0, %v5389
    %v5391 = vpop.f32.mrb[0].mxu0
    %5392 = vmatprep.mubr.bf16.mxu0 0
    %5393 = vmatmul.mubr.bf16.gmra.mrb[0].mxu0 %v5329
    %v5394 = vpop.f32.mrb[0].mxu0
    %v5395 = vadd.f32 0.0, %v5394
    %v5396 = vpop.f32.mrb[0].mxu0
    %v5397 = vpop.f32.mrb[0].mxu0
    %v5398 = vadd.f32 0.0, %v5397
    %v5399 = vpop.f32.mrb[0].mxu0
    %5400 = vmatprep.mubr.bf16.mxu0 0
    %5401 = vmatmul.mubr.bf16.gmra.mrb[0].mxu0 %v5332
    %v5402 = vpop.f32.mrb[0].mxu0
    %v5403 = vadd.f32 0.0, %v5402
    %v5404 = vpop.f32.mrb[0].mxu0
    %v5405 = vpop.f32.mrb[0].mxu0
    %v5406 = vadd.f32 0.0, %v5405
    %v5407 = vpop.f32.mrb[0].mxu0
    %5408 = vmatprep.mubr.bf16.mxu0 0
    %5409 = vmatmul.mubr.bf16.gmra.mrb[0].mxu0 %v5335
    %v5410 = vpop.f32.mrb[0].mxu0
    %v5411 = vadd.f32 0.0, %v5410
    %v5412 = vpop.f32.mrb[0].mxu0
    %v5413 = vpop.f32.mrb[0].mxu0
    %v5414 = vadd.f32 0.0, %v5413
    %v5415 = vpop.f32.mrb[0].mxu0
    %5416 = vmatprep.mubr.bf16.mxu0 0
    %5417 = vmatmul.mubr.bf16.gmra.mrb[0].mxu0 %v5338
    %v5418 = vpop.f32.mrb[0].mxu0
    %v5419 = vadd.f32 0.0, %v5418
    %v5420 = vpop.f32.mrb[0].mxu0
    %v5421 = vpop.f32.mrb[0].mxu0
    %v5422 = vadd.f32 0.0, %v5421
    %v5423 = vpop.f32.mrb[0].mxu0
    %5424 = vmatprep.mubr.bf16.mxu0 0
    %5425 = vmatmul.mubr.bf16.gmra.mrb[0].mxu0 %v5341
    %v5426 = vpop.f32.mrb[0].mxu0
    %v5427 = vadd.f32 0.0, %v5426
    %v5428 = vpop.f32.mrb[0].mxu0
    %v5429 = vpop.f32.mrb[0].mxu0
    %v5430 = vadd.f32 0.0, %v5429
    %v5431 = vpop.f32.mrb[0].mxu0
    %5432 = vmatprep.mubr.bf16.mxu0 0
    %5433 = vmatmul.mubr.bf16.gmra.mrb[0].mxu0 %v5344
    %v5434 = vpop.f32.mrb[0].mxu0
    %v5435 = vadd.f32 0.0, %v5434
    %v5436 = vpop.f32.mrb[0].mxu0
    %v5437 = vpop.f32.mrb[0].mxu0
    %v5438 = vadd.f32 0.0, %v5437
    %v5439 = vpop.f32.mrb[0].mxu0
    %5440 = vmatprep.mubr.bf16.mxu0 0
    %5441 = vmatmul.mubr.bf16.gmra.mrb[0].mxu0 %v5347
    %v5442 = vpop.f32.mrb[0].mxu0
    %v5443 = vadd.f32 0.0, %v5442
    %v5444 = vpop.f32.mrb[0].mxu0
    %v5445 = vpop.f32.mrb[0].mxu0
    %v5446 = vadd.f32 0.0, %v5445
    %v5447 = vpop.f32.mrb[0].mxu0
    %5448 = vdwg.mxu0
    %v5449 = vadd.f32 %v5285, %v5387
    %v5450 = vadd.f32 %v5286, %v5390
    %v5451 = vadd.f32 %v5287, %v5395
    %v5452 = vadd.f32 %v5288, %v5398
    %v5453 = vadd.f32 %v5289, %v5403
    %v5454 = vadd.f32 %v5290, %v5406
    %v5455 = vadd.f32 %v5291, %v5411
    %v5456 = vadd.f32 %v5292, %v5414
    %v5457 = vadd.f32 %v5293, %v5419
    %v5458 = vadd.f32 %v5294, %v5422
    %v5459 = vadd.f32 %v5295, %v5427
    %v5460 = vadd.f32 %v5296, %v5430
    %v5461 = vadd.f32 %v5297, %v5435
    %v5462 = vadd.f32 %v5298, %v5438
    %v5463 = vadd.f32 %v5299, %v5443
    %v5464 = vadd.f32 %v5300, %v5446
    %v5465 = vld [vmem:[%s10] sm:$0x1]
    %v5467 = vlaneseq
    %v5468 = vshrl.u32 %v5467, 7
    %v5469 = vsub.s32 0, %v5468
    %v5470 = vrot.slane %v5465, %v5469
    %v5472 = vadd.f32 %v5449, %v5470
    %v5473 = vadd.f32 %v5450, %v5470
    %v5474 = vadd.f32 %v5451, %v5470
    %v5475 = vadd.f32 %v5452, %v5470
    %v5476 = vadd.f32 %v5453, %v5470
    %v5477 = vadd.f32 %v5454, %v5470
    %v5478 = vadd.f32 %v5455, %v5470
    %v5479 = vadd.f32 %v5456, %v5470
    %v5480 = vadd.f32 %v5457, %v5470
    %v5481 = vadd.f32 %v5458, %v5470
    %v5482 = vadd.f32 %v5459, %v5470
    %v5483 = vadd.f32 %v5460, %v5470
    %v5484 = vadd.f32 %v5461, %v5470
    %v5485 = vadd.f32 %v5462, %v5470
    %v5486 = vadd.f32 %v5463, %v5470
    %v5487 = vadd.f32 %v5464, %v5470
    %vm5488 = vcmp.ge.f32.partialorder %v5472, 0.0
    %vm5489 = vcmp.ge.f32.partialorder %v5473, 0.0
    %vm5490 = vcmp.ge.f32.partialorder %v5474, 0.0
    %vm5491 = vcmp.ge.f32.partialorder %v5475, 0.0
    %vm5492 = vcmp.ge.f32.partialorder %v5476, 0.0
    %vm5493 = vcmp.ge.f32.partialorder %v5477, 0.0
    %vm5494 = vcmp.ge.f32.partialorder %v5478, 0.0
    %vm5495 = vcmp.ge.f32.partialorder %v5479, 0.0
    %vm5496 = vcmp.ge.f32.partialorder %v5480, 0.0
    %vm5497 = vcmp.ge.f32.partialorder %v5481, 0.0
    %vm5498 = vcmp.ge.f32.partialorder %v5482, 0.0
    %vm5499 = vcmp.ge.f32.partialorder %v5483, 0.0
    %vm5500 = vcmp.ge.f32.partialorder %v5484, 0.0
    %vm5501 = vcmp.ge.f32.partialorder %v5485, 0.0
    %vm5502 = vcmp.ge.f32.partialorder %v5486, 0.0
    %vm5503 = vcmp.ge.f32.partialorder %v5487, 0.0
    %v5504 = vmul.f32 %v5472, 0.1
    %v5505 = vmul.f32 %v5473, 0.1
    %v5506 = vmul.f32 %v5474, 0.1
    %v5507 = vmul.f32 %v5475, 0.1
    %v5508 = vmul.f32 %v5476, 0.1
    %v5509 = vmul.f32 %v5477, 0.1
    %v5510 = vmul.f32 %v5478, 0.1
    %v5511 = vmul.f32 %v5479, 0.1
    %v5512 = vmul.f32 %v5480, 0.1
    %v5513 = vmul.f32 %v5481, 0.1
    %v5514 = vmul.f32 %v5482, 0.1
    %v5515 = vmul.f32 %v5483, 0.1
    %v5516 = vmul.f32 %v5484, 0.1
    %v5517 = vmul.f32 %v5485, 0.1
    %v5518 = vmul.f32 %v5486, 0.1
    %v5519 = vmul.f32 %v5487, 0.1
    %v5520 = vsel %vm5488, %v5472, %v5504
    %v5521 = vsel %vm5489, %v5473, %v5505
    %v5522 = vsel %vm5490, %v5474, %v5506
    %v5523 = vsel %vm5491, %v5475, %v5507
    %v5524 = vsel %vm5492, %v5476, %v5508
    %v5525 = vsel %vm5493, %v5477, %v5509
    %v5526 = vsel %vm5494, %v5478, %v5510
    %v5527 = vsel %vm5495, %v5479, %v5511
    %v5528 = vsel %vm5496, %v5480, %v5512
    %v5529 = vsel %vm5497, %v5481, %v5513
    %v5530 = vsel %vm5498, %v5482, %v5514
    %v5531 = vsel %vm5499, %v5483, %v5515
    %v5532 = vsel %vm5500, %v5484, %v5516
    %v5533 = vsel %vm5501, %v5485, %v5517
    %v5534 = vsel %vm5502, %v5486, %v5518
    %v5535 = vsel %vm5503, %v5487, %v5519
    %v5536 = vld [vmem:[%s11] sm:$0xf]
    %v5537 = vld [vmem:[%s11 + $0x4] sm:$0xf]
    %v5538 = vld [vmem:[%s11 + $0x8] sm:$0xf]
    %v5539 = vld [vmem:[%s11 + $0xc] sm:$0xf]
    %v5540 = vld [vmem:[%s11 + $0x10] sm:$0xf]
    %v5541 = vld [vmem:[%s11 + $0x14] sm:$0xf]
    %v5542 = vld [vmem:[%s11 + $0x18] sm:$0xf]
    %v5543 = vld [vmem:[%s11 + $0x1c] sm:$0xf]
    %v5544 = vld [vmem:[%s11 + $0x20] sm:$0xf]
    %5545 = vst.msk [vmem:[%s2322 + $0x1] sm:$0xff] %vm131, %v5520
    %5546 = vst.msk [vmem:[%s2322 + $0x11] sm:$0xff] %vm131, %v5521
    %5547 = vst.msk [vmem:[%s2322 + $0x21] sm:$0xff] %vm131, %v5522
    %5548 = vst.msk [vmem:[%s2322 + $0x31] sm:$0xff] %vm131, %v5523
    %5549 = vst.msk [vmem:[%s2322 + $0x41] sm:$0xff] %vm131, %v5524
    %5550 = vst.msk [vmem:[%s2322 + $0x51] sm:$0xff] %vm131, %v5525
    %5551 = vst.msk [vmem:[%s2322 + $0x61] sm:$0xff] %vm131, %v5526
    %5552 = vst.msk [vmem:[%s2322 + $0x71] sm:$0xff] %vm131, %v5527
    %5553 = vst.msk [vmem:[%s2322 + $0xa1] sm:$0xff] %vm131, %v5528
    %5554 = vst.msk [vmem:[%s2322 + $0xb1] sm:$0xff] %vm131, %v5529
    %5555 = vst.msk [vmem:[%s2322 + $0xc1] sm:$0xff] %vm131, %v5530
    %5556 = vst.msk [vmem:[%s2322 + $0xd1] sm:$0xff] %vm131, %v5531
    %5557 = vst.msk [vmem:[%s2322 + $0xe1] sm:$0xff] %vm131, %v5532
    %5558 = vst.msk [vmem:[%s2322 + $0xf1] sm:$0xff] %vm131, %v5533
    %5559 = vst.msk [vmem:[%s2322 + $0x101] sm:$0xff] %vm131, %v5534
    %5560 = vst.msk [vmem:[%s2322 + $0x111] sm:$0xff] %vm131, %v5535
    %v5561 = vld [vmem:[#allocation3] sm:$0xff]
    %v5562 = vld [vmem:[#allocation3 + $0x10] sm:$0xff]
    %v5563 = vld [vmem:[#allocation3 + $0x20] sm:$0xff]
    %v5564 = vld [vmem:[#allocation3 + $0x30] sm:$0xff]
    %v5565 = vld [vmem:[#allocation3 + $0x40] sm:$0xff]
    %v5566 = vld [vmem:[#allocation3 + $0x50] sm:$0xff]
    %v5567 = vld [vmem:[#allocation3 + $0x60] sm:$0xff]
    %v5568 = vld [vmem:[#allocation3 + $0x70] sm:$0xff]
    %v5569 = vld [vmem:[#allocation3 + $0xa0] sm:$0xff]
    %v5570 = vld [vmem:[#allocation3 + $0xb0] sm:$0xff]
    %v5571 = vld [vmem:[#allocation3 + $0xc0] sm:$0xff]
    %v5572 = vld [vmem:[#allocation3 + $0xd0] sm:$0xff]
    %v5573 = vld [vmem:[#allocation3 + $0xe0] sm:$0xff]
    %v5574 = vld [vmem:[#allocation3 + $0xf0] sm:$0xff]
    %v5575 = vld [vmem:[#allocation3 + $0x100] sm:$0xff]
    %v5576 = vld [vmem:[#allocation3 + $0x110] sm:$0xff]
    %v5577 = vpack.c.bf16 %v5562, %v5561
    %v5578 = vpack.c.bf16 %v5564, %v5563
    %v5579 = vpack.c.bf16 %v5566, %v5565
    %v5580 = vpack.c.bf16 %v5568, %v5567
    %v5581 = vpack.c.bf16 %v5570, %v5569
    %v5582 = vpack.c.bf16 %v5572, %v5571
    %v5583 = vpack.c.bf16 %v5574, %v5573
    %v5584 = vpack.c.bf16 %v5576, %v5575
    %v5585 = vld [vmem:[#allocation3 + $0x1] sm:$0xff]
    %v5586 = vld [vmem:[#allocation3 + $0x11] sm:$0xff]
    %v5587 = vld [vmem:[#allocation3 + $0x21] sm:$0xff]
    %v5588 = vld [vmem:[#allocation3 + $0x31] sm:$0xff]
    %v5589 = vld [vmem:[#allocation3 + $0x41] sm:$0xff]
    %v5590 = vld [vmem:[#allocation3 + $0x51] sm:$0xff]
    %v5591 = vld [vmem:[#allocation3 + $0x61] sm:$0xff]
    %v5592 = vld [vmem:[#allocation3 + $0x71] sm:$0xff]
    %v5593 = vld [vmem:[#allocation3 + $0xa1] sm:$0xff]
    %v5594 = vld [vmem:[#allocation3 + $0xb1] sm:$0xff]
    %v5595 = vld [vmem:[#allocation3 + $0xc1] sm:$0xff]
    %v5596 = vld [vmem:[#allocation3 + $0xd1] sm:$0xff]
    %v5597 = vld [vmem:[#allocation3 + $0xe1] sm:$0xff]
    %v5598 = vld [vmem:[#allocation3 + $0xf1] sm:$0xff]
    %v5599 = vld [vmem:[#allocation3 + $0x101] sm:$0xff]
    %v5600 = vld [vmem:[#allocation3 + $0x111] sm:$0xff]
    %v5601 = vpack.c.bf16 %v5586, %v5585
    %v5602 = vpack.c.bf16 %v5588, %v5587
    %v5603 = vpack.c.bf16 %v5590, %v5589
    %v5604 = vpack.c.bf16 %v5592, %v5591
    %v5605 = vpack.c.bf16 %v5594, %v5593
    %v5606 = vpack.c.bf16 %v5596, %v5595
    %v5607 = vpack.c.bf16 %v5598, %v5597
    %v5608 = vpack.c.bf16 %v5600, %v5599
    %v5610 = vsel %vm131, %v5601, 0
    %v5613 = vsel %vm131, %v5602, 0
    %v5616 = vsel %vm131, %v5603, 0
    %v5619 = vsel %vm131, %v5604, 0
    %v5622 = vsel %vm131, %v5605, 0
    %v5625 = vsel %vm131, %v5606, 0
    %v5628 = vsel %vm131, %v5607, 0
    %v5631 = vsel %vm131, %v5608, 0
    %v5634 = vsel %vm2411, %v5537, 0
    %5636 = vmatprep.subr.bf16.mxu0 0
    %5637 = vmatpush1.bf16.msra.mxu0 %v5634
    %5638 = vmatprep.subr.bf16.mxu0 0
    %5639 = vmatpush1.bf16.msra.mxu0 0
    %5640 = vmatprep.subr.bf16.mxu0 0
    %5641 = vmatpush1.bf16.msra.mxu0 0
    %5642 = vmatprep.subr.bf16.mxu0 0
    %5643 = vmatpush1.bf16.msra.mxu0 0
    %5644 = vmatprep.subr.bf16.mxu0 0
    %5645 = vmatpush1.bf16.msra.mxu0 0
    %5646 = vmatprep.subr.bf16.mxu0 0
    %5647 = vmatpush1.bf16.msra.mxu0 0
    %5648 = vmatprep.subr.bf16.mxu0 0
    %5649 = vmatpush1.bf16.msra.mxu0 0
    %5650 = vmatprep.subr.bf16.mxu0 0
    %5651 = vmatpush1.bf16.msra.mxu0 0
    %5652 = vmatprep.subr.bf16.mxu0 0
    %5653 = vmatpush1.bf16.msra.mxu0 0
    %5654 = vmatprep.subr.bf16.mxu0 0
    %5655 = vmatpush1.bf16.msra.mxu0 0
    %5656 = vmatprep.subr.bf16.mxu0 0
    %5657 = vmatpush1.bf16.msra.mxu0 0
    %5658 = vmatprep.subr.bf16.mxu0 0
    %5659 = vmatpush1.bf16.msra.mxu0 0
    %5660 = vmatprep.subr.bf16.mxu0 0
    %5661 = vmatpush1.bf16.msra.mxu0 0
    %5662 = vmatprep.subr.bf16.mxu0 0
    %5663 = vmatpush1.bf16.msra.mxu0 0
    %5664 = vmatprep.subr.bf16.mxu0 0
    %5665 = vmatpush1.bf16.msra.mxu0 0
    %5666 = vmatprep.subr.bf16.mxu0 0
    %5667 = vmatpush1.bf16.msra.mxu0 0
    %5668 = vmatprep.mubr.bf16.mxu0 0
    %5669 = vmatmul.mubr.bf16.gmra.mrb[0].mxu0 %v5610
    %v5670 = vpop.f32.mrb[0].mxu0
    %v5671 = vadd.f32 0.0, %v5670
    %v5672 = vpop.f32.mrb[0].mxu0
    %v5673 = vpop.f32.mrb[0].mxu0
    %v5674 = vadd.f32 0.0, %v5673
    %v5675 = vpop.f32.mrb[0].mxu0
    %5676 = vmatprep.mubr.bf16.mxu0 0
    %5677 = vmatmul.mubr.bf16.gmra.mrb[0].mxu0 %v5613
    %v5678 = vpop.f32.mrb[0].mxu0
    %v5679 = vadd.f32 0.0, %v5678
    %v5680 = vpop.f32.mrb[0].mxu0
    %v5681 = vpop.f32.mrb[0].mxu0
    %v5682 = vadd.f32 0.0, %v5681
    %v5683 = vpop.f32.mrb[0].mxu0
    %5684 = vmatprep.mubr.bf16.mxu0 0
    %5685 = vmatmul.mubr.bf16.gmra.mrb[0].mxu0 %v5616
    %v5686 = vpop.f32.mrb[0].mxu0
    %v5687 = vadd.f32 0.0, %v5686
    %v5688 = vpop.f32.mrb[0].mxu0
    %v5689 = vpop.f32.mrb[0].mxu0
    %v5690 = vadd.f32 0.0, %v5689
    %v5691 = vpop.f32.mrb[0].mxu0
    %5692 = vmatprep.mubr.bf16.mxu0 0
    %5693 = vmatmul.mubr.bf16.gmra.mrb[0].mxu0 %v5619
    %v5694 = vpop.f32.mrb[0].mxu0
    %v5695 = vadd.f32 0.0, %v5694
    %v5696 = vpop.f32.mrb[0].mxu0
    %v5697 = vpop.f32.mrb[0].mxu0
    %v5698 = vadd.f32 0.0, %v5697
    %v5699 = vpop.f32.mrb[0].mxu0
    %5700 = vmatprep.mubr.bf16.mxu0 0
    %5701 = vmatmul.mubr.bf16.gmra.mrb[0].mxu0 %v5622
    %v5702 = vpop.f32.mrb[0].mxu0
    %v5703 = vadd.f32 0.0, %v5702
    %v5704 = vpop.f32.mrb[0].mxu0
    %v5705 = vpop.f32.mrb[0].mxu0
    %v5706 = vadd.f32 0.0, %v5705
    %v5707 = vpop.f32.mrb[0].mxu0
    %5708 = vmatprep.mubr.bf16.mxu0 0
    %5709 = vmatmul.mubr.bf16.gmra.mrb[0].mxu0 %v5625
    %v5710 = vpop.f32.mrb[0].mxu0
    %v5711 = vadd.f32 0.0, %v5710
    %v5712 = vpop.f32.mrb[0].mxu0
    %v5713 = vpop.f32.mrb[0].mxu0
    %v5714 = vadd.f32 0.0, %v5713
    %v5715 = vpop.f32.mrb[0].mxu0
    %5716 = vmatprep.mubr.bf16.mxu0 0
    %5717 = vmatmul.mubr.bf16.gmra.mrb[0].mxu0 %v5628
    %v5718 = vpop.f32.mrb[0].mxu0
    %v5719 = vadd.f32 0.0, %v5718
    %v5720 = vpop.f32.mrb[0].mxu0
    %v5721 = vpop.f32.mrb[0].mxu0
    %v5722 = vadd.f32 0.0, %v5721
    %v5723 = vpop.f32.mrb[0].mxu0
    %5724 = vmatprep.mubr.bf16.mxu0 0
    %5725 = vmatmul.mubr.bf16.gmra.mrb[0].mxu0 %v5631
    %v5726 = vpop.f32.mrb[0].mxu0
    %v5727 = vadd.f32 0.0, %v5726
    %v5728 = vpop.f32.mrb[0].mxu0
    %v5729 = vpop.f32.mrb[0].mxu0
    %v5730 = vadd.f32 0.0, %v5729
    %v5731 = vpop.f32.mrb[0].mxu0
    %5732 = vdwg.mxu0
    %v5734 = vsel %vm131, %v5577, 0
    %v5737 = vsel %vm131, %v5578, 0
    %v5740 = vsel %vm131, %v5579, 0
    %v5743 = vsel %vm131, %v5580, 0
    %v5746 = vsel %vm131, %v5581, 0
    %v5749 = vsel %vm131, %v5582, 0
    %v5752 = vsel %vm131, %v5583, 0
    %v5755 = vsel %vm131, %v5584, 0
    %v5758 = vsel %vm2411, %v5536, 0
    %5760 = vmatprep.subr.bf16.mxu0 0
    %5761 = vmatpush1.bf16.msra.mxu0 %v5758
    %5762 = vmatprep.subr.bf16.mxu0 0
    %5763 = vmatpush1.bf16.msra.mxu0 0
    %5764 = vmatprep.subr.bf16.mxu0 0
    %5765 = vmatpush1.bf16.msra.mxu0 0
    %5766 = vmatprep.subr.bf16.mxu0 0
    %5767 = vmatpush1.bf16.msra.mxu0 0
    %5768 = vmatprep.subr.bf16.mxu0 0
    %5769 = vmatpush1.bf16.msra.mxu0 0
    %5770 = vmatprep.subr.bf16.mxu0 0
    %5771 = vmatpush1.bf16.msra.mxu0 0
    %5772 = vmatprep.subr.bf16.mxu0 0
    %5773 = vmatpush1.bf16.msra.mxu0 0
    %5774 = vmatprep.subr.bf16.mxu0 0
    %5775 = vmatpush1.bf16.msra.mxu0 0
    %5776 = vmatprep.subr.bf16.mxu0 0
    %5777 = vmatpush1.bf16.msra.mxu0 0
    %5778 = vmatprep.subr.bf16.mxu0 0
    %5779 = vmatpush1.bf16.msra.mxu0 0
    %5780 = vmatprep.subr.bf16.mxu0 0
    %5781 = vmatpush1.bf16.msra.mxu0 0
    %5782 = vmatprep.subr.bf16.mxu0 0
    %5783 = vmatpush1.bf16.msra.mxu0 0
    %5784 = vmatprep.subr.bf16.mxu0 0
    %5785 = vmatpush1.bf16.msra.mxu0 0
    %5786 = vmatprep.subr.bf16.mxu0 0
    %5787 = vmatpush1.bf16.msra.mxu0 0
    %5788 = vmatprep.subr.bf16.mxu0 0
    %5789 = vmatpush1.bf16.msra.mxu0 0
    %5790 = vmatprep.subr.bf16.mxu0 0
    %5791 = vmatpush1.bf16.msra.mxu0 0
    %5792 = vmatprep.mubr.bf16.mxu0 0
    %5793 = vmatmul.mubr.bf16.gmra.mrb[0].mxu0 %v5734
    %v5794 = vpop.f32.mrb[0].mxu0
    %v5795 = vadd.f32 %v5671, %v5794
    %v5796 = vpop.f32.mrb[0].mxu0
    %v5797 = vpop.f32.mrb[0].mxu0
    %v5798 = vadd.f32 %v5674, %v5797
    %v5799 = vpop.f32.mrb[0].mxu0
    %5800 = vmatprep.mubr.bf16.mxu0 0
    %5801 = vmatmul.mubr.bf16.gmra.mrb[0].mxu0 %v5737
    %v5802 = vpop.f32.mrb[0].mxu0
    %v5803 = vadd.f32 %v5679, %v5802
    %v5804 = vpop.f32.mrb[0].mxu0
    %v5805 = vpop.f32.mrb[0].mxu0
    %v5806 = vadd.f32 %v5682, %v5805
    %v5807 = vpop.f32.mrb[0].mxu0
    %5808 = vmatprep.mubr.bf16.mxu0 0
    %5809 = vmatmul.mubr.bf16.gmra.mrb[0].mxu0 %v5740
    %v5810 = vpop.f32.mrb[0].mxu0
    %v5811 = vadd.f32 %v5687, %v5810
    %v5812 = vpop.f32.mrb[0].mxu0
    %v5813 = vpop.f32.mrb[0].mxu0
    %v5814 = vadd.f32 %v5690, %v5813
    %v5815 = vpop.f32.mrb[0].mxu0
    %5816 = vmatprep.mubr.bf16.mxu0 0
    %5817 = vmatmul.mubr.bf16.gmra.mrb[0].mxu0 %v5743
    %v5818 = vpop.f32.mrb[0].mxu0
    %v5819 = vadd.f32 %v5695, %v5818
    %v5820 = vpop.f32.mrb[0].mxu0
    %v5821 = vpop.f32.mrb[0].mxu0
    %v5822 = vadd.f32 %v5698, %v5821
    %v5823 = vpop.f32.mrb[0].mxu0
    %5824 = vmatprep.mubr.bf16.mxu0 0
    %5825 = vmatmul.mubr.bf16.gmra.mrb[0].mxu0 %v5746
    %v5826 = vpop.f32.mrb[0].mxu0
    %v5827 = vadd.f32 %v5703, %v5826
    %v5828 = vpop.f32.mrb[0].mxu0
    %v5829 = vpop.f32.mrb[0].mxu0
    %v5830 = vadd.f32 %v5706, %v5829
    %v5831 = vpop.f32.mrb[0].mxu0
    %5832 = vmatprep.mubr.bf16.mxu0 0
    %5833 = vmatmul.mubr.bf16.gmra.mrb[0].mxu0 %v5749
    %v5834 = vpop.f32.mrb[0].mxu0
    %v5835 = vadd.f32 %v5711, %v5834
    %v5836 = vpop.f32.mrb[0].mxu0
    %v5837 = vpop.f32.mrb[0].mxu0
    %v5838 = vadd.f32 %v5714, %v5837
    %v5839 = vpop.f32.mrb[0].mxu0
    %5840 = vmatprep.mubr.bf16.mxu0 0
    %5841 = vmatmul.mubr.bf16.gmra.mrb[0].mxu0 %v5752
    %v5842 = vpop.f32.mrb[0].mxu0
    %v5843 = vadd.f32 %v5719, %v5842
    %v5844 = vpop.f32.mrb[0].mxu0
    %v5845 = vpop.f32.mrb[0].mxu0
    %v5846 = vadd.f32 %v5722, %v5845
    %v5847 = vpop.f32.mrb[0].mxu0
    %5848 = vmatprep.mubr.bf16.mxu0 0
    %5849 = vmatmul.mubr.bf16.gmra.mrb[0].mxu0 %v5755
    %v5850 = vpop.f32.mrb[0].mxu0
    %v5851 = vadd.f32 %v5727, %v5850
    %v5852 = vpop.f32.mrb[0].mxu0
    %v5853 = vpop.f32.mrb[0].mxu0
    %v5854 = vadd.f32 %v5730, %v5853
    %v5855 = vpop.f32.mrb[0].mxu0
    %5856 = vdwg.mxu0
    %v5857 = vld [vmem:[#allocation3 + $0x2] sm:$0xff]
    %v5858 = vld [vmem:[#allocation3 + $0x12] sm:$0xff]
    %v5859 = vld [vmem:[#allocation3 + $0x22] sm:$0xff]
    %v5860 = vld [vmem:[#allocation3 + $0x32] sm:$0xff]
    %v5861 = vld [vmem:[#allocation3 + $0x42] sm:$0xff]
    %v5862 = vld [vmem:[#allocation3 + $0x52] sm:$0xff]
    %v5863 = vld [vmem:[#allocation3 + $0x62] sm:$0xff]
    %v5864 = vld [vmem:[#allocation3 + $0x72] sm:$0xff]
    %v5865 = vld [vmem:[#allocation3 + $0xa2] sm:$0xff]
    %v5866 = vld [vmem:[#allocation3 + $0xb2] sm:$0xff]
    %v5867 = vld [vmem:[#allocation3 + $0xc2] sm:$0xff]
    %v5868 = vld [vmem:[#allocation3 + $0xd2] sm:$0xff]
    %v5869 = vld [vmem:[#allocation3 + $0xe2] sm:$0xff]
    %v5870 = vld [vmem:[#allocation3 + $0xf2] sm:$0xff]
    %v5871 = vld [vmem:[#allocation3 + $0x102] sm:$0xff]
    %v5872 = vld [vmem:[#allocation3 + $0x112] sm:$0xff]
    %v5873 = vpack.c.bf16 %v5858, %v5857
    %v5874 = vpack.c.bf16 %v5860, %v5859
    %v5875 = vpack.c.bf16 %v5862, %v5861
    %v5876 = vpack.c.bf16 %v5864, %v5863
    %v5877 = vpack.c.bf16 %v5866, %v5865
    %v5878 = vpack.c.bf16 %v5868, %v5867
    %v5879 = vpack.c.bf16 %v5870, %v5869
    %v5880 = vpack.c.bf16 %v5872, %v5871
    %v5882 = vsel %vm131, %v5873, 0
    %v5885 = vsel %vm131, %v5874, 0
    %v5888 = vsel %vm131, %v5875, 0
    %v5891 = vsel %vm131, %v5876, 0
    %v5894 = vsel %vm131, %v5877, 0
    %v5897 = vsel %vm131, %v5878, 0
    %v5900 = vsel %vm131, %v5879, 0
    %v5903 = vsel %vm131, %v5880, 0
    %v5906 = vsel %vm2411, %v5538, 0
    %5908 = vmatprep.subr.bf16.mxu0 0
    %5909 = vmatpush1.bf16.msra.mxu0 %v5906
    %5910 = vmatprep.subr.bf16.mxu0 0
    %5911 = vmatpush1.bf16.msra.mxu0 0
    %5912 = vmatprep.subr.bf16.mxu0 0
    %5913 = vmatpush1.bf16.msra.mxu0 0
    %5914 = vmatprep.subr.bf16.mxu0 0
    %5915 = vmatpush1.bf16.msra.mxu0 0
    %5916 = vmatprep.subr.bf16.mxu0 0
    %5917 = vmatpush1.bf16.msra.mxu0 0
    %5918 = vmatprep.subr.bf16.mxu0 0
    %5919 = vmatpush1.bf16.msra.mxu0 0
    %5920 = vmatprep.subr.bf16.mxu0 0
    %5921 = vmatpush1.bf16.msra.mxu0 0
    %5922 = vmatprep.subr.bf16.mxu0 0
    %5923 = vmatpush1.bf16.msra.mxu0 0
    %5924 = vmatprep.subr.bf16.mxu0 0
    %5925 = vmatpush1.bf16.msra.mxu0 0
    %5926 = vmatprep.subr.bf16.mxu0 0
    %5927 = vmatpush1.bf16.msra.mxu0 0
    %5928 = vmatprep.subr.bf16.mxu0 0
    %5929 = vmatpush1.bf16.msra.mxu0 0
    %5930 = vmatprep.subr.bf16.mxu0 0
    %5931 = vmatpush1.bf16.msra.mxu0 0
    %5932 = vmatprep.subr.bf16.mxu0 0
    %5933 = vmatpush1.bf16.msra.mxu0 0
    %5934 = vmatprep.subr.bf16.mxu0 0
    %5935 = vmatpush1.bf16.msra.mxu0 0
    %5936 = vmatprep.subr.bf16.mxu0 0
    %5937 = vmatpush1.bf16.msra.mxu0 0
    %5938 = vmatprep.subr.bf16.mxu0 0
    %5939 = vmatpush1.bf16.msra.mxu0 0
    %5940 = vmatprep.mubr.bf16.mxu0 0
    %5941 = vmatmul.mubr.bf16.gmra.mrb[0].mxu0 %v5882
    %v5942 = vpop.f32.mrb[0].mxu0
    %v5943 = vadd.f32 0.0, %v5942
    %v5944 = vpop.f32.mrb[0].mxu0
    %v5945 = vpop.f32.mrb[0].mxu0
    %v5946 = vadd.f32 0.0, %v5945
    %v5947 = vpop.f32.mrb[0].mxu0
    %5948 = vmatprep.mubr.bf16.mxu0 0
    %5949 = vmatmul.mubr.bf16.gmra.mrb[0].mxu0 %v5885
    %v5950 = vpop.f32.mrb[0].mxu0
    %v5951 = vadd.f32 0.0, %v5950
    %v5952 = vpop.f32.mrb[0].mxu0
    %v5953 = vpop.f32.mrb[0].mxu0
    %v5954 = vadd.f32 0.0, %v5953
    %v5955 = vpop.f32.mrb[0].mxu0
    %5956 = vmatprep.mubr.bf16.mxu0 0
    %5957 = vmatmul.mubr.bf16.gmra.mrb[0].mxu0 %v5888
    %v5958 = vpop.f32.mrb[0].mxu0
    %v5959 = vadd.f32 0.0, %v5958
    %v5960 = vpop.f32.mrb[0].mxu0
    %v5961 = vpop.f32.mrb[0].mxu0
    %v5962 = vadd.f32 0.0, %v5961
    %v5963 = vpop.f32.mrb[0].mxu0
    %5964 = vmatprep.mubr.bf16.mxu0 0
    %5965 = vmatmul.mubr.bf16.gmra.mrb[0].mxu0 %v5891
    %v5966 = vpop.f32.mrb[0].mxu0
    %v5967 = vadd.f32 0.0, %v5966
    %v5968 = vpop.f32.mrb[0].mxu0
    %v5969 = vpop.f32.mrb[0].mxu0
    %v5970 = vadd.f32 0.0, %v5969
    %v5971 = vpop.f32.mrb[0].mxu0
    %5972 = vmatprep.mubr.bf16.mxu0 0
    %5973 = vmatmul.mubr.bf16.gmra.mrb[0].mxu0 %v5894
    %v5974 = vpop.f32.mrb[0].mxu0
    %v5975 = vadd.f32 0.0, %v5974
    %v5976 = vpop.f32.mrb[0].mxu0
    %v5977 = vpop.f32.mrb[0].mxu0
    %v5978 = vadd.f32 0.0, %v5977
    %v5979 = vpop.f32.mrb[0].mxu0
    %5980 = vmatprep.mubr.bf16.mxu0 0
    %5981 = vmatmul.mubr.bf16.gmra.mrb[0].mxu0 %v5897
    %v5982 = vpop.f32.mrb[0].mxu0
    %v5983 = vadd.f32 0.0, %v5982
    %v5984 = vpop.f32.mrb[0].mxu0
    %v5985 = vpop.f32.mrb[0].mxu0
    %v5986 = vadd.f32 0.0, %v5985
    %v5987 = vpop.f32.mrb[0].mxu0
    %5988 = vmatprep.mubr.bf16.mxu0 0
    %5989 = vmatmul.mubr.bf16.gmra.mrb[0].mxu0 %v5900
    %v5990 = vpop.f32.mrb[0].mxu0
    %v5991 = vadd.f32 0.0, %v5990
    %v5992 = vpop.f32.mrb[0].mxu0
    %v5993 = vpop.f32.mrb[0].mxu0
    %v5994 = vadd.f32 0.0, %v5993
    %v5995 = vpop.f32.mrb[0].mxu0
    %5996 = vmatprep.mubr.bf16.mxu0 0
    %5997 = vmatmul.mubr.bf16.gmra.mrb[0].mxu0 %v5903
    %v5998 = vpop.f32.mrb[0].mxu0
    %v5999 = vadd.f32 0.0, %v5998
    %v6000 = vpop.f32.mrb[0].mxu0
    %v6001 = vpop.f32.mrb[0].mxu0
    %v6002 = vadd.f32 0.0, %v6001
    %v6003 = vpop.f32.mrb[0].mxu0
    %6004 = vdwg.mxu0
    %v6005 = vadd.f32 %v5795, %v5943
    %v6006 = vadd.f32 %v5798, %v5946
    %v6007 = vadd.f32 %v5803, %v5951
    %v6008 = vadd.f32 %v5806, %v5954
    %v6009 = vadd.f32 %v5811, %v5959
    %v6010 = vadd.f32 %v5814, %v5962
    %v6011 = vadd.f32 %v5819, %v5967
    %v6012 = vadd.f32 %v5822, %v5970
    %v6013 = vadd.f32 %v5827, %v5975
    %v6014 = vadd.f32 %v5830, %v5978
    %v6015 = vadd.f32 %v5835, %v5983
    %v6016 = vadd.f32 %v5838, %v5986
    %v6017 = vadd.f32 %v5843, %v5991
    %v6018 = vadd.f32 %v5846, %v5994
    %v6019 = vadd.f32 %v5851, %v5999
    %v6020 = vadd.f32 %v5854, %v6002
    %v6021 = vld [vmem:[%s2322] sm:$0xff]
    %v6022 = vld [vmem:[%s2322 + $0x10] sm:$0xff]
    %v6023 = vld [vmem:[%s2322 + $0x20] sm:$0xff]
    %v6024 = vld [vmem:[%s2322 + $0x30] sm:$0xff]
    %v6025 = vld [vmem:[%s2322 + $0x40] sm:$0xff]
    %v6026 = vld [vmem:[%s2322 + $0x50] sm:$0xff]
    %v6027 = vld [vmem:[%s2322 + $0x60] sm:$0xff]
    %v6028 = vld [vmem:[%s2322 + $0x70] sm:$0xff]
    %v6029 = vld [vmem:[%s2322 + $0xa0] sm:$0xff]
    %v6030 = vld [vmem:[%s2322 + $0xb0] sm:$0xff]
    %v6031 = vld [vmem:[%s2322 + $0xc0] sm:$0xff]
    %v6032 = vld [vmem:[%s2322 + $0xd0] sm:$0xff]
    %v6033 = vld [vmem:[%s2322 + $0xe0] sm:$0xff]
    %v6034 = vld [vmem:[%s2322 + $0xf0] sm:$0xff]
    %v6035 = vld [vmem:[%s2322 + $0x100] sm:$0xff]
    %v6036 = vld [vmem:[%s2322 + $0x110] sm:$0xff]
    %v6037 = vpack.c.bf16 %v6022, %v6021
    %v6038 = vpack.c.bf16 %v6024, %v6023
    %v6039 = vpack.c.bf16 %v6026, %v6025
    %v6040 = vpack.c.bf16 %v6028, %v6027
    %v6041 = vpack.c.bf16 %v6030, %v6029
    %v6042 = vpack.c.bf16 %v6032, %v6031
    %v6043 = vpack.c.bf16 %v6034, %v6033
    %v6044 = vpack.c.bf16 %v6036, %v6035
    %v6046 = vsel %vm131, %v6037, 0
    %v6049 = vsel %vm131, %v6038, 0
    %v6052 = vsel %vm131, %v6039, 0
    %v6055 = vsel %vm131, %v6040, 0
    %v6058 = vsel %vm131, %v6041, 0
    %v6061 = vsel %vm131, %v6042, 0
    %v6064 = vsel %vm131, %v6043, 0
    %v6067 = vsel %vm131, %v6044, 0
    %v6070 = vsel %vm2411, %v5539, 0
    %6072 = vmatprep.subr.bf16.mxu0 0
    %6073 = vmatpush1.bf16.msra.mxu0 %v6070
    %6074 = vmatprep.subr.bf16.mxu0 0
    %6075 = vmatpush1.bf16.msra.mxu0 0
    %6076 = vmatprep.subr.bf16.mxu0 0
    %6077 = vmatpush1.bf16.msra.mxu0 0
    %6078 = vmatprep.subr.bf16.mxu0 0
    %6079 = vmatpush1.bf16.msra.mxu0 0
    %6080 = vmatprep.subr.bf16.mxu0 0
    %6081 = vmatpush1.bf16.msra.mxu0 0
    %6082 = vmatprep.subr.bf16.mxu0 0
    %6083 = vmatpush1.bf16.msra.mxu0 0
    %6084 = vmatprep.subr.bf16.mxu0 0
    %6085 = vmatpush1.bf16.msra.mxu0 0
    %6086 = vmatprep.subr.bf16.mxu0 0
    %6087 = vmatpush1.bf16.msra.mxu0 0
    %6088 = vmatprep.subr.bf16.mxu0 0
    %6089 = vmatpush1.bf16.msra.mxu0 0
    %6090 = vmatprep.subr.bf16.mxu0 0
    %6091 = vmatpush1.bf16.msra.mxu0 0
    %6092 = vmatprep.subr.bf16.mxu0 0
    %6093 = vmatpush1.bf16.msra.mxu0 0
    %6094 = vmatprep.subr.bf16.mxu0 0
    %6095 = vmatpush1.bf16.msra.mxu0 0
    %6096 = vmatprep.subr.bf16.mxu0 0
    %6097 = vmatpush1.bf16.msra.mxu0 0
    %6098 = vmatprep.subr.bf16.mxu0 0
    %6099 = vmatpush1.bf16.msra.mxu0 0
    %6100 = vmatprep.subr.bf16.mxu0 0
    %6101 = vmatpush1.bf16.msra.mxu0 0
    %6102 = vmatprep.subr.bf16.mxu0 0
    %6103 = vmatpush1.bf16.msra.mxu0 0
    %6104 = vmatprep.mubr.bf16.mxu0 0
    %6105 = vmatmul.mubr.bf16.gmra.mrb[0].mxu0 %v6046
    %v6106 = vpop.f32.mrb[0].mxu0
    %v6107 = vadd.f32 0.0, %v6106
    %v6108 = vpop.f32.mrb[0].mxu0
    %v6109 = vpop.f32.mrb[0].mxu0
    %v6110 = vadd.f32 0.0, %v6109
    %v6111 = vpop.f32.mrb[0].mxu0
    %6112 = vmatprep.mubr.bf16.mxu0 0
    %6113 = vmatmul.mubr.bf16.gmra.mrb[0].mxu0 %v6049
    %v6114 = vpop.f32.mrb[0].mxu0
    %v6115 = vadd.f32 0.0, %v6114
    %v6116 = vpop.f32.mrb[0].mxu0
    %v6117 = vpop.f32.mrb[0].mxu0
    %v6118 = vadd.f32 0.0, %v6117
    %v6119 = vpop.f32.mrb[0].mxu0
    %6120 = vmatprep.mubr.bf16.mxu0 0
    %6121 = vmatmul.mubr.bf16.gmra.mrb[0].mxu0 %v6052
    %v6122 = vpop.f32.mrb[0].mxu0
    %v6123 = vadd.f32 0.0, %v6122
    %v6124 = vpop.f32.mrb[0].mxu0
    %v6125 = vpop.f32.mrb[0].mxu0
    %v6126 = vadd.f32 0.0, %v6125
    %v6127 = vpop.f32.mrb[0].mxu0
    %6128 = vmatprep.mubr.bf16.mxu0 0
    %6129 = vmatmul.mubr.bf16.gmra.mrb[0].mxu0 %v6055
    %v6130 = vpop.f32.mrb[0].mxu0
    %v6131 = vadd.f32 0.0, %v6130
    %v6132 = vpop.f32.mrb[0].mxu0
    %v6133 = vpop.f32.mrb[0].mxu0
    %v6134 = vadd.f32 0.0, %v6133
    %v6135 = vpop.f32.mrb[0].mxu0
    %6136 = vmatprep.mubr.bf16.mxu0 0
    %6137 = vmatmul.mubr.bf16.gmra.mrb[0].mxu0 %v6058
    %v6138 = vpop.f32.mrb[0].mxu0
    %v6139 = vadd.f32 0.0, %v6138
    %v6140 = vpop.f32.mrb[0].mxu0
    %v6141 = vpop.f32.mrb[0].mxu0
    %v6142 = vadd.f32 0.0, %v6141
    %v6143 = vpop.f32.mrb[0].mxu0
    %6144 = vmatprep.mubr.bf16.mxu0 0
    %6145 = vmatmul.mubr.bf16.gmra.mrb[0].mxu0 %v6061
    %v6146 = vpop.f32.mrb[0].mxu0
    %v6147 = vadd.f32 0.0, %v6146
    %v6148 = vpop.f32.mrb[0].mxu0
    %v6149 = vpop.f32.mrb[0].mxu0
    %v6150 = vadd.f32 0.0, %v6149
    %v6151 = vpop.f32.mrb[0].mxu0
    %6152 = vmatprep.mubr.bf16.mxu0 0
    %6153 = vmatmul.mubr.bf16.gmra.mrb[0].mxu0 %v6064
    %v6154 = vpop.f32.mrb[0].mxu0
    %v6155 = vadd.f32 0.0, %v6154
    %v6156 = vpop.f32.mrb[0].mxu0
    %v6157 = vpop.f32.mrb[0].mxu0
    %v6158 = vadd.f32 0.0, %v6157
    %v6159 = vpop.f32.mrb[0].mxu0
    %6160 = vmatprep.mubr.bf16.mxu0 0
    %6161 = vmatmul.mubr.bf16.gmra.mrb[0].mxu0 %v6067
    %v6162 = vpop.f32.mrb[0].mxu0
    %v6163 = vadd.f32 0.0, %v6162
    %v6164 = vpop.f32.mrb[0].mxu0
    %v6165 = vpop.f32.mrb[0].mxu0
    %v6166 = vadd.f32 0.0, %v6165
    %v6167 = vpop.f32.mrb[0].mxu0
    %6168 = vdwg.mxu0
    %v6169 = vadd.f32 %v6005, %v6107
    %v6170 = vadd.f32 %v6006, %v6110
    %v6171 = vadd.f32 %v6007, %v6115
    %v6172 = vadd.f32 %v6008, %v6118
    %v6173 = vadd.f32 %v6009, %v6123
    %v6174 = vadd.f32 %v6010, %v6126
    %v6175 = vadd.f32 %v6011, %v6131
    %v6176 = vadd.f32 %v6012, %v6134
    %v6177 = vadd.f32 %v6013, %v6139
    %v6178 = vadd.f32 %v6014, %v6142
    %v6179 = vadd.f32 %v6015, %v6147
    %v6180 = vadd.f32 %v6016, %v6150
    %v6181 = vadd.f32 %v6017, %v6155
    %v6182 = vadd.f32 %v6018, %v6158
    %v6183 = vadd.f32 %v6019, %v6163
    %v6184 = vadd.f32 %v6020, %v6166
    %v6185 = vld [vmem:[%s2322 + $0x1] sm:$0xff]
    %v6186 = vld [vmem:[%s2322 + $0x11] sm:$0xff]
    %v6187 = vld [vmem:[%s2322 + $0x21] sm:$0xff]
    %v6188 = vld [vmem:[%s2322 + $0x31] sm:$0xff]
    %v6189 = vld [vmem:[%s2322 + $0x41] sm:$0xff]
    %v6190 = vld [vmem:[%s2322 + $0x51] sm:$0xff]
    %v6191 = vld [vmem:[%s2322 + $0x61] sm:$0xff]
    %v6192 = vld [vmem:[%s2322 + $0x71] sm:$0xff]
    %v6193 = vld [vmem:[%s2322 + $0xa1] sm:$0xff]
    %v6194 = vld [vmem:[%s2322 + $0xb1] sm:$0xff]
    %v6195 = vld [vmem:[%s2322 + $0xc1] sm:$0xff]
    %v6196 = vld [vmem:[%s2322 + $0xd1] sm:$0xff]
    %v6197 = vld [vmem:[%s2322 + $0xe1] sm:$0xff]
    %v6198 = vld [vmem:[%s2322 + $0xf1] sm:$0xff]
    %v6199 = vld [vmem:[%s2322 + $0x101] sm:$0xff]
    %v6200 = vld [vmem:[%s2322 + $0x111] sm:$0xff]
    %v6201 = vpack.c.bf16 %v6186, %v6185
    %v6202 = vpack.c.bf16 %v6188, %v6187
    %v6203 = vpack.c.bf16 %v6190, %v6189
    %v6204 = vpack.c.bf16 %v6192, %v6191
    %v6205 = vpack.c.bf16 %v6194, %v6193
    %v6206 = vpack.c.bf16 %v6196, %v6195
    %v6207 = vpack.c.bf16 %v6198, %v6197
    %v6208 = vpack.c.bf16 %v6200, %v6199
    %v6210 = vsel %vm131, %v6201, 0
    %v6213 = vsel %vm131, %v6202, 0
    %v6216 = vsel %vm131, %v6203, 0
    %v6219 = vsel %vm131, %v6204, 0
    %v6222 = vsel %vm131, %v6205, 0
    %v6225 = vsel %vm131, %v6206, 0
    %v6228 = vsel %vm131, %v6207, 0
    %v6231 = vsel %vm131, %v6208, 0
    %v6234 = vsel %vm2411, %v5540, 0
    %6236 = vmatprep.subr.bf16.mxu0 0
    %6237 = vmatpush1.bf16.msra.mxu0 %v6234
    %6238 = vmatprep.subr.bf16.mxu0 0
    %6239 = vmatpush1.bf16.msra.mxu0 0
    %6240 = vmatprep.subr.bf16.mxu0 0
    %6241 = vmatpush1.bf16.msra.mxu0 0
    %6242 = vmatprep.subr.bf16.mxu0 0
    %6243 = vmatpush1.bf16.msra.mxu0 0
    %6244 = vmatprep.subr.bf16.mxu0 0
    %6245 = vmatpush1.bf16.msra.mxu0 0
    %6246 = vmatprep.subr.bf16.mxu0 0
    %6247 = vmatpush1.bf16.msra.mxu0 0
    %6248 = vmatprep.subr.bf16.mxu0 0
    %6249 = vmatpush1.bf16.msra.mxu0 0
    %6250 = vmatprep.subr.bf16.mxu0 0
    %6251 = vmatpush1.bf16.msra.mxu0 0
    %6252 = vmatprep.subr.bf16.mxu0 0
    %6253 = vmatpush1.bf16.msra.mxu0 0
    %6254 = vmatprep.subr.bf16.mxu0 0
    %6255 = vmatpush1.bf16.msra.mxu0 0
    %6256 = vmatprep.subr.bf16.mxu0 0
    %6257 = vmatpush1.bf16.msra.mxu0 0
    %6258 = vmatprep.subr.bf16.mxu0 0
    %6259 = vmatpush1.bf16.msra.mxu0 0
    %6260 = vmatprep.subr.bf16.mxu0 0
    %6261 = vmatpush1.bf16.msra.mxu0 0
    %6262 = vmatprep.subr.bf16.mxu0 0
    %6263 = vmatpush1.bf16.msra.mxu0 0
    %6264 = vmatprep.subr.bf16.mxu0 0
    %6265 = vmatpush1.bf16.msra.mxu0 0
    %6266 = vmatprep.subr.bf16.mxu0 0
    %6267 = vmatpush1.bf16.msra.mxu0 0
    %6268 = vmatprep.mubr.bf16.mxu0 0
    %6269 = vmatmul.mubr.bf16.gmra.mrb[0].mxu0 %v6210
    %v6270 = vpop.f32.mrb[0].mxu0
    %v6271 = vadd.f32 0.0, %v6270
    %v6272 = vpop.f32.mrb[0].mxu0
    %v6273 = vpop.f32.mrb[0].mxu0
    %v6274 = vadd.f32 0.0, %v6273
    %v6275 = vpop.f32.mrb[0].mxu0
    %6276 = vmatprep.mubr.bf16.mxu0 0
    %6277 = vmatmul.mubr.bf16.gmra.mrb[0].mxu0 %v6213
    %v6278 = vpop.f32.mrb[0].mxu0
    %v6279 = vadd.f32 0.0, %v6278
    %v6280 = vpop.f32.mrb[0].mxu0
    %v6281 = vpop.f32.mrb[0].mxu0
    %v6282 = vadd.f32 0.0, %v6281
    %v6283 = vpop.f32.mrb[0].mxu0
    %6284 = vmatprep.mubr.bf16.mxu0 0
    %6285 = vmatmul.mubr.bf16.gmra.mrb[0].mxu0 %v6216
    %v6286 = vpop.f32.mrb[0].mxu0
    %v6287 = vadd.f32 0.0, %v6286
    %v6288 = vpop.f32.mrb[0].mxu0
    %v6289 = vpop.f32.mrb[0].mxu0
    %v6290 = vadd.f32 0.0, %v6289
    %v6291 = vpop.f32.mrb[0].mxu0
    %6292 = vmatprep.mubr.bf16.mxu0 0
    %6293 = vmatmul.mubr.bf16.gmra.mrb[0].mxu0 %v6219
    %v6294 = vpop.f32.mrb[0].mxu0
    %v6295 = vadd.f32 0.0, %v6294
    %v6296 = vpop.f32.mrb[0].mxu0
    %v6297 = vpop.f32.mrb[0].mxu0
    %v6298 = vadd.f32 0.0, %v6297
    %v6299 = vpop.f32.mrb[0].mxu0
    %6300 = vmatprep.mubr.bf16.mxu0 0
    %6301 = vmatmul.mubr.bf16.gmra.mrb[0].mxu0 %v6222
    %v6302 = vpop.f32.mrb[0].mxu0
    %v6303 = vadd.f32 0.0, %v6302
    %v6304 = vpop.f32.mrb[0].mxu0
    %v6305 = vpop.f32.mrb[0].mxu0
    %v6306 = vadd.f32 0.0, %v6305
    %v6307 = vpop.f32.mrb[0].mxu0
    %6308 = vmatprep.mubr.bf16.mxu0 0
    %6309 = vmatmul.mubr.bf16.gmra.mrb[0].mxu0 %v6225
    %v6310 = vpop.f32.mrb[0].mxu0
    %v6311 = vadd.f32 0.0, %v6310
    %v6312 = vpop.f32.mrb[0].mxu0
    %v6313 = vpop.f32.mrb[0].mxu0
    %v6314 = vadd.f32 0.0, %v6313
    %v6315 = vpop.f32.mrb[0].mxu0
    %6316 = vmatprep.mubr.bf16.mxu0 0
    %6317 = vmatmul.mubr.bf16.gmra.mrb[0].mxu0 %v6228
    %v6318 = vpop.f32.mrb[0].mxu0
    %v6319 = vadd.f32 0.0, %v6318
    %v6320 = vpop.f32.mrb[0].mxu0
    %v6321 = vpop.f32.mrb[0].mxu0
    %v6322 = vadd.f32 0.0, %v6321
    %v6323 = vpop.f32.mrb[0].mxu0
    %6324 = vmatprep.mubr.bf16.mxu0 0
    %6325 = vmatmul.mubr.bf16.gmra.mrb[0].mxu0 %v6231
    %v6326 = vpop.f32.mrb[0].mxu0
    %v6327 = vadd.f32 0.0, %v6326
    %v6328 = vpop.f32.mrb[0].mxu0
    %v6329 = vpop.f32.mrb[0].mxu0
    %v6330 = vadd.f32 0.0, %v6329
    %v6331 = vpop.f32.mrb[0].mxu0
    %6332 = vdwg.mxu0
    %v6333 = vadd.f32 %v6169, %v6271
    %v6334 = vadd.f32 %v6170, %v6274
    %v6335 = vadd.f32 %v6171, %v6279
    %v6336 = vadd.f32 %v6172, %v6282
    %v6337 = vadd.f32 %v6173, %v6287
    %v6338 = vadd.f32 %v6174, %v6290
    %v6339 = vadd.f32 %v6175, %v6295
    %v6340 = vadd.f32 %v6176, %v6298
    %v6341 = vadd.f32 %v6177, %v6303
    %v6342 = vadd.f32 %v6178, %v6306
    %v6343 = vadd.f32 %v6179, %v6311
    %v6344 = vadd.f32 %v6180, %v6314
    %v6345 = vadd.f32 %v6181, %v6319
    %v6346 = vadd.f32 %v6182, %v6322
    %v6347 = vadd.f32 %v6183, %v6327
    %v6348 = vadd.f32 %v6184, %v6330
    %v6349 = vld [vmem:[%s2322 + $0x2] sm:$0xff]
    %v6350 = vld [vmem:[%s2322 + $0x12] sm:$0xff]
    %v6351 = vld [vmem:[%s2322 + $0x22] sm:$0xff]
    %v6352 = vld [vmem:[%s2322 + $0x32] sm:$0xff]
    %v6353 = vld [vmem:[%s2322 + $0x42] sm:$0xff]
    %v6354 = vld [vmem:[%s2322 + $0x52] sm:$0xff]
    %v6355 = vld [vmem:[%s2322 + $0x62] sm:$0xff]
    %v6356 = vld [vmem:[%s2322 + $0x72] sm:$0xff]
    %v6357 = vld [vmem:[%s2322 + $0xa2] sm:$0xff]
    %v6358 = vld [vmem:[%s2322 + $0xb2] sm:$0xff]
    %v6359 = vld [vmem:[%s2322 + $0xc2] sm:$0xff]
    %v6360 = vld [vmem:[%s2322 + $0xd2] sm:$0xff]
    %v6361 = vld [vmem:[%s2322 + $0xe2] sm:$0xff]
    %v6362 = vld [vmem:[%s2322 + $0xf2] sm:$0xff]
    %v6363 = vld [vmem:[%s2322 + $0x102] sm:$0xff]
    %v6364 = vld [vmem:[%s2322 + $0x112] sm:$0xff]
    %v6365 = vpack.c.bf16 %v6350, %v6349
    %v6366 = vpack.c.bf16 %v6352, %v6351
    %v6367 = vpack.c.bf16 %v6354, %v6353
    %v6368 = vpack.c.bf16 %v6356, %v6355
    %v6369 = vpack.c.bf16 %v6358, %v6357
    %v6370 = vpack.c.bf16 %v6360, %v6359
    %v6371 = vpack.c.bf16 %v6362, %v6361
    %v6372 = vpack.c.bf16 %v6364, %v6363
    %v6374 = vsel %vm131, %v6365, 0
    %v6377 = vsel %vm131, %v6366, 0
    %v6380 = vsel %vm131, %v6367, 0
    %v6383 = vsel %vm131, %v6368, 0
    %v6386 = vsel %vm131, %v6369, 0
    %v6389 = vsel %vm131, %v6370, 0
    %v6392 = vsel %vm131, %v6371, 0
    %v6395 = vsel %vm131, %v6372, 0
    %v6398 = vsel %vm2411, %v5541, 0
    %6400 = vmatprep.subr.bf16.mxu0 0
    %6401 = vmatpush1.bf16.msra.mxu0 %v6398
    %6402 = vmatprep.subr.bf16.mxu0 0
    %6403 = vmatpush1.bf16.msra.mxu0 0
    %6404 = vmatprep.subr.bf16.mxu0 0
    %6405 = vmatpush1.bf16.msra.mxu0 0
    %6406 = vmatprep.subr.bf16.mxu0 0
    %6407 = vmatpush1.bf16.msra.mxu0 0
    %6408 = vmatprep.subr.bf16.mxu0 0
    %6409 = vmatpush1.bf16.msra.mxu0 0
    %6410 = vmatprep.subr.bf16.mxu0 0
    %6411 = vmatpush1.bf16.msra.mxu0 0
    %6412 = vmatprep.subr.bf16.mxu0 0
    %6413 = vmatpush1.bf16.msra.mxu0 0
    %6414 = vmatprep.subr.bf16.mxu0 0
    %6415 = vmatpush1.bf16.msra.mxu0 0
    %6416 = vmatprep.subr.bf16.mxu0 0
    %6417 = vmatpush1.bf16.msra.mxu0 0
    %6418 = vmatprep.subr.bf16.mxu0 0
    %6419 = vmatpush1.bf16.msra.mxu0 0
    %6420 = vmatprep.subr.bf16.mxu0 0
    %6421 = vmatpush1.bf16.msra.mxu0 0
    %6422 = vmatprep.subr.bf16.mxu0 0
    %6423 = vmatpush1.bf16.msra.mxu0 0
    %6424 = vmatprep.subr.bf16.mxu0 0
    %6425 = vmatpush1.bf16.msra.mxu0 0
    %6426 = vmatprep.subr.bf16.mxu0 0
    %6427 = vmatpush1.bf16.msra.mxu0 0
    %6428 = vmatprep.subr.bf16.mxu0 0
    %6429 = vmatpush1.bf16.msra.mxu0 0
    %6430 = vmatprep.subr.bf16.mxu0 0
    %6431 = vmatpush1.bf16.msra.mxu0 0
    %6432 = vmatprep.mubr.bf16.mxu0 0
    %6433 = vmatmul.mubr.bf16.gmra.mrb[0].mxu0 %v6374
    %v6434 = vpop.f32.mrb[0].mxu0
    %v6435 = vadd.f32 0.0, %v6434
    %v6436 = vpop.f32.mrb[0].mxu0
    %v6437 = vpop.f32.mrb[0].mxu0
    %v6438 = vadd.f32 0.0, %v6437
    %v6439 = vpop.f32.mrb[0].mxu0
    %6440 = vmatprep.mubr.bf16.mxu0 0
    %6441 = vmatmul.mubr.bf16.gmra.mrb[0].mxu0 %v6377
    %v6442 = vpop.f32.mrb[0].mxu0
    %v6443 = vadd.f32 0.0, %v6442
    %v6444 = vpop.f32.mrb[0].mxu0
    %v6445 = vpop.f32.mrb[0].mxu0
    %v6446 = vadd.f32 0.0, %v6445
    %v6447 = vpop.f32.mrb[0].mxu0
    %6448 = vmatprep.mubr.bf16.mxu0 0
    %6449 = vmatmul.mubr.bf16.gmra.mrb[0].mxu0 %v6380
    %v6450 = vpop.f32.mrb[0].mxu0
    %v6451 = vadd.f32 0.0, %v6450
    %v6452 = vpop.f32.mrb[0].mxu0
    %v6453 = vpop.f32.mrb[0].mxu0
    %v6454 = vadd.f32 0.0, %v6453
    %v6455 = vpop.f32.mrb[0].mxu0
    %6456 = vmatprep.mubr.bf16.mxu0 0
    %6457 = vmatmul.mubr.bf16.gmra.mrb[0].mxu0 %v6383
    %v6458 = vpop.f32.mrb[0].mxu0
    %v6459 = vadd.f32 0.0, %v6458
    %v6460 = vpop.f32.mrb[0].mxu0
    %v6461 = vpop.f32.mrb[0].mxu0
    %v6462 = vadd.f32 0.0, %v6461
    %v6463 = vpop.f32.mrb[0].mxu0
    %6464 = vmatprep.mubr.bf16.mxu0 0
    %6465 = vmatmul.mubr.bf16.gmra.mrb[0].mxu0 %v6386
    %v6466 = vpop.f32.mrb[0].mxu0
    %v6467 = vadd.f32 0.0, %v6466
    %v6468 = vpop.f32.mrb[0].mxu0
    %v6469 = vpop.f32.mrb[0].mxu0
    %v6470 = vadd.f32 0.0, %v6469
    %v6471 = vpop.f32.mrb[0].mxu0
    %6472 = vmatprep.mubr.bf16.mxu0 0
    %6473 = vmatmul.mubr.bf16.gmra.mrb[0].mxu0 %v6389
    %v6474 = vpop.f32.mrb[0].mxu0
    %v6475 = vadd.f32 0.0, %v6474
    %v6476 = vpop.f32.mrb[0].mxu0
    %v6477 = vpop.f32.mrb[0].mxu0
    %v6478 = vadd.f32 0.0, %v6477
    %v6479 = vpop.f32.mrb[0].mxu0
    %6480 = vmatprep.mubr.bf16.mxu0 0
    %6481 = vmatmul.mubr.bf16.gmra.mrb[0].mxu0 %v6392
    %v6482 = vpop.f32.mrb[0].mxu0
    %v6483 = vadd.f32 0.0, %v6482
    %v6484 = vpop.f32.mrb[0].mxu0
    %v6485 = vpop.f32.mrb[0].mxu0
    %v6486 = vadd.f32 0.0, %v6485
    %v6487 = vpop.f32.mrb[0].mxu0
    %6488 = vmatprep.mubr.bf16.mxu0 0
    %6489 = vmatmul.mubr.bf16.gmra.mrb[0].mxu0 %v6395
    %v6490 = vpop.f32.mrb[0].mxu0
    %v6491 = vadd.f32 0.0, %v6490
    %v6492 = vpop.f32.mrb[0].mxu0
    %v6493 = vpop.f32.mrb[0].mxu0
    %v6494 = vadd.f32 0.0, %v6493
    %v6495 = vpop.f32.mrb[0].mxu0
    %6496 = vdwg.mxu0
    %v6497 = vadd.f32 %v6333, %v6435
    %v6498 = vadd.f32 %v6334, %v6438
    %v6499 = vadd.f32 %v6335, %v6443
    %v6500 = vadd.f32 %v6336, %v6446
    %v6501 = vadd.f32 %v6337, %v6451
    %v6502 = vadd.f32 %v6338, %v6454
    %v6503 = vadd.f32 %v6339, %v6459
    %v6504 = vadd.f32 %v6340, %v6462
    %v6505 = vadd.f32 %v6341, %v6467
    %v6506 = vadd.f32 %v6342, %v6470
    %v6507 = vadd.f32 %v6343, %v6475
    %v6508 = vadd.f32 %v6344, %v6478
    %v6509 = vadd.f32 %v6345, %v6483
    %v6510 = vadd.f32 %v6346, %v6486
    %v6511 = vadd.f32 %v6347, %v6491
    %v6512 = vadd.f32 %v6348, %v6494
    %v6513 = vld [vmem:[%s3292] sm:$0xff]
    %v6514 = vld [vmem:[%s3292 + $0x10] sm:$0xff]
    %v6515 = vld [vmem:[%s3292 + $0x20] sm:$0xff]
    %v6516 = vld [vmem:[%s3292 + $0x30] sm:$0xff]
    %v6517 = vld [vmem:[%s3292 + $0x40] sm:$0xff]
    %v6518 = vld [vmem:[%s3292 + $0x50] sm:$0xff]
    %v6519 = vld [vmem:[%s3292 + $0x60] sm:$0xff]
    %v6520 = vld [vmem:[%s3292 + $0x70] sm:$0xff]
    %v6521 = vld [vmem:[%s3292 + $0xa0] sm:$0xff]
    %v6522 = vld [vmem:[%s3292 + $0xb0] sm:$0xff]
    %v6523 = vld [vmem:[%s3292 + $0xc0] sm:$0xff]
    %v6524 = vld [vmem:[%s3292 + $0xd0] sm:$0xff]
    %v6525 = vld [vmem:[%s3292 + $0xe0] sm:$0xff]
    %v6526 = vld [vmem:[%s3292 + $0xf0] sm:$0xff]
    %v6527 = vld [vmem:[%s3292 + $0x100] sm:$0xff]
    %v6528 = vld [vmem:[%s3292 + $0x110] sm:$0xff]
    %v6529 = vpack.c.bf16 %v6514, %v6513
    %v6530 = vpack.c.bf16 %v6516, %v6515
    %v6531 = vpack.c.bf16 %v6518, %v6517
    %v6532 = vpack.c.bf16 %v6520, %v6519
    %v6533 = vpack.c.bf16 %v6522, %v6521
    %v6534 = vpack.c.bf16 %v6524, %v6523
    %v6535 = vpack.c.bf16 %v6526, %v6525
    %v6536 = vpack.c.bf16 %v6528, %v6527
    %v6538 = vsel %vm131, %v6529, 0
    %v6541 = vsel %vm131, %v6530, 0
    %v6544 = vsel %vm131, %v6531, 0
    %v6547 = vsel %vm131, %v6532, 0
    %v6550 = vsel %vm131, %v6533, 0
    %v6553 = vsel %vm131, %v6534, 0
    %v6556 = vsel %vm131, %v6535, 0
    %v6559 = vsel %vm131, %v6536, 0
    %v6562 = vsel %vm2411, %v5542, 0
    %6564 = vmatprep.subr.bf16.mxu0 0
    %6565 = vmatpush1.bf16.msra.mxu0 %v6562
    %6566 = vmatprep.subr.bf16.mxu0 0
    %6567 = vmatpush1.bf16.msra.mxu0 0
    %6568 = vmatprep.subr.bf16.mxu0 0
    %6569 = vmatpush1.bf16.msra.mxu0 0
    %6570 = vmatprep.subr.bf16.mxu0 0
    %6571 = vmatpush1.bf16.msra.mxu0 0
    %6572 = vmatprep.subr.bf16.mxu0 0
    %6573 = vmatpush1.bf16.msra.mxu0 0
    %6574 = vmatprep.subr.bf16.mxu0 0
    %6575 = vmatpush1.bf16.msra.mxu0 0
    %6576 = vmatprep.subr.bf16.mxu0 0
    %6577 = vmatpush1.bf16.msra.mxu0 0
    %6578 = vmatprep.subr.bf16.mxu0 0
    %6579 = vmatpush1.bf16.msra.mxu0 0
    %6580 = vmatprep.subr.bf16.mxu0 0
    %6581 = vmatpush1.bf16.msra.mxu0 0
    %6582 = vmatprep.subr.bf16.mxu0 0
    %6583 = vmatpush1.bf16.msra.mxu0 0
    %6584 = vmatprep.subr.bf16.mxu0 0
    %6585 = vmatpush1.bf16.msra.mxu0 0
    %6586 = vmatprep.subr.bf16.mxu0 0
    %6587 = vmatpush1.bf16.msra.mxu0 0
    %6588 = vmatprep.subr.bf16.mxu0 0
    %6589 = vmatpush1.bf16.msra.mxu0 0
    %6590 = vmatprep.subr.bf16.mxu0 0
    %6591 = vmatpush1.bf16.msra.mxu0 0
    %6592 = vmatprep.subr.bf16.mxu0 0
    %6593 = vmatpush1.bf16.msra.mxu0 0
    %6594 = vmatprep.subr.bf16.mxu0 0
    %6595 = vmatpush1.bf16.msra.mxu0 0
    %6596 = vmatprep.mubr.bf16.mxu0 0
    %6597 = vmatmul.mubr.bf16.gmra.mrb[0].mxu0 %v6538
    %v6598 = vpop.f32.mrb[0].mxu0
    %v6599 = vadd.f32 0.0, %v6598
    %v6600 = vpop.f32.mrb[0].mxu0
    %v6601 = vpop.f32.mrb[0].mxu0
    %v6602 = vadd.f32 0.0, %v6601
    %v6603 = vpop.f32.mrb[0].mxu0
    %6604 = vmatprep.mubr.bf16.mxu0 0
    %6605 = vmatmul.mubr.bf16.gmra.mrb[0].mxu0 %v6541
    %v6606 = vpop.f32.mrb[0].mxu0
    %v6607 = vadd.f32 0.0, %v6606
    %v6608 = vpop.f32.mrb[0].mxu0
    %v6609 = vpop.f32.mrb[0].mxu0
    %v6610 = vadd.f32 0.0, %v6609
    %v6611 = vpop.f32.mrb[0].mxu0
    %6612 = vmatprep.mubr.bf16.mxu0 0
    %6613 = vmatmul.mubr.bf16.gmra.mrb[0].mxu0 %v6544
    %v6614 = vpop.f32.mrb[0].mxu0
    %v6615 = vadd.f32 0.0, %v6614
    %v6616 = vpop.f32.mrb[0].mxu0
    %v6617 = vpop.f32.mrb[0].mxu0
    %v6618 = vadd.f32 0.0, %v6617
    %v6619 = vpop.f32.mrb[0].mxu0
    %6620 = vmatprep.mubr.bf16.mxu0 0
    %6621 = vmatmul.mubr.bf16.gmra.mrb[0].mxu0 %v6547
    %v6622 = vpop.f32.mrb[0].mxu0
    %v6623 = vadd.f32 0.0, %v6622
    %v6624 = vpop.f32.mrb[0].mxu0
    %v6625 = vpop.f32.mrb[0].mxu0
    %v6626 = vadd.f32 0.0, %v6625
    %v6627 = vpop.f32.mrb[0].mxu0
    %6628 = vmatprep.mubr.bf16.mxu0 0
    %6629 = vmatmul.mubr.bf16.gmra.mrb[0].mxu0 %v6550
    %v6630 = vpop.f32.mrb[0].mxu0
    %v6631 = vadd.f32 0.0, %v6630
    %v6632 = vpop.f32.mrb[0].mxu0
    %v6633 = vpop.f32.mrb[0].mxu0
    %v6634 = vadd.f32 0.0, %v6633
    %v6635 = vpop.f32.mrb[0].mxu0
    %6636 = vmatprep.mubr.bf16.mxu0 0
    %6637 = vmatmul.mubr.bf16.gmra.mrb[0].mxu0 %v6553
    %v6638 = vpop.f32.mrb[0].mxu0
    %v6639 = vadd.f32 0.0, %v6638
    %v6640 = vpop.f32.mrb[0].mxu0
    %v6641 = vpop.f32.mrb[0].mxu0
    %v6642 = vadd.f32 0.0, %v6641
    %v6643 = vpop.f32.mrb[0].mxu0
    %6644 = vmatprep.mubr.bf16.mxu0 0
    %6645 = vmatmul.mubr.bf16.gmra.mrb[0].mxu0 %v6556
    %v6646 = vpop.f32.mrb[0].mxu0
    %v6647 = vadd.f32 0.0, %v6646
    %v6648 = vpop.f32.mrb[0].mxu0
    %v6649 = vpop.f32.mrb[0].mxu0
    %v6650 = vadd.f32 0.0, %v6649
    %v6651 = vpop.f32.mrb[0].mxu0
    %6652 = vmatprep.mubr.bf16.mxu0 0
    %6653 = vmatmul.mubr.bf16.gmra.mrb[0].mxu0 %v6559
    %v6654 = vpop.f32.mrb[0].mxu0
    %v6655 = vadd.f32 0.0, %v6654
    %v6656 = vpop.f32.mrb[0].mxu0
    %v6657 = vpop.f32.mrb[0].mxu0
    %v6658 = vadd.f32 0.0, %v6657
    %v6659 = vpop.f32.mrb[0].mxu0
    %6660 = vdwg.mxu0
    %v6661 = vadd.f32 %v6497, %v6599
    %v6662 = vadd.f32 %v6498, %v6602
    %v6663 = vadd.f32 %v6499, %v6607
    %v6664 = vadd.f32 %v6500, %v6610
    %v6665 = vadd.f32 %v6501, %v6615
    %v6666 = vadd.f32 %v6502, %v6618
    %v6667 = vadd.f32 %v6503, %v6623
    %v6668 = vadd.f32 %v6504, %v6626
    %v6669 = vadd.f32 %v6505, %v6631
    %v6670 = vadd.f32 %v6506, %v6634
    %v6671 = vadd.f32 %v6507, %v6639
    %v6672 = vadd.f32 %v6508, %v6642
    %v6673 = vadd.f32 %v6509, %v6647
    %v6674 = vadd.f32 %v6510, %v6650
    %v6675 = vadd.f32 %v6511, %v6655
    %v6676 = vadd.f32 %v6512, %v6658
    %v6677 = vld [vmem:[%s3292 + $0x1] sm:$0xff]
    %v6678 = vld [vmem:[%s3292 + $0x11] sm:$0xff]
    %v6679 = vld [vmem:[%s3292 + $0x21] sm:$0xff]
    %v6680 = vld [vmem:[%s3292 + $0x31] sm:$0xff]
    %v6681 = vld [vmem:[%s3292 + $0x41] sm:$0xff]
    %v6682 = vld [vmem:[%s3292 + $0x51] sm:$0xff]
    %v6683 = vld [vmem:[%s3292 + $0x61] sm:$0xff]
    %v6684 = vld [vmem:[%s3292 + $0x71] sm:$0xff]
    %v6685 = vld [vmem:[%s3292 + $0xa1] sm:$0xff]
    %v6686 = vld [vmem:[%s3292 + $0xb1] sm:$0xff]
    %v6687 = vld [vmem:[%s3292 + $0xc1] sm:$0xff]
    %v6688 = vld [vmem:[%s3292 + $0xd1] sm:$0xff]
    %v6689 = vld [vmem:[%s3292 + $0xe1] sm:$0xff]
    %v6690 = vld [vmem:[%s3292 + $0xf1] sm:$0xff]
    %v6691 = vld [vmem:[%s3292 + $0x101] sm:$0xff]
    %v6692 = vld [vmem:[%s3292 + $0x111] sm:$0xff]
    %v6693 = vpack.c.bf16 %v6678, %v6677
    %v6694 = vpack.c.bf16 %v6680, %v6679
    %v6695 = vpack.c.bf16 %v6682, %v6681
    %v6696 = vpack.c.bf16 %v6684, %v6683
    %v6697 = vpack.c.bf16 %v6686, %v6685
    %v6698 = vpack.c.bf16 %v6688, %v6687
    %v6699 = vpack.c.bf16 %v6690, %v6689
    %v6700 = vpack.c.bf16 %v6692, %v6691
    %v6702 = vsel %vm131, %v6693, 0
    %v6705 = vsel %vm131, %v6694, 0
    %v6708 = vsel %vm131, %v6695, 0
    %v6711 = vsel %vm131, %v6696, 0
    %v6714 = vsel %vm131, %v6697, 0
    %v6717 = vsel %vm131, %v6698, 0
    %v6720 = vsel %vm131, %v6699, 0
    %v6723 = vsel %vm131, %v6700, 0
    %v6726 = vsel %vm2411, %v5543, 0
    %6728 = vmatprep.subr.bf16.mxu0 0
    %6729 = vmatpush1.bf16.msra.mxu0 %v6726
    %6730 = vmatprep.subr.bf16.mxu0 0
    %6731 = vmatpush1.bf16.msra.mxu0 0
    %6732 = vmatprep.subr.bf16.mxu0 0
    %6733 = vmatpush1.bf16.msra.mxu0 0
    %6734 = vmatprep.subr.bf16.mxu0 0
    %6735 = vmatpush1.bf16.msra.mxu0 0
    %6736 = vmatprep.subr.bf16.mxu0 0
    %6737 = vmatpush1.bf16.msra.mxu0 0
    %6738 = vmatprep.subr.bf16.mxu0 0
    %6739 = vmatpush1.bf16.msra.mxu0 0
    %6740 = vmatprep.subr.bf16.mxu0 0
    %6741 = vmatpush1.bf16.msra.mxu0 0
    %6742 = vmatprep.subr.bf16.mxu0 0
    %6743 = vmatpush1.bf16.msra.mxu0 0
    %6744 = vmatprep.subr.bf16.mxu0 0
    %6745 = vmatpush1.bf16.msra.mxu0 0
    %6746 = vmatprep.subr.bf16.mxu0 0
    %6747 = vmatpush1.bf16.msra.mxu0 0
    %6748 = vmatprep.subr.bf16.mxu0 0
    %6749 = vmatpush1.bf16.msra.mxu0 0
    %6750 = vmatprep.subr.bf16.mxu0 0
    %6751 = vmatpush1.bf16.msra.mxu0 0
    %6752 = vmatprep.subr.bf16.mxu0 0
    %6753 = vmatpush1.bf16.msra.mxu0 0
    %6754 = vmatprep.subr.bf16.mxu0 0
    %6755 = vmatpush1.bf16.msra.mxu0 0
    %6756 = vmatprep.subr.bf16.mxu0 0
    %6757 = vmatpush1.bf16.msra.mxu0 0
    %6758 = vmatprep.subr.bf16.mxu0 0
    %6759 = vmatpush1.bf16.msra.mxu0 0
    %6760 = vmatprep.mubr.bf16.mxu0 0
    %6761 = vmatmul.mubr.bf16.gmra.mrb[0].mxu0 %v6702
    %v6762 = vpop.f32.mrb[0].mxu0
    %v6763 = vadd.f32 0.0, %v6762
    %v6764 = vpop.f32.mrb[0].mxu0
    %v6765 = vpop.f32.mrb[0].mxu0
    %v6766 = vadd.f32 0.0, %v6765
    %v6767 = vpop.f32.mrb[0].mxu0
    %6768 = vmatprep.mubr.bf16.mxu0 0
    %6769 = vmatmul.mubr.bf16.gmra.mrb[0].mxu0 %v6705
    %v6770 = vpop.f32.mrb[0].mxu0
    %v6771 = vadd.f32 0.0, %v6770
    %v6772 = vpop.f32.mrb[0].mxu0
    %v6773 = vpop.f32.mrb[0].mxu0
    %v6774 = vadd.f32 0.0, %v6773
    %v6775 = vpop.f32.mrb[0].mxu0
    %6776 = vmatprep.mubr.bf16.mxu0 0
    %6777 = vmatmul.mubr.bf16.gmra.mrb[0].mxu0 %v6708
    %v6778 = vpop.f32.mrb[0].mxu0
    %v6779 = vadd.f32 0.0, %v6778
    %v6780 = vpop.f32.mrb[0].mxu0
    %v6781 = vpop.f32.mrb[0].mxu0
    %v6782 = vadd.f32 0.0, %v6781
    %v6783 = vpop.f32.mrb[0].mxu0
    %6784 = vmatprep.mubr.bf16.mxu0 0
    %6785 = vmatmul.mubr.bf16.gmra.mrb[0].mxu0 %v6711
    %v6786 = vpop.f32.mrb[0].mxu0
    %v6787 = vadd.f32 0.0, %v6786
    %v6788 = vpop.f32.mrb[0].mxu0
    %v6789 = vpop.f32.mrb[0].mxu0
    %v6790 = vadd.f32 0.0, %v6789
    %v6791 = vpop.f32.mrb[0].mxu0
    %6792 = vmatprep.mubr.bf16.mxu0 0
    %6793 = vmatmul.mubr.bf16.gmra.mrb[0].mxu0 %v6714
    %v6794 = vpop.f32.mrb[0].mxu0
    %v6795 = vadd.f32 0.0, %v6794
    %v6796 = vpop.f32.mrb[0].mxu0
    %v6797 = vpop.f32.mrb[0].mxu0
    %v6798 = vadd.f32 0.0, %v6797
    %v6799 = vpop.f32.mrb[0].mxu0
    %6800 = vmatprep.mubr.bf16.mxu0 0
    %6801 = vmatmul.mubr.bf16.gmra.mrb[0].mxu0 %v6717
    %v6802 = vpop.f32.mrb[0].mxu0
    %v6803 = vadd.f32 0.0, %v6802
    %v6804 = vpop.f32.mrb[0].mxu0
    %v6805 = vpop.f32.mrb[0].mxu0
    %v6806 = vadd.f32 0.0, %v6805
    %v6807 = vpop.f32.mrb[0].mxu0
    %6808 = vmatprep.mubr.bf16.mxu0 0
    %6809 = vmatmul.mubr.bf16.gmra.mrb[0].mxu0 %v6720
    %v6810 = vpop.f32.mrb[0].mxu0
    %v6811 = vadd.f32 0.0, %v6810
    %v6812 = vpop.f32.mrb[0].mxu0
    %v6813 = vpop.f32.mrb[0].mxu0
    %v6814 = vadd.f32 0.0, %v6813
    %v6815 = vpop.f32.mrb[0].mxu0
    %6816 = vmatprep.mubr.bf16.mxu0 0
    %6817 = vmatmul.mubr.bf16.gmra.mrb[0].mxu0 %v6723
    %v6818 = vpop.f32.mrb[0].mxu0
    %v6819 = vadd.f32 0.0, %v6818
    %v6820 = vpop.f32.mrb[0].mxu0
    %v6821 = vpop.f32.mrb[0].mxu0
    %v6822 = vadd.f32 0.0, %v6821
    %v6823 = vpop.f32.mrb[0].mxu0
    %6824 = vdwg.mxu0
    %v6825 = vadd.f32 %v6661, %v6763
    %v6826 = vadd.f32 %v6662, %v6766
    %v6827 = vadd.f32 %v6663, %v6771
    %v6828 = vadd.f32 %v6664, %v6774
    %v6829 = vadd.f32 %v6665, %v6779
    %v6830 = vadd.f32 %v6666, %v6782
    %v6831 = vadd.f32 %v6667, %v6787
    %v6832 = vadd.f32 %v6668, %v6790
    %v6833 = vadd.f32 %v6669, %v6795
    %v6834 = vadd.f32 %v6670, %v6798
    %v6835 = vadd.f32 %v6671, %v6803
    %v6836 = vadd.f32 %v6672, %v6806
    %v6837 = vadd.f32 %v6673, %v6811
    %v6838 = vadd.f32 %v6674, %v6814
    %v6839 = vadd.f32 %v6675, %v6819
    %v6840 = vadd.f32 %v6676, %v6822
    %v6841 = vld [vmem:[%s3292 + $0x2] sm:$0xff]
    %v6842 = vld [vmem:[%s3292 + $0x12] sm:$0xff]
    %v6843 = vld [vmem:[%s3292 + $0x22] sm:$0xff]
    %v6844 = vld [vmem:[%s3292 + $0x32] sm:$0xff]
    %v6845 = vld [vmem:[%s3292 + $0x42] sm:$0xff]
    %v6846 = vld [vmem:[%s3292 + $0x52] sm:$0xff]
    %v6847 = vld [vmem:[%s3292 + $0x62] sm:$0xff]
    %v6848 = vld [vmem:[%s3292 + $0x72] sm:$0xff]
    %v6849 = vld [vmem:[%s3292 + $0xa2] sm:$0xff]
    %v6850 = vld [vmem:[%s3292 + $0xb2] sm:$0xff]
    %v6851 = vld [vmem:[%s3292 + $0xc2] sm:$0xff]
    %v6852 = vld [vmem:[%s3292 + $0xd2] sm:$0xff]
    %v6853 = vld [vmem:[%s3292 + $0xe2] sm:$0xff]
    %v6854 = vld [vmem:[%s3292 + $0xf2] sm:$0xff]
    %v6855 = vld [vmem:[%s3292 + $0x102] sm:$0xff]
    %v6856 = vld [vmem:[%s3292 + $0x112] sm:$0xff]
    %v6857 = vpack.c.bf16 %v6842, %v6841
    %v6858 = vpack.c.bf16 %v6844, %v6843
    %v6859 = vpack.c.bf16 %v6846, %v6845
    %v6860 = vpack.c.bf16 %v6848, %v6847
    %v6861 = vpack.c.bf16 %v6850, %v6849
    %v6862 = vpack.c.bf16 %v6852, %v6851
    %v6863 = vpack.c.bf16 %v6854, %v6853
    %v6864 = vpack.c.bf16 %v6856, %v6855
    %v6866 = vsel %vm131, %v6857, 0
    %v6869 = vsel %vm131, %v6858, 0
    %v6872 = vsel %vm131, %v6859, 0
    %v6875 = vsel %vm131, %v6860, 0
    %v6878 = vsel %vm131, %v6861, 0
    %v6881 = vsel %vm131, %v6862, 0
    %v6884 = vsel %vm131, %v6863, 0
    %v6887 = vsel %vm131, %v6864, 0
    %v6890 = vsel %vm2411, %v5544, 0
    %6892 = vmatprep.subr.bf16.mxu0 0
    %6893 = vmatpush1.bf16.msra.mxu0 %v6890
    %6894 = vmatprep.subr.bf16.mxu0 0
    %6895 = vmatpush1.bf16.msra.mxu0 0
    %6896 = vmatprep.subr.bf16.mxu0 0
    %6897 = vmatpush1.bf16.msra.mxu0 0
    %6898 = vmatprep.subr.bf16.mxu0 0
    %6899 = vmatpush1.bf16.msra.mxu0 0
    %6900 = vmatprep.subr.bf16.mxu0 0
    %6901 = vmatpush1.bf16.msra.mxu0 0
    %6902 = vmatprep.subr.bf16.mxu0 0
    %6903 = vmatpush1.bf16.msra.mxu0 0
    %6904 = vmatprep.subr.bf16.mxu0 0
    %6905 = vmatpush1.bf16.msra.mxu0 0
    %6906 = vmatprep.subr.bf16.mxu0 0
    %6907 = vmatpush1.bf16.msra.mxu0 0
    %6908 = vmatprep.subr.bf16.mxu0 0
    %6909 = vmatpush1.bf16.msra.mxu0 0
    %6910 = vmatprep.subr.bf16.mxu0 0
    %6911 = vmatpush1.bf16.msra.mxu0 0
    %6912 = vmatprep.subr.bf16.mxu0 0
    %6913 = vmatpush1.bf16.msra.mxu0 0
    %6914 = vmatprep.subr.bf16.mxu0 0
    %6915 = vmatpush1.bf16.msra.mxu0 0
    %6916 = vmatprep.subr.bf16.mxu0 0
    %6917 = vmatpush1.bf16.msra.mxu0 0
    %6918 = vmatprep.subr.bf16.mxu0 0
    %6919 = vmatpush1.bf16.msra.mxu0 0
    %6920 = vmatprep.subr.bf16.mxu0 0
    %6921 = vmatpush1.bf16.msra.mxu0 0
    %6922 = vmatprep.subr.bf16.mxu0 0
    %6923 = vmatpush1.bf16.msra.mxu0 0
    %6924 = vmatprep.mubr.bf16.mxu0 0
    %6925 = vmatmul.mubr.bf16.gmra.mrb[0].mxu0 %v6866
    %v6926 = vpop.f32.mrb[0].mxu0
    %v6927 = vadd.f32 0.0, %v6926
    %v6928 = vpop.f32.mrb[0].mxu0
    %v6929 = vpop.f32.mrb[0].mxu0
    %v6930 = vadd.f32 0.0, %v6929
    %v6931 = vpop.f32.mrb[0].mxu0
    %6932 = vmatprep.mubr.bf16.mxu0 0
    %6933 = vmatmul.mubr.bf16.gmra.mrb[0].mxu0 %v6869
    %v6934 = vpop.f32.mrb[0].mxu0
    %v6935 = vadd.f32 0.0, %v6934
    %v6936 = vpop.f32.mrb[0].mxu0
    %v6937 = vpop.f32.mrb[0].mxu0
    %v6938 = vadd.f32 0.0, %v6937
    %v6939 = vpop.f32.mrb[0].mxu0
    %6940 = vmatprep.mubr.bf16.mxu0 0
    %6941 = vmatmul.mubr.bf16.gmra.mrb[0].mxu0 %v6872
    %v6942 = vpop.f32.mrb[0].mxu0
    %v6943 = vadd.f32 0.0, %v6942
    %v6944 = vpop.f32.mrb[0].mxu0
    %v6945 = vpop.f32.mrb[0].mxu0
    %v6946 = vadd.f32 0.0, %v6945
    %v6947 = vpop.f32.mrb[0].mxu0
    %6948 = vmatprep.mubr.bf16.mxu0 0
    %6949 = vmatmul.mubr.bf16.gmra.mrb[0].mxu0 %v6875
    %v6950 = vpop.f32.mrb[0].mxu0
    %v6951 = vadd.f32 0.0, %v6950
    %v6952 = vpop.f32.mrb[0].mxu0
    %v6953 = vpop.f32.mrb[0].mxu0
    %v6954 = vadd.f32 0.0, %v6953
    %v6955 = vpop.f32.mrb[0].mxu0
    %6956 = vmatprep.mubr.bf16.mxu0 0
    %6957 = vmatmul.mubr.bf16.gmra.mrb[0].mxu0 %v6878
    %v6958 = vpop.f32.mrb[0].mxu0
    %v6959 = vadd.f32 0.0, %v6958
    %v6960 = vpop.f32.mrb[0].mxu0
    %v6961 = vpop.f32.mrb[0].mxu0
    %v6962 = vadd.f32 0.0, %v6961
    %v6963 = vpop.f32.mrb[0].mxu0
    %6964 = vmatprep.mubr.bf16.mxu0 0
    %6965 = vmatmul.mubr.bf16.gmra.mrb[0].mxu0 %v6881
    %v6966 = vpop.f32.mrb[0].mxu0
    %v6967 = vadd.f32 0.0, %v6966
    %v6968 = vpop.f32.mrb[0].mxu0
    %v6969 = vpop.f32.mrb[0].mxu0
    %v6970 = vadd.f32 0.0, %v6969
    %v6971 = vpop.f32.mrb[0].mxu0
    %6972 = vmatprep.mubr.bf16.mxu0 0
    %6973 = vmatmul.mubr.bf16.gmra.mrb[0].mxu0 %v6884
    %v6974 = vpop.f32.mrb[0].mxu0
    %v6975 = vadd.f32 0.0, %v6974
    %v6976 = vpop.f32.mrb[0].mxu0
    %v6977 = vpop.f32.mrb[0].mxu0
    %v6978 = vadd.f32 0.0, %v6977
    %v6979 = vpop.f32.mrb[0].mxu0
    %6980 = vmatprep.mubr.bf16.mxu0 0
    %6981 = vmatmul.mubr.bf16.gmra.mrb[0].mxu0 %v6887
    %v6982 = vpop.f32.mrb[0].mxu0
    %v6983 = vadd.f32 0.0, %v6982
    %v6984 = vpop.f32.mrb[0].mxu0
    %v6985 = vpop.f32.mrb[0].mxu0
    %v6986 = vadd.f32 0.0, %v6985
    %v6987 = vpop.f32.mrb[0].mxu0
    %6988 = vdwg.mxu0
    %v6989 = vadd.f32 %v6825, %v6927
    %v6990 = vadd.f32 %v6826, %v6930
    %v6991 = vadd.f32 %v6827, %v6935
    %v6992 = vadd.f32 %v6828, %v6938
    %v6993 = vadd.f32 %v6829, %v6943
    %v6994 = vadd.f32 %v6830, %v6946
    %v6995 = vadd.f32 %v6831, %v6951
    %v6996 = vadd.f32 %v6832, %v6954
    %v6997 = vadd.f32 %v6833, %v6959
    %v6998 = vadd.f32 %v6834, %v6962
    %v6999 = vadd.f32 %v6835, %v6967
    %v7000 = vadd.f32 %v6836, %v6970
    %v7001 = vadd.f32 %v6837, %v6975
    %v7002 = vadd.f32 %v6838, %v6978
    %v7003 = vadd.f32 %v6839, %v6983
    %v7004 = vadd.f32 %v6840, %v6986
    %v7005 = vadd.f32 %v6989, %v3886
    %v7006 = vadd.f32 %v6990, %v3887
    %v7007 = vadd.f32 %v6991, %v3888
    %v7008 = vadd.f32 %v6992, %v3889
    %v7009 = vadd.f32 %v6993, %v3890
    %v7010 = vadd.f32 %v6994, %v3891
    %v7011 = vadd.f32 %v6995, %v3892
    %v7012 = vadd.f32 %v6996, %v3893
    %v7013 = vadd.f32 %v6997, %v3894
    %v7014 = vadd.f32 %v6998, %v3895
    %v7015 = vadd.f32 %v6999, %v3896
    %v7016 = vadd.f32 %v7000, %v3897
    %v7017 = vadd.f32 %v7001, %v3898
    %v7018 = vadd.f32 %v7002, %v3899
    %v7019 = vadd.f32 %v7003, %v3900
    %v7020 = vadd.f32 %v7004, %v3901
    %7021 = vst.msk [vmem:[#allocation4] sm:$0xff] %vm131, %v7005
    %7022 = vst.msk [vmem:[#allocation4 + $0x8] sm:$0xff] %vm131, %v7006
    %7023 = vst.msk [vmem:[#allocation4 + $0x10] sm:$0xff] %vm131, %v7007
    %7024 = vst.msk [vmem:[#allocation4 + $0x18] sm:$0xff] %vm131, %v7008
    %7025 = vst.msk [vmem:[#allocation4 + $0x20] sm:$0xff] %vm131, %v7009
    %7026 = vst.msk [vmem:[#allocation4 + $0x28] sm:$0xff] %vm131, %v7010
    %7027 = vst.msk [vmem:[#allocation4 + $0x30] sm:$0xff] %vm131, %v7011
    %7028 = vst.msk [vmem:[#allocation4 + $0x38] sm:$0xff] %vm131, %v7012
    %7029 = vst.msk [vmem:[#allocation4 + $0x40] sm:$0xff] %vm131, %v7013
    %7030 = vst.msk [vmem:[#allocation4 + $0x48] sm:$0xff] %vm131, %v7014
    %7031 = vst.msk [vmem:[#allocation4 + $0x50] sm:$0xff] %vm131, %v7015
    %7032 = vst.msk [vmem:[#allocation4 + $0x58] sm:$0xff] %vm131, %v7016
    %7033 = vst.msk [vmem:[#allocation4 + $0x60] sm:$0xff] %vm131, %v7017
    %7034 = vst.msk [vmem:[#allocation4 + $0x68] sm:$0xff] %vm131, %v7018
    %7035 = vst.msk [vmem:[#allocation4 + $0x70] sm:$0xff] %vm131, %v7019
    %7036 = vst.msk [vmem:[#allocation4 + $0x78] sm:$0xff] %vm131, %v7020
    // Predicated region
    $region50: #{network_block_forward.1} parent=1 // pred_check
      _
    $region51: #{network_block_forward.1} parent=1 // pred_check_branch
      %7038 = sbr.rel (0) target = $region53
    $region52: #{network_block_forward.1} parent=1 // pred_region
      %s7040 = ssub.s32 2048, 2048
      %7041 = vsyncadd [#allocation5], %s7040
      %s7042 = sshll.u32 [#allocation4], 4
      %s7043 = int_to_ptr.vmem [resolvable:$true] %s7042
      %7048 = dma.vmem_to_hbm [thread:$0]  %s7043, 2048, %s12, [#allocation5], 128, 128, 8
    $region53: #{network_block_forward.1} parent=1 // pred_fallthru
      _
    // Predicated region
    $region54: #{network_block_forward.1} parent=1 // pred_check
      _
    $region55: #{network_block_forward.1} parent=1 // pred_check_branch
      %7050 = sbr.rel (0) target = $region57
    $region56: #{network_block_forward.1} parent=1 // pred_region
      %7051 = dma.done [#allocation5], 2048
    $region57: #{network_block_forward.1} parent=1 // pred_fallthru
      _
    %7052 = vsyncpa [#allocation5], 1

</llo_original>
